<compile_context>
chip_gen: v7x
topology: tpu7x:2x2x1
jax: 0.10.0
libtpu: 0.0.40
codegen_flags: <defaults>
</compile_context>

<pallas_src>
import numpy as np

import jax
import jax.numpy as jnp
from jax import lax
from jax.experimental import pallas as pl
from jax.experimental.pallas import tpu as pltpu


T_PACK = 8    # images packed along the lane axis per grid step
G1 = 32       # per-image lane-group width at the conv1 stage (input width)
G2 = 16       # per-image lane-group width at the conv2 stage (14 padded to 16)


# --------------------------------------------------------------------------- #
# Host-side weight packing (done once, outside jit)
# --------------------------------------------------------------------------- #

def _conv_toeplitz(w, b, H):
    """Pack (Cout,Cin,k,k) conv weights into a stacked Toeplitz GEMM matrix.

    For one image X laid out as (Cin*H, W):
        part = AA @ X                                      # (k*Cout*Ho, W)
        conv[co*Ho+oh, ow] = sum_kw part[kw*Cout*Ho + co*Ho + oh, ow + kw]
    matching PyTorch's valid cross-correlation conv (stride 1).
    """
    w = np.asarray(w, np.float32)
    b = np.asarray(b, np.float32)
    Cout, Cin, k, _ = w.shape
    Ho = H - k + 1
    AA = np.zeros((k, Cout, Ho, Cin, H), np.float32)
    for kw in range(k):
        for kh in range(k):
            for oh in range(Ho):
                AA[kw, :, oh, :, oh + kh] = w[:, :, kh, kw]
    AA = AA.reshape(k * Cout * Ho, Cin * H)
    bias = np.repeat(b, Ho)[:, None].astype(np.float32)          # (Cout*Ho, 1)
    return AA, bias


def _pool_rows(C, Ho):
    """Row-parity selection matrices for maxpool2x2 over the (C*Ho) row axis."""
    Hp = Ho // 2
    Pe = np.zeros((C * Hp, C * Ho), np.float32)
    Po = np.zeros((C * Hp, C * Ho), np.float32)
    for c in range(C):
        for p in range(Hp):
            Pe[c * Hp + p, c * Ho + 2 * p] = 1.0
            Po[c * Hp + p, c * Ho + 2 * p + 1] = 1.0
    return np.stack([Pe, Po])


def _pool_cols_grouped(T, gin, gout, wvalid):
    """Column-parity selection for the lane-grouped layout (T images packed
    along lanes, input group width gin -> output group width gout; output
    columns >= wvalid stay exactly zero)."""
    Se = np.zeros((gin * T, gout * T), np.float32)
    So = np.zeros((gin * T, gout * T), np.float32)
    for t in range(T):
        for q in range(wvalid):
            Se[t * gin + 2 * q, t * gout + q] = 1.0
            So[t * gin + 2 * q + 1, t * gout + q] = 1.0
    return np.stack([Se, So])


def _pool2_fc_select(T, gin):
    """Pool2 column selection fused with the flatten 'w' offset: for each
    w in 0..4 select columns 2w / 2w+1 of every image group -> (80, T) slabs
    that feed fc1 directly (feature index = 5*row + w)."""
    Se = np.zeros((5, gin * T, T), np.float32)
    So = np.zeros((5, gin * T, T), np.float32)
    for w in range(5):
        for t in range(T):
            Se[w, t * gin + 2 * w, t] = 1.0
            So[w, t * gin + 2 * w + 1, t] = 1.0
    return Se, So


def init_params(key):
    """PyTorch-default-style uniform(-1/sqrt(fan_in), 1/sqrt(fan_in)) init."""
    def uniform(k, shape, fan_in):
        bound = 1.0 / float(fan_in) ** 0.5
        return jax.random.uniform(k, shape, jnp.float32, -bound, bound)

    ks = jax.random.split(key, 10)
    return {
        "conv1_w": uniform(ks[0], (6, 3, 5, 5), 3 * 25),
        "conv1_b": uniform(ks[1], (6,), 3 * 25),
        "conv2_w": uniform(ks[2], (16, 6, 5, 5), 6 * 25),
        "conv2_b": uniform(ks[3], (16,), 6 * 25),
        "fc1_w": uniform(ks[4], (120, 16 * 5 * 5), 16 * 5 * 5),
        "fc1_b": uniform(ks[5], (120,), 16 * 5 * 5),
        "fc2_w": uniform(ks[6], (84, 120), 120),
        "fc2_b": uniform(ks[7], (84,), 120),
        "fc3_w": uniform(ks[8], (10, 84), 84),
        "fc3_b": uniform(ks[9], (10,), 84),
    }


def prepare_params(params, T=T_PACK):
    """One-time packing into the layouts/dtypes the fused kernel wants."""
    aa1, b1 = _conv_toeplitz(params["conv1_w"], params["conv1_b"], H=32)  # (840,96)
    aa2, b2 = _conv_toeplitz(params["conv2_w"], params["conv2_b"], H=14)  # (800,84)
    pp1 = _pool_rows(6, 28)                      # (2, 84, 168)
    pp2 = _pool_rows(16, 10)                     # (2, 80, 160)
    ss1 = _pool_cols_grouped(T, G1, G2, 14)      # (2, 32T, 16T)
    se2, so2 = _pool2_fc_select(T, G2)           # (5, 16T, T) each

    w1 = np.asarray(params["fc1_w"], np.float32)                 # (120, 400)
    # flatten index = c*25 + h*5 + w = 5*(c*5+h) + w  ->  w1t[w] = w1[:, w::5]
    w1t = np.stack([w1[:, w::5] for w in range(5)], axis=0)      # (5, 120, 80)

    bf = jnp.bfloat16
    f32 = jnp.float32
    return {
        "aa1": jnp.asarray(aa1, bf), "b1": jnp.asarray(b1, f32),
        "pp1": jnp.asarray(pp1, bf), "ss1": jnp.asarray(ss1, bf),
        "aa2": jnp.asarray(aa2, bf), "b2": jnp.asarray(b2, f32),
        "pp2": jnp.asarray(pp2, bf),
        "se2": jnp.asarray(se2, bf), "so2": jnp.asarray(so2, bf),
        "w1t": jnp.asarray(w1t, bf),
        "fb1": jnp.asarray(np.asarray(params["fc1_b"], np.float32).reshape(-1, 1)),
        "w2": jnp.asarray(np.asarray(params["fc2_w"], np.float32), bf),
        "fb2": jnp.asarray(np.asarray(params["fc2_b"], np.float32).reshape(-1, 1)),
        "w3": jnp.asarray(np.asarray(params["fc3_w"], np.float32), bf),
        "fb3": jnp.asarray(np.asarray(params["fc3_b"], np.float32).reshape(-1, 1)),
    }


# --------------------------------------------------------------------------- #
# Fused kernel: conv1+pool+conv2+pool+fc1+fc2+fc3 for T lane-packed images
# --------------------------------------------------------------------------- #

def _shift_left_lanes(a, k):
    """b[:, j] = a[:, j + k] (wrap-around only lands in never-read columns)."""
    return pltpu.roll(a, shift=a.shape[-1] - k, axis=1)


def _net_kernel(x_ref, aa1_ref, b1_ref, pp1_ref, ss1_ref,
                aa2_ref, b2_ref, pp2_ref, se2_ref, so2_ref,
                w1_ref, fb1_ref, w2_ref, fb2_ref, w3_ref, fb3_ref,
                o_ref):
    f32, bf16 = jnp.float32, jnp.bfloat16
    x = x_ref[...]                                               # (96, 32T) bf16

    # ---- conv1: one Toeplitz GEMM + rolled kw-shift adds + bias + ReLU ------
    part1 = jnp.dot(aa1_ref[...], x, preferred_element_type=f32)  # (840, 32T)
    acc1 = part1[0:168, :]
    for kw in range(1, 5):
        acc1 = acc1 + _shift_left_lanes(part1[kw * 168:(kw + 1) * 168, :], kw)
    y1 = jnp.maximum(acc1 + b1_ref[...], 0.0).astype(bf16)        # (168, 32T)

    # ---- maxpool 2x2 via parity-selection matmuls (lane-group aware) --------
    r1 = jnp.maximum(
        jnp.dot(pp1_ref[0], y1, preferred_element_type=f32),
        jnp.dot(pp1_ref[1], y1, preferred_element_type=f32)).astype(bf16)  # (84, 32T)
    p1 = jnp.maximum(
        jnp.dot(r1, ss1_ref[0], preferred_element_type=f32),
        jnp.dot(r1, ss1_ref[1], preferred_element_type=f32)).astype(bf16)  # (84, 16T)

    # ---- conv2 --------------------------------------------------------------
    part2 = jnp.dot(aa2_ref[...], p1, preferred_element_type=f32)  # (800, 16T)
    acc2 = part2[0:160, :]
    for kw in range(1, 5):
        acc2 = acc2 + _shift_left_lanes(part2[kw * 160:(kw + 1) * 160, :], kw)
    y2 = jnp.maximum(acc2 + b2_ref[...], 0.0).astype(bf16)         # (160, 16T)

    # ---- pool2 rows, then fused (col-pool + flatten + fc1) ------------------
    r2 = jnp.maximum(
        jnp.dot(pp2_ref[0], y2, preferred_element_type=f32),
        jnp.dot(pp2_ref[1], y2, preferred_element_type=f32)).astype(bf16)  # (80, 16T)

    h1 = None
    for w in range(5):
        a_w = jnp.maximum(
            jnp.dot(r2, se2_ref[w], preferred_element_type=f32),
            jnp.dot(r2, so2_ref[w], preferred_element_type=f32)).astype(bf16)  # (80, T)
        contrib = jnp.dot(w1_ref[w], a_w, preferred_element_type=f32)          # (120, T)
        h1 = contrib if h1 is None else h1 + contrib
    h1 = jnp.maximum(h1 + fb1_ref[...], 0.0).astype(bf16)          # (120, T)

    # ---- fc2 / fc3 (activations stay feature-major: batch on lanes) ---------
    h2 = jnp.maximum(
        jnp.dot(w2_ref[...], h1, preferred_element_type=f32) + fb2_ref[...],
        0.0).astype(bf16)                                          # (84, T)
    logits = jnp.dot(w3_ref[...], h2, preferred_element_type=f32) + fb3_ref[...]  # (10, T)
    o_ref[0] = logits


def _const_spec(arr):
    nd = arr.ndim
    return pl.BlockSpec(arr.shape, lambda g, _nd=nd: (0,) * _nd)


def net_forward(packed, x):
    # x: (B, 3, 32, 32) float32
    B = x.shape[0]
    T = T_PACK
    Bp = ((B + T - 1) // T) * T
    nb = Bp // T

    # (B,3,32,32) -> (96, 32*Bp): image b occupies lanes [32b, 32b+32), bf16.
    x2 = x.reshape(B, 3 * 32, 32).astype(jnp.bfloat16)
    xp = jnp.transpose(x2, (1, 0, 2)).reshape(3 * 32, 32 * B)
    if Bp != B:
        xp = jnp.pad(xp, ((0, 0), (0, 32 * (Bp - B))))

    out3 = pl.pallas_call(
        _net_kernel,
        out_shape=jax.ShapeDtypeStruct((nb, 10, T), jnp.float32),
        grid_spec=pltpu.PrefetchScalarGridSpec(
            num_scalar_prefetch=0,
            grid=(nb,),
            in_specs=[
                pl.BlockSpec((96, 32 * T), lambda g: (0, g)),
                _const_spec(packed["aa1"]), _const_spec(packed["b1"]),
                _const_spec(packed["pp1"]), _const_spec(packed["ss1"]),
                _const_spec(packed["aa2"]), _const_spec(packed["b2"]),
                _const_spec(packed["pp2"]),
                _const_spec(packed["se2"]), _const_spec(packed["so2"]),
                _const_spec(packed["w1t"]), _const_spec(packed["fb1"]),
                _const_spec(packed["w2"]), _const_spec(packed["fb2"]),
                _const_spec(packed["w3"]), _const_spec(packed["fb3"]),
            ],
            out_specs=pl.BlockSpec((1, 10, T), lambda g: (g, 0, 0)),
        ),
        compiler_params=pltpu.CompilerParams(
            dimension_semantics=("parallel",),
            vmem_limit_bytes=32 * 1024 * 1024),
    )(xp, packed["aa1"], packed["b1"], packed["pp1"], packed["ss1"],
      packed["aa2"], packed["b2"], packed["pp2"], packed["se2"], packed["so2"],
      packed["w1t"], packed["fb1"], packed["w2"], packed["fb2"],
      packed["w3"], packed["fb3"])

    # (nb, 10, T) -> (Bp, 10): tiny XLA transpose of the logits only.
    logits = jnp.transpose(out3, (0, 2, 1)).reshape(Bp, 10)
    return logits[:B]


# --------------------------------------------------------------------------- #
# Pure-JAX reference (float32) for a correctness sanity check
# --------------------------------------------------------------------------- #

def _reference_forward(params, x):
    dn = ("NCHW", "OIHW", "NCHW")
    y = lax.conv_general_dilated(x, params["conv1_w"], (1, 1), "VALID",
                                 dimension_numbers=dn)
    y = jax.nn.relu(y + params["conv1_b"].reshape(1, -1, 1, 1))
    y = lax.reduce_window(y, -jnp.inf, lax.max, (1, 1, 2, 2), (1, 1, 2, 2), "VALID")
    y = lax.conv_general_dilated(y, params["conv2_w"], (1, 1), "VALID",
                                 dimension_numbers=dn)
    y = jax.nn.relu(y + params["conv2_b"].reshape(1, -1, 1, 1))
    y = lax.reduce_window(y, -jnp.inf, lax.max, (1, 1, 2, 2), (1, 1, 2, 2), "VALID")
    y = y.reshape(y.shape[0], -1)
    y = jax.nn.relu(y @ params["fc1_w"].T + params["fc1_b"])
    y = jax.nn.relu(y @ params["fc2_w"].T + params["fc2_b"])
    return y @ params["fc3_w"].T + params["fc3_b"]


if __name__ == "__main__":
    key = jax.random.PRNGKey(0)
    pkey, xkey = jax.random.split(key)
    params = init_params(pkey)
    packed = prepare_params(params)

    # Forward math (16*5*5 flatten) implies 3x32x32 inputs; small batch = 2.
    x = jax.random.normal(xkey, (2, 3, 32, 32), jnp.float32)

    out = jax.block_until_ready(jax.jit(net_forward)(packed, x))
    assert out.shape == (2, 10) and out.dtype == jnp.float32

    ref = _reference_forward(params, x)
    err = float(jnp.max(jnp.abs(out - ref)))
    assert jnp.allclose(out, ref, rtol=1e-1, atol=1e-1), f"max|diff|={err}"
    print("KERNEL_OK")
</pallas_src>

<mosaic_0001>
module attributes {stable_mosaic.version = 11 : i64} {
  func.func @_net_kernel(%arg0: i32, %arg1: memref<96x256xbf16, #tpu.memory_space<vmem>>, %arg2: memref<840x96xbf16, #tpu.memory_space<vmem>>, %arg3: memref<168x1xf32, #tpu.memory_space<vmem>>, %arg4: memref<2x84x168xbf16, #tpu.memory_space<vmem>>, %arg5: memref<2x256x128xbf16, #tpu.memory_space<vmem>>, %arg6: memref<800x84xbf16, #tpu.memory_space<vmem>>, %arg7: memref<160x1xf32, #tpu.memory_space<vmem>>, %arg8: memref<2x80x160xbf16, #tpu.memory_space<vmem>>, %arg9: memref<5x128x8xbf16, #tpu.memory_space<vmem>>, %arg10: memref<5x128x8xbf16, #tpu.memory_space<vmem>>, %arg11: memref<5x120x80xbf16, #tpu.memory_space<vmem>>, %arg12: memref<120x1xf32, #tpu.memory_space<vmem>>, %arg13: memref<84x120xbf16, #tpu.memory_space<vmem>>, %arg14: memref<84x1xf32, #tpu.memory_space<vmem>>, %arg15: memref<10x84xbf16, #tpu.memory_space<vmem>>, %arg16: memref<10x1xf32, #tpu.memory_space<vmem>>, %arg17: memref<1x10x8xf32, #tpu.memory_space<vmem>>) attributes {dimension_semantics = [#tpu.dimension_semantics<parallel>], iteration_bounds = array<i64: 1>, scalar_prefetch = 0 : i64, scratch_operands = 0 : i64, tpu.core_type = #tpu.core_type<tc>, window_params = [{transform_indices = @transform_0, window_bounds = array<i64: 96, 256>}, {pipeline_mode = #tpu.pipeline_mode<synchronous>, transform_indices = @transform_1, window_bounds = array<i64: 840, 96>}, {pipeline_mode = #tpu.pipeline_mode<synchronous>, transform_indices = @transform_2, window_bounds = array<i64: 168, 1>}, {pipeline_mode = #tpu.pipeline_mode<synchronous>, transform_indices = @transform_3, window_bounds = array<i64: 2, 84, 168>}, {pipeline_mode = #tpu.pipeline_mode<synchronous>, transform_indices = @transform_4, window_bounds = array<i64: 2, 256, 128>}, {pipeline_mode = #tpu.pipeline_mode<synchronous>, transform_indices = @transform_5, window_bounds = array<i64: 800, 84>}, {pipeline_mode = #tpu.pipeline_mode<synchronous>, transform_indices = @transform_6, window_bounds = array<i64: 160, 1>}, {pipeline_mode = #tpu.pipeline_mode<synchronous>, transform_indices = @transform_7, window_bounds = array<i64: 2, 80, 160>}, {pipeline_mode = #tpu.pipeline_mode<synchronous>, transform_indices = @transform_8, window_bounds = array<i64: 5, 128, 8>}, {pipeline_mode = #tpu.pipeline_mode<synchronous>, transform_indices = @transform_9, window_bounds = array<i64: 5, 128, 8>}, {pipeline_mode = #tpu.pipeline_mode<synchronous>, transform_indices = @transform_10, window_bounds = array<i64: 5, 120, 80>}, {pipeline_mode = #tpu.pipeline_mode<synchronous>, transform_indices = @transform_11, window_bounds = array<i64: 120, 1>}, {pipeline_mode = #tpu.pipeline_mode<synchronous>, transform_indices = @transform_12, window_bounds = array<i64: 84, 120>}, {pipeline_mode = #tpu.pipeline_mode<synchronous>, transform_indices = @transform_13, window_bounds = array<i64: 84, 1>}, {pipeline_mode = #tpu.pipeline_mode<synchronous>, transform_indices = @transform_14, window_bounds = array<i64: 10, 84>}, {pipeline_mode = #tpu.pipeline_mode<synchronous>, transform_indices = @transform_15, window_bounds = array<i64: 10, 1>}, {transform_indices = @transform_16, window_bounds = array<i64: 1, 10, 8>}]} {
    %c0 = arith.constant 0 : index
    %c0_0 = arith.constant 0 : index
    %0 = vector.load %arg1[%c0, %c0_0] : memref<96x256xbf16, #tpu.memory_space<vmem>>, vector<96x256xbf16>
    %c0_1 = arith.constant 0 : index
    %c0_2 = arith.constant 0 : index
    %1 = vector.load %arg2[%c0_1, %c0_2] : memref<840x96xbf16, #tpu.memory_space<vmem>>, vector<840x96xbf16>
    %cst = arith.constant dense<0.000000e+00> : vector<840x256xf32>
    %2 = tpu.matmul %1, %0, %cst {dimension_numbers = #tpu.dot_dimension_numbers<[1], [0], [0], [1], [0, 0, 1, 1], [], []>} : vector<840x96xbf16>, vector<96x256xbf16>, vector<840x256xf32> -> vector<840x256xf32>
    %3 = vector.extract_strided_slice %2 {offsets = [0, 0], sizes = [168, 256], strides = [1, 1]} : vector<840x256xf32> to vector<168x256xf32>
    %4 = vector.extract_strided_slice %2 {offsets = [168, 0], sizes = [168, 256], strides = [1, 1]} : vector<840x256xf32> to vector<168x256xf32>
    %c255_i32 = arith.constant 255 : i32
    %5 = tpu.dynamic_rotate %4 by %c255_i32 dim 1 : vector<168x256xf32>, i32 -> vector<168x256xf32>
    %6 = arith.addf %3, %5 : vector<168x256xf32>
    %7 = vector.extract_strided_slice %2 {offsets = [336, 0], sizes = [168, 256], strides = [1, 1]} : vector<840x256xf32> to vector<168x256xf32>
    %c254_i32 = arith.constant 254 : i32
    %8 = tpu.dynamic_rotate %7 by %c254_i32 dim 1 : vector<168x256xf32>, i32 -> vector<168x256xf32>
    %9 = arith.addf %6, %8 : vector<168x256xf32>
    %10 = vector.extract_strided_slice %2 {offsets = [504, 0], sizes = [168, 256], strides = [1, 1]} : vector<840x256xf32> to vector<168x256xf32>
    %c253_i32 = arith.constant 253 : i32
    %11 = tpu.dynamic_rotate %10 by %c253_i32 dim 1 : vector<168x256xf32>, i32 -> vector<168x256xf32>
    %12 = arith.addf %9, %11 : vector<168x256xf32>
    %13 = vector.extract_strided_slice %2 {offsets = [672, 0], sizes = [168, 256], strides = [1, 1]} : vector<840x256xf32> to vector<168x256xf32>
    %c252_i32 = arith.constant 252 : i32
    %14 = tpu.dynamic_rotate %13 by %c252_i32 dim 1 : vector<168x256xf32>, i32 -> vector<168x256xf32>
    %15 = arith.addf %12, %14 : vector<168x256xf32>
    %c0_3 = arith.constant 0 : index
    %c0_4 = arith.constant 0 : index
    %16 = vector.load %arg3[%c0_3, %c0_4] : memref<168x1xf32, #tpu.memory_space<vmem>>, vector<168x1xf32>
    %17 = vector.broadcast %16 : vector<168x1xf32> to vector<168x256xf32>
    %18 = arith.addf %15, %17 : vector<168x256xf32>
    %cst_5 = arith.constant 0.000000e+00 : f32
    %19 = vector.broadcast %cst_5 : f32 to vector<168x256xf32>
    %20 = arith.maximumf %18, %19 : vector<168x256xf32>
    %21 = arith.truncf %20 : vector<168x256xf32> to vector<168x256xbf16>
    %c0_6 = arith.constant 0 : index
    %c0_7 = arith.constant 0 : index
    %c0_8 = arith.constant 0 : index
    %22 = vector.load %arg4[%c0_6, %c0_7, %c0_8] : memref<2x84x168xbf16, #tpu.memory_space<vmem>>, vector<1x84x168xbf16>
    %23 = vector.shape_cast %22 : vector<1x84x168xbf16> to vector<84x168xbf16>
    %cst_9 = arith.constant dense<0.000000e+00> : vector<84x256xf32>
    %24 = tpu.matmul %23, %21, %cst_9 {dimension_numbers = #tpu.dot_dimension_numbers<[1], [0], [0], [1], [0, 0, 1, 1], [], []>} : vector<84x168xbf16>, vector<168x256xbf16>, vector<84x256xf32> -> vector<84x256xf32>
    %c1 = arith.constant 1 : index
    %c0_10 = arith.constant 0 : index
    %c0_11 = arith.constant 0 : index
    %25 = vector.load %arg4[%c1, %c0_10, %c0_11] : memref<2x84x168xbf16, #tpu.memory_space<vmem>>, vector<1x84x168xbf16>
    %26 = vector.shape_cast %25 : vector<1x84x168xbf16> to vector<84x168xbf16>
    %cst_12 = arith.constant dense<0.000000e+00> : vector<84x256xf32>
    %27 = tpu.matmul %26, %21, %cst_12 {dimension_numbers = #tpu.dot_dimension_numbers<[1], [0], [0], [1], [0, 0, 1, 1], [], []>} : vector<84x168xbf16>, vector<168x256xbf16>, vector<84x256xf32> -> vector<84x256xf32>
    %28 = arith.maximumf %24, %27 : vector<84x256xf32>
    %29 = arith.truncf %28 : vector<84x256xf32> to vector<84x256xbf16>
    %c0_13 = arith.constant 0 : index
    %c0_14 = arith.constant 0 : index
    %c0_15 = arith.constant 0 : index
    %30 = vector.load %arg5[%c0_13, %c0_14, %c0_15] : memref<2x256x128xbf16, #tpu.memory_space<vmem>>, vector<1x256x128xbf16>
    %31 = vector.shape_cast %30 : vector<1x256x128xbf16> to vector<256x128xbf16>
    %cst_16 = arith.constant dense<0.000000e+00> : vector<84x128xf32>
    %32 = tpu.matmul %29, %31, %cst_16 {dimension_numbers = #tpu.dot_dimension_numbers<[1], [0], [0], [1], [0, 0, 1, 1], [], []>} : vector<84x256xbf16>, vector<256x128xbf16>, vector<84x128xf32> -> vector<84x128xf32>
    %c1_17 = arith.constant 1 : index
    %c0_18 = arith.constant 0 : index
    %c0_19 = arith.constant 0 : index
    %33 = vector.load %arg5[%c1_17, %c0_18, %c0_19] : memref<2x256x128xbf16, #tpu.memory_space<vmem>>, vector<1x256x128xbf16>
    %34 = vector.shape_cast %33 : vector<1x256x128xbf16> to vector<256x128xbf16>
    %cst_20 = arith.constant dense<0.000000e+00> : vector<84x128xf32>
    %35 = tpu.matmul %29, %34, %cst_20 {dimension_numbers = #tpu.dot_dimension_numbers<[1], [0], [0], [1], [0, 0, 1, 1], [], []>} : vector<84x256xbf16>, vector<256x128xbf16>, vector<84x128xf32> -> vector<84x128xf32>
    %36 = arith.maximumf %32, %35 : vector<84x128xf32>
    %37 = arith.truncf %36 : vector<84x128xf32> to vector<84x128xbf16>
    %c0_21 = arith.constant 0 : index
    %c0_22 = arith.constant 0 : index
    %38 = vector.load %arg6[%c0_21, %c0_22] : memref<800x84xbf16, #tpu.memory_space<vmem>>, vector<800x84xbf16>
    %cst_23 = arith.constant dense<0.000000e+00> : vector<800x128xf32>
    %39 = tpu.matmul %38, %37, %cst_23 {dimension_numbers = #tpu.dot_dimension_numbers<[1], [0], [0], [1], [0, 0, 1, 1], [], []>} : vector<800x84xbf16>, vector<84x128xbf16>, vector<800x128xf32> -> vector<800x128xf32>
    %40 = vector.extract_strided_slice %39 {offsets = [0, 0], sizes = [160, 128], strides = [1, 1]} : vector<800x128xf32> to vector<160x128xf32>
    %41 = vector.extract_strided_slice %39 {offsets = [160, 0], sizes = [160, 128], strides = [1, 1]} : vector<800x128xf32> to vector<160x128xf32>
    %c127_i32 = arith.constant 127 : i32
    %42 = tpu.dynamic_rotate %41 by %c127_i32 dim 1 : vector<160x128xf32>, i32 -> vector<160x128xf32>
    %43 = arith.addf %40, %42 : vector<160x128xf32>
    %44 = vector.extract_strided_slice %39 {offsets = [320, 0], sizes = [160, 128], strides = [1, 1]} : vector<800x128xf32> to vector<160x128xf32>
    %c126_i32 = arith.constant 126 : i32
    %45 = tpu.dynamic_rotate %44 by %c126_i32 dim 1 : vector<160x128xf32>, i32 -> vector<160x128xf32>
    %46 = arith.addf %43, %45 : vector<160x128xf32>
    %47 = vector.extract_strided_slice %39 {offsets = [480, 0], sizes = [160, 128], strides = [1, 1]} : vector<800x128xf32> to vector<160x128xf32>
    %c125_i32 = arith.constant 125 : i32
    %48 = tpu.dynamic_rotate %47 by %c125_i32 dim 1 : vector<160x128xf32>, i32 -> vector<160x128xf32>
    %49 = arith.addf %46, %48 : vector<160x128xf32>
    %50 = vector.extract_strided_slice %39 {offsets = [640, 0], sizes = [160, 128], strides = [1, 1]} : vector<800x128xf32> to vector<160x128xf32>
    %c124_i32 = arith.constant 124 : i32
    %51 = tpu.dynamic_rotate %50 by %c124_i32 dim 1 : vector<160x128xf32>, i32 -> vector<160x128xf32>
    %52 = arith.addf %49, %51 : vector<160x128xf32>
    %c0_24 = arith.constant 0 : index
    %c0_25 = arith.constant 0 : index
    %53 = vector.load %arg7[%c0_24, %c0_25] : memref<160x1xf32, #tpu.memory_space<vmem>>, vector<160x1xf32>
    %54 = vector.broadcast %53 : vector<160x1xf32> to vector<160x128xf32>
    %55 = arith.addf %52, %54 : vector<160x128xf32>
    %cst_26 = arith.constant 0.000000e+00 : f32
    %56 = vector.broadcast %cst_26 : f32 to vector<160x128xf32>
    %57 = arith.maximumf %55, %56 : vector<160x128xf32>
    %58 = arith.truncf %57 : vector<160x128xf32> to vector<160x128xbf16>
    %c0_27 = arith.constant 0 : index
    %c0_28 = arith.constant 0 : index
    %c0_29 = arith.constant 0 : index
    %59 = vector.load %arg8[%c0_27, %c0_28, %c0_29] : memref<2x80x160xbf16, #tpu.memory_space<vmem>>, vector<1x80x160xbf16>
    %60 = vector.shape_cast %59 : vector<1x80x160xbf16> to vector<80x160xbf16>
    %cst_30 = arith.constant dense<0.000000e+00> : vector<80x128xf32>
    %61 = tpu.matmul %60, %58, %cst_30 {dimension_numbers = #tpu.dot_dimension_numbers<[1], [0], [0], [1], [0, 0, 1, 1], [], []>} : vector<80x160xbf16>, vector<160x128xbf16>, vector<80x128xf32> -> vector<80x128xf32>
    %c1_31 = arith.constant 1 : index
    %c0_32 = arith.constant 0 : index
    %c0_33 = arith.constant 0 : index
    %62 = vector.load %arg8[%c1_31, %c0_32, %c0_33] : memref<2x80x160xbf16, #tpu.memory_space<vmem>>, vector<1x80x160xbf16>
    %63 = vector.shape_cast %62 : vector<1x80x160xbf16> to vector<80x160xbf16>
    %cst_34 = arith.constant dense<0.000000e+00> : vector<80x128xf32>
    %64 = tpu.matmul %63, %58, %cst_34 {dimension_numbers = #tpu.dot_dimension_numbers<[1], [0], [0], [1], [0, 0, 1, 1], [], []>} : vector<80x160xbf16>, vector<160x128xbf16>, vector<80x128xf32> -> vector<80x128xf32>
    %65 = arith.maximumf %61, %64 : vector<80x128xf32>
    %66 = arith.truncf %65 : vector<80x128xf32> to vector<80x128xbf16>
    %c0_35 = arith.constant 0 : index
    %c0_36 = arith.constant 0 : index
    %c0_37 = arith.constant 0 : index
    %67 = vector.load %arg9[%c0_35, %c0_36, %c0_37] : memref<5x128x8xbf16, #tpu.memory_space<vmem>>, vector<1x128x8xbf16>
    %68 = vector.shape_cast %67 : vector<1x128x8xbf16> to vector<128x8xbf16>
    %cst_38 = arith.constant dense<0.000000e+00> : vector<80x8xf32>
    %69 = tpu.matmul %66, %68, %cst_38 {dimension_numbers = #tpu.dot_dimension_numbers<[1], [0], [0], [1], [0, 0, 1, 1], [], []>} : vector<80x128xbf16>, vector<128x8xbf16>, vector<80x8xf32> -> vector<80x8xf32>
    %c0_39 = arith.constant 0 : index
    %c0_40 = arith.constant 0 : index
    %c0_41 = arith.constant 0 : index
    %70 = vector.load %arg10[%c0_39, %c0_40, %c0_41] : memref<5x128x8xbf16, #tpu.memory_space<vmem>>, vector<1x128x8xbf16>
    %71 = vector.shape_cast %70 : vector<1x128x8xbf16> to vector<128x8xbf16>
    %cst_42 = arith.constant dense<0.000000e+00> : vector<80x8xf32>
    %72 = tpu.matmul %66, %71, %cst_42 {dimension_numbers = #tpu.dot_dimension_numbers<[1], [0], [0], [1], [0, 0, 1, 1], [], []>} : vector<80x128xbf16>, vector<128x8xbf16>, vector<80x8xf32> -> vector<80x8xf32>
    %73 = arith.maximumf %69, %72 : vector<80x8xf32>
    %74 = arith.truncf %73 : vector<80x8xf32> to vector<80x8xbf16>
    %c0_43 = arith.constant 0 : index
    %c0_44 = arith.constant 0 : index
    %c0_45 = arith.constant 0 : index
    %75 = vector.load %arg11[%c0_43, %c0_44, %c0_45] : memref<5x120x80xbf16, #tpu.memory_space<vmem>>, vector<1x120x80xbf16>
    %76 = vector.shape_cast %75 : vector<1x120x80xbf16> to vector<120x80xbf16>
    %cst_46 = arith.constant dense<0.000000e+00> : vector<120x8xf32>
    %77 = tpu.matmul %76, %74, %cst_46 {dimension_numbers = #tpu.dot_dimension_numbers<[1], [0], [0], [1], [0, 0, 1, 1], [], []>} : vector<120x80xbf16>, vector<80x8xbf16>, vector<120x8xf32> -> vector<120x8xf32>
    %c1_47 = arith.constant 1 : index
    %c0_48 = arith.constant 0 : index
    %c0_49 = arith.constant 0 : index
    %78 = vector.load %arg9[%c1_47, %c0_48, %c0_49] : memref<5x128x8xbf16, #tpu.memory_space<vmem>>, vector<1x128x8xbf16>
    %79 = vector.shape_cast %78 : vector<1x128x8xbf16> to vector<128x8xbf16>
    %cst_50 = arith.constant dense<0.000000e+00> : vector<80x8xf32>
    %80 = tpu.matmul %66, %79, %cst_50 {dimension_numbers = #tpu.dot_dimension_numbers<[1], [0], [0], [1], [0, 0, 1, 1], [], []>} : vector<80x128xbf16>, vector<128x8xbf16>, vector<80x8xf32> -> vector<80x8xf32>
    %c1_51 = arith.constant 1 : index
    %c0_52 = arith.constant 0 : index
    %c0_53 = arith.constant 0 : index
    %81 = vector.load %arg10[%c1_51, %c0_52, %c0_53] : memref<5x128x8xbf16, #tpu.memory_space<vmem>>, vector<1x128x8xbf16>
    %82 = vector.shape_cast %81 : vector<1x128x8xbf16> to vector<128x8xbf16>
    %cst_54 = arith.constant dense<0.000000e+00> : vector<80x8xf32>
    %83 = tpu.matmul %66, %82, %cst_54 {dimension_numbers = #tpu.dot_dimension_numbers<[1], [0], [0], [1], [0, 0, 1, 1], [], []>} : vector<80x128xbf16>, vector<128x8xbf16>, vector<80x8xf32> -> vector<80x8xf32>
    %84 = arith.maximumf %80, %83 : vector<80x8xf32>
    %85 = arith.truncf %84 : vector<80x8xf32> to vector<80x8xbf16>
    %c1_55 = arith.constant 1 : index
    %c0_56 = arith.constant 0 : index
    %c0_57 = arith.constant 0 : index
    %86 = vector.load %arg11[%c1_55, %c0_56, %c0_57] : memref<5x120x80xbf16, #tpu.memory_space<vmem>>, vector<1x120x80xbf16>
    %87 = vector.shape_cast %86 : vector<1x120x80xbf16> to vector<120x80xbf16>
    %cst_58 = arith.constant dense<0.000000e+00> : vector<120x8xf32>
    %88 = tpu.matmul %87, %85, %cst_58 {dimension_numbers = #tpu.dot_dimension_numbers<[1], [0], [0], [1], [0, 0, 1, 1], [], []>} : vector<120x80xbf16>, vector<80x8xbf16>, vector<120x8xf32> -> vector<120x8xf32>
    %89 = arith.addf %77, %88 : vector<120x8xf32>
    %c2 = arith.constant 2 : index
    %c0_59 = arith.constant 0 : index
    %c0_60 = arith.constant 0 : index
    %90 = vector.load %arg9[%c2, %c0_59, %c0_60] : memref<5x128x8xbf16, #tpu.memory_space<vmem>>, vector<1x128x8xbf16>
    %91 = vector.shape_cast %90 : vector<1x128x8xbf16> to vector<128x8xbf16>
    %cst_61 = arith.constant dense<0.000000e+00> : vector<80x8xf32>
    %92 = tpu.matmul %66, %91, %cst_61 {dimension_numbers = #tpu.dot_dimension_numbers<[1], [0], [0], [1], [0, 0, 1, 1], [], []>} : vector<80x128xbf16>, vector<128x8xbf16>, vector<80x8xf32> -> vector<80x8xf32>
    %c2_62 = arith.constant 2 : index
    %c0_63 = arith.constant 0 : index
    %c0_64 = arith.constant 0 : index
    %93 = vector.load %arg10[%c2_62, %c0_63, %c0_64] : memref<5x128x8xbf16, #tpu.memory_space<vmem>>, vector<1x128x8xbf16>
    %94 = vector.shape_cast %93 : vector<1x128x8xbf16> to vector<128x8xbf16>
    %cst_65 = arith.constant dense<0.000000e+00> : vector<80x8xf32>
    %95 = tpu.matmul %66, %94, %cst_65 {dimension_numbers = #tpu.dot_dimension_numbers<[1], [0], [0], [1], [0, 0, 1, 1], [], []>} : vector<80x128xbf16>, vector<128x8xbf16>, vector<80x8xf32> -> vector<80x8xf32>
    %96 = arith.maximumf %92, %95 : vector<80x8xf32>
    %97 = arith.truncf %96 : vector<80x8xf32> to vector<80x8xbf16>
    %c2_66 = arith.constant 2 : index
    %c0_67 = arith.constant 0 : index
    %c0_68 = arith.constant 0 : index
    %98 = vector.load %arg11[%c2_66, %c0_67, %c0_68] : memref<5x120x80xbf16, #tpu.memory_space<vmem>>, vector<1x120x80xbf16>
    %99 = vector.shape_cast %98 : vector<1x120x80xbf16> to vector<120x80xbf16>
    %cst_69 = arith.constant dense<0.000000e+00> : vector<120x8xf32>
    %100 = tpu.matmul %99, %97, %cst_69 {dimension_numbers = #tpu.dot_dimension_numbers<[1], [0], [0], [1], [0, 0, 1, 1], [], []>} : vector<120x80xbf16>, vector<80x8xbf16>, vector<120x8xf32> -> vector<120x8xf32>
    %101 = arith.addf %89, %100 : vector<120x8xf32>
    %c3 = arith.constant 3 : index
    %c0_70 = arith.constant 0 : index
    %c0_71 = arith.constant 0 : index
    %102 = vector.load %arg9[%c3, %c0_70, %c0_71] : memref<5x128x8xbf16, #tpu.memory_space<vmem>>, vector<1x128x8xbf16>
    %103 = vector.shape_cast %102 : vector<1x128x8xbf16> to vector<128x8xbf16>
    %cst_72 = arith.constant dense<0.000000e+00> : vector<80x8xf32>
    %104 = tpu.matmul %66, %103, %cst_72 {dimension_numbers = #tpu.dot_dimension_numbers<[1], [0], [0], [1], [0, 0, 1, 1], [], []>} : vector<80x128xbf16>, vector<128x8xbf16>, vector<80x8xf32> -> vector<80x8xf32>
    %c3_73 = arith.constant 3 : index
    %c0_74 = arith.constant 0 : index
    %c0_75 = arith.constant 0 : index
    %105 = vector.load %arg10[%c3_73, %c0_74, %c0_75] : memref<5x128x8xbf16, #tpu.memory_space<vmem>>, vector<1x128x8xbf16>
    %106 = vector.shape_cast %105 : vector<1x128x8xbf16> to vector<128x8xbf16>
    %cst_76 = arith.constant dense<0.000000e+00> : vector<80x8xf32>
    %107 = tpu.matmul %66, %106, %cst_76 {dimension_numbers = #tpu.dot_dimension_numbers<[1], [0], [0], [1], [0, 0, 1, 1], [], []>} : vector<80x128xbf16>, vector<128x8xbf16>, vector<80x8xf32> -> vector<80x8xf32>
    %108 = arith.maximumf %104, %107 : vector<80x8xf32>
    %109 = arith.truncf %108 : vector<80x8xf32> to vector<80x8xbf16>
    %c3_77 = arith.constant 3 : index
    %c0_78 = arith.constant 0 : index
    %c0_79 = arith.constant 0 : index
    %110 = vector.load %arg11[%c3_77, %c0_78, %c0_79] : memref<5x120x80xbf16, #tpu.memory_space<vmem>>, vector<1x120x80xbf16>
    %111 = vector.shape_cast %110 : vector<1x120x80xbf16> to vector<120x80xbf16>
    %cst_80 = arith.constant dense<0.000000e+00> : vector<120x8xf32>
    %112 = tpu.matmul %111, %109, %cst_80 {dimension_numbers = #tpu.dot_dimension_numbers<[1], [0], [0], [1], [0, 0, 1, 1], [], []>} : vector<120x80xbf16>, vector<80x8xbf16>, vector<120x8xf32> -> vector<120x8xf32>
    %113 = arith.addf %101, %112 : vector<120x8xf32>
    %c4 = arith.constant 4 : index
    %c0_81 = arith.constant 0 : index
    %c0_82 = arith.constant 0 : index
    %114 = vector.load %arg9[%c4, %c0_81, %c0_82] : memref<5x128x8xbf16, #tpu.memory_space<vmem>>, vector<1x128x8xbf16>
    %115 = vector.shape_cast %114 : vector<1x128x8xbf16> to vector<128x8xbf16>
    %cst_83 = arith.constant dense<0.000000e+00> : vector<80x8xf32>
    %116 = tpu.matmul %66, %115, %cst_83 {dimension_numbers = #tpu.dot_dimension_numbers<[1], [0], [0], [1], [0, 0, 1, 1], [], []>} : vector<80x128xbf16>, vector<128x8xbf16>, vector<80x8xf32> -> vector<80x8xf32>
    %c4_84 = arith.constant 4 : index
    %c0_85 = arith.constant 0 : index
    %c0_86 = arith.constant 0 : index
    %117 = vector.load %arg10[%c4_84, %c0_85, %c0_86] : memref<5x128x8xbf16, #tpu.memory_space<vmem>>, vector<1x128x8xbf16>
    %118 = vector.shape_cast %117 : vector<1x128x8xbf16> to vector<128x8xbf16>
    %cst_87 = arith.constant dense<0.000000e+00> : vector<80x8xf32>
    %119 = tpu.matmul %66, %118, %cst_87 {dimension_numbers = #tpu.dot_dimension_numbers<[1], [0], [0], [1], [0, 0, 1, 1], [], []>} : vector<80x128xbf16>, vector<128x8xbf16>, vector<80x8xf32> -> vector<80x8xf32>
    %120 = arith.maximumf %116, %119 : vector<80x8xf32>
    %121 = arith.truncf %120 : vector<80x8xf32> to vector<80x8xbf16>
    %c4_88 = arith.constant 4 : index
    %c0_89 = arith.constant 0 : index
    %c0_90 = arith.constant 0 : index
    %122 = vector.load %arg11[%c4_88, %c0_89, %c0_90] : memref<5x120x80xbf16, #tpu.memory_space<vmem>>, vector<1x120x80xbf16>
    %123 = vector.shape_cast %122 : vector<1x120x80xbf16> to vector<120x80xbf16>
    %cst_91 = arith.constant dense<0.000000e+00> : vector<120x8xf32>
    %124 = tpu.matmul %123, %121, %cst_91 {dimension_numbers = #tpu.dot_dimension_numbers<[1], [0], [0], [1], [0, 0, 1, 1], [], []>} : vector<120x80xbf16>, vector<80x8xbf16>, vector<120x8xf32> -> vector<120x8xf32>
    %125 = arith.addf %113, %124 : vector<120x8xf32>
    %c0_92 = arith.constant 0 : index
    %c0_93 = arith.constant 0 : index
    %126 = vector.load %arg12[%c0_92, %c0_93] : memref<120x1xf32, #tpu.memory_space<vmem>>, vector<120x1xf32>
    %127 = vector.broadcast %126 : vector<120x1xf32> to vector<120x8xf32>
    %128 = arith.addf %125, %127 : vector<120x8xf32>
    %cst_94 = arith.constant 0.000000e+00 : f32
    %129 = vector.broadcast %cst_94 : f32 to vector<120x8xf32>
    %130 = arith.maximumf %128, %129 : vector<120x8xf32>
    %131 = arith.truncf %130 : vector<120x8xf32> to vector<120x8xbf16>
    %c0_95 = arith.constant 0 : index
    %c0_96 = arith.constant 0 : index
    %132 = vector.load %arg13[%c0_95, %c0_96] : memref<84x120xbf16, #tpu.memory_space<vmem>>, vector<84x120xbf16>
    %cst_97 = arith.constant dense<0.000000e+00> : vector<84x8xf32>
    %133 = tpu.matmul %132, %131, %cst_97 {dimension_numbers = #tpu.dot_dimension_numbers<[1], [0], [0], [1], [0, 0, 1, 1], [], []>} : vector<84x120xbf16>, vector<120x8xbf16>, vector<84x8xf32> -> vector<84x8xf32>
    %c0_98 = arith.constant 0 : index
    %c0_99 = arith.constant 0 : index
    %134 = vector.load %arg14[%c0_98, %c0_99] : memref<84x1xf32, #tpu.memory_space<vmem>>, vector<84x1xf32>
    %135 = vector.broadcast %134 : vector<84x1xf32> to vector<84x8xf32>
    %136 = arith.addf %133, %135 : vector<84x8xf32>
    %cst_100 = arith.constant 0.000000e+00 : f32
    %137 = vector.broadcast %cst_100 : f32 to vector<84x8xf32>
    %138 = arith.maximumf %136, %137 : vector<84x8xf32>
    %139 = arith.truncf %138 : vector<84x8xf32> to vector<84x8xbf16>
    %c0_101 = arith.constant 0 : index
    %c0_102 = arith.constant 0 : index
    %140 = vector.load %arg15[%c0_101, %c0_102] : memref<10x84xbf16, #tpu.memory_space<vmem>>, vector<10x84xbf16>
    %cst_103 = arith.constant dense<0.000000e+00> : vector<10x8xf32>
    %141 = tpu.matmul %140, %139, %cst_103 {dimension_numbers = #tpu.dot_dimension_numbers<[1], [0], [0], [1], [0, 0, 1, 1], [], []>} : vector<10x84xbf16>, vector<84x8xbf16>, vector<10x8xf32> -> vector<10x8xf32>
    %c0_104 = arith.constant 0 : index
    %c0_105 = arith.constant 0 : index
    %142 = vector.load %arg16[%c0_104, %c0_105] : memref<10x1xf32, #tpu.memory_space<vmem>>, vector<10x1xf32>
    %143 = vector.broadcast %142 : vector<10x1xf32> to vector<10x8xf32>
    %144 = arith.addf %141, %143 : vector<10x8xf32>
    %c0_106 = arith.constant 0 : index
    %c0_107 = arith.constant 0 : index
    %c0_108 = arith.constant 0 : index
    %145 = vector.load %arg17[%c0_106, %c0_107, %c0_108] : memref<1x10x8xf32, #tpu.memory_space<vmem>>, vector<1x10x8xf32>
    %146 = vector.shape_cast %145 : vector<1x10x8xf32> to vector<10x8xf32>
    %147 = vector.shape_cast %144 : vector<10x8xf32> to vector<1x10x8xf32>
    tpu.vector_store %arg17[%c0_106, %c0_107, %c0_108], %147 {strides = array<i32>} : memref<1x10x8xf32, #tpu.memory_space<vmem>>, vector<1x10x8xf32>,
    return
  }
  func.func @transform_0(%arg0: i32) -> (i32, i32) {
    %c0_i32 = arith.constant 0 : i32
    %c0_i32_0 = arith.constant 0 : i32
    return %c0_i32, %arg0 : i32, i32
  }
  func.func @transform_1(%arg0: i32) -> (i32, i32) {
    %c0_i32 = arith.constant 0 : i32
    %c0_i32_0 = arith.constant 0 : i32
    %c0_i32_1 = arith.constant 0 : i32
    return %c0_i32, %c0_i32_0 : i32, i32
  }
  func.func @transform_2(%arg0: i32) -> (i32, i32) {
    %c0_i32 = arith.constant 0 : i32
    %c0_i32_0 = arith.constant 0 : i32
    %c0_i32_1 = arith.constant 0 : i32
    return %c0_i32, %c0_i32_0 : i32, i32
  }
  func.func @transform_3(%arg0: i32) -> (i32, i32, i32) {
    %c0_i32 = arith.constant 0 : i32
    %c0_i32_0 = arith.constant 0 : i32
    %c0_i32_1 = arith.constant 0 : i32
    %c0_i32_2 = arith.constant 0 : i32
    return %c0_i32, %c0_i32_0, %c0_i32_1 : i32, i32, i32
  }
  func.func @transform_4(%arg0: i32) -> (i32, i32, i32) {
    %c0_i32 = arith.constant 0 : i32
    %c0_i32_0 = arith.constant 0 : i32
    %c0_i32_1 = arith.constant 0 : i32
    %c0_i32_2 = arith.constant 0 : i32
    return %c0_i32, %c0_i32_0, %c0_i32_1 : i32, i32, i32
  }
  func.func @transform_5(%arg0: i32) -> (i32, i32) {
    %c0_i32 = arith.constant 0 : i32
    %c0_i32_0 = arith.constant 0 : i32
    %c0_i32_1 = arith.constant 0 : i32
    return %c0_i32, %c0_i32_0 : i32, i32
  }
  func.func @transform_6(%arg0: i32) -> (i32, i32) {
    %c0_i32 = arith.constant 0 : i32
    %c0_i32_0 = arith.constant 0 : i32
    %c0_i32_1 = arith.constant 0 : i32
    return %c0_i32, %c0_i32_0 : i32, i32
  }
  func.func @transform_7(%arg0: i32) -> (i32, i32, i32) {
    %c0_i32 = arith.constant 0 : i32
    %c0_i32_0 = arith.constant 0 : i32
    %c0_i32_1 = arith.constant 0 : i32
    %c0_i32_2 = arith.constant 0 : i32
    return %c0_i32, %c0_i32_0, %c0_i32_1 : i32, i32, i32
  }
  func.func @transform_8(%arg0: i32) -> (i32, i32, i32) {
    %c0_i32 = arith.constant 0 : i32
    %c0_i32_0 = arith.constant 0 : i32
    %c0_i32_1 = arith.constant 0 : i32
    %c0_i32_2 = arith.constant 0 : i32
    return %c0_i32, %c0_i32_0, %c0_i32_1 : i32, i32, i32
  }
  func.func @transform_9(%arg0: i32) -> (i32, i32, i32) {
    %c0_i32 = arith.constant 0 : i32
    %c0_i32_0 = arith.constant 0 : i32
    %c0_i32_1 = arith.constant 0 : i32
    %c0_i32_2 = arith.constant 0 : i32
    return %c0_i32, %c0_i32_0, %c0_i32_1 : i32, i32, i32
  }
  func.func @transform_10(%arg0: i32) -> (i32, i32, i32) {
    %c0_i32 = arith.constant 0 : i32
    %c0_i32_0 = arith.constant 0 : i32
    %c0_i32_1 = arith.constant 0 : i32
    %c0_i32_2 = arith.constant 0 : i32
    return %c0_i32, %c0_i32_0, %c0_i32_1 : i32, i32, i32
  }
  func.func @transform_11(%arg0: i32) -> (i32, i32) {
    %c0_i32 = arith.constant 0 : i32
    %c0_i32_0 = arith.constant 0 : i32
    %c0_i32_1 = arith.constant 0 : i32
    return %c0_i32, %c0_i32_0 : i32, i32
  }
  func.func @transform_12(%arg0: i32) -> (i32, i32) {
    %c0_i32 = arith.constant 0 : i32
    %c0_i32_0 = arith.constant 0 : i32
    %c0_i32_1 = arith.constant 0 : i32
    return %c0_i32, %c0_i32_0 : i32, i32
  }
  func.func @transform_13(%arg0: i32) -> (i32, i32) {
    %c0_i32 = arith.constant 0 : i32
    %c0_i32_0 = arith.constant 0 : i32
    %c0_i32_1 = arith.constant 0 : i32
    return %c0_i32, %c0_i32_0 : i32, i32
  }
  func.func @transform_14(%arg0: i32) -> (i32, i32) {
    %c0_i32 = arith.constant 0 : i32
    %c0_i32_0 = arith.constant 0 : i32
    %c0_i32_1 = arith.constant 0 : i32
    return %c0_i32, %c0_i32_0 : i32, i32
  }
  func.func @transform_15(%arg0: i32) -> (i32, i32) {
    %c0_i32 = arith.constant 0 : i32
    %c0_i32_0 = arith.constant 0 : i32
    %c0_i32_1 = arith.constant 0 : i32
    return %c0_i32, %c0_i32_0 : i32, i32
  }
  func.func @transform_16(%arg0: i32) -> (i32, i32, i32) {
    %c0_i32 = arith.constant 0 : i32
    %c0_i32_0 = arith.constant 0 : i32
    %c0_i32_1 = arith.constant 0 : i32
    return %arg0, %c0_i32, %c0_i32_0 : i32, i32, i32
  }
}

</mosaic_0001>

<llo_original>
// kernel: net_forward.1
$region0: #{net_forward.1}
  #allocation0 [shape = 'u32[]', space=smem, size = 0x4, offset = 0x4, fixed_abs, tag = 'smem constant byte address 0x4 - core index']
  #allocation1 [shape = 'u32[144,128]{1,0:T(1,128)}', space=vmem, size = 0x12000, scoped, tag = 'internal scratch']
  %s0 = inlined_call_operand.vmem [shape: bf16[96,256], index: 0, kind: input, shape index: {}]
  %s1 = inlined_call_operand.vmem [shape: bf16[840,96], index: 1, kind: input, shape index: {}]
  %s2 = inlined_call_operand.vmem [shape: f32[168,1], index: 2, kind: input, shape index: {}]
  %s3 = inlined_call_operand.vmem [shape: bf16[2,84,168], index: 3, kind: input, shape index: {}]
  %s4 = inlined_call_operand.vmem [shape: bf16[2,256,128], index: 4, kind: input, shape index: {}]
  %s5 = inlined_call_operand.vmem [shape: bf16[800,84], index: 5, kind: input, shape index: {}]
  %s6 = inlined_call_operand.vmem [shape: f32[160,1], index: 6, kind: input, shape index: {}]
  %s7 = inlined_call_operand.vmem [shape: bf16[2,80,160], index: 7, kind: input, shape index: {}]
  %s8 = inlined_call_operand.vmem [shape: bf16[5,128,8], index: 8, kind: input, shape index: {}]
  %s9 = inlined_call_operand.vmem [shape: bf16[5,128,8], index: 9, kind: input, shape index: {}]
  %s10 = inlined_call_operand.vmem [shape: bf16[5,120,80], index: 10, kind: input, shape index: {}]
  %s11 = inlined_call_operand.vmem [shape: f32[120,1], index: 11, kind: input, shape index: {}]
  %s12 = inlined_call_operand.vmem [shape: bf16[84,120], index: 12, kind: input, shape index: {}]
  %s13 = inlined_call_operand.vmem [shape: f32[84,1], index: 13, kind: input, shape index: {}]
  %s14 = inlined_call_operand.vmem [shape: bf16[10,84], index: 14, kind: input, shape index: {}]
  %s15 = inlined_call_operand.vmem [shape: f32[10,1], index: 15, kind: input, shape index: {}]
  %s16 = inlined_call_operand.vmem [shape: f32[1,10,8], index: 16, kind: output, shape index: {}]
  %s17 = sld [smem:[#allocation0]]
  $region74: #{net_forward.1} parent=0
    _
  %s19 = ssub.s32 1, %s17
  %s20 = scalar_select 0, %s19, %s17
  // Predicated region
  $region2: #{net_forward.1} parent=0 // pred_check
    _
  $region3: #{net_forward.1} parent=0 // pred_check_branch
    %22 = sbr.rel (0) target = $region5
  $region4: #{net_forward.1} parent=0 // pred_region
    _
  $region5: #{net_forward.1} parent=0 // pred_fallthru
    _
  // Predicated region
  $region6: #{net_forward.1} parent=0 // pred_check
    _
  $region7: #{net_forward.1} parent=0 // pred_check_branch
    %24 = sbr.rel (0) target = $region9
  $region8: #{net_forward.1} parent=0 // pred_region
    _
  $region9: #{net_forward.1} parent=0 // pred_fallthru
    _
  // Predicated region
  $region10: #{net_forward.1} parent=0 // pred_check
    _
  $region11: #{net_forward.1} parent=0 // pred_check_branch
    %26 = sbr.rel (0) target = $region13
  $region12: #{net_forward.1} parent=0 // pred_region
    _
  $region13: #{net_forward.1} parent=0 // pred_fallthru
    _
  // Predicated region
  $region14: #{net_forward.1} parent=0 // pred_check
    _
  $region15: #{net_forward.1} parent=0 // pred_check_branch
    %28 = sbr.rel (0) target = $region17
  $region16: #{net_forward.1} parent=0 // pred_region
    _
  $region17: #{net_forward.1} parent=0 // pred_fallthru
    _
  // Predicated region
  $region18: #{net_forward.1} parent=0 // pred_check
    _
  $region19: #{net_forward.1} parent=0 // pred_check_branch
    %30 = sbr.rel (0) target = $region21
  $region20: #{net_forward.1} parent=0 // pred_region
    _
  $region21: #{net_forward.1} parent=0 // pred_fallthru
    _
  // Predicated region
  $region22: #{net_forward.1} parent=0 // pred_check
    _
  $region23: #{net_forward.1} parent=0 // pred_check_branch
    %32 = sbr.rel (0) target = $region25
  $region24: #{net_forward.1} parent=0 // pred_region
    _
  $region25: #{net_forward.1} parent=0 // pred_fallthru
    _
  // Predicated region
  $region26: #{net_forward.1} parent=0 // pred_check
    _
  $region27: #{net_forward.1} parent=0 // pred_check_branch
    %34 = sbr.rel (0) target = $region29
  $region28: #{net_forward.1} parent=0 // pred_region
    _
  $region29: #{net_forward.1} parent=0 // pred_fallthru
    _
  // Predicated region
  $region30: #{net_forward.1} parent=0 // pred_check
    _
  $region31: #{net_forward.1} parent=0 // pred_check_branch
    %36 = sbr.rel (0) target = $region33
  $region32: #{net_forward.1} parent=0 // pred_region
    _
  $region33: #{net_forward.1} parent=0 // pred_fallthru
    _
  // Predicated region
  $region34: #{net_forward.1} parent=0 // pred_check
    _
  $region35: #{net_forward.1} parent=0 // pred_check_branch
    %38 = sbr.rel (0) target = $region37
  $region36: #{net_forward.1} parent=0 // pred_region
    _
  $region37: #{net_forward.1} parent=0 // pred_fallthru
    _
  // Predicated region
  $region38: #{net_forward.1} parent=0 // pred_check
    _
  $region39: #{net_forward.1} parent=0 // pred_check_branch
    %40 = sbr.rel (0) target = $region41
  $region40: #{net_forward.1} parent=0 // pred_region
    _
  $region41: #{net_forward.1} parent=0 // pred_fallthru
    _
  // Predicated region
  $region42: #{net_forward.1} parent=0 // pred_check
    _
  $region43: #{net_forward.1} parent=0 // pred_check_branch
    %42 = sbr.rel (0) target = $region45
  $region44: #{net_forward.1} parent=0 // pred_region
    _
  $region45: #{net_forward.1} parent=0 // pred_fallthru
    _
  // Predicated region
  $region46: #{net_forward.1} parent=0 // pred_check
    _
  $region47: #{net_forward.1} parent=0 // pred_check_branch
    %44 = sbr.rel (0) target = $region49
  $region48: #{net_forward.1} parent=0 // pred_region
    _
  $region49: #{net_forward.1} parent=0 // pred_fallthru
    _
  // Predicated region
  $region50: #{net_forward.1} parent=0 // pred_check
    _
  $region51: #{net_forward.1} parent=0 // pred_check_branch
    %46 = sbr.rel (0) target = $region53
  $region52: #{net_forward.1} parent=0 // pred_region
    _
  $region53: #{net_forward.1} parent=0 // pred_fallthru
    _
  // Predicated region
  $region54: #{net_forward.1} parent=0 // pred_check
    _
  $region55: #{net_forward.1} parent=0 // pred_check_branch
    %48 = sbr.rel (0) target = $region57
  $region56: #{net_forward.1} parent=0 // pred_region
    _
  $region57: #{net_forward.1} parent=0 // pred_fallthru
    _
  // Predicated region
  $region58: #{net_forward.1} parent=0 // pred_check
    _
  $region59: #{net_forward.1} parent=0 // pred_check_branch
    %50 = sbr.rel (0) target = $region61
  $region60: #{net_forward.1} parent=0 // pred_region
    _
  $region61: #{net_forward.1} parent=0 // pred_fallthru
    _
  // Predicated region
  $region62: #{net_forward.1} parent=0 // pred_check
    _
  $region63: #{net_forward.1} parent=0 // pred_check_branch
    %52 = sbr.rel (0) target = $region65
  $region64: #{net_forward.1} parent=0 // pred_region
    _
  $region65: #{net_forward.1} parent=0 // pred_fallthru
    _
  %v54 = vld [vmem:[%s0] sm:$0xff]
  %v55 = vld [vmem:[%s0 + $0x8] sm:$0xff]
  %v56 = vld [vmem:[%s0 + $0x10] sm:$0xff]
  %v57 = vld [vmem:[%s0 + $0x18] sm:$0xff]
  %v58 = vld [vmem:[%s0 + $0x20] sm:$0xff]
  %v59 = vld [vmem:[%s0 + $0x28] sm:$0xff]
  %v60 = vld [vmem:[%s0 + $0x30] sm:$0xff]
  %v61 = vld [vmem:[%s0 + $0x38] sm:$0xff]
  %v62 = vld [vmem:[%s0 + $0x40] sm:$0xff]
  %v63 = vld [vmem:[%s0 + $0x48] sm:$0xff]
  %v64 = vld [vmem:[%s0 + $0x50] sm:$0xff]
  %v65 = vld [vmem:[%s0 + $0x58] sm:$0xff]
  %v66 = vld [vmem:[%s1] sm:$0xf]
  %v67 = vld [vmem:[%s1 + $0x4] sm:$0xf]
  %v68 = vld [vmem:[%s1 + $0x8] sm:$0xf]
  %v69 = vld [vmem:[%s1 + $0xc] sm:$0xf]
  %v70 = vld [vmem:[%s1 + $0x10] sm:$0xf]
  %v71 = vld [vmem:[%s1 + $0x14] sm:$0xf]
  %v72 = vld [vmem:[%s1 + $0x18] sm:$0xf]
  %v73 = vld [vmem:[%s1 + $0x1c] sm:$0xf]
  %v74 = vld [vmem:[%s1 + $0x20] sm:$0xf]
  %v75 = vld [vmem:[%s1 + $0x24] sm:$0xf]
  %v76 = vld [vmem:[%s1 + $0x28] sm:$0xf]
  %v77 = vld [vmem:[%s1 + $0x2c] sm:$0xf]
  %v78 = vld [vmem:[%s1 + $0x30] sm:$0xf]
  %v79 = vld [vmem:[%s1 + $0x34] sm:$0xf]
  %v80 = vld [vmem:[%s1 + $0x38] sm:$0xf]
  %v81 = vld [vmem:[%s1 + $0x3c] sm:$0xf]
  %v82 = vld [vmem:[%s1 + $0x40] sm:$0xf]
  %v83 = vld [vmem:[%s1 + $0x44] sm:$0xf]
  %v84 = vld [vmem:[%s1 + $0x48] sm:$0xf]
  %v85 = vld [vmem:[%s1 + $0x4c] sm:$0xf]
  %v86 = vld [vmem:[%s1 + $0x50] sm:$0xf]
  %v87 = vld [vmem:[%s1 + $0x54] sm:$0xf]
  %v88 = vld [vmem:[%s1 + $0x58] sm:$0xf]
  %v89 = vld [vmem:[%s1 + $0x5c] sm:$0xf]
  %v90 = vld [vmem:[%s1 + $0x60] sm:$0xf]
  %v91 = vld [vmem:[%s1 + $0x64] sm:$0xf]
  %v92 = vld [vmem:[%s1 + $0x68] sm:$0xf]
  %v93 = vld [vmem:[%s1 + $0x6c] sm:$0xf]
  %v94 = vld [vmem:[%s1 + $0x70] sm:$0xf]
  %v95 = vld [vmem:[%s1 + $0x74] sm:$0xf]
  %v96 = vld [vmem:[%s1 + $0x78] sm:$0xf]
  %v97 = vld [vmem:[%s1 + $0x7c] sm:$0xf]
  %v98 = vld [vmem:[%s1 + $0x80] sm:$0xf]
  %v99 = vld [vmem:[%s1 + $0x84] sm:$0xf]
  %v100 = vld [vmem:[%s1 + $0x88] sm:$0xf]
  %v101 = vld [vmem:[%s1 + $0x8c] sm:$0xf]
  %v102 = vld [vmem:[%s1 + $0x90] sm:$0xf]
  %v103 = vld [vmem:[%s1 + $0x94] sm:$0xf]
  %v104 = vld [vmem:[%s1 + $0x98] sm:$0xf]
  %v105 = vld [vmem:[%s1 + $0x9c] sm:$0xf]
  %v106 = vld [vmem:[%s1 + $0xa0] sm:$0xf]
  %v107 = vld [vmem:[%s1 + $0xa4] sm:$0xf]
  %v108 = vld [vmem:[%s1 + $0xa8] sm:$0xf]
  %v109 = vld [vmem:[%s1 + $0xac] sm:$0xf]
  %v110 = vld [vmem:[%s1 + $0xb0] sm:$0xf]
  %v111 = vld [vmem:[%s1 + $0xb4] sm:$0xf]
  %v112 = vld [vmem:[%s1 + $0xb8] sm:$0xf]
  %v113 = vld [vmem:[%s1 + $0xbc] sm:$0xf]
  %v114 = vld [vmem:[%s1 + $0xc0] sm:$0xf]
  %v115 = vld [vmem:[%s1 + $0xc4] sm:$0xf]
  %v116 = vld [vmem:[%s1 + $0xc8] sm:$0xf]
  %v117 = vld [vmem:[%s1 + $0xcc] sm:$0xf]
  %v118 = vld [vmem:[%s1 + $0xd0] sm:$0xf]
  %v119 = vld [vmem:[%s1 + $0xd4] sm:$0xf]
  %v120 = vld [vmem:[%s1 + $0xd8] sm:$0xf]
  %v121 = vld [vmem:[%s1 + $0xdc] sm:$0xf]
  %v122 = vld [vmem:[%s1 + $0xe0] sm:$0xf]
  %v123 = vld [vmem:[%s1 + $0xe4] sm:$0xf]
  %v124 = vld [vmem:[%s1 + $0xe8] sm:$0xf]
  %v125 = vld [vmem:[%s1 + $0xec] sm:$0xf]
  %v126 = vld [vmem:[%s1 + $0xf0] sm:$0xf]
  %v127 = vld [vmem:[%s1 + $0xf4] sm:$0xf]
  %v128 = vld [vmem:[%s1 + $0xf8] sm:$0xf]
  %v129 = vld [vmem:[%s1 + $0xfc] sm:$0xf]
  %v130 = vld [vmem:[%s1 + $0x100] sm:$0xf]
  %v131 = vld [vmem:[%s1 + $0x104] sm:$0xf]
  %v132 = vld [vmem:[%s1 + $0x108] sm:$0xf]
  %v133 = vld [vmem:[%s1 + $0x10c] sm:$0xf]
  %v134 = vld [vmem:[%s1 + $0x110] sm:$0xf]
  %v135 = vld [vmem:[%s1 + $0x114] sm:$0xf]
  %v136 = vld [vmem:[%s1 + $0x118] sm:$0xf]
  %v137 = vld [vmem:[%s1 + $0x11c] sm:$0xf]
  %v138 = vld [vmem:[%s1 + $0x120] sm:$0xf]
  %v139 = vld [vmem:[%s1 + $0x124] sm:$0xf]
  %v140 = vld [vmem:[%s1 + $0x128] sm:$0xf]
  %v141 = vld [vmem:[%s1 + $0x12c] sm:$0xf]
  %v142 = vld [vmem:[%s1 + $0x130] sm:$0xf]
  %v143 = vld [vmem:[%s1 + $0x134] sm:$0xf]
  %v144 = vld [vmem:[%s1 + $0x138] sm:$0xf]
  %v145 = vld [vmem:[%s1 + $0x13c] sm:$0xf]
  %v146 = vld [vmem:[%s1 + $0x140] sm:$0xf]
  %v147 = vld [vmem:[%s1 + $0x144] sm:$0xf]
  %v148 = vld [vmem:[%s1 + $0x148] sm:$0xf]
  %v149 = vld [vmem:[%s1 + $0x14c] sm:$0xf]
  %v150 = vld [vmem:[%s1 + $0x150] sm:$0xf]
  %v151 = vld [vmem:[%s1 + $0x154] sm:$0xf]
  %v152 = vld [vmem:[%s1 + $0x158] sm:$0xf]
  %v153 = vld [vmem:[%s1 + $0x15c] sm:$0xf]
  %v154 = vld [vmem:[%s1 + $0x160] sm:$0xf]
  %v155 = vld [vmem:[%s1 + $0x164] sm:$0xf]
  %v156 = vld [vmem:[%s1 + $0x168] sm:$0xf]
  %v157 = vld [vmem:[%s1 + $0x16c] sm:$0xf]
  %v158 = vld [vmem:[%s1 + $0x170] sm:$0xf]
  %v159 = vld [vmem:[%s1 + $0x174] sm:$0xf]
  %v160 = vld [vmem:[%s1 + $0x178] sm:$0xf]
  %v161 = vld [vmem:[%s1 + $0x17c] sm:$0xf]
  %v162 = vld [vmem:[%s1 + $0x180] sm:$0xf]
  %v163 = vld [vmem:[%s1 + $0x184] sm:$0xf]
  %v164 = vld [vmem:[%s1 + $0x188] sm:$0xf]
  %v165 = vld [vmem:[%s1 + $0x18c] sm:$0xf]
  %v166 = vld [vmem:[%s1 + $0x190] sm:$0xf]
  %v167 = vld [vmem:[%s1 + $0x194] sm:$0xf]
  %v168 = vld [vmem:[%s1 + $0x198] sm:$0xf]
  %v169 = vld [vmem:[%s1 + $0x19c] sm:$0xf]
  %v170 = vld [vmem:[%s1 + $0x1a0] sm:$0xf]
  %v276 = vunpack.c.l.b16 %v66
  %v277 = vunpack.c.l.b16 %v67
  %v278 = vunpack.c.l.b16 %v68
  %v279 = vunpack.c.l.b16 %v69
  %v280 = vunpack.c.l.b16 %v70
  %v281 = vunpack.c.l.b16 %v71
  %v282 = vunpack.c.l.b16 %v72
  %v283 = vunpack.c.l.b16 %v73
  %v284 = vunpack.c.l.b16 %v74
  %v285 = vunpack.c.l.b16 %v75
  %v286 = vunpack.c.l.b16 %v76
  %v287 = vunpack.c.l.b16 %v77
  %v288 = vunpack.c.l.b16 %v78
  %v289 = vunpack.c.l.b16 %v79
  %v290 = vunpack.c.l.b16 %v80
  %v291 = vunpack.c.l.b16 %v81
  %v292 = vunpack.c.l.b16 %v82
  %v293 = vunpack.c.l.b16 %v83
  %v294 = vunpack.c.l.b16 %v84
  %v295 = vunpack.c.l.b16 %v85
  %v296 = vunpack.c.l.b16 %v86
  %v297 = vunpack.c.l.b16 %v87
  %v298 = vunpack.c.l.b16 %v88
  %v299 = vunpack.c.l.b16 %v89
  %v300 = vunpack.c.l.b16 %v90
  %v301 = vunpack.c.l.b16 %v91
  %v302 = vunpack.c.l.b16 %v92
  %v303 = vunpack.c.l.b16 %v93
  %v304 = vunpack.c.l.b16 %v94
  %v305 = vunpack.c.l.b16 %v95
  %v306 = vunpack.c.l.b16 %v96
  %v307 = vunpack.c.l.b16 %v97
  %v308 = vunpack.c.l.b16 %v98
  %v309 = vunpack.c.l.b16 %v99
  %v310 = vunpack.c.l.b16 %v100
  %v311 = vunpack.c.l.b16 %v101
  %v312 = vunpack.c.l.b16 %v102
  %v313 = vunpack.c.l.b16 %v103
  %v314 = vunpack.c.l.b16 %v104
  %v315 = vunpack.c.l.b16 %v105
  %v316 = vunpack.c.l.b16 %v106
  %v317 = vunpack.c.l.b16 %v107
  %v318 = vunpack.c.l.b16 %v108
  %v319 = vunpack.c.l.b16 %v109
  %v320 = vunpack.c.l.b16 %v110
  %v321 = vunpack.c.l.b16 %v111
  %v322 = vunpack.c.l.b16 %v112
  %v323 = vunpack.c.l.b16 %v113
  %v324 = vunpack.c.l.b16 %v114
  %v325 = vunpack.c.l.b16 %v115
  %v326 = vunpack.c.l.b16 %v116
  %v327 = vunpack.c.l.b16 %v117
  %v328 = vunpack.c.l.b16 %v118
  %v329 = vunpack.c.l.b16 %v119
  %v330 = vunpack.c.l.b16 %v120
  %v331 = vunpack.c.l.b16 %v121
  %v332 = vunpack.c.l.b16 %v122
  %v333 = vunpack.c.l.b16 %v123
  %v334 = vunpack.c.l.b16 %v124
  %v335 = vunpack.c.l.b16 %v125
  %v336 = vunpack.c.l.b16 %v126
  %v337 = vunpack.c.l.b16 %v127
  %v338 = vunpack.c.l.b16 %v128
  %v339 = vunpack.c.l.b16 %v129
  %v340 = vunpack.c.l.b16 %v130
  %v341 = vunpack.c.l.b16 %v131
  %v342 = vunpack.c.l.b16 %v132
  %v343 = vunpack.c.l.b16 %v133
  %v344 = vunpack.c.l.b16 %v134
  %v345 = vunpack.c.l.b16 %v135
  %v346 = vunpack.c.l.b16 %v136
  %v347 = vunpack.c.l.b16 %v137
  %v348 = vunpack.c.l.b16 %v138
  %v349 = vunpack.c.l.b16 %v139
  %v350 = vunpack.c.l.b16 %v140
  %v351 = vunpack.c.l.b16 %v141
  %v352 = vunpack.c.l.b16 %v142
  %v353 = vunpack.c.l.b16 %v143
  %v354 = vunpack.c.l.b16 %v144
  %v355 = vunpack.c.l.b16 %v145
  %v356 = vunpack.c.l.b16 %v146
  %v357 = vunpack.c.l.b16 %v147
  %v358 = vunpack.c.l.b16 %v148
  %v359 = vunpack.c.l.b16 %v149
  %v360 = vunpack.c.l.b16 %v150
  %v361 = vunpack.c.l.b16 %v151
  %v362 = vunpack.c.l.b16 %v152
  %v363 = vunpack.c.l.b16 %v153
  %v364 = vunpack.c.l.b16 %v154
  %v365 = vunpack.c.l.b16 %v155
  %v366 = vunpack.c.l.b16 %v156
  %v367 = vunpack.c.l.b16 %v157
  %v368 = vunpack.c.l.b16 %v158
  %v369 = vunpack.c.l.b16 %v159
  %v370 = vunpack.c.l.b16 %v160
  %v371 = vunpack.c.l.b16 %v161
  %v372 = vunpack.c.l.b16 %v162
  %v373 = vunpack.c.l.b16 %v163
  %v374 = vunpack.c.l.b16 %v164
  %v375 = vunpack.c.l.b16 %v165
  %v376 = vunpack.c.l.b16 %v166
  %v377 = vunpack.c.l.b16 %v167
  %v378 = vunpack.c.l.b16 %v168
  %v379 = vunpack.c.l.b16 %v169
  %v380 = vunpack.c.l.b16 %v170
  %v381 = vpack.c.b16 %v277, %v276
  %v382 = vpack.c.b16 %v279, %v278
  %v383 = vpack.c.b16 %v281, %v280
  %v384 = vpack.c.b16 %v283, %v282
  %v385 = vpack.c.b16 %v285, %v284
  %v386 = vpack.c.b16 %v287, %v286
  %v387 = vpack.c.b16 %v289, %v288
  %v388 = vpack.c.b16 %v291, %v290
  %v389 = vpack.c.b16 %v293, %v292
  %v390 = vpack.c.b16 %v295, %v294
  %v391 = vpack.c.b16 %v297, %v296
  %v392 = vpack.c.b16 %v299, %v298
  %v393 = vpack.c.b16 %v301, %v300
  %v394 = vpack.c.b16 %v303, %v302
  %v395 = vpack.c.b16 %v305, %v304
  %v396 = vpack.c.b16 %v307, %v306
  %v397 = vpack.c.b16 %v309, %v308
  %v398 = vpack.c.b16 %v311, %v310
  %v399 = vpack.c.b16 %v313, %v312
  %v400 = vpack.c.b16 %v315, %v314
  %v401 = vpack.c.b16 %v317, %v316
  %v402 = vpack.c.b16 %v319, %v318
  %v403 = vpack.c.b16 %v321, %v320
  %v404 = vpack.c.b16 %v323, %v322
  %v405 = vpack.c.b16 %v325, %v324
  %v406 = vpack.c.b16 %v327, %v326
  %v407 = vpack.c.b16 %v329, %v328
  %v408 = vpack.c.b16 %v331, %v330
  %v409 = vpack.c.b16 %v333, %v332
  %v410 = vpack.c.b16 %v335, %v334
  %v411 = vpack.c.b16 %v337, %v336
  %v412 = vpack.c.b16 %v339, %v338
  %v413 = vpack.c.b16 %v341, %v340
  %v414 = vpack.c.b16 %v343, %v342
  %v415 = vpack.c.b16 %v345, %v344
  %v416 = vpack.c.b16 %v347, %v346
  %v417 = vpack.c.b16 %v349, %v348
  %v418 = vpack.c.b16 %v351, %v350
  %v419 = vpack.c.b16 %v353, %v352
  %v420 = vpack.c.b16 %v355, %v354
  %v421 = vpack.c.b16 %v357, %v356
  %v422 = vpack.c.b16 %v359, %v358
  %v423 = vpack.c.b16 %v361, %v360
  %v424 = vpack.c.b16 %v363, %v362
  %v425 = vpack.c.b16 %v365, %v364
  %v426 = vpack.c.b16 %v367, %v366
  %v427 = vpack.c.b16 %v369, %v368
  %v428 = vpack.c.b16 %v371, %v370
  %v429 = vpack.c.b16 %v373, %v372
  %v430 = vpack.c.b16 %v375, %v374
  %v431 = vpack.c.b16 %v377, %v376
  %v432 = vpack.c.b16 %v379, %v378
  %v433 = vpack.c.b16 %v380, %v380
  %v446 = vunpack.c.l.b16 %v54
  %v447 = vunpack.c.h.b16 %v54
  %v448 = vunpack.c.l.b16 %v55
  %v449 = vunpack.c.h.b16 %v55
  %v450 = vunpack.c.l.b16 %v56
  %v451 = vunpack.c.h.b16 %v56
  %v452 = vunpack.c.l.b16 %v57
  %v453 = vunpack.c.h.b16 %v57
  %v454 = vunpack.c.l.b16 %v58
  %v455 = vunpack.c.h.b16 %v58
  %v456 = vunpack.c.l.b16 %v59
  %v457 = vunpack.c.h.b16 %v59
  %v458 = vunpack.c.l.b16 %v60
  %v459 = vunpack.c.h.b16 %v60
  %v460 = vunpack.c.l.b16 %v61
  %v461 = vunpack.c.h.b16 %v61
  %v462 = vunpack.c.l.b16 %v62
  %v463 = vunpack.c.h.b16 %v62
  %v464 = vunpack.c.l.b16 %v63
  %v465 = vunpack.c.h.b16 %v63
  %v466 = vunpack.c.l.b16 %v64
  %v467 = vunpack.c.h.b16 %v64
  %v468 = vunpack.c.l.b16 %v65
  %v469 = vunpack.c.h.b16 %v65
  %v470 = vpack.c.b16 %v448, %v446
  %v471 = vpack.c.b16 %v449, %v447
  %v472 = vpack.c.b16 %v452, %v450
  %v473 = vpack.c.b16 %v453, %v451
  %v474 = vpack.c.b16 %v456, %v454
  %v475 = vpack.c.b16 %v457, %v455
  %v476 = vpack.c.b16 %v460, %v458
  %v477 = vpack.c.b16 %v461, %v459
  %v478 = vpack.c.b16 %v464, %v462
  %v479 = vpack.c.b16 %v465, %v463
  %v480 = vpack.c.b16 %v468, %v466
  %v481 = vpack.c.b16 %v469, %v467
  %vm494 = vcmask 785408
  %v496 = vsel %vm494, %v381, 0
  %v499 = vsel %vm494, %v382, 0
  %v502 = vsel %vm494, %v383, 0
  %v505 = vsel %vm494, %v384, 0
  %v508 = vsel %vm494, %v385, 0
  %v511 = vsel %vm494, %v386, 0
  %v514 = vsel %vm494, %v387, 0
  %v517 = vsel %vm494, %v388, 0
  %v520 = vsel %vm494, %v389, 0
  %v523 = vsel %vm494, %v390, 0
  %v526 = vsel %vm494, %v391, 0
  %v529 = vsel %vm494, %v392, 0
  %v532 = vsel %vm494, %v393, 0
  %v535 = vsel %vm494, %v394, 0
  %v538 = vsel %vm494, %v395, 0
  %v541 = vsel %vm494, %v396, 0
  %v544 = vsel %vm494, %v397, 0
  %v547 = vsel %vm494, %v398, 0
  %v550 = vsel %vm494, %v399, 0
  %v553 = vsel %vm494, %v400, 0
  %v556 = vsel %vm494, %v401, 0
  %v559 = vsel %vm494, %v402, 0
  %v562 = vsel %vm494, %v403, 0
  %v565 = vsel %vm494, %v404, 0
  %v568 = vsel %vm494, %v405, 0
  %v571 = vsel %vm494, %v406, 0
  %v574 = vsel %vm494, %v407, 0
  %v577 = vsel %vm494, %v408, 0
  %v580 = vsel %vm494, %v409, 0
  %v583 = vsel %vm494, %v410, 0
  %v586 = vsel %vm494, %v411, 0
  %v589 = vsel %vm494, %v412, 0
  %v592 = vsel %vm494, %v413, 0
  %v595 = vsel %vm494, %v414, 0
  %v598 = vsel %vm494, %v415, 0
  %v601 = vsel %vm494, %v416, 0
  %v604 = vsel %vm494, %v417, 0
  %v607 = vsel %vm494, %v418, 0
  %v610 = vsel %vm494, %v419, 0
  %v613 = vsel %vm494, %v420, 0
  %v616 = vsel %vm494, %v421, 0
  %v619 = vsel %vm494, %v422, 0
  %v622 = vsel %vm494, %v423, 0
  %v625 = vsel %vm494, %v424, 0
  %v628 = vsel %vm494, %v425, 0
  %v631 = vsel %vm494, %v426, 0
  %v634 = vsel %vm494, %v427, 0
  %v637 = vsel %vm494, %v428, 0
  %v640 = vsel %vm494, %v429, 0
  %v643 = vsel %vm494, %v430, 0
  %v646 = vsel %vm494, %v431, 0
  %v649 = vsel %vm494, %v432, 0
  %v652 = vsel %vm494, %v433, 0
  %654 = vmatprep.subr.bf16.mxu0 %v471
  %655 = vmatpush1.bf16.msra.mxu0 %v470
  %656 = vmatprep.subr.bf16.mxu0 %v473
  %657 = vmatpush1.bf16.msra.mxu0 %v472
  %658 = vmatprep.subr.bf16.mxu0 %v475
  %659 = vmatpush1.bf16.msra.mxu0 %v474
  %660 = vmatprep.subr.bf16.mxu0 %v477
  %661 = vmatpush1.bf16.msra.mxu0 %v476
  %662 = vmatprep.subr.bf16.mxu0 %v479
  %663 = vmatpush1.bf16.msra.mxu0 %v478
  %664 = vmatprep.subr.bf16.mxu0 %v481
  %665 = vmatpush1.bf16.msra.mxu0 %v480
  %666 = vmatprep.subr.bf16.mxu0 0
  %667 = vmatpush1.bf16.msra.mxu0 0
  %668 = vmatprep.subr.bf16.mxu0 0
  %669 = vmatpush1.bf16.msra.mxu0 0
  %670 = vmatprep.subr.bf16.mxu0 0
  %671 = vmatpush1.bf16.msra.mxu0 0
  %672 = vmatprep.subr.bf16.mxu0 0
  %673 = vmatpush1.bf16.msra.mxu0 0
  %674 = vmatprep.subr.bf16.mxu0 0
  %675 = vmatpush1.bf16.msra.mxu0 0
  %676 = vmatprep.subr.bf16.mxu0 0
  %677 = vmatpush1.bf16.msra.mxu0 0
  %678 = vmatprep.subr.bf16.mxu0 0
  %679 = vmatpush1.bf16.msra.mxu0 0
  %680 = vmatprep.subr.bf16.mxu0 0
  %681 = vmatpush1.bf16.msra.mxu0 0
  %682 = vmatprep.subr.bf16.mxu0 0
  %683 = vmatpush1.bf16.msra.mxu0 0
  %684 = vmatprep.subr.bf16.mxu0 0
  %685 = vmatpush1.bf16.msra.mxu0 0
  %686 = vmatprep.mubr.bf16.mxu0 0
  %687 = vmatmul.mubr.bf16.gmra.mrb[0].mxu0 %v496
  %v688 = vpop.f32.mrb[0].mxu0
  %v689 = vadd.f32 0.0, %v688
  %v690 = vpop.f32.mrb[0].mxu0
  %v691 = vadd.f32 0.0, %v690
  %v692 = vpop.f32.mrb[0].mxu0
  %v693 = vadd.f32 0.0, %v692
  %v694 = vpop.f32.mrb[0].mxu0
  %v695 = vadd.f32 0.0, %v694
  %696 = vmatprep.mubr.bf16.mxu0 0
  %697 = vmatmul.mubr.bf16.gmra.mrb[0].mxu0 %v499
  %v698 = vpop.f32.mrb[0].mxu0
  %v699 = vadd.f32 0.0, %v698
  %v700 = vpop.f32.mrb[0].mxu0
  %v701 = vadd.f32 0.0, %v700
  %v702 = vpop.f32.mrb[0].mxu0
  %v703 = vadd.f32 0.0, %v702
  %v704 = vpop.f32.mrb[0].mxu0
  %v705 = vadd.f32 0.0, %v704
  %706 = vmatprep.mubr.bf16.mxu0 0
  %707 = vmatmul.mubr.bf16.gmra.mrb[0].mxu0 %v502
  %v708 = vpop.f32.mrb[0].mxu0
  %v709 = vadd.f32 0.0, %v708
  %v710 = vpop.f32.mrb[0].mxu0
  %v711 = vadd.f32 0.0, %v710
  %v712 = vpop.f32.mrb[0].mxu0
  %v713 = vadd.f32 0.0, %v712
  %v714 = vpop.f32.mrb[0].mxu0
  %v715 = vadd.f32 0.0, %v714
  %716 = vmatprep.mubr.bf16.mxu0 0
  %717 = vmatmul.mubr.bf16.gmra.mrb[0].mxu0 %v505
  %v718 = vpop.f32.mrb[0].mxu0
  %v719 = vadd.f32 0.0, %v718
  %v720 = vpop.f32.mrb[0].mxu0
  %v721 = vadd.f32 0.0, %v720
  %v722 = vpop.f32.mrb[0].mxu0
  %v723 = vadd.f32 0.0, %v722
  %v724 = vpop.f32.mrb[0].mxu0
  %v725 = vadd.f32 0.0, %v724
  %726 = vmatprep.mubr.bf16.mxu0 0
  %727 = vmatmul.mubr.bf16.gmra.mrb[0].mxu0 %v508
  %v728 = vpop.f32.mrb[0].mxu0
  %v729 = vadd.f32 0.0, %v728
  %v730 = vpop.f32.mrb[0].mxu0
  %v731 = vadd.f32 0.0, %v730
  %v732 = vpop.f32.mrb[0].mxu0
  %v733 = vadd.f32 0.0, %v732
  %v734 = vpop.f32.mrb[0].mxu0
  %v735 = vadd.f32 0.0, %v734
  %736 = vmatprep.mubr.bf16.mxu0 0
  %737 = vmatmul.mubr.bf16.gmra.mrb[0].mxu0 %v511
  %v738 = vpop.f32.mrb[0].mxu0
  %v739 = vadd.f32 0.0, %v738
  %v740 = vpop.f32.mrb[0].mxu0
  %v741 = vadd.f32 0.0, %v740
  %v742 = vpop.f32.mrb[0].mxu0
  %v743 = vadd.f32 0.0, %v742
  %v744 = vpop.f32.mrb[0].mxu0
  %v745 = vadd.f32 0.0, %v744
  %746 = vmatprep.mubr.bf16.mxu0 0
  %747 = vmatmul.mubr.bf16.gmra.mrb[0].mxu0 %v514
  %v748 = vpop.f32.mrb[0].mxu0
  %v749 = vadd.f32 0.0, %v748
  %v750 = vpop.f32.mrb[0].mxu0
  %v751 = vadd.f32 0.0, %v750
  %v752 = vpop.f32.mrb[0].mxu0
  %v753 = vadd.f32 0.0, %v752
  %v754 = vpop.f32.mrb[0].mxu0
  %v755 = vadd.f32 0.0, %v754
  %756 = vmatprep.mubr.bf16.mxu0 0
  %757 = vmatmul.mubr.bf16.gmra.mrb[0].mxu0 %v517
  %v758 = vpop.f32.mrb[0].mxu0
  %v759 = vadd.f32 0.0, %v758
  %v760 = vpop.f32.mrb[0].mxu0
  %v761 = vadd.f32 0.0, %v760
  %v762 = vpop.f32.mrb[0].mxu0
  %v763 = vadd.f32 0.0, %v762
  %v764 = vpop.f32.mrb[0].mxu0
  %v765 = vadd.f32 0.0, %v764
  %766 = vmatprep.mubr.bf16.mxu0 0
  %767 = vmatmul.mubr.bf16.gmra.mrb[0].mxu0 %v520
  %v768 = vpop.f32.mrb[0].mxu0
  %v769 = vadd.f32 0.0, %v768
  %v770 = vpop.f32.mrb[0].mxu0
  %v771 = vadd.f32 0.0, %v770
  %v772 = vpop.f32.mrb[0].mxu0
  %v773 = vadd.f32 0.0, %v772
  %v774 = vpop.f32.mrb[0].mxu0
  %v775 = vadd.f32 0.0, %v774
  %776 = vmatprep.mubr.bf16.mxu0 0
  %777 = vmatmul.mubr.bf16.gmra.mrb[0].mxu0 %v523
  %v778 = vpop.f32.mrb[0].mxu0
  %v779 = vadd.f32 0.0, %v778
  %v780 = vpop.f32.mrb[0].mxu0
  %v781 = vadd.f32 0.0, %v780
  %v782 = vpop.f32.mrb[0].mxu0
  %v783 = vadd.f32 0.0, %v782
  %v784 = vpop.f32.mrb[0].mxu0
  %v785 = vadd.f32 0.0, %v784
  %786 = vmatprep.mubr.bf16.mxu0 0
  %787 = vmatmul.mubr.bf16.gmra.mrb[0].mxu0 %v526
  %v788 = vpop.f32.mrb[0].mxu0
  %v789 = vadd.f32 0.0, %v788
  %v790 = vpop.f32.mrb[0].mxu0
  %v791 = vadd.f32 0.0, %v790
  %v792 = vpop.f32.mrb[0].mxu0
  %v793 = vadd.f32 0.0, %v792
  %v794 = vpop.f32.mrb[0].mxu0
  %v795 = vadd.f32 0.0, %v794
  %796 = vmatprep.mubr.bf16.mxu0 0
  %797 = vmatmul.mubr.bf16.gmra.mrb[0].mxu0 %v529
  %v798 = vpop.f32.mrb[0].mxu0
  %v799 = vadd.f32 0.0, %v798
  %v800 = vpop.f32.mrb[0].mxu0
  %v801 = vadd.f32 0.0, %v800
  %v802 = vpop.f32.mrb[0].mxu0
  %v803 = vadd.f32 0.0, %v802
  %v804 = vpop.f32.mrb[0].mxu0
  %v805 = vadd.f32 0.0, %v804
  %806 = vmatprep.mubr.bf16.mxu0 0
  %807 = vmatmul.mubr.bf16.gmra.mrb[0].mxu0 %v532
  %v808 = vpop.f32.mrb[0].mxu0
  %v809 = vadd.f32 0.0, %v808
  %v810 = vpop.f32.mrb[0].mxu0
  %v811 = vadd.f32 0.0, %v810
  %v812 = vpop.f32.mrb[0].mxu0
  %v813 = vadd.f32 0.0, %v812
  %v814 = vpop.f32.mrb[0].mxu0
  %v815 = vadd.f32 0.0, %v814
  %816 = vmatprep.mubr.bf16.mxu0 0
  %817 = vmatmul.mubr.bf16.gmra.mrb[0].mxu0 %v535
  %v818 = vpop.f32.mrb[0].mxu0
  %v819 = vadd.f32 0.0, %v818
  %v820 = vpop.f32.mrb[0].mxu0
  %v821 = vadd.f32 0.0, %v820
  %v822 = vpop.f32.mrb[0].mxu0
  %v823 = vadd.f32 0.0, %v822
  %v824 = vpop.f32.mrb[0].mxu0
  %v825 = vadd.f32 0.0, %v824
  %826 = vmatprep.mubr.bf16.mxu0 0
  %827 = vmatmul.mubr.bf16.gmra.mrb[0].mxu0 %v538
  %v828 = vpop.f32.mrb[0].mxu0
  %v829 = vadd.f32 0.0, %v828
  %v830 = vpop.f32.mrb[0].mxu0
  %v831 = vadd.f32 0.0, %v830
  %v832 = vpop.f32.mrb[0].mxu0
  %v833 = vadd.f32 0.0, %v832
  %v834 = vpop.f32.mrb[0].mxu0
  %v835 = vadd.f32 0.0, %v834
  %836 = vmatprep.mubr.bf16.mxu0 0
  %837 = vmatmul.mubr.bf16.gmra.mrb[0].mxu0 %v541
  %v838 = vpop.f32.mrb[0].mxu0
  %v839 = vadd.f32 0.0, %v838
  %v840 = vpop.f32.mrb[0].mxu0
  %v841 = vadd.f32 0.0, %v840
  %v842 = vpop.f32.mrb[0].mxu0
  %v843 = vadd.f32 0.0, %v842
  %v844 = vpop.f32.mrb[0].mxu0
  %v845 = vadd.f32 0.0, %v844
  %846 = vmatprep.mubr.bf16.mxu0 0
  %847 = vmatmul.mubr.bf16.gmra.mrb[0].mxu0 %v544
  %v848 = vpop.f32.mrb[0].mxu0
  %v849 = vadd.f32 0.0, %v848
  %v850 = vpop.f32.mrb[0].mxu0
  %v851 = vadd.f32 0.0, %v850
  %v852 = vpop.f32.mrb[0].mxu0
  %v853 = vadd.f32 0.0, %v852
  %v854 = vpop.f32.mrb[0].mxu0
  %v855 = vadd.f32 0.0, %v854
  %856 = vmatprep.mubr.bf16.mxu0 0
  %857 = vmatmul.mubr.bf16.gmra.mrb[0].mxu0 %v547
  %v858 = vpop.f32.mrb[0].mxu0
  %v859 = vadd.f32 0.0, %v858
  %v860 = vpop.f32.mrb[0].mxu0
  %v861 = vadd.f32 0.0, %v860
  %v862 = vpop.f32.mrb[0].mxu0
  %v863 = vadd.f32 0.0, %v862
  %v864 = vpop.f32.mrb[0].mxu0
  %v865 = vadd.f32 0.0, %v864
  %866 = vmatprep.mubr.bf16.mxu0 0
  %867 = vmatmul.mubr.bf16.gmra.mrb[0].mxu0 %v550
  %v868 = vpop.f32.mrb[0].mxu0
  %v869 = vadd.f32 0.0, %v868
  %v870 = vpop.f32.mrb[0].mxu0
  %v871 = vadd.f32 0.0, %v870
  %v872 = vpop.f32.mrb[0].mxu0
  %v873 = vadd.f32 0.0, %v872
  %v874 = vpop.f32.mrb[0].mxu0
  %v875 = vadd.f32 0.0, %v874
  %876 = vmatprep.mubr.bf16.mxu0 0
  %877 = vmatmul.mubr.bf16.gmra.mrb[0].mxu0 %v553
  %v878 = vpop.f32.mrb[0].mxu0
  %v879 = vadd.f32 0.0, %v878
  %v880 = vpop.f32.mrb[0].mxu0
  %v881 = vadd.f32 0.0, %v880
  %v882 = vpop.f32.mrb[0].mxu0
  %v883 = vadd.f32 0.0, %v882
  %v884 = vpop.f32.mrb[0].mxu0
  %v885 = vadd.f32 0.0, %v884
  %886 = vmatprep.mubr.bf16.mxu0 0
  %887 = vmatmul.mubr.bf16.gmra.mrb[0].mxu0 %v556
  %v888 = vpop.f32.mrb[0].mxu0
  %v889 = vadd.f32 0.0, %v888
  %v890 = vpop.f32.mrb[0].mxu0
  %v891 = vadd.f32 0.0, %v890
  %v892 = vpop.f32.mrb[0].mxu0
  %v893 = vadd.f32 0.0, %v892
  %v894 = vpop.f32.mrb[0].mxu0
  %v895 = vadd.f32 0.0, %v894
  %896 = vmatprep.mubr.bf16.mxu0 0
  %897 = vmatmul.mubr.bf16.gmra.mrb[0].mxu0 %v559
  %v898 = vpop.f32.mrb[0].mxu0
  %v899 = vadd.f32 0.0, %v898
  %v900 = vpop.f32.mrb[0].mxu0
  %v901 = vadd.f32 0.0, %v900
  %v902 = vpop.f32.mrb[0].mxu0
  %v903 = vadd.f32 0.0, %v902
  %v904 = vpop.f32.mrb[0].mxu0
  %v905 = vadd.f32 0.0, %v904
  %906 = vmatprep.mubr.bf16.mxu0 0
  %907 = vmatmul.mubr.bf16.gmra.mrb[0].mxu0 %v562
  %v908 = vpop.f32.mrb[0].mxu0
  %v909 = vadd.f32 0.0, %v908
  %v910 = vpop.f32.mrb[0].mxu0
  %v911 = vadd.f32 0.0, %v910
  %v912 = vpop.f32.mrb[0].mxu0
  %v913 = vadd.f32 0.0, %v912
  %v914 = vpop.f32.mrb[0].mxu0
  %v915 = vadd.f32 0.0, %v914
  %916 = vmatprep.mubr.bf16.mxu0 0
  %917 = vmatmul.mubr.bf16.gmra.mrb[0].mxu0 %v565
  %v918 = vpop.f32.mrb[0].mxu0
  %v919 = vadd.f32 0.0, %v918
  %v920 = vpop.f32.mrb[0].mxu0
  %v921 = vadd.f32 0.0, %v920
  %v922 = vpop.f32.mrb[0].mxu0
  %v923 = vadd.f32 0.0, %v922
  %v924 = vpop.f32.mrb[0].mxu0
  %v925 = vadd.f32 0.0, %v924
  %926 = vmatprep.mubr.bf16.mxu0 0
  %927 = vmatmul.mubr.bf16.gmra.mrb[0].mxu0 %v568
  %v928 = vpop.f32.mrb[0].mxu0
  %v929 = vadd.f32 0.0, %v928
  %v930 = vpop.f32.mrb[0].mxu0
  %v931 = vadd.f32 0.0, %v930
  %v932 = vpop.f32.mrb[0].mxu0
  %v933 = vadd.f32 0.0, %v932
  %v934 = vpop.f32.mrb[0].mxu0
  %v935 = vadd.f32 0.0, %v934
  %936 = vmatprep.mubr.bf16.mxu0 0
  %937 = vmatmul.mubr.bf16.gmra.mrb[0].mxu0 %v571
  %v938 = vpop.f32.mrb[0].mxu0
  %v939 = vadd.f32 0.0, %v938
  %v940 = vpop.f32.mrb[0].mxu0
  %v941 = vadd.f32 0.0, %v940
  %v942 = vpop.f32.mrb[0].mxu0
  %v943 = vadd.f32 0.0, %v942
  %v944 = vpop.f32.mrb[0].mxu0
  %v945 = vadd.f32 0.0, %v944
  %946 = vmatprep.mubr.bf16.mxu0 0
  %947 = vmatmul.mubr.bf16.gmra.mrb[0].mxu0 %v574
  %v948 = vpop.f32.mrb[0].mxu0
  %v949 = vadd.f32 0.0, %v948
  %v950 = vpop.f32.mrb[0].mxu0
  %v951 = vadd.f32 0.0, %v950
  %v952 = vpop.f32.mrb[0].mxu0
  %v953 = vadd.f32 0.0, %v952
  %v954 = vpop.f32.mrb[0].mxu0
  %v955 = vadd.f32 0.0, %v954
  %956 = vmatprep.mubr.bf16.mxu0 0
  %957 = vmatmul.mubr.bf16.gmra.mrb[0].mxu0 %v577
  %v958 = vpop.f32.mrb[0].mxu0
  %v959 = vadd.f32 0.0, %v958
  %v960 = vpop.f32.mrb[0].mxu0
  %v961 = vadd.f32 0.0, %v960
  %v962 = vpop.f32.mrb[0].mxu0
  %v963 = vadd.f32 0.0, %v962
  %v964 = vpop.f32.mrb[0].mxu0
  %v965 = vadd.f32 0.0, %v964
  %966 = vmatprep.mubr.bf16.mxu0 0
  %967 = vmatmul.mubr.bf16.gmra.mrb[0].mxu0 %v580
  %v968 = vpop.f32.mrb[0].mxu0
  %v969 = vadd.f32 0.0, %v968
  %v970 = vpop.f32.mrb[0].mxu0
  %v971 = vadd.f32 0.0, %v970
  %v972 = vpop.f32.mrb[0].mxu0
  %v973 = vadd.f32 0.0, %v972
  %v974 = vpop.f32.mrb[0].mxu0
  %v975 = vadd.f32 0.0, %v974
  %976 = vmatprep.mubr.bf16.mxu0 0
  %977 = vmatmul.mubr.bf16.gmra.mrb[0].mxu0 %v583
  %v978 = vpop.f32.mrb[0].mxu0
  %v979 = vadd.f32 0.0, %v978
  %v980 = vpop.f32.mrb[0].mxu0
  %v981 = vadd.f32 0.0, %v980
  %v982 = vpop.f32.mrb[0].mxu0
  %v983 = vadd.f32 0.0, %v982
  %v984 = vpop.f32.mrb[0].mxu0
  %v985 = vadd.f32 0.0, %v984
  %986 = vmatprep.mubr.bf16.mxu0 0
  %987 = vmatmul.mubr.bf16.gmra.mrb[0].mxu0 %v586
  %v988 = vpop.f32.mrb[0].mxu0
  %v989 = vadd.f32 0.0, %v988
  %v990 = vpop.f32.mrb[0].mxu0
  %v991 = vadd.f32 0.0, %v990
  %v992 = vpop.f32.mrb[0].mxu0
  %v993 = vadd.f32 0.0, %v992
  %v994 = vpop.f32.mrb[0].mxu0
  %v995 = vadd.f32 0.0, %v994
  %996 = vmatprep.mubr.bf16.mxu0 0
  %997 = vmatmul.mubr.bf16.gmra.mrb[0].mxu0 %v589
  %v998 = vpop.f32.mrb[0].mxu0
  %v999 = vadd.f32 0.0, %v998
  %v1000 = vpop.f32.mrb[0].mxu0
  %v1001 = vadd.f32 0.0, %v1000
  %v1002 = vpop.f32.mrb[0].mxu0
  %v1003 = vadd.f32 0.0, %v1002
  %v1004 = vpop.f32.mrb[0].mxu0
  %v1005 = vadd.f32 0.0, %v1004
  %1006 = vmatprep.mubr.bf16.mxu0 0
  %1007 = vmatmul.mubr.bf16.gmra.mrb[0].mxu0 %v592
  %v1008 = vpop.f32.mrb[0].mxu0
  %v1009 = vadd.f32 0.0, %v1008
  %v1010 = vpop.f32.mrb[0].mxu0
  %v1011 = vadd.f32 0.0, %v1010
  %v1012 = vpop.f32.mrb[0].mxu0
  %v1013 = vadd.f32 0.0, %v1012
  %v1014 = vpop.f32.mrb[0].mxu0
  %v1015 = vadd.f32 0.0, %v1014
  %1016 = vmatprep.mubr.bf16.mxu0 0
  %1017 = vmatmul.mubr.bf16.gmra.mrb[0].mxu0 %v595
  %v1018 = vpop.f32.mrb[0].mxu0
  %v1019 = vadd.f32 0.0, %v1018
  %v1020 = vpop.f32.mrb[0].mxu0
  %v1021 = vadd.f32 0.0, %v1020
  %v1022 = vpop.f32.mrb[0].mxu0
  %v1023 = vadd.f32 0.0, %v1022
  %v1024 = vpop.f32.mrb[0].mxu0
  %v1025 = vadd.f32 0.0, %v1024
  %1026 = vmatprep.mubr.bf16.mxu0 0
  %1027 = vmatmul.mubr.bf16.gmra.mrb[0].mxu0 %v598
  %v1028 = vpop.f32.mrb[0].mxu0
  %v1029 = vadd.f32 0.0, %v1028
  %v1030 = vpop.f32.mrb[0].mxu0
  %v1031 = vadd.f32 0.0, %v1030
  %v1032 = vpop.f32.mrb[0].mxu0
  %v1033 = vadd.f32 0.0, %v1032
  %v1034 = vpop.f32.mrb[0].mxu0
  %v1035 = vadd.f32 0.0, %v1034
  %1036 = vmatprep.mubr.bf16.mxu0 0
  %1037 = vmatmul.mubr.bf16.gmra.mrb[0].mxu0 %v601
  %v1038 = vpop.f32.mrb[0].mxu0
  %v1039 = vadd.f32 0.0, %v1038
  %v1040 = vpop.f32.mrb[0].mxu0
  %v1041 = vadd.f32 0.0, %v1040
  %v1042 = vpop.f32.mrb[0].mxu0
  %v1043 = vadd.f32 0.0, %v1042
  %v1044 = vpop.f32.mrb[0].mxu0
  %v1045 = vadd.f32 0.0, %v1044
  %1046 = vmatprep.mubr.bf16.mxu0 0
  %1047 = vmatmul.mubr.bf16.gmra.mrb[0].mxu0 %v604
  %v1048 = vpop.f32.mrb[0].mxu0
  %v1049 = vadd.f32 0.0, %v1048
  %v1050 = vpop.f32.mrb[0].mxu0
  %v1051 = vadd.f32 0.0, %v1050
  %v1052 = vpop.f32.mrb[0].mxu0
  %v1053 = vadd.f32 0.0, %v1052
  %v1054 = vpop.f32.mrb[0].mxu0
  %v1055 = vadd.f32 0.0, %v1054
  %1056 = vmatprep.mubr.bf16.mxu0 0
  %1057 = vmatmul.mubr.bf16.gmra.mrb[0].mxu0 %v607
  %v1058 = vpop.f32.mrb[0].mxu0
  %v1059 = vadd.f32 0.0, %v1058
  %v1060 = vpop.f32.mrb[0].mxu0
  %v1061 = vadd.f32 0.0, %v1060
  %v1062 = vpop.f32.mrb[0].mxu0
  %v1063 = vadd.f32 0.0, %v1062
  %v1064 = vpop.f32.mrb[0].mxu0
  %v1065 = vadd.f32 0.0, %v1064
  %1066 = vmatprep.mubr.bf16.mxu0 0
  %1067 = vmatmul.mubr.bf16.gmra.mrb[0].mxu0 %v610
  %v1068 = vpop.f32.mrb[0].mxu0
  %v1069 = vadd.f32 0.0, %v1068
  %v1070 = vpop.f32.mrb[0].mxu0
  %v1071 = vadd.f32 0.0, %v1070
  %v1072 = vpop.f32.mrb[0].mxu0
  %v1073 = vadd.f32 0.0, %v1072
  %v1074 = vpop.f32.mrb[0].mxu0
  %v1075 = vadd.f32 0.0, %v1074
  %1076 = vmatprep.mubr.bf16.mxu0 0
  %1077 = vmatmul.mubr.bf16.gmra.mrb[0].mxu0 %v613
  %v1078 = vpop.f32.mrb[0].mxu0
  %v1079 = vadd.f32 0.0, %v1078
  %v1080 = vpop.f32.mrb[0].mxu0
  %v1081 = vadd.f32 0.0, %v1080
  %v1082 = vpop.f32.mrb[0].mxu0
  %v1083 = vadd.f32 0.0, %v1082
  %v1084 = vpop.f32.mrb[0].mxu0
  %v1085 = vadd.f32 0.0, %v1084
  %1086 = vmatprep.mubr.bf16.mxu0 0
  %1087 = vmatmul.mubr.bf16.gmra.mrb[0].mxu0 %v616
  %v1088 = vpop.f32.mrb[0].mxu0
  %v1089 = vadd.f32 0.0, %v1088
  %v1090 = vpop.f32.mrb[0].mxu0
  %v1091 = vadd.f32 0.0, %v1090
  %v1092 = vpop.f32.mrb[0].mxu0
  %v1093 = vadd.f32 0.0, %v1092
  %v1094 = vpop.f32.mrb[0].mxu0
  %v1095 = vadd.f32 0.0, %v1094
  %1096 = vmatprep.mubr.bf16.mxu0 0
  %1097 = vmatmul.mubr.bf16.gmra.mrb[0].mxu0 %v619
  %v1098 = vpop.f32.mrb[0].mxu0
  %v1099 = vadd.f32 0.0, %v1098
  %v1100 = vpop.f32.mrb[0].mxu0
  %v1101 = vadd.f32 0.0, %v1100
  %v1102 = vpop.f32.mrb[0].mxu0
  %v1103 = vadd.f32 0.0, %v1102
  %v1104 = vpop.f32.mrb[0].mxu0
  %v1105 = vadd.f32 0.0, %v1104
  %1106 = vmatprep.mubr.bf16.mxu0 0
  %1107 = vmatmul.mubr.bf16.gmra.mrb[0].mxu0 %v622
  %v1108 = vpop.f32.mrb[0].mxu0
  %v1109 = vadd.f32 0.0, %v1108
  %v1110 = vpop.f32.mrb[0].mxu0
  %v1111 = vadd.f32 0.0, %v1110
  %v1112 = vpop.f32.mrb[0].mxu0
  %v1113 = vadd.f32 0.0, %v1112
  %v1114 = vpop.f32.mrb[0].mxu0
  %v1115 = vadd.f32 0.0, %v1114
  %1116 = vmatprep.mubr.bf16.mxu0 0
  %1117 = vmatmul.mubr.bf16.gmra.mrb[0].mxu0 %v625
  %v1118 = vpop.f32.mrb[0].mxu0
  %v1119 = vadd.f32 0.0, %v1118
  %v1120 = vpop.f32.mrb[0].mxu0
  %v1121 = vadd.f32 0.0, %v1120
  %v1122 = vpop.f32.mrb[0].mxu0
  %v1123 = vadd.f32 0.0, %v1122
  %v1124 = vpop.f32.mrb[0].mxu0
  %v1125 = vadd.f32 0.0, %v1124
  %1126 = vmatprep.mubr.bf16.mxu0 0
  %1127 = vmatmul.mubr.bf16.gmra.mrb[0].mxu0 %v628
  %v1128 = vpop.f32.mrb[0].mxu0
  %v1129 = vadd.f32 0.0, %v1128
  %v1130 = vpop.f32.mrb[0].mxu0
  %v1131 = vadd.f32 0.0, %v1130
  %v1132 = vpop.f32.mrb[0].mxu0
  %v1133 = vadd.f32 0.0, %v1132
  %v1134 = vpop.f32.mrb[0].mxu0
  %v1135 = vadd.f32 0.0, %v1134
  %1136 = vmatprep.mubr.bf16.mxu0 0
  %1137 = vmatmul.mubr.bf16.gmra.mrb[0].mxu0 %v631
  %v1138 = vpop.f32.mrb[0].mxu0
  %v1139 = vadd.f32 0.0, %v1138
  %v1140 = vpop.f32.mrb[0].mxu0
  %v1141 = vadd.f32 0.0, %v1140
  %v1142 = vpop.f32.mrb[0].mxu0
  %v1143 = vadd.f32 0.0, %v1142
  %v1144 = vpop.f32.mrb[0].mxu0
  %v1145 = vadd.f32 0.0, %v1144
  %1146 = vmatprep.mubr.bf16.mxu0 0
  %1147 = vmatmul.mubr.bf16.gmra.mrb[0].mxu0 %v634
  %v1148 = vpop.f32.mrb[0].mxu0
  %v1149 = vadd.f32 0.0, %v1148
  %v1150 = vpop.f32.mrb[0].mxu0
  %v1151 = vadd.f32 0.0, %v1150
  %v1152 = vpop.f32.mrb[0].mxu0
  %v1153 = vadd.f32 0.0, %v1152
  %v1154 = vpop.f32.mrb[0].mxu0
  %v1155 = vadd.f32 0.0, %v1154
  %1156 = vmatprep.mubr.bf16.mxu0 0
  %1157 = vmatmul.mubr.bf16.gmra.mrb[0].mxu0 %v637
  %v1158 = vpop.f32.mrb[0].mxu0
  %v1159 = vadd.f32 0.0, %v1158
  %v1160 = vpop.f32.mrb[0].mxu0
  %v1161 = vadd.f32 0.0, %v1160
  %v1162 = vpop.f32.mrb[0].mxu0
  %v1163 = vadd.f32 0.0, %v1162
  %v1164 = vpop.f32.mrb[0].mxu0
  %v1165 = vadd.f32 0.0, %v1164
  %1166 = vmatprep.mubr.bf16.mxu0 0
  %1167 = vmatmul.mubr.bf16.gmra.mrb[0].mxu0 %v640
  %v1168 = vpop.f32.mrb[0].mxu0
  %v1169 = vadd.f32 0.0, %v1168
  %v1170 = vpop.f32.mrb[0].mxu0
  %v1171 = vadd.f32 0.0, %v1170
  %v1172 = vpop.f32.mrb[0].mxu0
  %v1173 = vadd.f32 0.0, %v1172
  %v1174 = vpop.f32.mrb[0].mxu0
  %v1175 = vadd.f32 0.0, %v1174
  %1176 = vmatprep.mubr.bf16.mxu0 0
  %1177 = vmatmul.mubr.bf16.gmra.mrb[0].mxu0 %v643
  %v1178 = vpop.f32.mrb[0].mxu0
  %v1179 = vadd.f32 0.0, %v1178
  %v1180 = vpop.f32.mrb[0].mxu0
  %v1181 = vadd.f32 0.0, %v1180
  %v1182 = vpop.f32.mrb[0].mxu0
  %v1183 = vadd.f32 0.0, %v1182
  %v1184 = vpop.f32.mrb[0].mxu0
  %v1185 = vadd.f32 0.0, %v1184
  %1186 = vmatprep.mubr.bf16.mxu0 0
  %1187 = vmatmul.mubr.bf16.gmra.mrb[0].mxu0 %v646
  %v1188 = vpop.f32.mrb[0].mxu0
  %v1189 = vadd.f32 0.0, %v1188
  %v1190 = vpop.f32.mrb[0].mxu0
  %v1191 = vadd.f32 0.0, %v1190
  %v1192 = vpop.f32.mrb[0].mxu0
  %v1193 = vadd.f32 0.0, %v1192
  %v1194 = vpop.f32.mrb[0].mxu0
  %v1195 = vadd.f32 0.0, %v1194
  %1196 = vmatprep.mubr.bf16.mxu0 0
  %1197 = vmatmul.mubr.bf16.gmra.mrb[0].mxu0 %v649
  %v1198 = vpop.f32.mrb[0].mxu0
  %v1199 = vadd.f32 0.0, %v1198
  %v1200 = vpop.f32.mrb[0].mxu0
  %v1201 = vadd.f32 0.0, %v1200
  %v1202 = vpop.f32.mrb[0].mxu0
  %v1203 = vadd.f32 0.0, %v1202
  %v1204 = vpop.f32.mrb[0].mxu0
  %v1205 = vadd.f32 0.0, %v1204
  %1206 = vmatprep.mubr.bf16.mxu0 0
  %1207 = vmatmul.mubr.bf16.gmra.mrb[0].mxu0 %v652
  %v1208 = vpop.f32.mrb[0].mxu0
  %v1209 = vadd.f32 0.0, %v1208
  %v1210 = vpop.f32.mrb[0].mxu0
  %v1211 = vadd.f32 0.0, %v1210
  %v1212 = vpop.f32.mrb[0].mxu0
  %v1213 = vpop.f32.mrb[0].mxu0
  %1214 = vdwg.mxu0
  %1215 = vrot.lane.b32.xlu0 %v793, 127
  %v1216 = vpop.permute.xlu0 %1215
  %1217 = vrot.lane.b32.xlu0 %v799, 127
  %v1218 = vpop.permute.xlu0 %1217
  %1219 = vrot.lane.b32.xlu0 %v803, 127
  %v1220 = vpop.permute.xlu0 %1219
  %1221 = vrot.lane.b32.xlu0 %v809, 127
  %v1222 = vpop.permute.xlu0 %1221
  %1223 = vrot.lane.b32.xlu0 %v813, 127
  %v1224 = vpop.permute.xlu0 %1223
  %1225 = vrot.lane.b32.xlu0 %v819, 127
  %v1226 = vpop.permute.xlu0 %1225
  %1227 = vrot.lane.b32.xlu0 %v823, 127
  %v1228 = vpop.permute.xlu0 %1227
  %1229 = vrot.lane.b32.xlu0 %v829, 127
  %v1230 = vpop.permute.xlu0 %1229
  %1231 = vrot.lane.b32.xlu0 %v833, 127
  %v1232 = vpop.permute.xlu0 %1231
  %1233 = vrot.lane.b32.xlu0 %v839, 127
  %v1234 = vpop.permute.xlu0 %1233
  %1235 = vrot.lane.b32.xlu0 %v843, 127
  %v1236 = vpop.permute.xlu0 %1235
  %1237 = vrot.lane.b32.xlu0 %v849, 127
  %v1238 = vpop.permute.xlu0 %1237
  %1239 = vrot.lane.b32.xlu0 %v853, 127
  %v1240 = vpop.permute.xlu0 %1239
  %1241 = vrot.lane.b32.xlu0 %v859, 127
  %v1242 = vpop.permute.xlu0 %1241
  %1243 = vrot.lane.b32.xlu0 %v863, 127
  %v1244 = vpop.permute.xlu0 %1243
  %1245 = vrot.lane.b32.xlu0 %v869, 127
  %v1246 = vpop.permute.xlu0 %1245
  %1247 = vrot.lane.b32.xlu0 %v873, 127
  %v1248 = vpop.permute.xlu0 %1247
  %1249 = vrot.lane.b32.xlu0 %v879, 127
  %v1250 = vpop.permute.xlu0 %1249
  %1251 = vrot.lane.b32.xlu0 %v883, 127
  %v1252 = vpop.permute.xlu0 %1251
  %1253 = vrot.lane.b32.xlu0 %v889, 127
  %v1254 = vpop.permute.xlu0 %1253
  %1255 = vrot.lane.b32.xlu0 %v893, 127
  %v1256 = vpop.permute.xlu0 %1255
  %1257 = vrot.lane.b32.xlu0 %v795, 127
  %v1258 = vpop.permute.xlu0 %1257
  %1259 = vrot.lane.b32.xlu0 %v801, 127
  %v1260 = vpop.permute.xlu0 %1259
  %1261 = vrot.lane.b32.xlu0 %v805, 127
  %v1262 = vpop.permute.xlu0 %1261
  %1263 = vrot.lane.b32.xlu0 %v811, 127
  %v1264 = vpop.permute.xlu0 %1263
  %1265 = vrot.lane.b32.xlu0 %v815, 127
  %v1266 = vpop.permute.xlu0 %1265
  %1267 = vrot.lane.b32.xlu0 %v821, 127
  %v1268 = vpop.permute.xlu0 %1267
  %1269 = vrot.lane.b32.xlu0 %v825, 127
  %v1270 = vpop.permute.xlu0 %1269
  %1271 = vrot.lane.b32.xlu0 %v831, 127
  %v1272 = vpop.permute.xlu0 %1271
  %1273 = vrot.lane.b32.xlu0 %v835, 127
  %v1274 = vpop.permute.xlu0 %1273
  %1275 = vrot.lane.b32.xlu0 %v841, 127
  %v1276 = vpop.permute.xlu0 %1275
  %1277 = vrot.lane.b32.xlu0 %v845, 127
  %v1278 = vpop.permute.xlu0 %1277
  %1279 = vrot.lane.b32.xlu0 %v851, 127
  %v1280 = vpop.permute.xlu0 %1279
  %1281 = vrot.lane.b32.xlu0 %v855, 127
  %v1282 = vpop.permute.xlu0 %1281
  %1283 = vrot.lane.b32.xlu0 %v861, 127
  %v1284 = vpop.permute.xlu0 %1283
  %1285 = vrot.lane.b32.xlu0 %v865, 127
  %v1286 = vpop.permute.xlu0 %1285
  %1287 = vrot.lane.b32.xlu0 %v871, 127
  %v1288 = vpop.permute.xlu0 %1287
  %1289 = vrot.lane.b32.xlu0 %v875, 127
  %v1290 = vpop.permute.xlu0 %1289
  %1291 = vrot.lane.b32.xlu0 %v881, 127
  %v1292 = vpop.permute.xlu0 %1291
  %1293 = vrot.lane.b32.xlu0 %v885, 127
  %v1294 = vpop.permute.xlu0 %1293
  %1295 = vrot.lane.b32.xlu0 %v891, 127
  %v1296 = vpop.permute.xlu0 %1295
  %1297 = vrot.lane.b32.xlu0 %v895, 127
  %v1298 = vpop.permute.xlu0 %1297
  %v1299 = vlaneseq
  %v1300 = vand.u32 %v1299, 127
  %vm1301 = vcmp.lt.s32.totalorder %v1300, 127
  %v1302 = vsel %vm1301, %v1216, %v1258
  %v1303 = vsel %vm1301, %v1218, %v1260
  %v1304 = vsel %vm1301, %v1220, %v1262
  %v1305 = vsel %vm1301, %v1222, %v1264
  %v1306 = vsel %vm1301, %v1224, %v1266
  %v1307 = vsel %vm1301, %v1226, %v1268
  %v1308 = vsel %vm1301, %v1228, %v1270
  %v1309 = vsel %vm1301, %v1230, %v1272
  %v1310 = vsel %vm1301, %v1232, %v1274
  %v1311 = vsel %vm1301, %v1234, %v1276
  %v1312 = vsel %vm1301, %v1236, %v1278
  %v1313 = vsel %vm1301, %v1238, %v1280
  %v1314 = vsel %vm1301, %v1240, %v1282
  %v1315 = vsel %vm1301, %v1242, %v1284
  %v1316 = vsel %vm1301, %v1244, %v1286
  %v1317 = vsel %vm1301, %v1246, %v1288
  %v1318 = vsel %vm1301, %v1248, %v1290
  %v1319 = vsel %vm1301, %v1250, %v1292
  %v1320 = vsel %vm1301, %v1252, %v1294
  %v1321 = vsel %vm1301, %v1254, %v1296
  %v1322 = vsel %vm1301, %v1256, %v1298
  %v1323 = vsel %vm1301, %v1258, %v1216
  %v1324 = vsel %vm1301, %v1260, %v1218
  %v1325 = vsel %vm1301, %v1262, %v1220
  %v1326 = vsel %vm1301, %v1264, %v1222
  %v1327 = vsel %vm1301, %v1266, %v1224
  %v1328 = vsel %vm1301, %v1268, %v1226
  %v1329 = vsel %vm1301, %v1270, %v1228
  %v1330 = vsel %vm1301, %v1272, %v1230
  %v1331 = vsel %vm1301, %v1274, %v1232
  %v1332 = vsel %vm1301, %v1276, %v1234
  %v1333 = vsel %vm1301, %v1278, %v1236
  %v1334 = vsel %vm1301, %v1280, %v1238
  %v1335 = vsel %vm1301, %v1282, %v1240
  %v1336 = vsel %vm1301, %v1284, %v1242
  %v1337 = vsel %vm1301, %v1286, %v1244
  %v1338 = vsel %vm1301, %v1288, %v1246
  %v1339 = vsel %vm1301, %v1290, %v1248
  %v1340 = vsel %vm1301, %v1292, %v1250
  %v1341 = vsel %vm1301, %v1294, %v1252
  %v1342 = vsel %vm1301, %v1296, %v1254
  %v1343 = vsel %vm1301, %v1298, %v1256
  %v1344 = vadd.f32 %v689, %v1302
  %v1345 = vadd.f32 %v691, %v1323
  %v1346 = vadd.f32 %v693, %v1303
  %v1347 = vadd.f32 %v695, %v1324
  %v1348 = vadd.f32 %v699, %v1304
  %v1349 = vadd.f32 %v701, %v1325
  %v1350 = vadd.f32 %v703, %v1305
  %v1351 = vadd.f32 %v705, %v1326
  %v1352 = vadd.f32 %v709, %v1306
  %v1353 = vadd.f32 %v711, %v1327
  %v1354 = vadd.f32 %v713, %v1307
  %v1355 = vadd.f32 %v715, %v1328
  %v1356 = vadd.f32 %v719, %v1308
  %v1357 = vadd.f32 %v721, %v1329
  %v1358 = vadd.f32 %v723, %v1309
  %v1359 = vadd.f32 %v725, %v1330
  %v1360 = vadd.f32 %v729, %v1310
  %v1361 = vadd.f32 %v731, %v1331
  %v1362 = vadd.f32 %v733, %v1311
  %v1363 = vadd.f32 %v735, %v1332
  %v1364 = vadd.f32 %v739, %v1312
  %v1365 = vadd.f32 %v741, %v1333
  %v1366 = vadd.f32 %v743, %v1313
  %v1367 = vadd.f32 %v745, %v1334
  %v1368 = vadd.f32 %v749, %v1314
  %v1369 = vadd.f32 %v751, %v1335
  %v1370 = vadd.f32 %v753, %v1315
  %v1371 = vadd.f32 %v755, %v1336
  %v1372 = vadd.f32 %v759, %v1316
  %v1373 = vadd.f32 %v761, %v1337
  %v1374 = vadd.f32 %v763, %v1317
  %v1375 = vadd.f32 %v765, %v1338
  %v1376 = vadd.f32 %v769, %v1318
  %v1377 = vadd.f32 %v771, %v1339
  %v1378 = vadd.f32 %v773, %v1319
  %v1379 = vadd.f32 %v775, %v1340
  %v1380 = vadd.f32 %v779, %v1320
  %v1381 = vadd.f32 %v781, %v1341
  %v1382 = vadd.f32 %v783, %v1321
  %v1383 = vadd.f32 %v785, %v1342
  %v1384 = vadd.f32 %v789, %v1322
  %v1385 = vadd.f32 %v791, %v1343
  %1386 = vrot.lane.b32.xlu0 %v899, 126
  %v1387 = vpop.permute.xlu0 %1386
  %1388 = vrot.lane.b32.xlu0 %v903, 126
  %v1389 = vpop.permute.xlu0 %1388
  %1390 = vrot.lane.b32.xlu0 %v909, 126
  %v1391 = vpop.permute.xlu0 %1390
  %1392 = vrot.lane.b32.xlu0 %v913, 126
  %v1393 = vpop.permute.xlu0 %1392
  %1394 = vrot.lane.b32.xlu0 %v919, 126
  %v1395 = vpop.permute.xlu0 %1394
  %1396 = vrot.lane.b32.xlu0 %v923, 126
  %v1397 = vpop.permute.xlu0 %1396
  %1398 = vrot.lane.b32.xlu0 %v929, 126
  %v1399 = vpop.permute.xlu0 %1398
  %1400 = vrot.lane.b32.xlu0 %v933, 126
  %v1401 = vpop.permute.xlu0 %1400
  %1402 = vrot.lane.b32.xlu0 %v939, 126
  %v1403 = vpop.permute.xlu0 %1402
  %1404 = vrot.lane.b32.xlu0 %v943, 126
  %v1405 = vpop.permute.xlu0 %1404
  %1406 = vrot.lane.b32.xlu0 %v949, 126
  %v1407 = vpop.permute.xlu0 %1406
  %1408 = vrot.lane.b32.xlu0 %v953, 126
  %v1409 = vpop.permute.xlu0 %1408
  %1410 = vrot.lane.b32.xlu0 %v959, 126
  %v1411 = vpop.permute.xlu0 %1410
  %1412 = vrot.lane.b32.xlu0 %v963, 126
  %v1413 = vpop.permute.xlu0 %1412
  %1414 = vrot.lane.b32.xlu0 %v969, 126
  %v1415 = vpop.permute.xlu0 %1414
  %1416 = vrot.lane.b32.xlu0 %v973, 126
  %v1417 = vpop.permute.xlu0 %1416
  %1418 = vrot.lane.b32.xlu0 %v979, 126
  %v1419 = vpop.permute.xlu0 %1418
  %1420 = vrot.lane.b32.xlu0 %v983, 126
  %v1421 = vpop.permute.xlu0 %1420
  %1422 = vrot.lane.b32.xlu0 %v989, 126
  %v1423 = vpop.permute.xlu0 %1422
  %1424 = vrot.lane.b32.xlu0 %v993, 126
  %v1425 = vpop.permute.xlu0 %1424
  %1426 = vrot.lane.b32.xlu0 %v999, 126
  %v1427 = vpop.permute.xlu0 %1426
  %1428 = vrot.lane.b32.xlu0 %v901, 126
  %v1429 = vpop.permute.xlu0 %1428
  %1430 = vrot.lane.b32.xlu0 %v905, 126
  %v1431 = vpop.permute.xlu0 %1430
  %1432 = vrot.lane.b32.xlu0 %v911, 126
  %v1433 = vpop.permute.xlu0 %1432
  %1434 = vrot.lane.b32.xlu0 %v915, 126
  %v1435 = vpop.permute.xlu0 %1434
  %1436 = vrot.lane.b32.xlu0 %v921, 126
  %v1437 = vpop.permute.xlu0 %1436
  %1438 = vrot.lane.b32.xlu0 %v925, 126
  %v1439 = vpop.permute.xlu0 %1438
  %1440 = vrot.lane.b32.xlu0 %v931, 126
  %v1441 = vpop.permute.xlu0 %1440
  %1442 = vrot.lane.b32.xlu0 %v935, 126
  %v1443 = vpop.permute.xlu0 %1442
  %1444 = vrot.lane.b32.xlu0 %v941, 126
  %v1445 = vpop.permute.xlu0 %1444
  %1446 = vrot.lane.b32.xlu0 %v945, 126
  %v1447 = vpop.permute.xlu0 %1446
  %1448 = vrot.lane.b32.xlu0 %v951, 126
  %v1449 = vpop.permute.xlu0 %1448
  %1450 = vrot.lane.b32.xlu0 %v955, 126
  %v1451 = vpop.permute.xlu0 %1450
  %1452 = vrot.lane.b32.xlu0 %v961, 126
  %v1453 = vpop.permute.xlu0 %1452
  %1454 = vrot.lane.b32.xlu0 %v965, 126
  %v1455 = vpop.permute.xlu0 %1454
  %1456 = vrot.lane.b32.xlu0 %v971, 126
  %v1457 = vpop.permute.xlu0 %1456
  %1458 = vrot.lane.b32.xlu0 %v975, 126
  %v1459 = vpop.permute.xlu0 %1458
  %1460 = vrot.lane.b32.xlu0 %v981, 126
  %v1461 = vpop.permute.xlu0 %1460
  %1462 = vrot.lane.b32.xlu0 %v985, 126
  %v1463 = vpop.permute.xlu0 %1462
  %1464 = vrot.lane.b32.xlu0 %v991, 126
  %v1465 = vpop.permute.xlu0 %1464
  %1466 = vrot.lane.b32.xlu0 %v995, 126
  %v1467 = vpop.permute.xlu0 %1466
  %1468 = vrot.lane.b32.xlu0 %v1001, 126
  %v1469 = vpop.permute.xlu0 %1468
  %vm1470 = vcmp.lt.s32.totalorder %v1300, 126
  %v1471 = vsel %vm1470, %v1387, %v1429
  %v1472 = vsel %vm1470, %v1389, %v1431
  %v1473 = vsel %vm1470, %v1391, %v1433
  %v1474 = vsel %vm1470, %v1393, %v1435
  %v1475 = vsel %vm1470, %v1395, %v1437
  %v1476 = vsel %vm1470, %v1397, %v1439
  %v1477 = vsel %vm1470, %v1399, %v1441
  %v1478 = vsel %vm1470, %v1401, %v1443
  %v1479 = vsel %vm1470, %v1403, %v1445
  %v1480 = vsel %vm1470, %v1405, %v1447
  %v1481 = vsel %vm1470, %v1407, %v1449
  %v1482 = vsel %vm1470, %v1409, %v1451
  %v1483 = vsel %vm1470, %v1411, %v1453
  %v1484 = vsel %vm1470, %v1413, %v1455
  %v1485 = vsel %vm1470, %v1415, %v1457
  %v1486 = vsel %vm1470, %v1417, %v1459
  %v1487 = vsel %vm1470, %v1419, %v1461
  %v1488 = vsel %vm1470, %v1421, %v1463
  %v1489 = vsel %vm1470, %v1423, %v1465
  %v1490 = vsel %vm1470, %v1425, %v1467
  %v1491 = vsel %vm1470, %v1427, %v1469
  %v1492 = vsel %vm1470, %v1429, %v1387
  %v1493 = vsel %vm1470, %v1431, %v1389
  %v1494 = vsel %vm1470, %v1433, %v1391
  %v1495 = vsel %vm1470, %v1435, %v1393
  %v1496 = vsel %vm1470, %v1437, %v1395
  %v1497 = vsel %vm1470, %v1439, %v1397
  %v1498 = vsel %vm1470, %v1441, %v1399
  %v1499 = vsel %vm1470, %v1443, %v1401
  %v1500 = vsel %vm1470, %v1445, %v1403
  %v1501 = vsel %vm1470, %v1447, %v1405
  %v1502 = vsel %vm1470, %v1449, %v1407
  %v1503 = vsel %vm1470, %v1451, %v1409
  %v1504 = vsel %vm1470, %v1453, %v1411
  %v1505 = vsel %vm1470, %v1455, %v1413
  %v1506 = vsel %vm1470, %v1457, %v1415
  %v1507 = vsel %vm1470, %v1459, %v1417
  %v1508 = vsel %vm1470, %v1461, %v1419
  %v1509 = vsel %vm1470, %v1463, %v1421
  %v1510 = vsel %vm1470, %v1465, %v1423
  %v1511 = vsel %vm1470, %v1467, %v1425
  %v1512 = vsel %vm1470, %v1469, %v1427
  %v1513 = vadd.f32 %v1344, %v1471
  %v1514 = vadd.f32 %v1345, %v1492
  %v1515 = vadd.f32 %v1346, %v1472
  %v1516 = vadd.f32 %v1347, %v1493
  %v1517 = vadd.f32 %v1348, %v1473
  %v1518 = vadd.f32 %v1349, %v1494
  %v1519 = vadd.f32 %v1350, %v1474
  %v1520 = vadd.f32 %v1351, %v1495
  %v1521 = vadd.f32 %v1352, %v1475
  %v1522 = vadd.f32 %v1353, %v1496
  %v1523 = vadd.f32 %v1354, %v1476
  %v1524 = vadd.f32 %v1355, %v1497
  %v1525 = vadd.f32 %v1356, %v1477
  %v1526 = vadd.f32 %v1357, %v1498
  %v1527 = vadd.f32 %v1358, %v1478
  %v1528 = vadd.f32 %v1359, %v1499
  %v1529 = vadd.f32 %v1360, %v1479
  %v1530 = vadd.f32 %v1361, %v1500
  %v1531 = vadd.f32 %v1362, %v1480
  %v1532 = vadd.f32 %v1363, %v1501
  %v1533 = vadd.f32 %v1364, %v1481
  %v1534 = vadd.f32 %v1365, %v1502
  %v1535 = vadd.f32 %v1366, %v1482
  %v1536 = vadd.f32 %v1367, %v1503
  %v1537 = vadd.f32 %v1368, %v1483
  %v1538 = vadd.f32 %v1369, %v1504
  %v1539 = vadd.f32 %v1370, %v1484
  %v1540 = vadd.f32 %v1371, %v1505
  %v1541 = vadd.f32 %v1372, %v1485
  %v1542 = vadd.f32 %v1373, %v1506
  %v1543 = vadd.f32 %v1374, %v1486
  %v1544 = vadd.f32 %v1375, %v1507
  %v1545 = vadd.f32 %v1376, %v1487
  %v1546 = vadd.f32 %v1377, %v1508
  %v1547 = vadd.f32 %v1378, %v1488
  %v1548 = vadd.f32 %v1379, %v1509
  %v1549 = vadd.f32 %v1380, %v1489
  %v1550 = vadd.f32 %v1381, %v1510
  %v1551 = vadd.f32 %v1382, %v1490
  %v1552 = vadd.f32 %v1383, %v1511
  %v1553 = vadd.f32 %v1384, %v1491
  %v1554 = vadd.f32 %v1385, %v1512
  %1555 = vrot.lane.b32.xlu0 %v1003, 125
  %v1556 = vpop.permute.xlu0 %1555
  %1557 = vrot.lane.b32.xlu0 %v1009, 125
  %v1558 = vpop.permute.xlu0 %1557
  %1559 = vrot.lane.b32.xlu0 %v1013, 125
  %v1560 = vpop.permute.xlu0 %1559
  %1561 = vrot.lane.b32.xlu0 %v1019, 125
  %v1562 = vpop.permute.xlu0 %1561
  %1563 = vrot.lane.b32.xlu0 %v1023, 125
  %v1564 = vpop.permute.xlu0 %1563
  %1565 = vrot.lane.b32.xlu0 %v1029, 125
  %v1566 = vpop.permute.xlu0 %1565
  %1567 = vrot.lane.b32.xlu0 %v1033, 125
  %v1568 = vpop.permute.xlu0 %1567
  %1569 = vrot.lane.b32.xlu0 %v1039, 125
  %v1570 = vpop.permute.xlu0 %1569
  %1571 = vrot.lane.b32.xlu0 %v1043, 125
  %v1572 = vpop.permute.xlu0 %1571
  %1573 = vrot.lane.b32.xlu0 %v1049, 125
  %v1574 = vpop.permute.xlu0 %1573
  %1575 = vrot.lane.b32.xlu0 %v1053, 125
  %v1576 = vpop.permute.xlu0 %1575
  %1577 = vrot.lane.b32.xlu0 %v1059, 125
  %v1578 = vpop.permute.xlu0 %1577
  %1579 = vrot.lane.b32.xlu0 %v1063, 125
  %v1580 = vpop.permute.xlu0 %1579
  %1581 = vrot.lane.b32.xlu0 %v1069, 125
  %v1582 = vpop.permute.xlu0 %1581
  %1583 = vrot.lane.b32.xlu0 %v1073, 125
  %v1584 = vpop.permute.xlu0 %1583
  %1585 = vrot.lane.b32.xlu0 %v1079, 125
  %v1586 = vpop.permute.xlu0 %1585
  %1587 = vrot.lane.b32.xlu0 %v1083, 125
  %v1588 = vpop.permute.xlu0 %1587
  %1589 = vrot.lane.b32.xlu0 %v1089, 125
  %v1590 = vpop.permute.xlu0 %1589
  %1591 = vrot.lane.b32.xlu0 %v1093, 125
  %v1592 = vpop.permute.xlu0 %1591
  %1593 = vrot.lane.b32.xlu0 %v1099, 125
  %v1594 = vpop.permute.xlu0 %1593
  %1595 = vrot.lane.b32.xlu0 %v1103, 125
  %v1596 = vpop.permute.xlu0 %1595
  %1597 = vrot.lane.b32.xlu0 %v1005, 125
  %v1598 = vpop.permute.xlu0 %1597
  %1599 = vrot.lane.b32.xlu0 %v1011, 125
  %v1600 = vpop.permute.xlu0 %1599
  %1601 = vrot.lane.b32.xlu0 %v1015, 125
  %v1602 = vpop.permute.xlu0 %1601
  %1603 = vrot.lane.b32.xlu0 %v1021, 125
  %v1604 = vpop.permute.xlu0 %1603
  %1605 = vrot.lane.b32.xlu0 %v1025, 125
  %v1606 = vpop.permute.xlu0 %1605
  %1607 = vrot.lane.b32.xlu0 %v1031, 125
  %v1608 = vpop.permute.xlu0 %1607
  %1609 = vrot.lane.b32.xlu0 %v1035, 125
  %v1610 = vpop.permute.xlu0 %1609
  %1611 = vrot.lane.b32.xlu0 %v1041, 125
  %v1612 = vpop.permute.xlu0 %1611
  %1613 = vrot.lane.b32.xlu0 %v1045, 125
  %v1614 = vpop.permute.xlu0 %1613
  %1615 = vrot.lane.b32.xlu0 %v1051, 125
  %v1616 = vpop.permute.xlu0 %1615
  %1617 = vrot.lane.b32.xlu0 %v1055, 125
  %v1618 = vpop.permute.xlu0 %1617
  %1619 = vrot.lane.b32.xlu0 %v1061, 125
  %v1620 = vpop.permute.xlu0 %1619
  %1621 = vrot.lane.b32.xlu0 %v1065, 125
  %v1622 = vpop.permute.xlu0 %1621
  %1623 = vrot.lane.b32.xlu0 %v1071, 125
  %v1624 = vpop.permute.xlu0 %1623
  %1625 = vrot.lane.b32.xlu0 %v1075, 125
  %v1626 = vpop.permute.xlu0 %1625
  %1627 = vrot.lane.b32.xlu0 %v1081, 125
  %v1628 = vpop.permute.xlu0 %1627
  %1629 = vrot.lane.b32.xlu0 %v1085, 125
  %v1630 = vpop.permute.xlu0 %1629
  %1631 = vrot.lane.b32.xlu0 %v1091, 125
  %v1632 = vpop.permute.xlu0 %1631
  %1633 = vrot.lane.b32.xlu0 %v1095, 125
  %v1634 = vpop.permute.xlu0 %1633
  %1635 = vrot.lane.b32.xlu0 %v1101, 125
  %v1636 = vpop.permute.xlu0 %1635
  %1637 = vrot.lane.b32.xlu0 %v1105, 125
  %v1638 = vpop.permute.xlu0 %1637
  %vm1639 = vcmp.lt.s32.totalorder %v1300, 125
  %v1640 = vsel %vm1639, %v1556, %v1598
  %v1641 = vsel %vm1639, %v1558, %v1600
  %v1642 = vsel %vm1639, %v1560, %v1602
  %v1643 = vsel %vm1639, %v1562, %v1604
  %v1644 = vsel %vm1639, %v1564, %v1606
  %v1645 = vsel %vm1639, %v1566, %v1608
  %v1646 = vsel %vm1639, %v1568, %v1610
  %v1647 = vsel %vm1639, %v1570, %v1612
  %v1648 = vsel %vm1639, %v1572, %v1614
  %v1649 = vsel %vm1639, %v1574, %v1616
  %v1650 = vsel %vm1639, %v1576, %v1618
  %v1651 = vsel %vm1639, %v1578, %v1620
  %v1652 = vsel %vm1639, %v1580, %v1622
  %v1653 = vsel %vm1639, %v1582, %v1624
  %v1654 = vsel %vm1639, %v1584, %v1626
  %v1655 = vsel %vm1639, %v1586, %v1628
  %v1656 = vsel %vm1639, %v1588, %v1630
  %v1657 = vsel %vm1639, %v1590, %v1632
  %v1658 = vsel %vm1639, %v1592, %v1634
  %v1659 = vsel %vm1639, %v1594, %v1636
  %v1660 = vsel %vm1639, %v1596, %v1638
  %v1661 = vsel %vm1639, %v1598, %v1556
  %v1662 = vsel %vm1639, %v1600, %v1558
  %v1663 = vsel %vm1639, %v1602, %v1560
  %v1664 = vsel %vm1639, %v1604, %v1562
  %v1665 = vsel %vm1639, %v1606, %v1564
  %v1666 = vsel %vm1639, %v1608, %v1566
  %v1667 = vsel %vm1639, %v1610, %v1568
  %v1668 = vsel %vm1639, %v1612, %v1570
  %v1669 = vsel %vm1639, %v1614, %v1572
  %v1670 = vsel %vm1639, %v1616, %v1574
  %v1671 = vsel %vm1639, %v1618, %v1576
  %v1672 = vsel %vm1639, %v1620, %v1578
  %v1673 = vsel %vm1639, %v1622, %v1580
  %v1674 = vsel %vm1639, %v1624, %v1582
  %v1675 = vsel %vm1639, %v1626, %v1584
  %v1676 = vsel %vm1639, %v1628, %v1586
  %v1677 = vsel %vm1639, %v1630, %v1588
  %v1678 = vsel %vm1639, %v1632, %v1590
  %v1679 = vsel %vm1639, %v1634, %v1592
  %v1680 = vsel %vm1639, %v1636, %v1594
  %v1681 = vsel %vm1639, %v1638, %v1596
  %v1682 = vadd.f32 %v1513, %v1640
  %v1683 = vadd.f32 %v1514, %v1661
  %v1684 = vadd.f32 %v1515, %v1641
  %v1685 = vadd.f32 %v1516, %v1662
  %v1686 = vadd.f32 %v1517, %v1642
  %v1687 = vadd.f32 %v1518, %v1663
  %v1688 = vadd.f32 %v1519, %v1643
  %v1689 = vadd.f32 %v1520, %v1664
  %v1690 = vadd.f32 %v1521, %v1644
  %v1691 = vadd.f32 %v1522, %v1665
  %v1692 = vadd.f32 %v1523, %v1645
  %v1693 = vadd.f32 %v1524, %v1666
  %v1694 = vadd.f32 %v1525, %v1646
  %v1695 = vadd.f32 %v1526, %v1667
  %v1696 = vadd.f32 %v1527, %v1647
  %v1697 = vadd.f32 %v1528, %v1668
  %v1698 = vadd.f32 %v1529, %v1648
  %v1699 = vadd.f32 %v1530, %v1669
  %v1700 = vadd.f32 %v1531, %v1649
  %v1701 = vadd.f32 %v1532, %v1670
  %v1702 = vadd.f32 %v1533, %v1650
  %v1703 = vadd.f32 %v1534, %v1671
  %v1704 = vadd.f32 %v1535, %v1651
  %v1705 = vadd.f32 %v1536, %v1672
  %v1706 = vadd.f32 %v1537, %v1652
  %v1707 = vadd.f32 %v1538, %v1673
  %v1708 = vadd.f32 %v1539, %v1653
  %v1709 = vadd.f32 %v1540, %v1674
  %v1710 = vadd.f32 %v1541, %v1654
  %v1711 = vadd.f32 %v1542, %v1675
  %v1712 = vadd.f32 %v1543, %v1655
  %v1713 = vadd.f32 %v1544, %v1676
  %v1714 = vadd.f32 %v1545, %v1656
  %v1715 = vadd.f32 %v1546, %v1677
  %v1716 = vadd.f32 %v1547, %v1657
  %v1717 = vadd.f32 %v1548, %v1678
  %v1718 = vadd.f32 %v1549, %v1658
  %v1719 = vadd.f32 %v1550, %v1679
  %v1720 = vadd.f32 %v1551, %v1659
  %v1721 = vadd.f32 %v1552, %v1680
  %v1722 = vadd.f32 %v1553, %v1660
  %v1723 = vadd.f32 %v1554, %v1681
  %1724 = vrot.lane.b32.xlu0 %v1109, 124
  %v1725 = vpop.permute.xlu0 %1724
  %1726 = vrot.lane.b32.xlu0 %v1113, 124
  %v1727 = vpop.permute.xlu0 %1726
  %1728 = vrot.lane.b32.xlu0 %v1119, 124
  %v1729 = vpop.permute.xlu0 %1728
  %1730 = vrot.lane.b32.xlu0 %v1123, 124
  %v1731 = vpop.permute.xlu0 %1730
  %1732 = vrot.lane.b32.xlu0 %v1129, 124
  %v1733 = vpop.permute.xlu0 %1732
  %1734 = vrot.lane.b32.xlu0 %v1133, 124
  %v1735 = vpop.permute.xlu0 %1734
  %1736 = vrot.lane.b32.xlu0 %v1139, 124
  %v1737 = vpop.permute.xlu0 %1736
  %1738 = vrot.lane.b32.xlu0 %v1143, 124
  %v1739 = vpop.permute.xlu0 %1738
  %1740 = vrot.lane.b32.xlu0 %v1149, 124
  %v1741 = vpop.permute.xlu0 %1740
  %1742 = vrot.lane.b32.xlu0 %v1153, 124
  %v1743 = vpop.permute.xlu0 %1742
  %1744 = vrot.lane.b32.xlu0 %v1159, 124
  %v1745 = vpop.permute.xlu0 %1744
  %1746 = vrot.lane.b32.xlu0 %v1163, 124
  %v1747 = vpop.permute.xlu0 %1746
  %1748 = vrot.lane.b32.xlu0 %v1169, 124
  %v1749 = vpop.permute.xlu0 %1748
  %1750 = vrot.lane.b32.xlu0 %v1173, 124
  %v1751 = vpop.permute.xlu0 %1750
  %1752 = vrot.lane.b32.xlu0 %v1179, 124
  %v1753 = vpop.permute.xlu0 %1752
  %1754 = vrot.lane.b32.xlu0 %v1183, 124
  %v1755 = vpop.permute.xlu0 %1754
  %1756 = vrot.lane.b32.xlu0 %v1189, 124
  %v1757 = vpop.permute.xlu0 %1756
  %1758 = vrot.lane.b32.xlu0 %v1193, 124
  %v1759 = vpop.permute.xlu0 %1758
  %1760 = vrot.lane.b32.xlu0 %v1199, 124
  %v1761 = vpop.permute.xlu0 %1760
  %1762 = vrot.lane.b32.xlu0 %v1203, 124
  %v1763 = vpop.permute.xlu0 %1762
  %1764 = vrot.lane.b32.xlu0 %v1209, 124
  %v1765 = vpop.permute.xlu0 %1764
  %1766 = vrot.lane.b32.xlu0 %v1111, 124
  %v1767 = vpop.permute.xlu0 %1766
  %1768 = vrot.lane.b32.xlu0 %v1115, 124
  %v1769 = vpop.permute.xlu0 %1768
  %1770 = vrot.lane.b32.xlu0 %v1121, 124
  %v1771 = vpop.permute.xlu0 %1770
  %1772 = vrot.lane.b32.xlu0 %v1125, 124
  %v1773 = vpop.permute.xlu0 %1772
  %1774 = vrot.lane.b32.xlu0 %v1131, 124
  %v1775 = vpop.permute.xlu0 %1774
  %1776 = vrot.lane.b32.xlu0 %v1135, 124
  %v1777 = vpop.permute.xlu0 %1776
  %1778 = vrot.lane.b32.xlu0 %v1141, 124
  %v1779 = vpop.permute.xlu0 %1778
  %1780 = vrot.lane.b32.xlu0 %v1145, 124
  %v1781 = vpop.permute.xlu0 %1780
  %1782 = vrot.lane.b32.xlu0 %v1151, 124
  %v1783 = vpop.permute.xlu0 %1782
  %1784 = vrot.lane.b32.xlu0 %v1155, 124
  %v1785 = vpop.permute.xlu0 %1784
  %1786 = vrot.lane.b32.xlu0 %v1161, 124
  %v1787 = vpop.permute.xlu0 %1786
  %1788 = vrot.lane.b32.xlu0 %v1165, 124
  %v1789 = vpop.permute.xlu0 %1788
  %1790 = vrot.lane.b32.xlu0 %v1171, 124
  %v1791 = vpop.permute.xlu0 %1790
  %1792 = vrot.lane.b32.xlu0 %v1175, 124
  %v1793 = vpop.permute.xlu0 %1792
  %1794 = vrot.lane.b32.xlu0 %v1181, 124
  %v1795 = vpop.permute.xlu0 %1794
  %1796 = vrot.lane.b32.xlu0 %v1185, 124
  %v1797 = vpop.permute.xlu0 %1796
  %1798 = vrot.lane.b32.xlu0 %v1191, 124
  %v1799 = vpop.permute.xlu0 %1798
  %1800 = vrot.lane.b32.xlu0 %v1195, 124
  %v1801 = vpop.permute.xlu0 %1800
  %1802 = vrot.lane.b32.xlu0 %v1201, 124
  %v1803 = vpop.permute.xlu0 %1802
  %1804 = vrot.lane.b32.xlu0 %v1205, 124
  %v1805 = vpop.permute.xlu0 %1804
  %1806 = vrot.lane.b32.xlu0 %v1211, 124
  %v1807 = vpop.permute.xlu0 %1806
  %vm1808 = vcmp.lt.s32.totalorder %v1300, 124
  %v1809 = vsel %vm1808, %v1725, %v1767
  %v1810 = vsel %vm1808, %v1727, %v1769
  %v1811 = vsel %vm1808, %v1729, %v1771
  %v1812 = vsel %vm1808, %v1731, %v1773
  %v1813 = vsel %vm1808, %v1733, %v1775
  %v1814 = vsel %vm1808, %v1735, %v1777
  %v1815 = vsel %vm1808, %v1737, %v1779
  %v1816 = vsel %vm1808, %v1739, %v1781
  %v1817 = vsel %vm1808, %v1741, %v1783
  %v1818 = vsel %vm1808, %v1743, %v1785
  %v1819 = vsel %vm1808, %v1745, %v1787
  %v1820 = vsel %vm1808, %v1747, %v1789
  %v1821 = vsel %vm1808, %v1749, %v1791
  %v1822 = vsel %vm1808, %v1751, %v1793
  %v1823 = vsel %vm1808, %v1753, %v1795
  %v1824 = vsel %vm1808, %v1755, %v1797
  %v1825 = vsel %vm1808, %v1757, %v1799
  %v1826 = vsel %vm1808, %v1759, %v1801
  %v1827 = vsel %vm1808, %v1761, %v1803
  %v1828 = vsel %vm1808, %v1763, %v1805
  %v1829 = vsel %vm1808, %v1765, %v1807
  %v1830 = vsel %vm1808, %v1767, %v1725
  %v1831 = vsel %vm1808, %v1769, %v1727
  %v1832 = vsel %vm1808, %v1771, %v1729
  %v1833 = vsel %vm1808, %v1773, %v1731
  %v1834 = vsel %vm1808, %v1775, %v1733
  %v1835 = vsel %vm1808, %v1777, %v1735
  %v1836 = vsel %vm1808, %v1779, %v1737
  %v1837 = vsel %vm1808, %v1781, %v1739
  %v1838 = vsel %vm1808, %v1783, %v1741
  %v1839 = vsel %vm1808, %v1785, %v1743
  %v1840 = vsel %vm1808, %v1787, %v1745
  %v1841 = vsel %vm1808, %v1789, %v1747
  %v1842 = vsel %vm1808, %v1791, %v1749
  %v1843 = vsel %vm1808, %v1793, %v1751
  %v1844 = vsel %vm1808, %v1795, %v1753
  %v1845 = vsel %vm1808, %v1797, %v1755
  %v1846 = vsel %vm1808, %v1799, %v1757
  %v1847 = vsel %vm1808, %v1801, %v1759
  %v1848 = vsel %vm1808, %v1803, %v1761
  %v1849 = vsel %vm1808, %v1805, %v1763
  %v1850 = vsel %vm1808, %v1807, %v1765
  %v1851 = vadd.f32 %v1682, %v1809
  %v1852 = vadd.f32 %v1683, %v1830
  %v1853 = vadd.f32 %v1684, %v1810
  %v1854 = vadd.f32 %v1685, %v1831
  %v1855 = vadd.f32 %v1686, %v1811
  %v1856 = vadd.f32 %v1687, %v1832
  %v1857 = vadd.f32 %v1688, %v1812
  %v1858 = vadd.f32 %v1689, %v1833
  %v1859 = vadd.f32 %v1690, %v1813
  %v1860 = vadd.f32 %v1691, %v1834
  %v1861 = vadd.f32 %v1692, %v1814
  %v1862 = vadd.f32 %v1693, %v1835
  %v1863 = vadd.f32 %v1694, %v1815
  %v1864 = vadd.f32 %v1695, %v1836
  %v1865 = vadd.f32 %v1696, %v1816
  %v1866 = vadd.f32 %v1697, %v1837
  %v1867 = vadd.f32 %v1698, %v1817
  %v1868 = vadd.f32 %v1699, %v1838
  %v1869 = vadd.f32 %v1700, %v1818
  %v1870 = vadd.f32 %v1701, %v1839
  %v1871 = vadd.f32 %v1702, %v1819
  %v1872 = vadd.f32 %v1703, %v1840
  %v1873 = vadd.f32 %v1704, %v1820
  %v1874 = vadd.f32 %v1705, %v1841
  %v1875 = vadd.f32 %v1706, %v1821
  %v1876 = vadd.f32 %v1707, %v1842
  %v1877 = vadd.f32 %v1708, %v1822
  %v1878 = vadd.f32 %v1709, %v1843
  %v1879 = vadd.f32 %v1710, %v1823
  %v1880 = vadd.f32 %v1711, %v1844
  %v1881 = vadd.f32 %v1712, %v1824
  %v1882 = vadd.f32 %v1713, %v1845
  %v1883 = vadd.f32 %v1714, %v1825
  %v1884 = vadd.f32 %v1715, %v1846
  %v1885 = vadd.f32 %v1716, %v1826
  %v1886 = vadd.f32 %v1717, %v1847
  %v1887 = vadd.f32 %v1718, %v1827
  %v1888 = vadd.f32 %v1719, %v1848
  %v1889 = vadd.f32 %v1720, %v1828
  %v1890 = vadd.f32 %v1721, %v1849
  %v1891 = vadd.f32 %v1722, %v1829
  %v1892 = vadd.f32 %v1723, %v1850
  %v1893 = vld [vmem:[%s2] sm:$0xff]
  %v1894 = vld [vmem:[%s2 + $0x8] sm:$0xff]
  %v1895 = vld [vmem:[%s2 + $0x10] sm:$0xff]
  %v1896 = vld [vmem:[%s2 + $0x18] sm:$0xff]
  %v1897 = vld [vmem:[%s2 + $0x20] sm:$0xff]
  %v1898 = vld [vmem:[%s2 + $0x28] sm:$0xff]
  %v1899 = vld [vmem:[%s2 + $0x30] sm:$0xff]
  %v1900 = vld [vmem:[%s2 + $0x38] sm:$0xff]
  %v1901 = vld [vmem:[%s2 + $0x40] sm:$0xff]
  %v1902 = vld [vmem:[%s2 + $0x48] sm:$0xff]
  %v1903 = vld [vmem:[%s2 + $0x50] sm:$0xff]
  %v1904 = vld [vmem:[%s2 + $0x58] sm:$0xff]
  %v1905 = vld [vmem:[%s2 + $0x60] sm:$0xff]
  %v1906 = vld [vmem:[%s2 + $0x68] sm:$0xff]
  %v1907 = vld [vmem:[%s2 + $0x70] sm:$0xff]
  %v1908 = vld [vmem:[%s2 + $0x78] sm:$0xff]
  %v1909 = vld [vmem:[%s2 + $0x80] sm:$0xff]
  %v1910 = vld [vmem:[%s2 + $0x88] sm:$0xff]
  %v1911 = vld [vmem:[%s2 + $0x90] sm:$0xff]
  %v1912 = vld [vmem:[%s2 + $0x98] sm:$0xff]
  %v1913 = vld [vmem:[%s2 + $0xa0] sm:$0xff]
  %1915 = vset.pattern.permute.xlu0 0
  %1916 = vperm.xlu0 %1915, %v1893
  %v1917 = vpop.permute.xlu0 %1916
  %1920 = vset.pattern.permute.xlu0 0
  %1921 = vperm.xlu0 %1920, %v1894
  %v1922 = vpop.permute.xlu0 %1921
  %1925 = vset.pattern.permute.xlu0 0
  %1926 = vperm.xlu0 %1925, %v1895
  %v1927 = vpop.permute.xlu0 %1926
  %1930 = vset.pattern.permute.xlu0 0
  %1931 = vperm.xlu0 %1930, %v1896
  %v1932 = vpop.permute.xlu0 %1931
  %1935 = vset.pattern.permute.xlu0 0
  %1936 = vperm.xlu0 %1935, %v1897
  %v1937 = vpop.permute.xlu0 %1936
  %1940 = vset.pattern.permute.xlu0 0
  %1941 = vperm.xlu0 %1940, %v1898
  %v1942 = vpop.permute.xlu0 %1941
  %1945 = vset.pattern.permute.xlu0 0
  %1946 = vperm.xlu0 %1945, %v1899
  %v1947 = vpop.permute.xlu0 %1946
  %1950 = vset.pattern.permute.xlu0 0
  %1951 = vperm.xlu0 %1950, %v1900
  %v1952 = vpop.permute.xlu0 %1951
  %1955 = vset.pattern.permute.xlu0 0
  %1956 = vperm.xlu0 %1955, %v1901
  %v1957 = vpop.permute.xlu0 %1956
  %1960 = vset.pattern.permute.xlu0 0
  %1961 = vperm.xlu0 %1960, %v1902
  %v1962 = vpop.permute.xlu0 %1961
  %1965 = vset.pattern.permute.xlu0 0
  %1966 = vperm.xlu0 %1965, %v1903
  %v1967 = vpop.permute.xlu0 %1966
  %1970 = vset.pattern.permute.xlu0 0
  %1971 = vperm.xlu0 %1970, %v1904
  %v1972 = vpop.permute.xlu0 %1971
  %1975 = vset.pattern.permute.xlu0 0
  %1976 = vperm.xlu0 %1975, %v1905
  %v1977 = vpop.permute.xlu0 %1976
  %1980 = vset.pattern.permute.xlu0 0
  %1981 = vperm.xlu0 %1980, %v1906
  %v1982 = vpop.permute.xlu0 %1981
  %1985 = vset.pattern.permute.xlu0 0
  %1986 = vperm.xlu0 %1985, %v1907
  %v1987 = vpop.permute.xlu0 %1986
  %1990 = vset.pattern.permute.xlu0 0
  %1991 = vperm.xlu0 %1990, %v1908
  %v1992 = vpop.permute.xlu0 %1991
  %1995 = vset.pattern.permute.xlu0 0
  %1996 = vperm.xlu0 %1995, %v1909
  %v1997 = vpop.permute.xlu0 %1996
  %2000 = vset.pattern.permute.xlu0 0
  %2001 = vperm.xlu0 %2000, %v1910
  %v2002 = vpop.permute.xlu0 %2001
  %2005 = vset.pattern.permute.xlu0 0
  %2006 = vperm.xlu0 %2005, %v1911
  %v2007 = vpop.permute.xlu0 %2006
  %2010 = vset.pattern.permute.xlu0 0
  %2011 = vperm.xlu0 %2010, %v1912
  %v2012 = vpop.permute.xlu0 %2011
  %2015 = vset.pattern.permute.xlu0 0
  %2016 = vperm.xlu0 %2015, %v1913
  %v2017 = vpop.permute.xlu0 %2016
  %v2019 = vadd.f32 %v1851, %v1917
  %v2020 = vadd.f32 %v1852, %v1917
  %v2021 = vadd.f32 %v1853, %v1922
  %v2022 = vadd.f32 %v1854, %v1922
  %v2023 = vadd.f32 %v1855, %v1927
  %v2024 = vadd.f32 %v1856, %v1927
  %v2025 = vadd.f32 %v1857, %v1932
  %v2026 = vadd.f32 %v1858, %v1932
  %v2027 = vadd.f32 %v1859, %v1937
  %v2028 = vadd.f32 %v1860, %v1937
  %v2029 = vadd.f32 %v1861, %v1942
  %v2030 = vadd.f32 %v1862, %v1942
  %v2031 = vadd.f32 %v1863, %v1947
  %v2032 = vadd.f32 %v1864, %v1947
  %v2033 = vadd.f32 %v1865, %v1952
  %v2034 = vadd.f32 %v1866, %v1952
  %v2035 = vadd.f32 %v1867, %v1957
  %v2036 = vadd.f32 %v1868, %v1957
  %v2037 = vadd.f32 %v1869, %v1962
  %v2038 = vadd.f32 %v1870, %v1962
  %v2039 = vadd.f32 %v1871, %v1967
  %v2040 = vadd.f32 %v1872, %v1967
  %v2041 = vadd.f32 %v1873, %v1972
  %v2042 = vadd.f32 %v1874, %v1972
  %v2043 = vadd.f32 %v1875, %v1977
  %v2044 = vadd.f32 %v1876, %v1977
  %v2045 = vadd.f32 %v1877, %v1982
  %v2046 = vadd.f32 %v1878, %v1982
  %v2047 = vadd.f32 %v1879, %v1987
  %v2048 = vadd.f32 %v1880, %v1987
  %v2049 = vadd.f32 %v1881, %v1992
  %v2050 = vadd.f32 %v1882, %v1992
  %v2051 = vadd.f32 %v1883, %v1997
  %v2052 = vadd.f32 %v1884, %v1997
  %v2053 = vadd.f32 %v1885, %v2002
  %v2054 = vadd.f32 %v1886, %v2002
  %v2055 = vadd.f32 %v1887, %v2007
  %v2056 = vadd.f32 %v1888, %v2007
  %v2057 = vadd.f32 %v1889, %v2012
  %v2058 = vadd.f32 %v1890, %v2012
  %v2059 = vadd.f32 %v1891, %v2017
  %v2060 = vadd.f32 %v1892, %v2017
  %v2061 = vmax.f32 %v2019, 0.0
  %v2062 = vmax.f32 %v2020, 0.0
  %v2063 = vmax.f32 %v2021, 0.0
  %v2064 = vmax.f32 %v2022, 0.0
  %v2065 = vmax.f32 %v2023, 0.0
  %v2066 = vmax.f32 %v2024, 0.0
  %v2067 = vmax.f32 %v2025, 0.0
  %v2068 = vmax.f32 %v2026, 0.0
  %v2069 = vmax.f32 %v2027, 0.0
  %v2070 = vmax.f32 %v2028, 0.0
  %v2071 = vmax.f32 %v2029, 0.0
  %v2072 = vmax.f32 %v2030, 0.0
  %v2073 = vmax.f32 %v2031, 0.0
  %v2074 = vmax.f32 %v2032, 0.0
  %v2075 = vmax.f32 %v2033, 0.0
  %v2076 = vmax.f32 %v2034, 0.0
  %v2077 = vmax.f32 %v2035, 0.0
  %v2078 = vmax.f32 %v2036, 0.0
  %v2079 = vmax.f32 %v2037, 0.0
  %v2080 = vmax.f32 %v2038, 0.0
  %v2081 = vmax.f32 %v2039, 0.0
  %v2082 = vmax.f32 %v2040, 0.0
  %v2083 = vmax.f32 %v2041, 0.0
  %v2084 = vmax.f32 %v2042, 0.0
  %v2085 = vmax.f32 %v2043, 0.0
  %v2086 = vmax.f32 %v2044, 0.0
  %v2087 = vmax.f32 %v2045, 0.0
  %v2088 = vmax.f32 %v2046, 0.0
  %v2089 = vmax.f32 %v2047, 0.0
  %v2090 = vmax.f32 %v2048, 0.0
  %v2091 = vmax.f32 %v2049, 0.0
  %v2092 = vmax.f32 %v2050, 0.0
  %v2093 = vmax.f32 %v2051, 0.0
  %v2094 = vmax.f32 %v2052, 0.0
  %v2095 = vmax.f32 %v2053, 0.0
  %v2096 = vmax.f32 %v2054, 0.0
  %v2097 = vmax.f32 %v2055, 0.0
  %v2098 = vmax.f32 %v2056, 0.0
  %v2099 = vmax.f32 %v2057, 0.0
  %v2100 = vmax.f32 %v2058, 0.0
  %v2101 = vmax.f32 %v2059, 0.0
  %v2102 = vmax.f32 %v2060, 0.0
  %v2103 = vpack.c.bf16 %v2063, %v2061
  %v2104 = vpack.c.bf16 %v2064, %v2062
  %v2105 = vpack.c.bf16 %v2067, %v2065
  %v2106 = vpack.c.bf16 %v2068, %v2066
  %v2107 = vpack.c.bf16 %v2071, %v2069
  %v2108 = vpack.c.bf16 %v2072, %v2070
  %v2109 = vpack.c.bf16 %v2075, %v2073
  %v2110 = vpack.c.bf16 %v2076, %v2074
  %v2111 = vpack.c.bf16 %v2079, %v2077
  %v2112 = vpack.c.bf16 %v2080, %v2078
  %v2113 = vpack.c.bf16 %v2083, %v2081
  %v2114 = vpack.c.bf16 %v2084, %v2082
  %v2115 = vpack.c.bf16 %v2087, %v2085
  %v2116 = vpack.c.bf16 %v2088, %v2086
  %v2117 = vpack.c.bf16 %v2091, %v2089
  %v2118 = vpack.c.bf16 %v2092, %v2090
  %v2119 = vpack.c.bf16 %v2095, %v2093
  %v2120 = vpack.c.bf16 %v2096, %v2094
  %v2121 = vpack.c.bf16 %v2099, %v2097
  %v2122 = vpack.c.bf16 %v2100, %v2098
  %v2123 = vpack.c.bf16 %v2101, %v2101
  %v2124 = vpack.c.bf16 %v2102, %v2102
  %v2125 = vld [vmem:[%s3] sm:$0xff]
  %v2126 = vld [vmem:[%s3 + $0x8] sm:$0xff]
  %v2127 = vld [vmem:[%s3 + $0x10] sm:$0xff]
  %v2128 = vld [vmem:[%s3 + $0x18] sm:$0xff]
  %v2129 = vld [vmem:[%s3 + $0x20] sm:$0xff]
  %v2130 = vld [vmem:[%s3 + $0x28] sm:$0xff]
  %v2131 = vld [vmem:[%s3 + $0x30] sm:$0xff]
  %v2132 = vld [vmem:[%s3 + $0x38] sm:$0xff]
  %v2133 = vld [vmem:[%s3 + $0x40] sm:$0xff]
  %v2134 = vld [vmem:[%s3 + $0x48] sm:$0xff]
  %v2135 = vld [vmem:[%s3 + $0x50] sm:$0x33]
  %v2147 = vunpack.c.l.b16 %v2125
  %v2148 = vunpack.c.h.b16 %v2125
  %v2149 = vunpack.c.l.b16 %v2126
  %v2150 = vunpack.c.h.b16 %v2126
  %v2151 = vunpack.c.l.b16 %v2127
  %v2152 = vunpack.c.h.b16 %v2127
  %v2153 = vunpack.c.l.b16 %v2128
  %v2154 = vunpack.c.h.b16 %v2128
  %v2155 = vunpack.c.l.b16 %v2129
  %v2156 = vunpack.c.h.b16 %v2129
  %v2157 = vunpack.c.l.b16 %v2130
  %v2158 = vunpack.c.h.b16 %v2130
  %v2159 = vunpack.c.l.b16 %v2131
  %v2160 = vunpack.c.h.b16 %v2131
  %v2161 = vunpack.c.l.b16 %v2132
  %v2162 = vunpack.c.h.b16 %v2132
  %v2163 = vunpack.c.l.b16 %v2133
  %v2164 = vunpack.c.h.b16 %v2133
  %v2165 = vunpack.c.l.b16 %v2134
  %v2166 = vunpack.c.h.b16 %v2134
  %v2167 = vunpack.c.l.b16 %v2135
  %v2168 = vunpack.c.h.b16 %v2135
  %v2169 = vpack.c.b16 %v2149, %v2147
  %v2170 = vpack.c.b16 %v2150, %v2148
  %v2171 = vpack.c.b16 %v2153, %v2151
  %v2172 = vpack.c.b16 %v2154, %v2152
  %v2173 = vpack.c.b16 %v2157, %v2155
  %v2174 = vpack.c.b16 %v2158, %v2156
  %v2175 = vpack.c.b16 %v2161, %v2159
  %v2176 = vpack.c.b16 %v2162, %v2160
  %v2177 = vpack.c.b16 %v2165, %v2163
  %v2178 = vpack.c.b16 %v2166, %v2164
  %v2179 = vpack.c.b16 %v2167, %v2167
  %v2180 = vpack.c.b16 %v2168, %v2168
  %vm2187 = vcmask 326656
  %v2189 = vsel %vm2187, %v2170, 0
  %v2192 = vsel %vm2187, %v2172, 0
  %v2195 = vsel %vm2187, %v2174, 0
  %v2198 = vsel %vm2187, %v2176, 0
  %v2201 = vsel %vm2187, %v2178, 0
  %v2204 = vsel %vm2187, %v2180, 0
  %vm2206 = vcmask 1043456
  %v2208 = vsel %vm2206, %v2123, 0
  %v2211 = vsel %vm2206, %v2124, 0
  %2213 = vmatprep.subr.bf16.mxu0 %v2104
  %2214 = vmatpush1.bf16.msra.mxu0 %v2103
  %2215 = vmatprep.subr.bf16.mxu0 %v2106
  %2216 = vmatpush1.bf16.msra.mxu0 %v2105
  %2217 = vmatprep.subr.bf16.mxu0 %v2108
  %2218 = vmatpush1.bf16.msra.mxu0 %v2107
  %2219 = vmatprep.subr.bf16.mxu0 %v2110
  %2220 = vmatpush1.bf16.msra.mxu0 %v2109
  %2221 = vmatprep.subr.bf16.mxu0 %v2112
  %2222 = vmatpush1.bf16.msra.mxu0 %v2111
  %2223 = vmatprep.subr.bf16.mxu0 %v2114
  %2224 = vmatpush1.bf16.msra.mxu0 %v2113
  %2225 = vmatprep.subr.bf16.mxu0 %v2116
  %2226 = vmatpush1.bf16.msra.mxu0 %v2115
  %2227 = vmatprep.subr.bf16.mxu0 %v2118
  %2228 = vmatpush1.bf16.msra.mxu0 %v2117
  %2229 = vmatprep.subr.bf16.mxu0 %v2120
  %2230 = vmatpush1.bf16.msra.mxu0 %v2119
  %2231 = vmatprep.subr.bf16.mxu0 %v2122
  %2232 = vmatpush1.bf16.msra.mxu0 %v2121
  %2233 = vmatprep.subr.bf16.mxu0 %v2211
  %2234 = vmatpush1.bf16.msra.mxu0 %v2208
  %2235 = vmatprep.subr.bf16.mxu0 0
  %2236 = vmatpush1.bf16.msra.mxu0 0
  %2237 = vmatprep.subr.bf16.mxu0 0
  %2238 = vmatpush1.bf16.msra.mxu0 0
  %2239 = vmatprep.subr.bf16.mxu0 0
  %2240 = vmatpush1.bf16.msra.mxu0 0
  %2241 = vmatprep.subr.bf16.mxu0 0
  %2242 = vmatpush1.bf16.msra.mxu0 0
  %2243 = vmatprep.subr.bf16.mxu0 0
  %2244 = vmatpush1.bf16.msra.mxu0 0
  %2245 = vmatprep.mubr.bf16.mxu0 %v2189
  %2246 = vmatmul.mubr.bf16.gmra.mrb[0].mxu0 %v2169
  %v2247 = vpop.f32.mrb[0].mxu0
  %v2248 = vadd.f32 0.0, %v2247
  %v2249 = vpop.f32.mrb[0].mxu0
  %v2250 = vadd.f32 0.0, %v2249
  %v2251 = vpop.f32.mrb[0].mxu0
  %v2252 = vadd.f32 0.0, %v2251
  %v2253 = vpop.f32.mrb[0].mxu0
  %v2254 = vadd.f32 0.0, %v2253
  %2255 = vmatprep.mubr.bf16.mxu0 %v2192
  %2256 = vmatmul.mubr.bf16.gmra.mrb[0].mxu0 %v2171
  %v2257 = vpop.f32.mrb[0].mxu0
  %v2258 = vadd.f32 0.0, %v2257
  %v2259 = vpop.f32.mrb[0].mxu0
  %v2260 = vadd.f32 0.0, %v2259
  %v2261 = vpop.f32.mrb[0].mxu0
  %v2262 = vadd.f32 0.0, %v2261
  %v2263 = vpop.f32.mrb[0].mxu0
  %v2264 = vadd.f32 0.0, %v2263
  %2265 = vmatprep.mubr.bf16.mxu0 %v2195
  %2266 = vmatmul.mubr.bf16.gmra.mrb[0].mxu0 %v2173
  %v2267 = vpop.f32.mrb[0].mxu0
  %v2268 = vadd.f32 0.0, %v2267
  %v2269 = vpop.f32.mrb[0].mxu0
  %v2270 = vadd.f32 0.0, %v2269
  %v2271 = vpop.f32.mrb[0].mxu0
  %v2272 = vadd.f32 0.0, %v2271
  %v2273 = vpop.f32.mrb[0].mxu0
  %v2274 = vadd.f32 0.0, %v2273
  %2275 = vmatprep.mubr.bf16.mxu0 %v2198
  %2276 = vmatmul.mubr.bf16.gmra.mrb[0].mxu0 %v2175
  %v2277 = vpop.f32.mrb[0].mxu0
  %v2278 = vadd.f32 0.0, %v2277
  %v2279 = vpop.f32.mrb[0].mxu0
  %v2280 = vadd.f32 0.0, %v2279
  %v2281 = vpop.f32.mrb[0].mxu0
  %v2282 = vadd.f32 0.0, %v2281
  %v2283 = vpop.f32.mrb[0].mxu0
  %v2284 = vadd.f32 0.0, %v2283
  %2285 = vmatprep.mubr.bf16.mxu0 %v2201
  %2286 = vmatmul.mubr.bf16.gmra.mrb[0].mxu0 %v2177
  %v2287 = vpop.f32.mrb[0].mxu0
  %v2288 = vadd.f32 0.0, %v2287
  %v2289 = vpop.f32.mrb[0].mxu0
  %v2290 = vadd.f32 0.0, %v2289
  %v2291 = vpop.f32.mrb[0].mxu0
  %v2292 = vadd.f32 0.0, %v2291
  %v2293 = vpop.f32.mrb[0].mxu0
  %v2294 = vadd.f32 0.0, %v2293
  %2295 = vmatprep.mubr.bf16.mxu0 %v2204
  %2296 = vmatmul.mubr.bf16.gmra.mrb[0].mxu0 %v2179
  %v2297 = vpop.f32.mrb[0].mxu0
  %v2298 = vadd.f32 0.0, %v2297
  %v2299 = vpop.f32.mrb[0].mxu0
  %v2300 = vadd.f32 0.0, %v2299
  %v2301 = vpop.f32.mrb[0].mxu0
  %v2302 = vpop.f32.mrb[0].mxu0
  %2303 = vdwg.mxu0
  %s2304 = scalar_lea.vmem %s3, 88
  %v2305 = vld [vmem:[%s2304] sm:$0xff]
  %v2306 = vld [vmem:[%s2304 + $0x8] sm:$0xff]
  %v2307 = vld [vmem:[%s2304 + $0x10] sm:$0xff]
  %v2308 = vld [vmem:[%s2304 + $0x18] sm:$0xff]
  %v2309 = vld [vmem:[%s2304 + $0x20] sm:$0xff]
  %v2310 = vld [vmem:[%s2304 + $0x28] sm:$0xff]
  %v2311 = vld [vmem:[%s2304 + $0x30] sm:$0xff]
  %v2312 = vld [vmem:[%s2304 + $0x38] sm:$0xff]
  %v2313 = vld [vmem:[%s2304 + $0x40] sm:$0xff]
  %v2314 = vld [vmem:[%s2304 + $0x48] sm:$0xff]
  %v2315 = vld [vmem:[%s2304 + $0x50] sm:$0x33]
  %v2327 = vunpack.c.l.b16 %v2305
  %v2328 = vunpack.c.h.b16 %v2305
  %v2329 = vunpack.c.l.b16 %v2306
  %v2330 = vunpack.c.h.b16 %v2306
  %v2331 = vunpack.c.l.b16 %v2307
  %v2332 = vunpack.c.h.b16 %v2307
  %v2333 = vunpack.c.l.b16 %v2308
  %v2334 = vunpack.c.h.b16 %v2308
  %v2335 = vunpack.c.l.b16 %v2309
  %v2336 = vunpack.c.h.b16 %v2309
  %v2337 = vunpack.c.l.b16 %v2310
  %v2338 = vunpack.c.h.b16 %v2310
  %v2339 = vunpack.c.l.b16 %v2311
  %v2340 = vunpack.c.h.b16 %v2311
  %v2341 = vunpack.c.l.b16 %v2312
  %v2342 = vunpack.c.h.b16 %v2312
  %v2343 = vunpack.c.l.b16 %v2313
  %v2344 = vunpack.c.h.b16 %v2313
  %v2345 = vunpack.c.l.b16 %v2314
  %v2346 = vunpack.c.h.b16 %v2314
  %v2347 = vunpack.c.l.b16 %v2315
  %v2348 = vunpack.c.h.b16 %v2315
  %v2349 = vpack.c.b16 %v2329, %v2327
  %v2350 = vpack.c.b16 %v2330, %v2328
  %v2351 = vpack.c.b16 %v2333, %v2331
  %v2352 = vpack.c.b16 %v2334, %v2332
  %v2353 = vpack.c.b16 %v2337, %v2335
  %v2354 = vpack.c.b16 %v2338, %v2336
  %v2355 = vpack.c.b16 %v2341, %v2339
  %v2356 = vpack.c.b16 %v2342, %v2340
  %v2357 = vpack.c.b16 %v2345, %v2343
  %v2358 = vpack.c.b16 %v2346, %v2344
  %v2359 = vpack.c.b16 %v2347, %v2347
  %v2360 = vpack.c.b16 %v2348, %v2348
  %v2368 = vsel %vm2187, %v2350, 0
  %v2371 = vsel %vm2187, %v2352, 0
  %v2374 = vsel %vm2187, %v2354, 0
  %v2377 = vsel %vm2187, %v2356, 0
  %v2380 = vsel %vm2187, %v2358, 0
  %v2383 = vsel %vm2187, %v2360, 0
  %2385 = vmatprep.subr.bf16.mxu0 %v2104
  %2386 = vmatpush1.bf16.msra.mxu0 %v2103
  %2387 = vmatprep.subr.bf16.mxu0 %v2106
  %2388 = vmatpush1.bf16.msra.mxu0 %v2105
  %2389 = vmatprep.subr.bf16.mxu0 %v2108
  %2390 = vmatpush1.bf16.msra.mxu0 %v2107
  %2391 = vmatprep.subr.bf16.mxu0 %v2110
  %2392 = vmatpush1.bf16.msra.mxu0 %v2109
  %2393 = vmatprep.subr.bf16.mxu0 %v2112
  %2394 = vmatpush1.bf16.msra.mxu0 %v2111
  %2395 = vmatprep.subr.bf16.mxu0 %v2114
  %2396 = vmatpush1.bf16.msra.mxu0 %v2113
  %2397 = vmatprep.subr.bf16.mxu0 %v2116
  %2398 = vmatpush1.bf16.msra.mxu0 %v2115
  %2399 = vmatprep.subr.bf16.mxu0 %v2118
  %2400 = vmatpush1.bf16.msra.mxu0 %v2117
  %2401 = vmatprep.subr.bf16.mxu0 %v2120
  %2402 = vmatpush1.bf16.msra.mxu0 %v2119
  %2403 = vmatprep.subr.bf16.mxu0 %v2122
  %2404 = vmatpush1.bf16.msra.mxu0 %v2121
  %2405 = vmatprep.subr.bf16.mxu0 %v2211
  %2406 = vmatpush1.bf16.msra.mxu0 %v2208
  %2407 = vmatprep.subr.bf16.mxu0 0
  %2408 = vmatpush1.bf16.msra.mxu0 0
  %2409 = vmatprep.subr.bf16.mxu0 0
  %2410 = vmatpush1.bf16.msra.mxu0 0
  %2411 = vmatprep.subr.bf16.mxu0 0
  %2412 = vmatpush1.bf16.msra.mxu0 0
  %2413 = vmatprep.subr.bf16.mxu0 0
  %2414 = vmatpush1.bf16.msra.mxu0 0
  %2415 = vmatprep.subr.bf16.mxu0 0
  %2416 = vmatpush1.bf16.msra.mxu0 0
  %2417 = vmatprep.mubr.bf16.mxu0 %v2368
  %2418 = vmatmul.mubr.bf16.gmra.mrb[0].mxu0 %v2349
  %v2419 = vpop.f32.mrb[0].mxu0
  %v2420 = vadd.f32 0.0, %v2419
  %v2421 = vpop.f32.mrb[0].mxu0
  %v2422 = vadd.f32 0.0, %v2421
  %v2423 = vpop.f32.mrb[0].mxu0
  %v2424 = vadd.f32 0.0, %v2423
  %v2425 = vpop.f32.mrb[0].mxu0
  %v2426 = vadd.f32 0.0, %v2425
  %2427 = vmatprep.mubr.bf16.mxu0 %v2371
  %2428 = vmatmul.mubr.bf16.gmra.mrb[0].mxu0 %v2351
  %v2429 = vpop.f32.mrb[0].mxu0
  %v2430 = vadd.f32 0.0, %v2429
  %v2431 = vpop.f32.mrb[0].mxu0
  %v2432 = vadd.f32 0.0, %v2431
  %v2433 = vpop.f32.mrb[0].mxu0
  %v2434 = vadd.f32 0.0, %v2433
  %v2435 = vpop.f32.mrb[0].mxu0
  %v2436 = vadd.f32 0.0, %v2435
  %2437 = vmatprep.mubr.bf16.mxu0 %v2374
  %2438 = vmatmul.mubr.bf16.gmra.mrb[0].mxu0 %v2353
  %v2439 = vpop.f32.mrb[0].mxu0
  %v2440 = vadd.f32 0.0, %v2439
  %v2441 = vpop.f32.mrb[0].mxu0
  %v2442 = vadd.f32 0.0, %v2441
  %v2443 = vpop.f32.mrb[0].mxu0
  %v2444 = vadd.f32 0.0, %v2443
  %v2445 = vpop.f32.mrb[0].mxu0
  %v2446 = vadd.f32 0.0, %v2445
  %2447 = vmatprep.mubr.bf16.mxu0 %v2377
  %2448 = vmatmul.mubr.bf16.gmra.mrb[0].mxu0 %v2355
  %v2449 = vpop.f32.mrb[0].mxu0
  %v2450 = vadd.f32 0.0, %v2449
  %v2451 = vpop.f32.mrb[0].mxu0
  %v2452 = vadd.f32 0.0, %v2451
  %v2453 = vpop.f32.mrb[0].mxu0
  %v2454 = vadd.f32 0.0, %v2453
  %v2455 = vpop.f32.mrb[0].mxu0
  %v2456 = vadd.f32 0.0, %v2455
  %2457 = vmatprep.mubr.bf16.mxu0 %v2380
  %2458 = vmatmul.mubr.bf16.gmra.mrb[0].mxu0 %v2357
  %v2459 = vpop.f32.mrb[0].mxu0
  %v2460 = vadd.f32 0.0, %v2459
  %v2461 = vpop.f32.mrb[0].mxu0
  %v2462 = vadd.f32 0.0, %v2461
  %v2463 = vpop.f32.mrb[0].mxu0
  %v2464 = vadd.f32 0.0, %v2463
  %v2465 = vpop.f32.mrb[0].mxu0
  %v2466 = vadd.f32 0.0, %v2465
  %2467 = vmatprep.mubr.bf16.mxu0 %v2383
  %2468 = vmatmul.mubr.bf16.gmra.mrb[0].mxu0 %v2359
  %v2469 = vpop.f32.mrb[0].mxu0
  %v2470 = vadd.f32 0.0, %v2469
  %v2471 = vpop.f32.mrb[0].mxu0
  %v2472 = vadd.f32 0.0, %v2471
  %v2473 = vpop.f32.mrb[0].mxu0
  %v2474 = vpop.f32.mrb[0].mxu0
  %2475 = vdwg.mxu0
  %v2476 = vmax.f32 %v2248, %v2420
  %v2477 = vmax.f32 %v2250, %v2422
  %v2478 = vmax.f32 %v2252, %v2424
  %v2479 = vmax.f32 %v2254, %v2426
  %v2480 = vmax.f32 %v2258, %v2430
  %v2481 = vmax.f32 %v2260, %v2432
  %v2482 = vmax.f32 %v2262, %v2434
  %v2483 = vmax.f32 %v2264, %v2436
  %v2484 = vmax.f32 %v2268, %v2440
  %v2485 = vmax.f32 %v2270, %v2442
  %v2486 = vmax.f32 %v2272, %v2444
  %v2487 = vmax.f32 %v2274, %v2446
  %v2488 = vmax.f32 %v2278, %v2450
  %v2489 = vmax.f32 %v2280, %v2452
  %v2490 = vmax.f32 %v2282, %v2454
  %v2491 = vmax.f32 %v2284, %v2456
  %v2492 = vmax.f32 %v2288, %v2460
  %v2493 = vmax.f32 %v2290, %v2462
  %v2494 = vmax.f32 %v2292, %v2464
  %v2495 = vmax.f32 %v2294, %v2466
  %v2496 = vmax.f32 %v2298, %v2470
  %v2497 = vmax.f32 %v2300, %v2472
  %v2498 = vpack.c.bf16 %v2478, %v2476
  %v2499 = vpack.c.bf16 %v2479, %v2477
  %v2500 = vpack.c.bf16 %v2482, %v2480
  %v2501 = vpack.c.bf16 %v2483, %v2481
  %v2502 = vpack.c.bf16 %v2486, %v2484
  %v2503 = vpack.c.bf16 %v2487, %v2485
  %v2504 = vpack.c.bf16 %v2490, %v2488
  %v2505 = vpack.c.bf16 %v2491, %v2489
  %v2506 = vpack.c.bf16 %v2494, %v2492
  %v2507 = vpack.c.bf16 %v2495, %v2493
  %v2508 = vpack.c.bf16 %v2496, %v2496
  %v2509 = vpack.c.bf16 %v2497, %v2497
  %v2510 = vld [vmem:[%s4] sm:$0xf]
  %v2511 = vld [vmem:[%s4 + $0x4] sm:$0xf]
  %v2512 = vld [vmem:[%s4 + $0x8] sm:$0xf]
  %v2513 = vld [vmem:[%s4 + $0xc] sm:$0xf]
  %v2514 = vld [vmem:[%s4 + $0x10] sm:$0xf]
  %v2515 = vld [vmem:[%s4 + $0x14] sm:$0xf]
  %v2516 = vld [vmem:[%s4 + $0x18] sm:$0xf]
  %v2517 = vld [vmem:[%s4 + $0x1c] sm:$0xf]
  %v2518 = vld [vmem:[%s4 + $0x20] sm:$0xf]
  %v2519 = vld [vmem:[%s4 + $0x24] sm:$0xf]
  %v2520 = vld [vmem:[%s4 + $0x28] sm:$0xf]
  %v2521 = vld [vmem:[%s4 + $0x2c] sm:$0xf]
  %v2522 = vld [vmem:[%s4 + $0x30] sm:$0xf]
  %v2523 = vld [vmem:[%s4 + $0x34] sm:$0xf]
  %v2524 = vld [vmem:[%s4 + $0x38] sm:$0xf]
  %v2525 = vld [vmem:[%s4 + $0x3c] sm:$0xf]
  %v2526 = vld [vmem:[%s4 + $0x40] sm:$0xf]
  %v2527 = vld [vmem:[%s4 + $0x44] sm:$0xf]
  %v2528 = vld [vmem:[%s4 + $0x48] sm:$0xf]
  %v2529 = vld [vmem:[%s4 + $0x4c] sm:$0xf]
  %v2530 = vld [vmem:[%s4 + $0x50] sm:$0xf]
  %v2531 = vld [vmem:[%s4 + $0x54] sm:$0xf]
  %v2532 = vld [vmem:[%s4 + $0x58] sm:$0xf]
  %v2533 = vld [vmem:[%s4 + $0x5c] sm:$0xf]
  %v2534 = vld [vmem:[%s4 + $0x60] sm:$0xf]
  %v2535 = vld [vmem:[%s4 + $0x64] sm:$0xf]
  %v2536 = vld [vmem:[%s4 + $0x68] sm:$0xf]
  %v2537 = vld [vmem:[%s4 + $0x6c] sm:$0xf]
  %v2538 = vld [vmem:[%s4 + $0x70] sm:$0xf]
  %v2539 = vld [vmem:[%s4 + $0x74] sm:$0xf]
  %v2540 = vld [vmem:[%s4 + $0x78] sm:$0xf]
  %v2541 = vld [vmem:[%s4 + $0x7c] sm:$0xf]
  %v2574 = vunpack.c.l.b16 %v2510
  %v2575 = vunpack.c.l.b16 %v2511
  %v2576 = vunpack.c.l.b16 %v2512
  %v2577 = vunpack.c.l.b16 %v2513
  %v2578 = vunpack.c.l.b16 %v2514
  %v2579 = vunpack.c.l.b16 %v2515
  %v2580 = vunpack.c.l.b16 %v2516
  %v2581 = vunpack.c.l.b16 %v2517
  %v2582 = vunpack.c.l.b16 %v2518
  %v2583 = vunpack.c.l.b16 %v2519
  %v2584 = vunpack.c.l.b16 %v2520
  %v2585 = vunpack.c.l.b16 %v2521
  %v2586 = vunpack.c.l.b16 %v2522
  %v2587 = vunpack.c.l.b16 %v2523
  %v2588 = vunpack.c.l.b16 %v2524
  %v2589 = vunpack.c.l.b16 %v2525
  %v2590 = vunpack.c.l.b16 %v2526
  %v2591 = vunpack.c.l.b16 %v2527
  %v2592 = vunpack.c.l.b16 %v2528
  %v2593 = vunpack.c.l.b16 %v2529
  %v2594 = vunpack.c.l.b16 %v2530
  %v2595 = vunpack.c.l.b16 %v2531
  %v2596 = vunpack.c.l.b16 %v2532
  %v2597 = vunpack.c.l.b16 %v2533
  %v2598 = vunpack.c.l.b16 %v2534
  %v2599 = vunpack.c.l.b16 %v2535
  %v2600 = vunpack.c.l.b16 %v2536
  %v2601 = vunpack.c.l.b16 %v2537
  %v2602 = vunpack.c.l.b16 %v2538
  %v2603 = vunpack.c.l.b16 %v2539
  %v2604 = vunpack.c.l.b16 %v2540
  %v2605 = vunpack.c.l.b16 %v2541
  %v2606 = vpack.c.b16 %v2575, %v2574
  %v2607 = vpack.c.b16 %v2577, %v2576
  %v2608 = vpack.c.b16 %v2579, %v2578
  %v2609 = vpack.c.b16 %v2581, %v2580
  %v2610 = vpack.c.b16 %v2583, %v2582
  %v2611 = vpack.c.b16 %v2585, %v2584
  %v2612 = vpack.c.b16 %v2587, %v2586
  %v2613 = vpack.c.b16 %v2589, %v2588
  %v2614 = vpack.c.b16 %v2591, %v2590
  %v2615 = vpack.c.b16 %v2593, %v2592
  %v2616 = vpack.c.b16 %v2595, %v2594
  %v2617 = vpack.c.b16 %v2597, %v2596
  %v2618 = vpack.c.b16 %v2599, %v2598
  %v2619 = vpack.c.b16 %v2601, %v2600
  %v2620 = vpack.c.b16 %v2603, %v2602
  %v2621 = vpack.c.b16 %v2605, %v2604
  %2638 = vmatprep.subr.bf16.mxu0 0
  %2639 = vmatpush1.bf16.msra.mxu0 %v2606
  %2640 = vmatprep.subr.bf16.mxu0 0
  %2641 = vmatpush1.bf16.msra.mxu0 %v2607
  %2642 = vmatprep.subr.bf16.mxu0 0
  %2643 = vmatpush1.bf16.msra.mxu0 %v2608
  %2644 = vmatprep.subr.bf16.mxu0 0
  %2645 = vmatpush1.bf16.msra.mxu0 %v2609
  %2646 = vmatprep.subr.bf16.mxu0 0
  %2647 = vmatpush1.bf16.msra.mxu0 %v2610
  %2648 = vmatprep.subr.bf16.mxu0 0
  %2649 = vmatpush1.bf16.msra.mxu0 %v2611
  %2650 = vmatprep.subr.bf16.mxu0 0
  %2651 = vmatpush1.bf16.msra.mxu0 %v2612
  %2652 = vmatprep.subr.bf16.mxu0 0
  %2653 = vmatpush1.bf16.msra.mxu0 %v2613
  %2654 = vmatprep.subr.bf16.mxu0 0
  %2655 = vmatpush1.bf16.msra.mxu0 %v2614
  %2656 = vmatprep.subr.bf16.mxu0 0
  %2657 = vmatpush1.bf16.msra.mxu0 %v2615
  %2658 = vmatprep.subr.bf16.mxu0 0
  %2659 = vmatpush1.bf16.msra.mxu0 %v2616
  %2660 = vmatprep.subr.bf16.mxu0 0
  %2661 = vmatpush1.bf16.msra.mxu0 %v2617
  %2662 = vmatprep.subr.bf16.mxu0 0
  %2663 = vmatpush1.bf16.msra.mxu0 %v2618
  %2664 = vmatprep.subr.bf16.mxu0 0
  %2665 = vmatpush1.bf16.msra.mxu0 %v2619
  %2666 = vmatprep.subr.bf16.mxu0 0
  %2667 = vmatpush1.bf16.msra.mxu0 %v2620
  %2668 = vmatprep.subr.bf16.mxu0 0
  %2669 = vmatpush1.bf16.msra.mxu0 %v2621
  %2670 = vmatprep.mubr.bf16.mxu0 %v2499
  %2671 = vmatmul.mubr.bf16.gmra.mrb[0].mxu0 %v2498
  %v2672 = vpop.f32.mrb[0].mxu0
  %v2673 = vadd.f32 0.0, %v2672
  %v2674 = vpop.f32.mrb[0].mxu0
  %v2675 = vpop.f32.mrb[0].mxu0
  %v2676 = vadd.f32 0.0, %v2675
  %v2677 = vpop.f32.mrb[0].mxu0
  %2678 = vmatprep.mubr.bf16.mxu0 %v2501
  %2679 = vmatmul.mubr.bf16.gmra.mrb[0].mxu0 %v2500
  %v2680 = vpop.f32.mrb[0].mxu0
  %v2681 = vadd.f32 0.0, %v2680
  %v2682 = vpop.f32.mrb[0].mxu0
  %v2683 = vpop.f32.mrb[0].mxu0
  %v2684 = vadd.f32 0.0, %v2683
  %v2685 = vpop.f32.mrb[0].mxu0
  %2686 = vmatprep.mubr.bf16.mxu0 %v2503
  %2687 = vmatmul.mubr.bf16.gmra.mrb[0].mxu0 %v2502
  %v2688 = vpop.f32.mrb[0].mxu0
  %v2689 = vadd.f32 0.0, %v2688
  %v2690 = vpop.f32.mrb[0].mxu0
  %v2691 = vpop.f32.mrb[0].mxu0
  %v2692 = vadd.f32 0.0, %v2691
  %v2693 = vpop.f32.mrb[0].mxu0
  %2694 = vmatprep.mubr.bf16.mxu0 %v2505
  %2695 = vmatmul.mubr.bf16.gmra.mrb[0].mxu0 %v2504
  %v2696 = vpop.f32.mrb[0].mxu0
  %v2697 = vadd.f32 0.0, %v2696
  %v2698 = vpop.f32.mrb[0].mxu0
  %v2699 = vpop.f32.mrb[0].mxu0
  %v2700 = vadd.f32 0.0, %v2699
  %v2701 = vpop.f32.mrb[0].mxu0
  %2702 = vmatprep.mubr.bf16.mxu0 %v2507
  %2703 = vmatmul.mubr.bf16.gmra.mrb[0].mxu0 %v2506
  %v2704 = vpop.f32.mrb[0].mxu0
  %v2705 = vadd.f32 0.0, %v2704
  %v2706 = vpop.f32.mrb[0].mxu0
  %v2707 = vpop.f32.mrb[0].mxu0
  %v2708 = vadd.f32 0.0, %v2707
  %v2709 = vpop.f32.mrb[0].mxu0
  %2710 = vmatprep.mubr.bf16.mxu0 %v2509
  %2711 = vmatmul.mubr.bf16.gmra.mrb[0].mxu0 %v2508
  %v2712 = vpop.f32.mrb[0].mxu0
  %v2713 = vadd.f32 0.0, %v2712
  %v2714 = vpop.f32.mrb[0].mxu0
  %v2715 = vpop.f32.mrb[0].mxu0
  %v2716 = vpop.f32.mrb[0].mxu0
  %2717 = vdwg.mxu0
  %s2718 = scalar_lea.vmem %s4, 128
  %v2719 = vld [vmem:[%s2718] sm:$0xf]
  %v2720 = vld [vmem:[%s2718 + $0x4] sm:$0xf]
  %v2721 = vld [vmem:[%s2718 + $0x8] sm:$0xf]
  %v2722 = vld [vmem:[%s2718 + $0xc] sm:$0xf]
  %v2723 = vld [vmem:[%s2718 + $0x10] sm:$0xf]
  %v2724 = vld [vmem:[%s2718 + $0x14] sm:$0xf]
  %v2725 = vld [vmem:[%s2718 + $0x18] sm:$0xf]
  %v2726 = vld [vmem:[%s2718 + $0x1c] sm:$0xf]
  %v2727 = vld [vmem:[%s2718 + $0x20] sm:$0xf]
  %v2728 = vld [vmem:[%s2718 + $0x24] sm:$0xf]
  %v2729 = vld [vmem:[%s2718 + $0x28] sm:$0xf]
  %v2730 = vld [vmem:[%s2718 + $0x2c] sm:$0xf]
  %v2731 = vld [vmem:[%s2718 + $0x30] sm:$0xf]
  %v2732 = vld [vmem:[%s2718 + $0x34] sm:$0xf]
  %v2733 = vld [vmem:[%s2718 + $0x38] sm:$0xf]
  %v2734 = vld [vmem:[%s2718 + $0x3c] sm:$0xf]
  %v2735 = vld [vmem:[%s2718 + $0x40] sm:$0xf]
  %v2736 = vld [vmem:[%s2718 + $0x44] sm:$0xf]
  %v2737 = vld [vmem:[%s2718 + $0x48] sm:$0xf]
  %v2738 = vld [vmem:[%s2718 + $0x4c] sm:$0xf]
  %v2739 = vld [vmem:[%s2718 + $0x50] sm:$0xf]
  %v2740 = vld [vmem:[%s2718 + $0x54] sm:$0xf]
  %v2741 = vld [vmem:[%s2718 + $0x58] sm:$0xf]
  %v2742 = vld [vmem:[%s2718 + $0x5c] sm:$0xf]
  %v2743 = vld [vmem:[%s2718 + $0x60] sm:$0xf]
  %v2744 = vld [vmem:[%s2718 + $0x64] sm:$0xf]
  %v2745 = vld [vmem:[%s2718 + $0x68] sm:$0xf]
  %v2746 = vld [vmem:[%s2718 + $0x6c] sm:$0xf]
  %v2747 = vld [vmem:[%s2718 + $0x70] sm:$0xf]
  %v2748 = vld [vmem:[%s2718 + $0x74] sm:$0xf]
  %v2749 = vld [vmem:[%s2718 + $0x78] sm:$0xf]
  %v2750 = vld [vmem:[%s2718 + $0x7c] sm:$0xf]
  %v2783 = vunpack.c.l.b16 %v2719
  %v2784 = vunpack.c.l.b16 %v2720
  %v2785 = vunpack.c.l.b16 %v2721
  %v2786 = vunpack.c.l.b16 %v2722
  %v2787 = vunpack.c.l.b16 %v2723
  %v2788 = vunpack.c.l.b16 %v2724
  %v2789 = vunpack.c.l.b16 %v2725
  %v2790 = vunpack.c.l.b16 %v2726
  %v2791 = vunpack.c.l.b16 %v2727
  %v2792 = vunpack.c.l.b16 %v2728
  %v2793 = vunpack.c.l.b16 %v2729
  %v2794 = vunpack.c.l.b16 %v2730
  %v2795 = vunpack.c.l.b16 %v2731
  %v2796 = vunpack.c.l.b16 %v2732
  %v2797 = vunpack.c.l.b16 %v2733
  %v2798 = vunpack.c.l.b16 %v2734
  %v2799 = vunpack.c.l.b16 %v2735
  %v2800 = vunpack.c.l.b16 %v2736
  %v2801 = vunpack.c.l.b16 %v2737
  %v2802 = vunpack.c.l.b16 %v2738
  %v2803 = vunpack.c.l.b16 %v2739
  %v2804 = vunpack.c.l.b16 %v2740
  %v2805 = vunpack.c.l.b16 %v2741
  %v2806 = vunpack.c.l.b16 %v2742
  %v2807 = vunpack.c.l.b16 %v2743
  %v2808 = vunpack.c.l.b16 %v2744
  %v2809 = vunpack.c.l.b16 %v2745
  %v2810 = vunpack.c.l.b16 %v2746
  %v2811 = vunpack.c.l.b16 %v2747
  %v2812 = vunpack.c.l.b16 %v2748
  %v2813 = vunpack.c.l.b16 %v2749
  %v2814 = vunpack.c.l.b16 %v2750
  %v2815 = vpack.c.b16 %v2784, %v2783
  %v2816 = vpack.c.b16 %v2786, %v2785
  %v2817 = vpack.c.b16 %v2788, %v2787
  %v2818 = vpack.c.b16 %v2790, %v2789
  %v2819 = vpack.c.b16 %v2792, %v2791
  %v2820 = vpack.c.b16 %v2794, %v2793
  %v2821 = vpack.c.b16 %v2796, %v2795
  %v2822 = vpack.c.b16 %v2798, %v2797
  %v2823 = vpack.c.b16 %v2800, %v2799
  %v2824 = vpack.c.b16 %v2802, %v2801
  %v2825 = vpack.c.b16 %v2804, %v2803
  %v2826 = vpack.c.b16 %v2806, %v2805
  %v2827 = vpack.c.b16 %v2808, %v2807
  %v2828 = vpack.c.b16 %v2810, %v2809
  %v2829 = vpack.c.b16 %v2812, %v2811
  %v2830 = vpack.c.b16 %v2814, %v2813
  %2847 = vmatprep.subr.bf16.mxu0 0
  %2848 = vmatpush1.bf16.msra.mxu0 %v2815
  %2849 = vmatprep.subr.bf16.mxu0 0
  %2850 = vmatpush1.bf16.msra.mxu0 %v2816
  %2851 = vmatprep.subr.bf16.mxu0 0
  %2852 = vmatpush1.bf16.msra.mxu0 %v2817
  %2853 = vmatprep.subr.bf16.mxu0 0
  %2854 = vmatpush1.bf16.msra.mxu0 %v2818
  %2855 = vmatprep.subr.bf16.mxu0 0
  %2856 = vmatpush1.bf16.msra.mxu0 %v2819
  %2857 = vmatprep.subr.bf16.mxu0 0
  %2858 = vmatpush1.bf16.msra.mxu0 %v2820
  %2859 = vmatprep.subr.bf16.mxu0 0
  %2860 = vmatpush1.bf16.msra.mxu0 %v2821
  %2861 = vmatprep.subr.bf16.mxu0 0
  %2862 = vmatpush1.bf16.msra.mxu0 %v2822
  %2863 = vmatprep.subr.bf16.mxu0 0
  %2864 = vmatpush1.bf16.msra.mxu0 %v2823
  %2865 = vmatprep.subr.bf16.mxu0 0
  %2866 = vmatpush1.bf16.msra.mxu0 %v2824
  %2867 = vmatprep.subr.bf16.mxu0 0
  %2868 = vmatpush1.bf16.msra.mxu0 %v2825
  %2869 = vmatprep.subr.bf16.mxu0 0
  %2870 = vmatpush1.bf16.msra.mxu0 %v2826
  %2871 = vmatprep.subr.bf16.mxu0 0
  %2872 = vmatpush1.bf16.msra.mxu0 %v2827
  %2873 = vmatprep.subr.bf16.mxu0 0
  %2874 = vmatpush1.bf16.msra.mxu0 %v2828
  %2875 = vmatprep.subr.bf16.mxu0 0
  %2876 = vmatpush1.bf16.msra.mxu0 %v2829
  %2877 = vmatprep.subr.bf16.mxu0 0
  %2878 = vmatpush1.bf16.msra.mxu0 %v2830
  %2879 = vmatprep.mubr.bf16.mxu0 %v2499
  %2880 = vmatmul.mubr.bf16.gmra.mrb[0].mxu0 %v2498
  %v2881 = vpop.f32.mrb[0].mxu0
  %v2882 = vadd.f32 0.0, %v2881
  %v2883 = vpop.f32.mrb[0].mxu0
  %v2884 = vpop.f32.mrb[0].mxu0
  %v2885 = vadd.f32 0.0, %v2884
  %v2886 = vpop.f32.mrb[0].mxu0
  %2887 = vmatprep.mubr.bf16.mxu0 %v2501
  %2888 = vmatmul.mubr.bf16.gmra.mrb[0].mxu0 %v2500
  %v2889 = vpop.f32.mrb[0].mxu0
  %v2890 = vadd.f32 0.0, %v2889
  %v2891 = vpop.f32.mrb[0].mxu0
  %v2892 = vpop.f32.mrb[0].mxu0
  %v2893 = vadd.f32 0.0, %v2892
  %v2894 = vpop.f32.mrb[0].mxu0
  %2895 = vmatprep.mubr.bf16.mxu0 %v2503
  %2896 = vmatmul.mubr.bf16.gmra.mrb[0].mxu0 %v2502
  %v2897 = vpop.f32.mrb[0].mxu0
  %v2898 = vadd.f32 0.0, %v2897
  %v2899 = vpop.f32.mrb[0].mxu0
  %v2900 = vpop.f32.mrb[0].mxu0
  %v2901 = vadd.f32 0.0, %v2900
  %v2902 = vpop.f32.mrb[0].mxu0
  %2903 = vmatprep.mubr.bf16.mxu0 %v2505
  %2904 = vmatmul.mubr.bf16.gmra.mrb[0].mxu0 %v2504
  %v2905 = vpop.f32.mrb[0].mxu0
  %v2906 = vadd.f32 0.0, %v2905
  %v2907 = vpop.f32.mrb[0].mxu0
  %v2908 = vpop.f32.mrb[0].mxu0
  %v2909 = vadd.f32 0.0, %v2908
  %v2910 = vpop.f32.mrb[0].mxu0
  %2911 = vmatprep.mubr.bf16.mxu0 %v2507
  %2912 = vmatmul.mubr.bf16.gmra.mrb[0].mxu0 %v2506
  %v2913 = vpop.f32.mrb[0].mxu0
  %v2914 = vadd.f32 0.0, %v2913
  %v2915 = vpop.f32.mrb[0].mxu0
  %v2916 = vpop.f32.mrb[0].mxu0
  %v2917 = vadd.f32 0.0, %v2916
  %v2918 = vpop.f32.mrb[0].mxu0
  %2919 = vmatprep.mubr.bf16.mxu0 %v2509
  %2920 = vmatmul.mubr.bf16.gmra.mrb[0].mxu0 %v2508
  %v2921 = vpop.f32.mrb[0].mxu0
  %v2922 = vadd.f32 0.0, %v2921
  %v2923 = vpop.f32.mrb[0].mxu0
  %v2924 = vpop.f32.mrb[0].mxu0
  %v2925 = vpop.f32.mrb[0].mxu0
  %2926 = vdwg.mxu0
  %v2927 = vmax.f32 %v2673, %v2882
  %v2928 = vmax.f32 %v2676, %v2885
  %v2929 = vmax.f32 %v2681, %v2890
  %v2930 = vmax.f32 %v2684, %v2893
  %v2931 = vmax.f32 %v2689, %v2898
  %v2932 = vmax.f32 %v2692, %v2901
  %v2933 = vmax.f32 %v2697, %v2906
  %v2934 = vmax.f32 %v2700, %v2909
  %v2935 = vmax.f32 %v2705, %v2914
  %v2936 = vmax.f32 %v2708, %v2917
  %v2937 = vmax.f32 %v2713, %v2922
  %v2938 = vpack.c.bf16 %v2928, %v2927
  %v2939 = vpack.c.bf16 %v2930, %v2929
  %v2940 = vpack.c.bf16 %v2932, %v2931
  %v2941 = vpack.c.bf16 %v2934, %v2933
  %v2942 = vpack.c.bf16 %v2936, %v2935
  %v2943 = vpack.c.bf16 %v2937, %v2937
  %v2944 = vld [vmem:[%s5] sm:$0xf]
  %v2945 = vld [vmem:[%s5 + $0x4] sm:$0xf]
  %v2946 = vld [vmem:[%s5 + $0x8] sm:$0xf]
  %v2947 = vld [vmem:[%s5 + $0xc] sm:$0xf]
  %v2948 = vld [vmem:[%s5 + $0x10] sm:$0xf]
  %v2949 = vld [vmem:[%s5 + $0x14] sm:$0xf]
  %v2950 = vld [vmem:[%s5 + $0x18] sm:$0xf]
  %v2951 = vld [vmem:[%s5 + $0x1c] sm:$0xf]
  %v2952 = vld [vmem:[%s5 + $0x20] sm:$0xf]
  %v2953 = vld [vmem:[%s5 + $0x24] sm:$0xf]
  %v2954 = vld [vmem:[%s5 + $0x28] sm:$0xf]
  %v2955 = vld [vmem:[%s5 + $0x2c] sm:$0xf]
  %v2956 = vld [vmem:[%s5 + $0x30] sm:$0xf]
  %v2957 = vld [vmem:[%s5 + $0x34] sm:$0xf]
  %v2958 = vld [vmem:[%s5 + $0x38] sm:$0xf]
  %v2959 = vld [vmem:[%s5 + $0x3c] sm:$0xf]
  %v2960 = vld [vmem:[%s5 + $0x40] sm:$0xf]
  %v2961 = vld [vmem:[%s5 + $0x44] sm:$0xf]
  %v2962 = vld [vmem:[%s5 + $0x48] sm:$0xf]
  %v2963 = vld [vmem:[%s5 + $0x4c] sm:$0xf]
  %v2964 = vld [vmem:[%s5 + $0x50] sm:$0xf]
  %v2965 = vld [vmem:[%s5 + $0x54] sm:$0xf]
  %v2966 = vld [vmem:[%s5 + $0x58] sm:$0xf]
  %v2967 = vld [vmem:[%s5 + $0x5c] sm:$0xf]
  %v2968 = vld [vmem:[%s5 + $0x60] sm:$0xf]
  %v2969 = vld [vmem:[%s5 + $0x64] sm:$0xf]
  %v2970 = vld [vmem:[%s5 + $0x68] sm:$0xf]
  %v2971 = vld [vmem:[%s5 + $0x6c] sm:$0xf]
  %v2972 = vld [vmem:[%s5 + $0x70] sm:$0xf]
  %v2973 = vld [vmem:[%s5 + $0x74] sm:$0xf]
  %v2974 = vld [vmem:[%s5 + $0x78] sm:$0xf]
  %v2975 = vld [vmem:[%s5 + $0x7c] sm:$0xf]
  %v2976 = vld [vmem:[%s5 + $0x80] sm:$0xf]
  %v2977 = vld [vmem:[%s5 + $0x84] sm:$0xf]
  %v2978 = vld [vmem:[%s5 + $0x88] sm:$0xf]
  %v2979 = vld [vmem:[%s5 + $0x8c] sm:$0xf]
  %v2980 = vld [vmem:[%s5 + $0x90] sm:$0xf]
  %v2981 = vld [vmem:[%s5 + $0x94] sm:$0xf]
  %v2982 = vld [vmem:[%s5 + $0x98] sm:$0xf]
  %v2983 = vld [vmem:[%s5 + $0x9c] sm:$0xf]
  %v2984 = vld [vmem:[%s5 + $0xa0] sm:$0xf]
  %v2985 = vld [vmem:[%s5 + $0xa4] sm:$0xf]
  %v2986 = vld [vmem:[%s5 + $0xa8] sm:$0xf]
  %v2987 = vld [vmem:[%s5 + $0xac] sm:$0xf]
  %v2988 = vld [vmem:[%s5 + $0xb0] sm:$0xf]
  %v2989 = vld [vmem:[%s5 + $0xb4] sm:$0xf]
  %v2990 = vld [vmem:[%s5 + $0xb8] sm:$0xf]
  %v2991 = vld [vmem:[%s5 + $0xbc] sm:$0xf]
  %v2992 = vld [vmem:[%s5 + $0xc0] sm:$0xf]
  %v2993 = vld [vmem:[%s5 + $0xc4] sm:$0xf]
  %v2994 = vld [vmem:[%s5 + $0xc8] sm:$0xf]
  %v2995 = vld [vmem:[%s5 + $0xcc] sm:$0xf]
  %v2996 = vld [vmem:[%s5 + $0xd0] sm:$0xf]
  %v2997 = vld [vmem:[%s5 + $0xd4] sm:$0xf]
  %v2998 = vld [vmem:[%s5 + $0xd8] sm:$0xf]
  %v2999 = vld [vmem:[%s5 + $0xdc] sm:$0xf]
  %v3000 = vld [vmem:[%s5 + $0xe0] sm:$0xf]
  %v3001 = vld [vmem:[%s5 + $0xe4] sm:$0xf]
  %v3002 = vld [vmem:[%s5 + $0xe8] sm:$0xf]
  %v3003 = vld [vmem:[%s5 + $0xec] sm:$0xf]
  %v3004 = vld [vmem:[%s5 + $0xf0] sm:$0xf]
  %v3005 = vld [vmem:[%s5 + $0xf4] sm:$0xf]
  %v3006 = vld [vmem:[%s5 + $0xf8] sm:$0xf]
  %v3007 = vld [vmem:[%s5 + $0xfc] sm:$0xf]
  %v3008 = vld [vmem:[%s5 + $0x100] sm:$0xf]
  %v3009 = vld [vmem:[%s5 + $0x104] sm:$0xf]
  %v3010 = vld [vmem:[%s5 + $0x108] sm:$0xf]
  %v3011 = vld [vmem:[%s5 + $0x10c] sm:$0xf]
  %v3012 = vld [vmem:[%s5 + $0x110] sm:$0xf]
  %v3013 = vld [vmem:[%s5 + $0x114] sm:$0xf]
  %v3014 = vld [vmem:[%s5 + $0x118] sm:$0xf]
  %v3015 = vld [vmem:[%s5 + $0x11c] sm:$0xf]
  %v3016 = vld [vmem:[%s5 + $0x120] sm:$0xf]
  %v3017 = vld [vmem:[%s5 + $0x124] sm:$0xf]
  %v3018 = vld [vmem:[%s5 + $0x128] sm:$0xf]
  %v3019 = vld [vmem:[%s5 + $0x12c] sm:$0xf]
  %v3020 = vld [vmem:[%s5 + $0x130] sm:$0xf]
  %v3021 = vld [vmem:[%s5 + $0x134] sm:$0xf]
  %v3022 = vld [vmem:[%s5 + $0x138] sm:$0xf]
  %v3023 = vld [vmem:[%s5 + $0x13c] sm:$0xf]
  %v3024 = vld [vmem:[%s5 + $0x140] sm:$0xf]
  %v3025 = vld [vmem:[%s5 + $0x144] sm:$0xf]
  %v3026 = vld [vmem:[%s5 + $0x148] sm:$0xf]
  %v3027 = vld [vmem:[%s5 + $0x14c] sm:$0xf]
  %v3028 = vld [vmem:[%s5 + $0x150] sm:$0xf]
  %v3029 = vld [vmem:[%s5 + $0x154] sm:$0xf]
  %v3030 = vld [vmem:[%s5 + $0x158] sm:$0xf]
  %v3031 = vld [vmem:[%s5 + $0x15c] sm:$0xf]
  %v3032 = vld [vmem:[%s5 + $0x160] sm:$0xf]
  %v3033 = vld [vmem:[%s5 + $0x164] sm:$0xf]
  %v3034 = vld [vmem:[%s5 + $0x168] sm:$0xf]
  %v3035 = vld [vmem:[%s5 + $0x16c] sm:$0xf]
  %v3036 = vld [vmem:[%s5 + $0x170] sm:$0xf]
  %v3037 = vld [vmem:[%s5 + $0x174] sm:$0xf]
  %v3038 = vld [vmem:[%s5 + $0x178] sm:$0xf]
  %v3039 = vld [vmem:[%s5 + $0x17c] sm:$0xf]
  %v3040 = vld [vmem:[%s5 + $0x180] sm:$0xf]
  %v3041 = vld [vmem:[%s5 + $0x184] sm:$0xf]
  %v3042 = vld [vmem:[%s5 + $0x188] sm:$0xf]
  %v3043 = vld [vmem:[%s5 + $0x18c] sm:$0xf]
  %v3144 = vunpack.c.l.b16 %v2944
  %v3145 = vunpack.c.l.b16 %v2945
  %v3146 = vunpack.c.l.b16 %v2946
  %v3147 = vunpack.c.l.b16 %v2947
  %v3148 = vunpack.c.l.b16 %v2948
  %v3149 = vunpack.c.l.b16 %v2949
  %v3150 = vunpack.c.l.b16 %v2950
  %v3151 = vunpack.c.l.b16 %v2951
  %v3152 = vunpack.c.l.b16 %v2952
  %v3153 = vunpack.c.l.b16 %v2953
  %v3154 = vunpack.c.l.b16 %v2954
  %v3155 = vunpack.c.l.b16 %v2955
  %v3156 = vunpack.c.l.b16 %v2956
  %v3157 = vunpack.c.l.b16 %v2957
  %v3158 = vunpack.c.l.b16 %v2958
  %v3159 = vunpack.c.l.b16 %v2959
  %v3160 = vunpack.c.l.b16 %v2960
  %v3161 = vunpack.c.l.b16 %v2961
  %v3162 = vunpack.c.l.b16 %v2962
  %v3163 = vunpack.c.l.b16 %v2963
  %v3164 = vunpack.c.l.b16 %v2964
  %v3165 = vunpack.c.l.b16 %v2965
  %v3166 = vunpack.c.l.b16 %v2966
  %v3167 = vunpack.c.l.b16 %v2967
  %v3168 = vunpack.c.l.b16 %v2968
  %v3169 = vunpack.c.l.b16 %v2969
  %v3170 = vunpack.c.l.b16 %v2970
  %v3171 = vunpack.c.l.b16 %v2971
  %v3172 = vunpack.c.l.b16 %v2972
  %v3173 = vunpack.c.l.b16 %v2973
  %v3174 = vunpack.c.l.b16 %v2974
  %v3175 = vunpack.c.l.b16 %v2975
  %v3176 = vunpack.c.l.b16 %v2976
  %v3177 = vunpack.c.l.b16 %v2977
  %v3178 = vunpack.c.l.b16 %v2978
  %v3179 = vunpack.c.l.b16 %v2979
  %v3180 = vunpack.c.l.b16 %v2980
  %v3181 = vunpack.c.l.b16 %v2981
  %v3182 = vunpack.c.l.b16 %v2982
  %v3183 = vunpack.c.l.b16 %v2983
  %v3184 = vunpack.c.l.b16 %v2984
  %v3185 = vunpack.c.l.b16 %v2985
  %v3186 = vunpack.c.l.b16 %v2986
  %v3187 = vunpack.c.l.b16 %v2987
  %v3188 = vunpack.c.l.b16 %v2988
  %v3189 = vunpack.c.l.b16 %v2989
  %v3190 = vunpack.c.l.b16 %v2990
  %v3191 = vunpack.c.l.b16 %v2991
  %v3192 = vunpack.c.l.b16 %v2992
  %v3193 = vunpack.c.l.b16 %v2993
  %v3194 = vunpack.c.l.b16 %v2994
  %v3195 = vunpack.c.l.b16 %v2995
  %v3196 = vunpack.c.l.b16 %v2996
  %v3197 = vunpack.c.l.b16 %v2997
  %v3198 = vunpack.c.l.b16 %v2998
  %v3199 = vunpack.c.l.b16 %v2999
  %v3200 = vunpack.c.l.b16 %v3000
  %v3201 = vunpack.c.l.b16 %v3001
  %v3202 = vunpack.c.l.b16 %v3002
  %v3203 = vunpack.c.l.b16 %v3003
  %v3204 = vunpack.c.l.b16 %v3004
  %v3205 = vunpack.c.l.b16 %v3005
  %v3206 = vunpack.c.l.b16 %v3006
  %v3207 = vunpack.c.l.b16 %v3007
  %v3208 = vunpack.c.l.b16 %v3008
  %v3209 = vunpack.c.l.b16 %v3009
  %v3210 = vunpack.c.l.b16 %v3010
  %v3211 = vunpack.c.l.b16 %v3011
  %v3212 = vunpack.c.l.b16 %v3012
  %v3213 = vunpack.c.l.b16 %v3013
  %v3214 = vunpack.c.l.b16 %v3014
  %v3215 = vunpack.c.l.b16 %v3015
  %v3216 = vunpack.c.l.b16 %v3016
  %v3217 = vunpack.c.l.b16 %v3017
  %v3218 = vunpack.c.l.b16 %v3018
  %v3219 = vunpack.c.l.b16 %v3019
  %v3220 = vunpack.c.l.b16 %v3020
  %v3221 = vunpack.c.l.b16 %v3021
  %v3222 = vunpack.c.l.b16 %v3022
  %v3223 = vunpack.c.l.b16 %v3023
  %v3224 = vunpack.c.l.b16 %v3024
  %v3225 = vunpack.c.l.b16 %v3025
  %v3226 = vunpack.c.l.b16 %v3026
  %v3227 = vunpack.c.l.b16 %v3027
  %v3228 = vunpack.c.l.b16 %v3028
  %v3229 = vunpack.c.l.b16 %v3029
  %v3230 = vunpack.c.l.b16 %v3030
  %v3231 = vunpack.c.l.b16 %v3031
  %v3232 = vunpack.c.l.b16 %v3032
  %v3233 = vunpack.c.l.b16 %v3033
  %v3234 = vunpack.c.l.b16 %v3034
  %v3235 = vunpack.c.l.b16 %v3035
  %v3236 = vunpack.c.l.b16 %v3036
  %v3237 = vunpack.c.l.b16 %v3037
  %v3238 = vunpack.c.l.b16 %v3038
  %v3239 = vunpack.c.l.b16 %v3039
  %v3240 = vunpack.c.l.b16 %v3040
  %v3241 = vunpack.c.l.b16 %v3041
  %v3242 = vunpack.c.l.b16 %v3042
  %v3243 = vunpack.c.l.b16 %v3043
  %v3244 = vpack.c.b16 %v3145, %v3144
  %v3245 = vpack.c.b16 %v3147, %v3146
  %v3246 = vpack.c.b16 %v3149, %v3148
  %v3247 = vpack.c.b16 %v3151, %v3150
  %v3248 = vpack.c.b16 %v3153, %v3152
  %v3249 = vpack.c.b16 %v3155, %v3154
  %v3250 = vpack.c.b16 %v3157, %v3156
  %v3251 = vpack.c.b16 %v3159, %v3158
  %v3252 = vpack.c.b16 %v3161, %v3160
  %v3253 = vpack.c.b16 %v3163, %v3162
  %v3254 = vpack.c.b16 %v3165, %v3164
  %v3255 = vpack.c.b16 %v3167, %v3166
  %v3256 = vpack.c.b16 %v3169, %v3168
  %v3257 = vpack.c.b16 %v3171, %v3170
  %v3258 = vpack.c.b16 %v3173, %v3172
  %v3259 = vpack.c.b16 %v3175, %v3174
  %v3260 = vpack.c.b16 %v3177, %v3176
  %v3261 = vpack.c.b16 %v3179, %v3178
  %v3262 = vpack.c.b16 %v3181, %v3180
  %v3263 = vpack.c.b16 %v3183, %v3182
  %v3264 = vpack.c.b16 %v3185, %v3184
  %v3265 = vpack.c.b16 %v3187, %v3186
  %v3266 = vpack.c.b16 %v3189, %v3188
  %v3267 = vpack.c.b16 %v3191, %v3190
  %v3268 = vpack.c.b16 %v3193, %v3192
  %v3269 = vpack.c.b16 %v3195, %v3194
  %v3270 = vpack.c.b16 %v3197, %v3196
  %v3271 = vpack.c.b16 %v3199, %v3198
  %v3272 = vpack.c.b16 %v3201, %v3200
  %v3273 = vpack.c.b16 %v3203, %v3202
  %v3274 = vpack.c.b16 %v3205, %v3204
  %v3275 = vpack.c.b16 %v3207, %v3206
  %v3276 = vpack.c.b16 %v3209, %v3208
  %v3277 = vpack.c.b16 %v3211, %v3210
  %v3278 = vpack.c.b16 %v3213, %v3212
  %v3279 = vpack.c.b16 %v3215, %v3214
  %v3280 = vpack.c.b16 %v3217, %v3216
  %v3281 = vpack.c.b16 %v3219, %v3218
  %v3282 = vpack.c.b16 %v3221, %v3220
  %v3283 = vpack.c.b16 %v3223, %v3222
  %v3284 = vpack.c.b16 %v3225, %v3224
  %v3285 = vpack.c.b16 %v3227, %v3226
  %v3286 = vpack.c.b16 %v3229, %v3228
  %v3287 = vpack.c.b16 %v3231, %v3230
  %v3288 = vpack.c.b16 %v3233, %v3232
  %v3289 = vpack.c.b16 %v3235, %v3234
  %v3290 = vpack.c.b16 %v3237, %v3236
  %v3291 = vpack.c.b16 %v3239, %v3238
  %v3292 = vpack.c.b16 %v3241, %v3240
  %v3293 = vpack.c.b16 %v3243, %v3242
  %vm3294 = vcmask 687104
  %v3296 = vsel %vm3294, %v3244, 0
  %v3299 = vsel %vm3294, %v3245, 0
  %v3302 = vsel %vm3294, %v3246, 0
  %v3305 = vsel %vm3294, %v3247, 0
  %v3308 = vsel %vm3294, %v3248, 0
  %v3311 = vsel %vm3294, %v3249, 0
  %v3314 = vsel %vm3294, %v3250, 0
  %v3317 = vsel %vm3294, %v3251, 0
  %v3320 = vsel %vm3294, %v3252, 0
  %v3323 = vsel %vm3294, %v3253, 0
  %v3326 = vsel %vm3294, %v3254, 0
  %v3329 = vsel %vm3294, %v3255, 0
  %v3332 = vsel %vm3294, %v3256, 0
  %v3335 = vsel %vm3294, %v3257, 0
  %v3338 = vsel %vm3294, %v3258, 0
  %v3341 = vsel %vm3294, %v3259, 0
  %v3344 = vsel %vm3294, %v3260, 0
  %v3347 = vsel %vm3294, %v3261, 0
  %v3350 = vsel %vm3294, %v3262, 0
  %v3353 = vsel %vm3294, %v3263, 0
  %v3356 = vsel %vm3294, %v3264, 0
  %v3359 = vsel %vm3294, %v3265, 0
  %v3362 = vsel %vm3294, %v3266, 0
  %v3365 = vsel %vm3294, %v3267, 0
  %v3368 = vsel %vm3294, %v3268, 0
  %v3371 = vsel %vm3294, %v3269, 0
  %v3374 = vsel %vm3294, %v3270, 0
  %v3377 = vsel %vm3294, %v3271, 0
  %v3380 = vsel %vm3294, %v3272, 0
  %v3383 = vsel %vm3294, %v3273, 0
  %v3386 = vsel %vm3294, %v3274, 0
  %v3389 = vsel %vm3294, %v3275, 0
  %v3392 = vsel %vm3294, %v3276, 0
  %v3395 = vsel %vm3294, %v3277, 0
  %v3398 = vsel %vm3294, %v3278, 0
  %v3401 = vsel %vm3294, %v3279, 0
  %v3404 = vsel %vm3294, %v3280, 0
  %v3407 = vsel %vm3294, %v3281, 0
  %v3410 = vsel %vm3294, %v3282, 0
  %v3413 = vsel %vm3294, %v3283, 0
  %v3416 = vsel %vm3294, %v3284, 0
  %v3419 = vsel %vm3294, %v3285, 0
  %v3422 = vsel %vm3294, %v3286, 0
  %v3425 = vsel %vm3294, %v3287, 0
  %v3428 = vsel %vm3294, %v3288, 0
  %v3431 = vsel %vm3294, %v3289, 0
  %v3434 = vsel %vm3294, %v3290, 0
  %v3437 = vsel %vm3294, %v3291, 0
  %v3440 = vsel %vm3294, %v3292, 0
  %v3443 = vsel %vm3294, %v3293, 0
  %vm3445 = vcmask 1041408
  %v3447 = vsel %vm3445, %v2943, 0
  %3449 = vmatprep.subr.bf16.mxu0 0
  %3450 = vmatpush1.bf16.msra.mxu0 %v2938
  %3451 = vmatprep.subr.bf16.mxu0 0
  %3452 = vmatpush1.bf16.msra.mxu0 %v2939
  %3453 = vmatprep.subr.bf16.mxu0 0
  %3454 = vmatpush1.bf16.msra.mxu0 %v2940
  %3455 = vmatprep.subr.bf16.mxu0 0
  %3456 = vmatpush1.bf16.msra.mxu0 %v2941
  %3457 = vmatprep.subr.bf16.mxu0 0
  %3458 = vmatpush1.bf16.msra.mxu0 %v2942
  %3459 = vmatprep.subr.bf16.mxu0 0
  %3460 = vmatpush1.bf16.msra.mxu0 %v3447
  %3461 = vmatprep.subr.bf16.mxu0 0
  %3462 = vmatpush1.bf16.msra.mxu0 0
  %3463 = vmatprep.subr.bf16.mxu0 0
  %3464 = vmatpush1.bf16.msra.mxu0 0
  %3465 = vmatprep.subr.bf16.mxu0 0
  %3466 = vmatpush1.bf16.msra.mxu0 0
  %3467 = vmatprep.subr.bf16.mxu0 0
  %3468 = vmatpush1.bf16.msra.mxu0 0
  %3469 = vmatprep.subr.bf16.mxu0 0
  %3470 = vmatpush1.bf16.msra.mxu0 0
  %3471 = vmatprep.subr.bf16.mxu0 0
  %3472 = vmatpush1.bf16.msra.mxu0 0
  %3473 = vmatprep.subr.bf16.mxu0 0
  %3474 = vmatpush1.bf16.msra.mxu0 0
  %3475 = vmatprep.subr.bf16.mxu0 0
  %3476 = vmatpush1.bf16.msra.mxu0 0
  %3477 = vmatprep.subr.bf16.mxu0 0
  %3478 = vmatpush1.bf16.msra.mxu0 0
  %3479 = vmatprep.subr.bf16.mxu0 0
  %3480 = vmatpush1.bf16.msra.mxu0 0
  %3481 = vmatprep.mubr.bf16.mxu0 0
  %3482 = vmatmul.mubr.bf16.gmra.mrb[0].mxu0 %v3296
  %v3483 = vpop.f32.mrb[0].mxu0
  %v3484 = vadd.f32 0.0, %v3483
  %v3485 = vpop.f32.mrb[0].mxu0
  %v3486 = vpop.f32.mrb[0].mxu0
  %v3487 = vadd.f32 0.0, %v3486
  %v3488 = vpop.f32.mrb[0].mxu0
  %3489 = vmatprep.mubr.bf16.mxu0 0
  %3490 = vmatmul.mubr.bf16.gmra.mrb[0].mxu0 %v3299
  %v3491 = vpop.f32.mrb[0].mxu0
  %v3492 = vadd.f32 0.0, %v3491
  %v3493 = vpop.f32.mrb[0].mxu0
  %v3494 = vpop.f32.mrb[0].mxu0
  %v3495 = vadd.f32 0.0, %v3494
  %v3496 = vpop.f32.mrb[0].mxu0
  %3497 = vmatprep.mubr.bf16.mxu0 0
  %3498 = vmatmul.mubr.bf16.gmra.mrb[0].mxu0 %v3302
  %v3499 = vpop.f32.mrb[0].mxu0
  %v3500 = vadd.f32 0.0, %v3499
  %v3501 = vpop.f32.mrb[0].mxu0
  %v3502 = vpop.f32.mrb[0].mxu0
  %v3503 = vadd.f32 0.0, %v3502
  %v3504 = vpop.f32.mrb[0].mxu0
  %3505 = vmatprep.mubr.bf16.mxu0 0
  %3506 = vmatmul.mubr.bf16.gmra.mrb[0].mxu0 %v3305
  %v3507 = vpop.f32.mrb[0].mxu0
  %v3508 = vadd.f32 0.0, %v3507
  %v3509 = vpop.f32.mrb[0].mxu0
  %v3510 = vpop.f32.mrb[0].mxu0
  %v3511 = vadd.f32 0.0, %v3510
  %v3512 = vpop.f32.mrb[0].mxu0
  %3513 = vmatprep.mubr.bf16.mxu0 0
  %3514 = vmatmul.mubr.bf16.gmra.mrb[0].mxu0 %v3308
  %v3515 = vpop.f32.mrb[0].mxu0
  %v3516 = vadd.f32 0.0, %v3515
  %v3517 = vpop.f32.mrb[0].mxu0
  %v3518 = vpop.f32.mrb[0].mxu0
  %v3519 = vadd.f32 0.0, %v3518
  %v3520 = vpop.f32.mrb[0].mxu0
  %3521 = vmatprep.mubr.bf16.mxu0 0
  %3522 = vmatmul.mubr.bf16.gmra.mrb[0].mxu0 %v3311
  %v3523 = vpop.f32.mrb[0].mxu0
  %v3524 = vadd.f32 0.0, %v3523
  %v3525 = vpop.f32.mrb[0].mxu0
  %v3526 = vpop.f32.mrb[0].mxu0
  %v3527 = vadd.f32 0.0, %v3526
  %v3528 = vpop.f32.mrb[0].mxu0
  %3529 = vmatprep.mubr.bf16.mxu0 0
  %3530 = vmatmul.mubr.bf16.gmra.mrb[0].mxu0 %v3314
  %v3531 = vpop.f32.mrb[0].mxu0
  %v3532 = vadd.f32 0.0, %v3531
  %v3533 = vpop.f32.mrb[0].mxu0
  %v3534 = vpop.f32.mrb[0].mxu0
  %v3535 = vadd.f32 0.0, %v3534
  %v3536 = vpop.f32.mrb[0].mxu0
  %3537 = vmatprep.mubr.bf16.mxu0 0
  %3538 = vmatmul.mubr.bf16.gmra.mrb[0].mxu0 %v3317
  %v3539 = vpop.f32.mrb[0].mxu0
  %v3540 = vadd.f32 0.0, %v3539
  %v3541 = vpop.f32.mrb[0].mxu0
  %v3542 = vpop.f32.mrb[0].mxu0
  %v3543 = vadd.f32 0.0, %v3542
  %v3544 = vpop.f32.mrb[0].mxu0
  %3545 = vmatprep.mubr.bf16.mxu0 0
  %3546 = vmatmul.mubr.bf16.gmra.mrb[0].mxu0 %v3320
  %v3547 = vpop.f32.mrb[0].mxu0
  %v3548 = vadd.f32 0.0, %v3547
  %v3549 = vpop.f32.mrb[0].mxu0
  %v3550 = vpop.f32.mrb[0].mxu0
  %v3551 = vadd.f32 0.0, %v3550
  %v3552 = vpop.f32.mrb[0].mxu0
  %3553 = vmatprep.mubr.bf16.mxu0 0
  %3554 = vmatmul.mubr.bf16.gmra.mrb[0].mxu0 %v3323
  %v3555 = vpop.f32.mrb[0].mxu0
  %v3556 = vadd.f32 0.0, %v3555
  %v3557 = vpop.f32.mrb[0].mxu0
  %v3558 = vpop.f32.mrb[0].mxu0
  %v3559 = vadd.f32 0.0, %v3558
  %v3560 = vpop.f32.mrb[0].mxu0
  %3561 = vmatprep.mubr.bf16.mxu0 0
  %3562 = vmatmul.mubr.bf16.gmra.mrb[0].mxu0 %v3326
  %v3563 = vpop.f32.mrb[0].mxu0
  %v3564 = vadd.f32 0.0, %v3563
  %v3565 = vpop.f32.mrb[0].mxu0
  %v3566 = vpop.f32.mrb[0].mxu0
  %v3567 = vadd.f32 0.0, %v3566
  %v3568 = vpop.f32.mrb[0].mxu0
  %3569 = vmatprep.mubr.bf16.mxu0 0
  %3570 = vmatmul.mubr.bf16.gmra.mrb[0].mxu0 %v3329
  %v3571 = vpop.f32.mrb[0].mxu0
  %v3572 = vadd.f32 0.0, %v3571
  %v3573 = vpop.f32.mrb[0].mxu0
  %v3574 = vpop.f32.mrb[0].mxu0
  %v3575 = vadd.f32 0.0, %v3574
  %v3576 = vpop.f32.mrb[0].mxu0
  %3577 = vmatprep.mubr.bf16.mxu0 0
  %3578 = vmatmul.mubr.bf16.gmra.mrb[0].mxu0 %v3332
  %v3579 = vpop.f32.mrb[0].mxu0
  %v3580 = vadd.f32 0.0, %v3579
  %v3581 = vpop.f32.mrb[0].mxu0
  %v3582 = vpop.f32.mrb[0].mxu0
  %v3583 = vadd.f32 0.0, %v3582
  %v3584 = vpop.f32.mrb[0].mxu0
  %3585 = vmatprep.mubr.bf16.mxu0 0
  %3586 = vmatmul.mubr.bf16.gmra.mrb[0].mxu0 %v3335
  %v3587 = vpop.f32.mrb[0].mxu0
  %v3588 = vadd.f32 0.0, %v3587
  %v3589 = vpop.f32.mrb[0].mxu0
  %v3590 = vpop.f32.mrb[0].mxu0
  %v3591 = vadd.f32 0.0, %v3590
  %v3592 = vpop.f32.mrb[0].mxu0
  %3593 = vmatprep.mubr.bf16.mxu0 0
  %3594 = vmatmul.mubr.bf16.gmra.mrb[0].mxu0 %v3338
  %v3595 = vpop.f32.mrb[0].mxu0
  %v3596 = vadd.f32 0.0, %v3595
  %v3597 = vpop.f32.mrb[0].mxu0
  %v3598 = vpop.f32.mrb[0].mxu0
  %v3599 = vadd.f32 0.0, %v3598
  %v3600 = vpop.f32.mrb[0].mxu0
  %3601 = vmatprep.mubr.bf16.mxu0 0
  %3602 = vmatmul.mubr.bf16.gmra.mrb[0].mxu0 %v3341
  %v3603 = vpop.f32.mrb[0].mxu0
  %v3604 = vadd.f32 0.0, %v3603
  %v3605 = vpop.f32.mrb[0].mxu0
  %v3606 = vpop.f32.mrb[0].mxu0
  %v3607 = vadd.f32 0.0, %v3606
  %v3608 = vpop.f32.mrb[0].mxu0
  %3609 = vmatprep.mubr.bf16.mxu0 0
  %3610 = vmatmul.mubr.bf16.gmra.mrb[0].mxu0 %v3344
  %v3611 = vpop.f32.mrb[0].mxu0
  %v3612 = vadd.f32 0.0, %v3611
  %v3613 = vpop.f32.mrb[0].mxu0
  %v3614 = vpop.f32.mrb[0].mxu0
  %v3615 = vadd.f32 0.0, %v3614
  %v3616 = vpop.f32.mrb[0].mxu0
  %3617 = vmatprep.mubr.bf16.mxu0 0
  %3618 = vmatmul.mubr.bf16.gmra.mrb[0].mxu0 %v3347
  %v3619 = vpop.f32.mrb[0].mxu0
  %v3620 = vadd.f32 0.0, %v3619
  %v3621 = vpop.f32.mrb[0].mxu0
  %v3622 = vpop.f32.mrb[0].mxu0
  %v3623 = vadd.f32 0.0, %v3622
  %v3624 = vpop.f32.mrb[0].mxu0
  %3625 = vmatprep.mubr.bf16.mxu0 0
  %3626 = vmatmul.mubr.bf16.gmra.mrb[0].mxu0 %v3350
  %v3627 = vpop.f32.mrb[0].mxu0
  %v3628 = vadd.f32 0.0, %v3627
  %v3629 = vpop.f32.mrb[0].mxu0
  %v3630 = vpop.f32.mrb[0].mxu0
  %v3631 = vadd.f32 0.0, %v3630
  %v3632 = vpop.f32.mrb[0].mxu0
  %3633 = vmatprep.mubr.bf16.mxu0 0
  %3634 = vmatmul.mubr.bf16.gmra.mrb[0].mxu0 %v3353
  %v3635 = vpop.f32.mrb[0].mxu0
  %v3636 = vadd.f32 0.0, %v3635
  %v3637 = vpop.f32.mrb[0].mxu0
  %v3638 = vpop.f32.mrb[0].mxu0
  %v3639 = vadd.f32 0.0, %v3638
  %v3640 = vpop.f32.mrb[0].mxu0
  %3641 = vmatprep.mubr.bf16.mxu0 0
  %3642 = vmatmul.mubr.bf16.gmra.mrb[0].mxu0 %v3356
  %v3643 = vpop.f32.mrb[0].mxu0
  %v3644 = vadd.f32 0.0, %v3643
  %v3645 = vpop.f32.mrb[0].mxu0
  %v3646 = vpop.f32.mrb[0].mxu0
  %v3647 = vadd.f32 0.0, %v3646
  %v3648 = vpop.f32.mrb[0].mxu0
  %3649 = vmatprep.mubr.bf16.mxu0 0
  %3650 = vmatmul.mubr.bf16.gmra.mrb[0].mxu0 %v3359
  %v3651 = vpop.f32.mrb[0].mxu0
  %v3652 = vadd.f32 0.0, %v3651
  %v3653 = vpop.f32.mrb[0].mxu0
  %v3654 = vpop.f32.mrb[0].mxu0
  %v3655 = vadd.f32 0.0, %v3654
  %v3656 = vpop.f32.mrb[0].mxu0
  %3657 = vmatprep.mubr.bf16.mxu0 0
  %3658 = vmatmul.mubr.bf16.gmra.mrb[0].mxu0 %v3362
  %v3659 = vpop.f32.mrb[0].mxu0
  %v3660 = vadd.f32 0.0, %v3659
  %v3661 = vpop.f32.mrb[0].mxu0
  %v3662 = vpop.f32.mrb[0].mxu0
  %v3663 = vadd.f32 0.0, %v3662
  %v3664 = vpop.f32.mrb[0].mxu0
  %3665 = vmatprep.mubr.bf16.mxu0 0
  %3666 = vmatmul.mubr.bf16.gmra.mrb[0].mxu0 %v3365
  %v3667 = vpop.f32.mrb[0].mxu0
  %v3668 = vadd.f32 0.0, %v3667
  %v3669 = vpop.f32.mrb[0].mxu0
  %v3670 = vpop.f32.mrb[0].mxu0
  %v3671 = vadd.f32 0.0, %v3670
  %v3672 = vpop.f32.mrb[0].mxu0
  %3673 = vmatprep.mubr.bf16.mxu0 0
  %3674 = vmatmul.mubr.bf16.gmra.mrb[0].mxu0 %v3368
  %v3675 = vpop.f32.mrb[0].mxu0
  %v3676 = vadd.f32 0.0, %v3675
  %v3677 = vpop.f32.mrb[0].mxu0
  %v3678 = vpop.f32.mrb[0].mxu0
  %v3679 = vadd.f32 0.0, %v3678
  %v3680 = vpop.f32.mrb[0].mxu0
  %3681 = vmatprep.mubr.bf16.mxu0 0
  %3682 = vmatmul.mubr.bf16.gmra.mrb[0].mxu0 %v3371
  %v3683 = vpop.f32.mrb[0].mxu0
  %v3684 = vadd.f32 0.0, %v3683
  %v3685 = vpop.f32.mrb[0].mxu0
  %v3686 = vpop.f32.mrb[0].mxu0
  %v3687 = vadd.f32 0.0, %v3686
  %v3688 = vpop.f32.mrb[0].mxu0
  %3689 = vmatprep.mubr.bf16.mxu0 0
  %3690 = vmatmul.mubr.bf16.gmra.mrb[0].mxu0 %v3374
  %v3691 = vpop.f32.mrb[0].mxu0
  %v3692 = vadd.f32 0.0, %v3691
  %v3693 = vpop.f32.mrb[0].mxu0
  %v3694 = vpop.f32.mrb[0].mxu0
  %v3695 = vadd.f32 0.0, %v3694
  %v3696 = vpop.f32.mrb[0].mxu0
  %3697 = vmatprep.mubr.bf16.mxu0 0
  %3698 = vmatmul.mubr.bf16.gmra.mrb[0].mxu0 %v3377
  %v3699 = vpop.f32.mrb[0].mxu0
  %v3700 = vadd.f32 0.0, %v3699
  %v3701 = vpop.f32.mrb[0].mxu0
  %v3702 = vpop.f32.mrb[0].mxu0
  %v3703 = vadd.f32 0.0, %v3702
  %v3704 = vpop.f32.mrb[0].mxu0
  %3705 = vmatprep.mubr.bf16.mxu0 0
  %3706 = vmatmul.mubr.bf16.gmra.mrb[0].mxu0 %v3380
  %v3707 = vpop.f32.mrb[0].mxu0
  %v3708 = vadd.f32 0.0, %v3707
  %v3709 = vpop.f32.mrb[0].mxu0
  %v3710 = vpop.f32.mrb[0].mxu0
  %v3711 = vadd.f32 0.0, %v3710
  %v3712 = vpop.f32.mrb[0].mxu0
  %3713 = vmatprep.mubr.bf16.mxu0 0
  %3714 = vmatmul.mubr.bf16.gmra.mrb[0].mxu0 %v3383
  %v3715 = vpop.f32.mrb[0].mxu0
  %v3716 = vadd.f32 0.0, %v3715
  %v3717 = vpop.f32.mrb[0].mxu0
  %v3718 = vpop.f32.mrb[0].mxu0
  %v3719 = vadd.f32 0.0, %v3718
  %v3720 = vpop.f32.mrb[0].mxu0
  %3721 = vmatprep.mubr.bf16.mxu0 0
  %3722 = vmatmul.mubr.bf16.gmra.mrb[0].mxu0 %v3386
  %v3723 = vpop.f32.mrb[0].mxu0
  %v3724 = vadd.f32 0.0, %v3723
  %v3725 = vpop.f32.mrb[0].mxu0
  %v3726 = vpop.f32.mrb[0].mxu0
  %v3727 = vadd.f32 0.0, %v3726
  %v3728 = vpop.f32.mrb[0].mxu0
  %3729 = vmatprep.mubr.bf16.mxu0 0
  %3730 = vmatmul.mubr.bf16.gmra.mrb[0].mxu0 %v3389
  %v3731 = vpop.f32.mrb[0].mxu0
  %v3732 = vadd.f32 0.0, %v3731
  %v3733 = vpop.f32.mrb[0].mxu0
  %v3734 = vpop.f32.mrb[0].mxu0
  %v3735 = vadd.f32 0.0, %v3734
  %v3736 = vpop.f32.mrb[0].mxu0
  %3737 = vmatprep.mubr.bf16.mxu0 0
  %3738 = vmatmul.mubr.bf16.gmra.mrb[0].mxu0 %v3392
  %v3739 = vpop.f32.mrb[0].mxu0
  %v3740 = vadd.f32 0.0, %v3739
  %v3741 = vpop.f32.mrb[0].mxu0
  %v3742 = vpop.f32.mrb[0].mxu0
  %v3743 = vadd.f32 0.0, %v3742
  %v3744 = vpop.f32.mrb[0].mxu0
  %3745 = vmatprep.mubr.bf16.mxu0 0
  %3746 = vmatmul.mubr.bf16.gmra.mrb[0].mxu0 %v3395
  %v3747 = vpop.f32.mrb[0].mxu0
  %v3748 = vadd.f32 0.0, %v3747
  %v3749 = vpop.f32.mrb[0].mxu0
  %v3750 = vpop.f32.mrb[0].mxu0
  %v3751 = vadd.f32 0.0, %v3750
  %v3752 = vpop.f32.mrb[0].mxu0
  %3753 = vmatprep.mubr.bf16.mxu0 0
  %3754 = vmatmul.mubr.bf16.gmra.mrb[0].mxu0 %v3398
  %v3755 = vpop.f32.mrb[0].mxu0
  %v3756 = vadd.f32 0.0, %v3755
  %v3757 = vpop.f32.mrb[0].mxu0
  %v3758 = vpop.f32.mrb[0].mxu0
  %v3759 = vadd.f32 0.0, %v3758
  %v3760 = vpop.f32.mrb[0].mxu0
  %3761 = vmatprep.mubr.bf16.mxu0 0
  %3762 = vmatmul.mubr.bf16.gmra.mrb[0].mxu0 %v3401
  %v3763 = vpop.f32.mrb[0].mxu0
  %v3764 = vadd.f32 0.0, %v3763
  %v3765 = vpop.f32.mrb[0].mxu0
  %v3766 = vpop.f32.mrb[0].mxu0
  %v3767 = vadd.f32 0.0, %v3766
  %v3768 = vpop.f32.mrb[0].mxu0
  %3769 = vmatprep.mubr.bf16.mxu0 0
  %3770 = vmatmul.mubr.bf16.gmra.mrb[0].mxu0 %v3404
  %v3771 = vpop.f32.mrb[0].mxu0
  %v3772 = vadd.f32 0.0, %v3771
  %v3773 = vpop.f32.mrb[0].mxu0
  %v3774 = vpop.f32.mrb[0].mxu0
  %v3775 = vadd.f32 0.0, %v3774
  %v3776 = vpop.f32.mrb[0].mxu0
  %3777 = vmatprep.mubr.bf16.mxu0 0
  %3778 = vmatmul.mubr.bf16.gmra.mrb[0].mxu0 %v3407
  %v3779 = vpop.f32.mrb[0].mxu0
  %v3780 = vadd.f32 0.0, %v3779
  %v3781 = vpop.f32.mrb[0].mxu0
  %v3782 = vpop.f32.mrb[0].mxu0
  %v3783 = vadd.f32 0.0, %v3782
  %v3784 = vpop.f32.mrb[0].mxu0
  %3785 = vmatprep.mubr.bf16.mxu0 0
  %3786 = vmatmul.mubr.bf16.gmra.mrb[0].mxu0 %v3410
  %v3787 = vpop.f32.mrb[0].mxu0
  %v3788 = vadd.f32 0.0, %v3787
  %v3789 = vpop.f32.mrb[0].mxu0
  %v3790 = vpop.f32.mrb[0].mxu0
  %v3791 = vadd.f32 0.0, %v3790
  %v3792 = vpop.f32.mrb[0].mxu0
  %3793 = vmatprep.mubr.bf16.mxu0 0
  %3794 = vmatmul.mubr.bf16.gmra.mrb[0].mxu0 %v3413
  %v3795 = vpop.f32.mrb[0].mxu0
  %v3796 = vadd.f32 0.0, %v3795
  %v3797 = vpop.f32.mrb[0].mxu0
  %v3798 = vpop.f32.mrb[0].mxu0
  %v3799 = vadd.f32 0.0, %v3798
  %v3800 = vpop.f32.mrb[0].mxu0
  %3801 = vmatprep.mubr.bf16.mxu0 0
  %3802 = vmatmul.mubr.bf16.gmra.mrb[0].mxu0 %v3416
  %v3803 = vpop.f32.mrb[0].mxu0
  %v3804 = vadd.f32 0.0, %v3803
  %v3805 = vpop.f32.mrb[0].mxu0
  %v3806 = vpop.f32.mrb[0].mxu0
  %v3807 = vadd.f32 0.0, %v3806
  %v3808 = vpop.f32.mrb[0].mxu0
  %3809 = vmatprep.mubr.bf16.mxu0 0
  %3810 = vmatmul.mubr.bf16.gmra.mrb[0].mxu0 %v3419
  %v3811 = vpop.f32.mrb[0].mxu0
  %v3812 = vadd.f32 0.0, %v3811
  %v3813 = vpop.f32.mrb[0].mxu0
  %v3814 = vpop.f32.mrb[0].mxu0
  %v3815 = vadd.f32 0.0, %v3814
  %v3816 = vpop.f32.mrb[0].mxu0
  %3817 = vmatprep.mubr.bf16.mxu0 0
  %3818 = vmatmul.mubr.bf16.gmra.mrb[0].mxu0 %v3422
  %v3819 = vpop.f32.mrb[0].mxu0
  %v3820 = vadd.f32 0.0, %v3819
  %v3821 = vpop.f32.mrb[0].mxu0
  %v3822 = vpop.f32.mrb[0].mxu0
  %v3823 = vadd.f32 0.0, %v3822
  %v3824 = vpop.f32.mrb[0].mxu0
  %3825 = vmatprep.mubr.bf16.mxu0 0
  %3826 = vmatmul.mubr.bf16.gmra.mrb[0].mxu0 %v3425
  %v3827 = vpop.f32.mrb[0].mxu0
  %v3828 = vadd.f32 0.0, %v3827
  %v3829 = vpop.f32.mrb[0].mxu0
  %v3830 = vpop.f32.mrb[0].mxu0
  %v3831 = vadd.f32 0.0, %v3830
  %v3832 = vpop.f32.mrb[0].mxu0
  %3833 = vmatprep.mubr.bf16.mxu0 0
  %3834 = vmatmul.mubr.bf16.gmra.mrb[0].mxu0 %v3428
  %v3835 = vpop.f32.mrb[0].mxu0
  %v3836 = vadd.f32 0.0, %v3835
  %v3837 = vpop.f32.mrb[0].mxu0
  %v3838 = vpop.f32.mrb[0].mxu0
  %v3839 = vadd.f32 0.0, %v3838
  %v3840 = vpop.f32.mrb[0].mxu0
  %3841 = vmatprep.mubr.bf16.mxu0 0
  %3842 = vmatmul.mubr.bf16.gmra.mrb[0].mxu0 %v3431
  %v3843 = vpop.f32.mrb[0].mxu0
  %v3844 = vadd.f32 0.0, %v3843
  %v3845 = vpop.f32.mrb[0].mxu0
  %v3846 = vpop.f32.mrb[0].mxu0
  %v3847 = vadd.f32 0.0, %v3846
  %v3848 = vpop.f32.mrb[0].mxu0
  %3849 = vmatprep.mubr.bf16.mxu0 0
  %3850 = vmatmul.mubr.bf16.gmra.mrb[0].mxu0 %v3434
  %v3851 = vpop.f32.mrb[0].mxu0
  %v3852 = vadd.f32 0.0, %v3851
  %v3853 = vpop.f32.mrb[0].mxu0
  %v3854 = vpop.f32.mrb[0].mxu0
  %v3855 = vadd.f32 0.0, %v3854
  %v3856 = vpop.f32.mrb[0].mxu0
  %3857 = vmatprep.mubr.bf16.mxu0 0
  %3858 = vmatmul.mubr.bf16.gmra.mrb[0].mxu0 %v3437
  %v3859 = vpop.f32.mrb[0].mxu0
  %v3860 = vadd.f32 0.0, %v3859
  %v3861 = vpop.f32.mrb[0].mxu0
  %v3862 = vpop.f32.mrb[0].mxu0
  %v3863 = vadd.f32 0.0, %v3862
  %v3864 = vpop.f32.mrb[0].mxu0
  %3865 = vmatprep.mubr.bf16.mxu0 0
  %3866 = vmatmul.mubr.bf16.gmra.mrb[0].mxu0 %v3440
  %v3867 = vpop.f32.mrb[0].mxu0
  %v3868 = vadd.f32 0.0, %v3867
  %v3869 = vpop.f32.mrb[0].mxu0
  %v3870 = vpop.f32.mrb[0].mxu0
  %v3871 = vadd.f32 0.0, %v3870
  %v3872 = vpop.f32.mrb[0].mxu0
  %3873 = vmatprep.mubr.bf16.mxu0 0
  %3874 = vmatmul.mubr.bf16.gmra.mrb[0].mxu0 %v3443
  %v3875 = vpop.f32.mrb[0].mxu0
  %v3876 = vadd.f32 0.0, %v3875
  %v3877 = vpop.f32.mrb[0].mxu0
  %v3878 = vpop.f32.mrb[0].mxu0
  %v3879 = vadd.f32 0.0, %v3878
  %v3880 = vpop.f32.mrb[0].mxu0
  %3881 = vdwg.mxu0
  %3882 = vrot.lane.b32.xlu0 %v3564, 127
  %v3883 = vpop.permute.xlu0 %3882
  %3884 = vrot.lane.b32.xlu0 %v3567, 127
  %v3885 = vpop.permute.xlu0 %3884
  %3886 = vrot.lane.b32.xlu0 %v3572, 127
  %v3887 = vpop.permute.xlu0 %3886
  %3888 = vrot.lane.b32.xlu0 %v3575, 127
  %v3889 = vpop.permute.xlu0 %3888
  %3890 = vrot.lane.b32.xlu0 %v3580, 127
  %v3891 = vpop.permute.xlu0 %3890
  %3892 = vrot.lane.b32.xlu0 %v3583, 127
  %v3893 = vpop.permute.xlu0 %3892
  %3894 = vrot.lane.b32.xlu0 %v3588, 127
  %v3895 = vpop.permute.xlu0 %3894
  %3896 = vrot.lane.b32.xlu0 %v3591, 127
  %v3897 = vpop.permute.xlu0 %3896
  %3898 = vrot.lane.b32.xlu0 %v3596, 127
  %v3899 = vpop.permute.xlu0 %3898
  %3900 = vrot.lane.b32.xlu0 %v3599, 127
  %v3901 = vpop.permute.xlu0 %3900
  %3902 = vrot.lane.b32.xlu0 %v3604, 127
  %v3903 = vpop.permute.xlu0 %3902
  %3904 = vrot.lane.b32.xlu0 %v3607, 127
  %v3905 = vpop.permute.xlu0 %3904
  %3906 = vrot.lane.b32.xlu0 %v3612, 127
  %v3907 = vpop.permute.xlu0 %3906
  %3908 = vrot.lane.b32.xlu0 %v3615, 127
  %v3909 = vpop.permute.xlu0 %3908
  %3910 = vrot.lane.b32.xlu0 %v3620, 127
  %v3911 = vpop.permute.xlu0 %3910
  %3912 = vrot.lane.b32.xlu0 %v3623, 127
  %v3913 = vpop.permute.xlu0 %3912
  %3914 = vrot.lane.b32.xlu0 %v3628, 127
  %v3915 = vpop.permute.xlu0 %3914
  %3916 = vrot.lane.b32.xlu0 %v3631, 127
  %v3917 = vpop.permute.xlu0 %3916
  %3918 = vrot.lane.b32.xlu0 %v3636, 127
  %v3919 = vpop.permute.xlu0 %3918
  %3920 = vrot.lane.b32.xlu0 %v3639, 127
  %v3921 = vpop.permute.xlu0 %3920
  %v3922 = vadd.f32 %v3484, %v3883
  %v3923 = vadd.f32 %v3487, %v3885
  %v3924 = vadd.f32 %v3492, %v3887
  %v3925 = vadd.f32 %v3495, %v3889
  %v3926 = vadd.f32 %v3500, %v3891
  %v3927 = vadd.f32 %v3503, %v3893
  %v3928 = vadd.f32 %v3508, %v3895
  %v3929 = vadd.f32 %v3511, %v3897
  %v3930 = vadd.f32 %v3516, %v3899
  %v3931 = vadd.f32 %v3519, %v3901
  %v3932 = vadd.f32 %v3524, %v3903
  %v3933 = vadd.f32 %v3527, %v3905
  %v3934 = vadd.f32 %v3532, %v3907
  %v3935 = vadd.f32 %v3535, %v3909
  %v3936 = vadd.f32 %v3540, %v3911
  %v3937 = vadd.f32 %v3543, %v3913
  %v3938 = vadd.f32 %v3548, %v3915
  %v3939 = vadd.f32 %v3551, %v3917
  %v3940 = vadd.f32 %v3556, %v3919
  %v3941 = vadd.f32 %v3559, %v3921
  %3942 = vrot.lane.b32.xlu0 %v3644, 126
  %v3943 = vpop.permute.xlu0 %3942
  %3944 = vrot.lane.b32.xlu0 %v3647, 126
  %v3945 = vpop.permute.xlu0 %3944
  %3946 = vrot.lane.b32.xlu0 %v3652, 126
  %v3947 = vpop.permute.xlu0 %3946
  %3948 = vrot.lane.b32.xlu0 %v3655, 126
  %v3949 = vpop.permute.xlu0 %3948
  %3950 = vrot.lane.b32.xlu0 %v3660, 126
  %v3951 = vpop.permute.xlu0 %3950
  %3952 = vrot.lane.b32.xlu0 %v3663, 126
  %v3953 = vpop.permute.xlu0 %3952
  %3954 = vrot.lane.b32.xlu0 %v3668, 126
  %v3955 = vpop.permute.xlu0 %3954
  %3956 = vrot.lane.b32.xlu0 %v3671, 126
  %v3957 = vpop.permute.xlu0 %3956
  %3958 = vrot.lane.b32.xlu0 %v3676, 126
  %v3959 = vpop.permute.xlu0 %3958
  %3960 = vrot.lane.b32.xlu0 %v3679, 126
  %v3961 = vpop.permute.xlu0 %3960
  %3962 = vrot.lane.b32.xlu0 %v3684, 126
  %v3963 = vpop.permute.xlu0 %3962
  %3964 = vrot.lane.b32.xlu0 %v3687, 126
  %v3965 = vpop.permute.xlu0 %3964
  %3966 = vrot.lane.b32.xlu0 %v3692, 126
  %v3967 = vpop.permute.xlu0 %3966
  %3968 = vrot.lane.b32.xlu0 %v3695, 126
  %v3969 = vpop.permute.xlu0 %3968
  %3970 = vrot.lane.b32.xlu0 %v3700, 126
  %v3971 = vpop.permute.xlu0 %3970
  %3972 = vrot.lane.b32.xlu0 %v3703, 126
  %v3973 = vpop.permute.xlu0 %3972
  %3974 = vrot.lane.b32.xlu0 %v3708, 126
  %v3975 = vpop.permute.xlu0 %3974
  %3976 = vrot.lane.b32.xlu0 %v3711, 126
  %v3977 = vpop.permute.xlu0 %3976
  %3978 = vrot.lane.b32.xlu0 %v3716, 126
  %v3979 = vpop.permute.xlu0 %3978
  %3980 = vrot.lane.b32.xlu0 %v3719, 126
  %v3981 = vpop.permute.xlu0 %3980
  %v3982 = vadd.f32 %v3922, %v3943
  %v3983 = vadd.f32 %v3923, %v3945
  %v3984 = vadd.f32 %v3924, %v3947
  %v3985 = vadd.f32 %v3925, %v3949
  %v3986 = vadd.f32 %v3926, %v3951
  %v3987 = vadd.f32 %v3927, %v3953
  %v3988 = vadd.f32 %v3928, %v3955
  %v3989 = vadd.f32 %v3929, %v3957
  %v3990 = vadd.f32 %v3930, %v3959
  %v3991 = vadd.f32 %v3931, %v3961
  %v3992 = vadd.f32 %v3932, %v3963
  %v3993 = vadd.f32 %v3933, %v3965
  %v3994 = vadd.f32 %v3934, %v3967
  %v3995 = vadd.f32 %v3935, %v3969
  %v3996 = vadd.f32 %v3936, %v3971
  %v3997 = vadd.f32 %v3937, %v3973
  %v3998 = vadd.f32 %v3938, %v3975
  %v3999 = vadd.f32 %v3939, %v3977
  %v4000 = vadd.f32 %v3940, %v3979
  %v4001 = vadd.f32 %v3941, %v3981
  %4002 = vrot.lane.b32.xlu0 %v3724, 125
  %v4003 = vpop.permute.xlu0 %4002
  %4004 = vrot.lane.b32.xlu0 %v3727, 125
  %v4005 = vpop.permute.xlu0 %4004
  %4006 = vrot.lane.b32.xlu0 %v3732, 125
  %v4007 = vpop.permute.xlu0 %4006
  %4008 = vrot.lane.b32.xlu0 %v3735, 125
  %v4009 = vpop.permute.xlu0 %4008
  %4010 = vrot.lane.b32.xlu0 %v3740, 125
  %v4011 = vpop.permute.xlu0 %4010
  %4012 = vrot.lane.b32.xlu0 %v3743, 125
  %v4013 = vpop.permute.xlu0 %4012
  %4014 = vrot.lane.b32.xlu0 %v3748, 125
  %v4015 = vpop.permute.xlu0 %4014
  %4016 = vrot.lane.b32.xlu0 %v3751, 125
  %v4017 = vpop.permute.xlu0 %4016
  %4018 = vrot.lane.b32.xlu0 %v3756, 125
  %v4019 = vpop.permute.xlu0 %4018
  %4020 = vrot.lane.b32.xlu0 %v3759, 125
  %v4021 = vpop.permute.xlu0 %4020
  %4022 = vrot.lane.b32.xlu0 %v3764, 125
  %v4023 = vpop.permute.xlu0 %4022
  %4024 = vrot.lane.b32.xlu0 %v3767, 125
  %v4025 = vpop.permute.xlu0 %4024
  %4026 = vrot.lane.b32.xlu0 %v3772, 125
  %v4027 = vpop.permute.xlu0 %4026
  %4028 = vrot.lane.b32.xlu0 %v3775, 125
  %v4029 = vpop.permute.xlu0 %4028
  %4030 = vrot.lane.b32.xlu0 %v3780, 125
  %v4031 = vpop.permute.xlu0 %4030
  %4032 = vrot.lane.b32.xlu0 %v3783, 125
  %v4033 = vpop.permute.xlu0 %4032
  %4034 = vrot.lane.b32.xlu0 %v3788, 125
  %v4035 = vpop.permute.xlu0 %4034
  %4036 = vrot.lane.b32.xlu0 %v3791, 125
  %v4037 = vpop.permute.xlu0 %4036
  %4038 = vrot.lane.b32.xlu0 %v3796, 125
  %v4039 = vpop.permute.xlu0 %4038
  %4040 = vrot.lane.b32.xlu0 %v3799, 125
  %v4041 = vpop.permute.xlu0 %4040
  %v4042 = vadd.f32 %v3982, %v4003
  %v4043 = vadd.f32 %v3983, %v4005
  %v4044 = vadd.f32 %v3984, %v4007
  %v4045 = vadd.f32 %v3985, %v4009
  %v4046 = vadd.f32 %v3986, %v4011
  %v4047 = vadd.f32 %v3987, %v4013
  %v4048 = vadd.f32 %v3988, %v4015
  %v4049 = vadd.f32 %v3989, %v4017
  %v4050 = vadd.f32 %v3990, %v4019
  %v4051 = vadd.f32 %v3991, %v4021
  %v4052 = vadd.f32 %v3992, %v4023
  %v4053 = vadd.f32 %v3993, %v4025
  %v4054 = vadd.f32 %v3994, %v4027
  %v4055 = vadd.f32 %v3995, %v4029
  %v4056 = vadd.f32 %v3996, %v4031
  %v4057 = vadd.f32 %v3997, %v4033
  %v4058 = vadd.f32 %v3998, %v4035
  %v4059 = vadd.f32 %v3999, %v4037
  %v4060 = vadd.f32 %v4000, %v4039
  %v4061 = vadd.f32 %v4001, %v4041
  %4062 = vrot.lane.b32.xlu0 %v3804, 124
  %v4063 = vpop.permute.xlu0 %4062
  %4064 = vrot.lane.b32.xlu0 %v3807, 124
  %v4065 = vpop.permute.xlu0 %4064
  %4066 = vrot.lane.b32.xlu0 %v3812, 124
  %v4067 = vpop.permute.xlu0 %4066
  %4068 = vrot.lane.b32.xlu0 %v3815, 124
  %v4069 = vpop.permute.xlu0 %4068
  %4070 = vrot.lane.b32.xlu0 %v3820, 124
  %v4071 = vpop.permute.xlu0 %4070
  %4072 = vrot.lane.b32.xlu0 %v3823, 124
  %v4073 = vpop.permute.xlu0 %4072
  %4074 = vrot.lane.b32.xlu0 %v3828, 124
  %v4075 = vpop.permute.xlu0 %4074
  %4076 = vrot.lane.b32.xlu0 %v3831, 124
  %v4077 = vpop.permute.xlu0 %4076
  %4078 = vrot.lane.b32.xlu0 %v3836, 124
  %v4079 = vpop.permute.xlu0 %4078
  %4080 = vrot.lane.b32.xlu0 %v3839, 124
  %v4081 = vpop.permute.xlu0 %4080
  %4082 = vrot.lane.b32.xlu0 %v3844, 124
  %v4083 = vpop.permute.xlu0 %4082
  %4084 = vrot.lane.b32.xlu0 %v3847, 124
  %v4085 = vpop.permute.xlu0 %4084
  %4086 = vrot.lane.b32.xlu0 %v3852, 124
  %v4087 = vpop.permute.xlu0 %4086
  %4088 = vrot.lane.b32.xlu0 %v3855, 124
  %v4089 = vpop.permute.xlu0 %4088
  %4090 = vrot.lane.b32.xlu0 %v3860, 124
  %v4091 = vpop.permute.xlu0 %4090
  %4092 = vrot.lane.b32.xlu0 %v3863, 124
  %v4093 = vpop.permute.xlu0 %4092
  %4094 = vrot.lane.b32.xlu0 %v3868, 124
  %v4095 = vpop.permute.xlu0 %4094
  %4096 = vrot.lane.b32.xlu0 %v3871, 124
  %v4097 = vpop.permute.xlu0 %4096
  %4098 = vrot.lane.b32.xlu0 %v3876, 124
  %v4099 = vpop.permute.xlu0 %4098
  %4100 = vrot.lane.b32.xlu0 %v3879, 124
  %v4101 = vpop.permute.xlu0 %4100
  %v4102 = vadd.f32 %v4042, %v4063
  %v4103 = vadd.f32 %v4043, %v4065
  %v4104 = vadd.f32 %v4044, %v4067
  %v4105 = vadd.f32 %v4045, %v4069
  %v4106 = vadd.f32 %v4046, %v4071
  %v4107 = vadd.f32 %v4047, %v4073
  %v4108 = vadd.f32 %v4048, %v4075
  %v4109 = vadd.f32 %v4049, %v4077
  %v4110 = vadd.f32 %v4050, %v4079
  %v4111 = vadd.f32 %v4051, %v4081
  %v4112 = vadd.f32 %v4052, %v4083
  %v4113 = vadd.f32 %v4053, %v4085
  %v4114 = vadd.f32 %v4054, %v4087
  %v4115 = vadd.f32 %v4055, %v4089
  %v4116 = vadd.f32 %v4056, %v4091
  %v4117 = vadd.f32 %v4057, %v4093
  %v4118 = vadd.f32 %v4058, %v4095
  %v4119 = vadd.f32 %v4059, %v4097
  %v4120 = vadd.f32 %v4060, %v4099
  %v4121 = vadd.f32 %v4061, %v4101
  %v4122 = vld [vmem:[%s6] sm:$0xff]
  %v4123 = vld [vmem:[%s6 + $0x8] sm:$0xff]
  %v4124 = vld [vmem:[%s6 + $0x10] sm:$0xff]
  %v4125 = vld [vmem:[%s6 + $0x18] sm:$0xff]
  %v4126 = vld [vmem:[%s6 + $0x20] sm:$0xff]
  %v4127 = vld [vmem:[%s6 + $0x28] sm:$0xff]
  %v4128 = vld [vmem:[%s6 + $0x30] sm:$0xff]
  %v4129 = vld [vmem:[%s6 + $0x38] sm:$0xff]
  %v4130 = vld [vmem:[%s6 + $0x40] sm:$0xff]
  %v4131 = vld [vmem:[%s6 + $0x48] sm:$0xff]
  %v4132 = vld [vmem:[%s6 + $0x50] sm:$0xff]
  %v4133 = vld [vmem:[%s6 + $0x58] sm:$0xff]
  %v4134 = vld [vmem:[%s6 + $0x60] sm:$0xff]
  %v4135 = vld [vmem:[%s6 + $0x68] sm:$0xff]
  %v4136 = vld [vmem:[%s6 + $0x70] sm:$0xff]
  %v4137 = vld [vmem:[%s6 + $0x78] sm:$0xff]
  %v4138 = vld [vmem:[%s6 + $0x80] sm:$0xff]
  %v4139 = vld [vmem:[%s6 + $0x88] sm:$0xff]
  %v4140 = vld [vmem:[%s6 + $0x90] sm:$0xff]
  %v4141 = vld [vmem:[%s6 + $0x98] sm:$0xff]
  %4143 = vset.pattern.permute.xlu0 0
  %4144 = vperm.xlu0 %4143, %v4122
  %v4145 = vpop.permute.xlu0 %4144
  %4148 = vset.pattern.permute.xlu0 0
  %4149 = vperm.xlu0 %4148, %v4123
  %v4150 = vpop.permute.xlu0 %4149
  %4153 = vset.pattern.permute.xlu0 0
  %4154 = vperm.xlu0 %4153, %v4124
  %v4155 = vpop.permute.xlu0 %4154
  %4158 = vset.pattern.permute.xlu0 0
  %4159 = vperm.xlu0 %4158, %v4125
  %v4160 = vpop.permute.xlu0 %4159
  %4163 = vset.pattern.permute.xlu0 0
  %4164 = vperm.xlu0 %4163, %v4126
  %v4165 = vpop.permute.xlu0 %4164
  %4168 = vset.pattern.permute.xlu0 0
  %4169 = vperm.xlu0 %4168, %v4127
  %v4170 = vpop.permute.xlu0 %4169
  %4173 = vset.pattern.permute.xlu0 0
  %4174 = vperm.xlu0 %4173, %v4128
  %v4175 = vpop.permute.xlu0 %4174
  %4178 = vset.pattern.permute.xlu0 0
  %4179 = vperm.xlu0 %4178, %v4129
  %v4180 = vpop.permute.xlu0 %4179
  %4183 = vset.pattern.permute.xlu0 0
  %4184 = vperm.xlu0 %4183, %v4130
  %v4185 = vpop.permute.xlu0 %4184
  %4188 = vset.pattern.permute.xlu0 0
  %4189 = vperm.xlu0 %4188, %v4131
  %v4190 = vpop.permute.xlu0 %4189
  %4193 = vset.pattern.permute.xlu0 0
  %4194 = vperm.xlu0 %4193, %v4132
  %v4195 = vpop.permute.xlu0 %4194
  %4198 = vset.pattern.permute.xlu0 0
  %4199 = vperm.xlu0 %4198, %v4133
  %v4200 = vpop.permute.xlu0 %4199
  %4203 = vset.pattern.permute.xlu0 0
  %4204 = vperm.xlu0 %4203, %v4134
  %v4205 = vpop.permute.xlu0 %4204
  %4208 = vset.pattern.permute.xlu0 0
  %4209 = vperm.xlu0 %4208, %v4135
  %v4210 = vpop.permute.xlu0 %4209
  %4213 = vset.pattern.permute.xlu0 0
  %4214 = vperm.xlu0 %4213, %v4136
  %v4215 = vpop.permute.xlu0 %4214
  %4218 = vset.pattern.permute.xlu0 0
  %4219 = vperm.xlu0 %4218, %v4137
  %v4220 = vpop.permute.xlu0 %4219
  %4223 = vset.pattern.permute.xlu0 0
  %4224 = vperm.xlu0 %4223, %v4138
  %v4225 = vpop.permute.xlu0 %4224
  %4228 = vset.pattern.permute.xlu0 0
  %4229 = vperm.xlu0 %4228, %v4139
  %v4230 = vpop.permute.xlu0 %4229
  %4233 = vset.pattern.permute.xlu0 0
  %4234 = vperm.xlu0 %4233, %v4140
  %v4235 = vpop.permute.xlu0 %4234
  %4238 = vset.pattern.permute.xlu0 0
  %4239 = vperm.xlu0 %4238, %v4141
  %v4240 = vpop.permute.xlu0 %4239
  %v4242 = vadd.f32 %v4102, %v4145
  %v4243 = vadd.f32 %v4103, %v4150
  %v4244 = vadd.f32 %v4104, %v4155
  %v4245 = vadd.f32 %v4105, %v4160
  %v4246 = vadd.f32 %v4106, %v4165
  %v4247 = vadd.f32 %v4107, %v4170
  %v4248 = vadd.f32 %v4108, %v4175
  %v4249 = vadd.f32 %v4109, %v4180
  %v4250 = vadd.f32 %v4110, %v4185
  %v4251 = vadd.f32 %v4111, %v4190
  %v4252 = vadd.f32 %v4112, %v4195
  %v4253 = vadd.f32 %v4113, %v4200
  %v4254 = vadd.f32 %v4114, %v4205
  %v4255 = vadd.f32 %v4115, %v4210
  %v4256 = vadd.f32 %v4116, %v4215
  %v4257 = vadd.f32 %v4117, %v4220
  %v4258 = vadd.f32 %v4118, %v4225
  %v4259 = vadd.f32 %v4119, %v4230
  %v4260 = vadd.f32 %v4120, %v4235
  %v4261 = vadd.f32 %v4121, %v4240
  %v4262 = vmax.f32 %v4242, 0.0
  %v4263 = vmax.f32 %v4243, 0.0
  %v4264 = vmax.f32 %v4244, 0.0
  %v4265 = vmax.f32 %v4245, 0.0
  %v4266 = vmax.f32 %v4246, 0.0
  %v4267 = vmax.f32 %v4247, 0.0
  %v4268 = vmax.f32 %v4248, 0.0
  %v4269 = vmax.f32 %v4249, 0.0
  %v4270 = vmax.f32 %v4250, 0.0
  %v4271 = vmax.f32 %v4251, 0.0
  %v4272 = vmax.f32 %v4252, 0.0
  %v4273 = vmax.f32 %v4253, 0.0
  %v4274 = vmax.f32 %v4254, 0.0
  %v4275 = vmax.f32 %v4255, 0.0
  %v4276 = vmax.f32 %v4256, 0.0
  %v4277 = vmax.f32 %v4257, 0.0
  %v4278 = vmax.f32 %v4258, 0.0
  %v4279 = vmax.f32 %v4259, 0.0
  %v4280 = vmax.f32 %v4260, 0.0
  %v4281 = vmax.f32 %v4261, 0.0
  %v4282 = vpack.c.bf16 %v4263, %v4262
  %v4283 = vpack.c.bf16 %v4265, %v4264
  %v4284 = vpack.c.bf16 %v4267, %v4266
  %v4285 = vpack.c.bf16 %v4269, %v4268
  %v4286 = vpack.c.bf16 %v4271, %v4270
  %v4287 = vpack.c.bf16 %v4273, %v4272
  %v4288 = vpack.c.bf16 %v4275, %v4274
  %v4289 = vpack.c.bf16 %v4277, %v4276
  %v4290 = vpack.c.bf16 %v4279, %v4278
  %v4291 = vpack.c.bf16 %v4281, %v4280
  %v4292 = vld [vmem:[%s7] sm:$0xff]
  %v4293 = vld [vmem:[%s7 + $0x8] sm:$0xff]
  %v4294 = vld [vmem:[%s7 + $0x10] sm:$0xff]
  %v4295 = vld [vmem:[%s7 + $0x18] sm:$0xff]
  %v4296 = vld [vmem:[%s7 + $0x20] sm:$0xff]
  %v4297 = vld [vmem:[%s7 + $0x28] sm:$0xff]
  %v4298 = vld [vmem:[%s7 + $0x30] sm:$0xff]
  %v4299 = vld [vmem:[%s7 + $0x38] sm:$0xff]
  %v4300 = vld [vmem:[%s7 + $0x40] sm:$0xff]
  %v4301 = vld [vmem:[%s7 + $0x48] sm:$0xff]
  %v4312 = vunpack.c.l.b16 %v4292
  %v4313 = vunpack.c.h.b16 %v4292
  %v4314 = vunpack.c.l.b16 %v4293
  %v4315 = vunpack.c.h.b16 %v4293
  %v4316 = vunpack.c.l.b16 %v4294
  %v4317 = vunpack.c.h.b16 %v4294
  %v4318 = vunpack.c.l.b16 %v4295
  %v4319 = vunpack.c.h.b16 %v4295
  %v4320 = vunpack.c.l.b16 %v4296
  %v4321 = vunpack.c.h.b16 %v4296
  %v4322 = vunpack.c.l.b16 %v4297
  %v4323 = vunpack.c.h.b16 %v4297
  %v4324 = vunpack.c.l.b16 %v4298
  %v4325 = vunpack.c.h.b16 %v4298
  %v4326 = vunpack.c.l.b16 %v4299
  %v4327 = vunpack.c.h.b16 %v4299
  %v4328 = vunpack.c.l.b16 %v4300
  %v4329 = vunpack.c.h.b16 %v4300
  %v4330 = vunpack.c.l.b16 %v4301
  %v4331 = vunpack.c.h.b16 %v4301
  %v4332 = vpack.c.b16 %v4314, %v4312
  %v4333 = vpack.c.b16 %v4315, %v4313
  %v4334 = vpack.c.b16 %v4318, %v4316
  %v4335 = vpack.c.b16 %v4319, %v4317
  %v4336 = vpack.c.b16 %v4322, %v4320
  %v4337 = vpack.c.b16 %v4323, %v4321
  %v4338 = vpack.c.b16 %v4326, %v4324
  %v4339 = vpack.c.b16 %v4327, %v4325
  %v4340 = vpack.c.b16 %v4330, %v4328
  %v4341 = vpack.c.b16 %v4331, %v4329
  %vm4347 = vcmask 261120
  %v4349 = vsel %vm4347, %v4333, 0
  %v4352 = vsel %vm4347, %v4335, 0
  %v4355 = vsel %vm4347, %v4337, 0
  %v4358 = vsel %vm4347, %v4339, 0
  %v4361 = vsel %vm4347, %v4341, 0
  %4363 = vmatprep.subr.bf16.mxu0 0
  %4364 = vmatpush1.bf16.msra.mxu0 %v4282
  %4365 = vmatprep.subr.bf16.mxu0 0
  %4366 = vmatpush1.bf16.msra.mxu0 %v4283
  %4367 = vmatprep.subr.bf16.mxu0 0
  %4368 = vmatpush1.bf16.msra.mxu0 %v4284
  %4369 = vmatprep.subr.bf16.mxu0 0
  %4370 = vmatpush1.bf16.msra.mxu0 %v4285
  %4371 = vmatprep.subr.bf16.mxu0 0
  %4372 = vmatpush1.bf16.msra.mxu0 %v4286
  %4373 = vmatprep.subr.bf16.mxu0 0
  %4374 = vmatpush1.bf16.msra.mxu0 %v4287
  %4375 = vmatprep.subr.bf16.mxu0 0
  %4376 = vmatpush1.bf16.msra.mxu0 %v4288
  %4377 = vmatprep.subr.bf16.mxu0 0
  %4378 = vmatpush1.bf16.msra.mxu0 %v4289
  %4379 = vmatprep.subr.bf16.mxu0 0
  %4380 = vmatpush1.bf16.msra.mxu0 %v4290
  %4381 = vmatprep.subr.bf16.mxu0 0
  %4382 = vmatpush1.bf16.msra.mxu0 %v4291
  %4383 = vmatprep.subr.bf16.mxu0 0
  %4384 = vmatpush1.bf16.msra.mxu0 0
  %4385 = vmatprep.subr.bf16.mxu0 0
  %4386 = vmatpush1.bf16.msra.mxu0 0
  %4387 = vmatprep.subr.bf16.mxu0 0
  %4388 = vmatpush1.bf16.msra.mxu0 0
  %4389 = vmatprep.subr.bf16.mxu0 0
  %4390 = vmatpush1.bf16.msra.mxu0 0
  %4391 = vmatprep.subr.bf16.mxu0 0
  %4392 = vmatpush1.bf16.msra.mxu0 0
  %4393 = vmatprep.subr.bf16.mxu0 0
  %4394 = vmatpush1.bf16.msra.mxu0 0
  %4395 = vmatprep.mubr.bf16.mxu0 %v4349
  %4396 = vmatmul.mubr.bf16.gmra.mrb[0].mxu0 %v4332
  %v4397 = vpop.f32.mrb[0].mxu0
  %v4398 = vadd.f32 0.0, %v4397
  %v4399 = vpop.f32.mrb[0].mxu0
  %v4400 = vpop.f32.mrb[0].mxu0
  %v4401 = vadd.f32 0.0, %v4400
  %v4402 = vpop.f32.mrb[0].mxu0
  %4403 = vmatprep.mubr.bf16.mxu0 %v4352
  %4404 = vmatmul.mubr.bf16.gmra.mrb[0].mxu0 %v4334
  %v4405 = vpop.f32.mrb[0].mxu0
  %v4406 = vadd.f32 0.0, %v4405
  %v4407 = vpop.f32.mrb[0].mxu0
  %v4408 = vpop.f32.mrb[0].mxu0
  %v4409 = vadd.f32 0.0, %v4408
  %v4410 = vpop.f32.mrb[0].mxu0
  %4411 = vmatprep.mubr.bf16.mxu0 %v4355
  %4412 = vmatmul.mubr.bf16.gmra.mrb[0].mxu0 %v4336
  %v4413 = vpop.f32.mrb[0].mxu0
  %v4414 = vadd.f32 0.0, %v4413
  %v4415 = vpop.f32.mrb[0].mxu0
  %v4416 = vpop.f32.mrb[0].mxu0
  %v4417 = vadd.f32 0.0, %v4416
  %v4418 = vpop.f32.mrb[0].mxu0
  %4419 = vmatprep.mubr.bf16.mxu0 %v4358
  %4420 = vmatmul.mubr.bf16.gmra.mrb[0].mxu0 %v4338
  %v4421 = vpop.f32.mrb[0].mxu0
  %v4422 = vadd.f32 0.0, %v4421
  %v4423 = vpop.f32.mrb[0].mxu0
  %v4424 = vpop.f32.mrb[0].mxu0
  %v4425 = vadd.f32 0.0, %v4424
  %v4426 = vpop.f32.mrb[0].mxu0
  %4427 = vmatprep.mubr.bf16.mxu0 %v4361
  %4428 = vmatmul.mubr.bf16.gmra.mrb[0].mxu0 %v4340
  %v4429 = vpop.f32.mrb[0].mxu0
  %v4430 = vadd.f32 0.0, %v4429
  %v4431 = vpop.f32.mrb[0].mxu0
  %v4432 = vpop.f32.mrb[0].mxu0
  %v4433 = vadd.f32 0.0, %v4432
  %v4434 = vpop.f32.mrb[0].mxu0
  %4435 = vdwg.mxu0
  %s4436 = scalar_lea.vmem %s7, 80
  %v4437 = vld [vmem:[%s4436] sm:$0xff]
  %v4438 = vld [vmem:[%s4436 + $0x8] sm:$0xff]
  %v4439 = vld [vmem:[%s4436 + $0x10] sm:$0xff]
  %v4440 = vld [vmem:[%s4436 + $0x18] sm:$0xff]
  %v4441 = vld [vmem:[%s4436 + $0x20] sm:$0xff]
  %v4442 = vld [vmem:[%s4436 + $0x28] sm:$0xff]
  %v4443 = vld [vmem:[%s4436 + $0x30] sm:$0xff]
  %v4444 = vld [vmem:[%s4436 + $0x38] sm:$0xff]
  %v4445 = vld [vmem:[%s4436 + $0x40] sm:$0xff]
  %v4446 = vld [vmem:[%s4436 + $0x48] sm:$0xff]
  %v4457 = vunpack.c.l.b16 %v4437
  %v4458 = vunpack.c.h.b16 %v4437
  %v4459 = vunpack.c.l.b16 %v4438
  %v4460 = vunpack.c.h.b16 %v4438
  %v4461 = vunpack.c.l.b16 %v4439
  %v4462 = vunpack.c.h.b16 %v4439
  %v4463 = vunpack.c.l.b16 %v4440
  %v4464 = vunpack.c.h.b16 %v4440
  %v4465 = vunpack.c.l.b16 %v4441
  %v4466 = vunpack.c.h.b16 %v4441
  %v4467 = vunpack.c.l.b16 %v4442
  %v4468 = vunpack.c.h.b16 %v4442
  %v4469 = vunpack.c.l.b16 %v4443
  %v4470 = vunpack.c.h.b16 %v4443
  %v4471 = vunpack.c.l.b16 %v4444
  %v4472 = vunpack.c.h.b16 %v4444
  %v4473 = vunpack.c.l.b16 %v4445
  %v4474 = vunpack.c.h.b16 %v4445
  %v4475 = vunpack.c.l.b16 %v4446
  %v4476 = vunpack.c.h.b16 %v4446
  %v4477 = vpack.c.b16 %v4459, %v4457
  %v4478 = vpack.c.b16 %v4460, %v4458
  %v4479 = vpack.c.b16 %v4463, %v4461
  %v4480 = vpack.c.b16 %v4464, %v4462
  %v4481 = vpack.c.b16 %v4467, %v4465
  %v4482 = vpack.c.b16 %v4468, %v4466
  %v4483 = vpack.c.b16 %v4471, %v4469
  %v4484 = vpack.c.b16 %v4472, %v4470
  %v4485 = vpack.c.b16 %v4475, %v4473
  %v4486 = vpack.c.b16 %v4476, %v4474
  %v4493 = vsel %vm4347, %v4478, 0
  %v4496 = vsel %vm4347, %v4480, 0
  %v4499 = vsel %vm4347, %v4482, 0
  %v4502 = vsel %vm4347, %v4484, 0
  %v4505 = vsel %vm4347, %v4486, 0
  %4507 = vmatprep.subr.bf16.mxu0 0
  %4508 = vmatpush1.bf16.msra.mxu0 %v4282
  %4509 = vmatprep.subr.bf16.mxu0 0
  %4510 = vmatpush1.bf16.msra.mxu0 %v4283
  %4511 = vmatprep.subr.bf16.mxu0 0
  %4512 = vmatpush1.bf16.msra.mxu0 %v4284
  %4513 = vmatprep.subr.bf16.mxu0 0
  %4514 = vmatpush1.bf16.msra.mxu0 %v4285
  %4515 = vmatprep.subr.bf16.mxu0 0
  %4516 = vmatpush1.bf16.msra.mxu0 %v4286
  %4517 = vmatprep.subr.bf16.mxu0 0
  %4518 = vmatpush1.bf16.msra.mxu0 %v4287
  %4519 = vmatprep.subr.bf16.mxu0 0
  %4520 = vmatpush1.bf16.msra.mxu0 %v4288
  %4521 = vmatprep.subr.bf16.mxu0 0
  %4522 = vmatpush1.bf16.msra.mxu0 %v4289
  %4523 = vmatprep.subr.bf16.mxu0 0
  %4524 = vmatpush1.bf16.msra.mxu0 %v4290
  %4525 = vmatprep.subr.bf16.mxu0 0
  %4526 = vmatpush1.bf16.msra.mxu0 %v4291
  %4527 = vmatprep.subr.bf16.mxu0 0
  %4528 = vmatpush1.bf16.msra.mxu0 0
  %4529 = vmatprep.subr.bf16.mxu0 0
  %4530 = vmatpush1.bf16.msra.mxu0 0
  %4531 = vmatprep.subr.bf16.mxu0 0
  %4532 = vmatpush1.bf16.msra.mxu0 0
  %4533 = vmatprep.subr.bf16.mxu0 0
  %4534 = vmatpush1.bf16.msra.mxu0 0
  %4535 = vmatprep.subr.bf16.mxu0 0
  %4536 = vmatpush1.bf16.msra.mxu0 0
  %4537 = vmatprep.subr.bf16.mxu0 0
  %4538 = vmatpush1.bf16.msra.mxu0 0
  %4539 = vmatprep.mubr.bf16.mxu0 %v4493
  %4540 = vmatmul.mubr.bf16.gmra.mrb[0].mxu0 %v4477
  %v4541 = vpop.f32.mrb[0].mxu0
  %v4542 = vadd.f32 0.0, %v4541
  %v4543 = vpop.f32.mrb[0].mxu0
  %v4544 = vpop.f32.mrb[0].mxu0
  %v4545 = vadd.f32 0.0, %v4544
  %v4546 = vpop.f32.mrb[0].mxu0
  %4547 = vmatprep.mubr.bf16.mxu0 %v4496
  %4548 = vmatmul.mubr.bf16.gmra.mrb[0].mxu0 %v4479
  %v4549 = vpop.f32.mrb[0].mxu0
  %v4550 = vadd.f32 0.0, %v4549
  %v4551 = vpop.f32.mrb[0].mxu0
  %v4552 = vpop.f32.mrb[0].mxu0
  %v4553 = vadd.f32 0.0, %v4552
  %v4554 = vpop.f32.mrb[0].mxu0
  %4555 = vmatprep.mubr.bf16.mxu0 %v4499
  %4556 = vmatmul.mubr.bf16.gmra.mrb[0].mxu0 %v4481
  %v4557 = vpop.f32.mrb[0].mxu0
  %v4558 = vadd.f32 0.0, %v4557
  %v4559 = vpop.f32.mrb[0].mxu0
  %v4560 = vpop.f32.mrb[0].mxu0
  %v4561 = vadd.f32 0.0, %v4560
  %v4562 = vpop.f32.mrb[0].mxu0
  %4563 = vmatprep.mubr.bf16.mxu0 %v4502
  %4564 = vmatmul.mubr.bf16.gmra.mrb[0].mxu0 %v4483
  %v4565 = vpop.f32.mrb[0].mxu0
  %v4566 = vadd.f32 0.0, %v4565
  %v4567 = vpop.f32.mrb[0].mxu0
  %v4568 = vpop.f32.mrb[0].mxu0
  %v4569 = vadd.f32 0.0, %v4568
  %v4570 = vpop.f32.mrb[0].mxu0
  %4571 = vmatprep.mubr.bf16.mxu0 %v4505
  %4572 = vmatmul.mubr.bf16.gmra.mrb[0].mxu0 %v4485
  %v4573 = vpop.f32.mrb[0].mxu0
  %v4574 = vadd.f32 0.0, %v4573
  %v4575 = vpop.f32.mrb[0].mxu0
  %v4576 = vpop.f32.mrb[0].mxu0
  %v4577 = vadd.f32 0.0, %v4576
  %v4578 = vpop.f32.mrb[0].mxu0
  %4579 = vdwg.mxu0
  %v4580 = vmax.f32 %v4398, %v4542
  %v4581 = vmax.f32 %v4401, %v4545
  %v4582 = vmax.f32 %v4406, %v4550
  %v4583 = vmax.f32 %v4409, %v4553
  %v4584 = vmax.f32 %v4414, %v4558
  %v4585 = vmax.f32 %v4417, %v4561
  %v4586 = vmax.f32 %v4422, %v4566
  %v4587 = vmax.f32 %v4425, %v4569
  %v4588 = vmax.f32 %v4430, %v4574
  %v4589 = vmax.f32 %v4433, %v4577
  %v4590 = vpack.c.bf16 %v4581, %v4580
  %v4591 = vpack.c.bf16 %v4583, %v4582
  %v4592 = vpack.c.bf16 %v4585, %v4584
  %v4593 = vpack.c.bf16 %v4587, %v4586
  %v4594 = vpack.c.bf16 %v4589, %v4588
  %v4595 = vld [vmem:[%s8] sm:$0xf]
  %v4596 = vld [vmem:[%s8 + $0x4] sm:$0xf]
  %v4597 = vld [vmem:[%s8 + $0x8] sm:$0xf]
  %v4598 = vld [vmem:[%s8 + $0xc] sm:$0xf]
  %v4599 = vld [vmem:[%s8 + $0x10] sm:$0xf]
  %v4600 = vld [vmem:[%s8 + $0x14] sm:$0xf]
  %v4601 = vld [vmem:[%s8 + $0x18] sm:$0xf]
  %v4602 = vld [vmem:[%s8 + $0x1c] sm:$0xf]
  %v4603 = vld [vmem:[%s8 + $0x20] sm:$0xf]
  %v4604 = vld [vmem:[%s8 + $0x24] sm:$0xf]
  %v4605 = vld [vmem:[%s8 + $0x28] sm:$0xf]
  %v4606 = vld [vmem:[%s8 + $0x2c] sm:$0xf]
  %v4607 = vld [vmem:[%s8 + $0x30] sm:$0xf]
  %v4608 = vld [vmem:[%s8 + $0x34] sm:$0xf]
  %v4609 = vld [vmem:[%s8 + $0x38] sm:$0xf]
  %v4610 = vld [vmem:[%s8 + $0x3c] sm:$0xf]
  %v4627 = vunpack.c.l.b16 %v4595
  %v4628 = vunpack.c.l.b16 %v4596
  %v4629 = vunpack.c.l.b16 %v4597
  %v4630 = vunpack.c.l.b16 %v4598
  %v4631 = vunpack.c.l.b16 %v4599
  %v4632 = vunpack.c.l.b16 %v4600
  %v4633 = vunpack.c.l.b16 %v4601
  %v4634 = vunpack.c.l.b16 %v4602
  %v4635 = vunpack.c.l.b16 %v4603
  %v4636 = vunpack.c.l.b16 %v4604
  %v4637 = vunpack.c.l.b16 %v4605
  %v4638 = vunpack.c.l.b16 %v4606
  %v4639 = vunpack.c.l.b16 %v4607
  %v4640 = vunpack.c.l.b16 %v4608
  %v4641 = vunpack.c.l.b16 %v4609
  %v4642 = vunpack.c.l.b16 %v4610
  %v4643 = vpack.c.b16 %v4628, %v4627
  %v4644 = vpack.c.b16 %v4630, %v4629
  %v4645 = vpack.c.b16 %v4632, %v4631
  %v4646 = vpack.c.b16 %v4634, %v4633
  %v4647 = vpack.c.b16 %v4636, %v4635
  %v4648 = vpack.c.b16 %v4638, %v4637
  %v4649 = vpack.c.b16 %v4640, %v4639
  %v4650 = vpack.c.b16 %v4642, %v4641
  %4659 = vmatprep.subr.bf16.mxu0 0
  %4660 = vmatpush1.bf16.msra.mxu0 %v4643
  %4661 = vmatprep.subr.bf16.mxu0 0
  %4662 = vmatpush1.bf16.msra.mxu0 %v4644
  %4663 = vmatprep.subr.bf16.mxu0 0
  %4664 = vmatpush1.bf16.msra.mxu0 %v4645
  %4665 = vmatprep.subr.bf16.mxu0 0
  %4666 = vmatpush1.bf16.msra.mxu0 %v4646
  %4667 = vmatprep.subr.bf16.mxu0 0
  %4668 = vmatpush1.bf16.msra.mxu0 %v4647
  %4669 = vmatprep.subr.bf16.mxu0 0
  %4670 = vmatpush1.bf16.msra.mxu0 %v4648
  %4671 = vmatprep.subr.bf16.mxu0 0
  %4672 = vmatpush1.bf16.msra.mxu0 %v4649
  %4673 = vmatprep.subr.bf16.mxu0 0
  %4674 = vmatpush1.bf16.msra.mxu0 %v4650
  %4675 = vmatprep.subr.bf16.mxu0 0
  %4676 = vmatpush1.bf16.msra.mxu0 0
  %4677 = vmatprep.subr.bf16.mxu0 0
  %4678 = vmatpush1.bf16.msra.mxu0 0
  %4679 = vmatprep.subr.bf16.mxu0 0
  %4680 = vmatpush1.bf16.msra.mxu0 0
  %4681 = vmatprep.subr.bf16.mxu0 0
  %4682 = vmatpush1.bf16.msra.mxu0 0
  %4683 = vmatprep.subr.bf16.mxu0 0
  %4684 = vmatpush1.bf16.msra.mxu0 0
  %4685 = vmatprep.subr.bf16.mxu0 0
  %4686 = vmatpush1.bf16.msra.mxu0 0
  %4687 = vmatprep.subr.bf16.mxu0 0
  %4688 = vmatpush1.bf16.msra.mxu0 0
  %4689 = vmatprep.subr.bf16.mxu0 0
  %4690 = vmatpush1.bf16.msra.mxu0 0
  %4691 = vmatprep.mubr.bf16.mxu0 0
  %4692 = vmatmul.mubr.bf16.gmra.mrb[0].mxu0 %v4590
  %v4693 = vpop.f32.mrb[0].mxu0
  %v4694 = vadd.f32 0.0, %v4693
  %v4695 = vpop.f32.mrb[0].mxu0
  %v4696 = vpop.f32.mrb[0].mxu0
  %v4697 = vadd.f32 0.0, %v4696
  %v4698 = vpop.f32.mrb[0].mxu0
  %4699 = vmatprep.mubr.bf16.mxu0 0
  %4700 = vmatmul.mubr.bf16.gmra.mrb[0].mxu0 %v4591
  %v4701 = vpop.f32.mrb[0].mxu0
  %v4702 = vadd.f32 0.0, %v4701
  %v4703 = vpop.f32.mrb[0].mxu0
  %v4704 = vpop.f32.mrb[0].mxu0
  %v4705 = vadd.f32 0.0, %v4704
  %v4706 = vpop.f32.mrb[0].mxu0
  %4707 = vmatprep.mubr.bf16.mxu0 0
  %4708 = vmatmul.mubr.bf16.gmra.mrb[0].mxu0 %v4592
  %v4709 = vpop.f32.mrb[0].mxu0
  %v4710 = vadd.f32 0.0, %v4709
  %v4711 = vpop.f32.mrb[0].mxu0
  %v4712 = vpop.f32.mrb[0].mxu0
  %v4713 = vadd.f32 0.0, %v4712
  %v4714 = vpop.f32.mrb[0].mxu0
  %4715 = vmatprep.mubr.bf16.mxu0 0
  %4716 = vmatmul.mubr.bf16.gmra.mrb[0].mxu0 %v4593
  %v4717 = vpop.f32.mrb[0].mxu0
  %v4718 = vadd.f32 0.0, %v4717
  %v4719 = vpop.f32.mrb[0].mxu0
  %v4720 = vpop.f32.mrb[0].mxu0
  %v4721 = vadd.f32 0.0, %v4720
  %v4722 = vpop.f32.mrb[0].mxu0
  %4723 = vmatprep.mubr.bf16.mxu0 0
  %4724 = vmatmul.mubr.bf16.gmra.mrb[0].mxu0 %v4594
  %v4725 = vpop.f32.mrb[0].mxu0
  %v4726 = vadd.f32 0.0, %v4725
  %v4727 = vpop.f32.mrb[0].mxu0
  %v4728 = vpop.f32.mrb[0].mxu0
  %v4729 = vadd.f32 0.0, %v4728
  %v4730 = vpop.f32.mrb[0].mxu0
  %4731 = vdwg.mxu0
  %v4732 = vld [vmem:[%s9] sm:$0xf]
  %v4733 = vld [vmem:[%s9 + $0x4] sm:$0xf]
  %v4734 = vld [vmem:[%s9 + $0x8] sm:$0xf]
  %v4735 = vld [vmem:[%s9 + $0xc] sm:$0xf]
  %v4736 = vld [vmem:[%s9 + $0x10] sm:$0xf]
  %v4737 = vld [vmem:[%s9 + $0x14] sm:$0xf]
  %v4738 = vld [vmem:[%s9 + $0x18] sm:$0xf]
  %v4739 = vld [vmem:[%s9 + $0x1c] sm:$0xf]
  %v4740 = vld [vmem:[%s9 + $0x20] sm:$0xf]
  %v4741 = vld [vmem:[%s9 + $0x24] sm:$0xf]
  %v4742 = vld [vmem:[%s9 + $0x28] sm:$0xf]
  %v4743 = vld [vmem:[%s9 + $0x2c] sm:$0xf]
  %v4744 = vld [vmem:[%s9 + $0x30] sm:$0xf]
  %v4745 = vld [vmem:[%s9 + $0x34] sm:$0xf]
  %v4746 = vld [vmem:[%s9 + $0x38] sm:$0xf]
  %v4747 = vld [vmem:[%s9 + $0x3c] sm:$0xf]
  %v4764 = vunpack.c.l.b16 %v4732
  %v4765 = vunpack.c.l.b16 %v4733
  %v4766 = vunpack.c.l.b16 %v4734
  %v4767 = vunpack.c.l.b16 %v4735
  %v4768 = vunpack.c.l.b16 %v4736
  %v4769 = vunpack.c.l.b16 %v4737
  %v4770 = vunpack.c.l.b16 %v4738
  %v4771 = vunpack.c.l.b16 %v4739
  %v4772 = vunpack.c.l.b16 %v4740
  %v4773 = vunpack.c.l.b16 %v4741
  %v4774 = vunpack.c.l.b16 %v4742
  %v4775 = vunpack.c.l.b16 %v4743
  %v4776 = vunpack.c.l.b16 %v4744
  %v4777 = vunpack.c.l.b16 %v4745
  %v4778 = vunpack.c.l.b16 %v4746
  %v4779 = vunpack.c.l.b16 %v4747
  %v4780 = vpack.c.b16 %v4765, %v4764
  %v4781 = vpack.c.b16 %v4767, %v4766
  %v4782 = vpack.c.b16 %v4769, %v4768
  %v4783 = vpack.c.b16 %v4771, %v4770
  %v4784 = vpack.c.b16 %v4773, %v4772
  %v4785 = vpack.c.b16 %v4775, %v4774
  %v4786 = vpack.c.b16 %v4777, %v4776
  %v4787 = vpack.c.b16 %v4779, %v4778
  %4796 = vmatprep.subr.bf16.mxu0 0
  %4797 = vmatpush1.bf16.msra.mxu0 %v4780
  %4798 = vmatprep.subr.bf16.mxu0 0
  %4799 = vmatpush1.bf16.msra.mxu0 %v4781
  %4800 = vmatprep.subr.bf16.mxu0 0
  %4801 = vmatpush1.bf16.msra.mxu0 %v4782
  %4802 = vmatprep.subr.bf16.mxu0 0
  %4803 = vmatpush1.bf16.msra.mxu0 %v4783
  %4804 = vmatprep.subr.bf16.mxu0 0
  %4805 = vmatpush1.bf16.msra.mxu0 %v4784
  %4806 = vmatprep.subr.bf16.mxu0 0
  %4807 = vmatpush1.bf16.msra.mxu0 %v4785
  %4808 = vmatprep.subr.bf16.mxu0 0
  %4809 = vmatpush1.bf16.msra.mxu0 %v4786
  %4810 = vmatprep.subr.bf16.mxu0 0
  %4811 = vmatpush1.bf16.msra.mxu0 %v4787
  %4812 = vmatprep.subr.bf16.mxu0 0
  %4813 = vmatpush1.bf16.msra.mxu0 0
  %4814 = vmatprep.subr.bf16.mxu0 0
  %4815 = vmatpush1.bf16.msra.mxu0 0
  %4816 = vmatprep.subr.bf16.mxu0 0
  %4817 = vmatpush1.bf16.msra.mxu0 0
  %4818 = vmatprep.subr.bf16.mxu0 0
  %4819 = vmatpush1.bf16.msra.mxu0 0
  %4820 = vmatprep.subr.bf16.mxu0 0
  %4821 = vmatpush1.bf16.msra.mxu0 0
  %4822 = vmatprep.subr.bf16.mxu0 0
  %4823 = vmatpush1.bf16.msra.mxu0 0
  %4824 = vmatprep.subr.bf16.mxu0 0
  %4825 = vmatpush1.bf16.msra.mxu0 0
  %4826 = vmatprep.subr.bf16.mxu0 0
  %4827 = vmatpush1.bf16.msra.mxu0 0
  %4828 = vmatprep.mubr.bf16.mxu0 0
  %4829 = vmatmul.mubr.bf16.gmra.mrb[0].mxu0 %v4590
  %v4830 = vpop.f32.mrb[0].mxu0
  %v4831 = vadd.f32 0.0, %v4830
  %v4832 = vpop.f32.mrb[0].mxu0
  %v4833 = vpop.f32.mrb[0].mxu0
  %v4834 = vadd.f32 0.0, %v4833
  %v4835 = vpop.f32.mrb[0].mxu0
  %4836 = vmatprep.mubr.bf16.mxu0 0
  %4837 = vmatmul.mubr.bf16.gmra.mrb[0].mxu0 %v4591
  %v4838 = vpop.f32.mrb[0].mxu0
  %v4839 = vadd.f32 0.0, %v4838
  %v4840 = vpop.f32.mrb[0].mxu0
  %v4841 = vpop.f32.mrb[0].mxu0
  %v4842 = vadd.f32 0.0, %v4841
  %v4843 = vpop.f32.mrb[0].mxu0
  %4844 = vmatprep.mubr.bf16.mxu0 0
  %4845 = vmatmul.mubr.bf16.gmra.mrb[0].mxu0 %v4592
  %v4846 = vpop.f32.mrb[0].mxu0
  %v4847 = vadd.f32 0.0, %v4846
  %v4848 = vpop.f32.mrb[0].mxu0
  %v4849 = vpop.f32.mrb[0].mxu0
  %v4850 = vadd.f32 0.0, %v4849
  %v4851 = vpop.f32.mrb[0].mxu0
  %4852 = vmatprep.mubr.bf16.mxu0 0
  %4853 = vmatmul.mubr.bf16.gmra.mrb[0].mxu0 %v4593
  %v4854 = vpop.f32.mrb[0].mxu0
  %v4855 = vadd.f32 0.0, %v4854
  %v4856 = vpop.f32.mrb[0].mxu0
  %v4857 = vpop.f32.mrb[0].mxu0
  %v4858 = vadd.f32 0.0, %v4857
  %v4859 = vpop.f32.mrb[0].mxu0
  %4860 = vmatprep.mubr.bf16.mxu0 0
  %4861 = vmatmul.mubr.bf16.gmra.mrb[0].mxu0 %v4594
  %v4862 = vpop.f32.mrb[0].mxu0
  %v4863 = vadd.f32 0.0, %v4862
  %v4864 = vpop.f32.mrb[0].mxu0
  %v4865 = vpop.f32.mrb[0].mxu0
  %v4866 = vadd.f32 0.0, %v4865
  %v4867 = vpop.f32.mrb[0].mxu0
  %4868 = vdwg.mxu0
  %v4869 = vmax.f32 %v4694, %v4831
  %v4870 = vmax.f32 %v4697, %v4834
  %v4871 = vmax.f32 %v4702, %v4839
  %v4872 = vmax.f32 %v4705, %v4842
  %v4873 = vmax.f32 %v4710, %v4847
  %v4874 = vmax.f32 %v4713, %v4850
  %v4875 = vmax.f32 %v4718, %v4855
  %v4876 = vmax.f32 %v4721, %v4858
  %v4877 = vmax.f32 %v4726, %v4863
  %v4878 = vmax.f32 %v4729, %v4866
  %v4879 = vpack.c.bf16 %v4870, %v4869
  %v4880 = vpack.c.bf16 %v4872, %v4871
  %v4881 = vpack.c.bf16 %v4874, %v4873
  %v4882 = vpack.c.bf16 %v4876, %v4875
  %v4883 = vpack.c.bf16 %v4878, %v4877
  %v4884 = vld [vmem:[%s10] sm:$0xf]
  %v4885 = vld [vmem:[%s10 + $0x4] sm:$0xf]
  %v4886 = vld [vmem:[%s10 + $0x8] sm:$0xf]
  %v4887 = vld [vmem:[%s10 + $0xc] sm:$0xf]
  %v4888 = vld [vmem:[%s10 + $0x10] sm:$0xf]
  %v4889 = vld [vmem:[%s10 + $0x14] sm:$0xf]
  %v4890 = vld [vmem:[%s10 + $0x18] sm:$0xf]
  %v4891 = vld [vmem:[%s10 + $0x1c] sm:$0xf]
  %v4892 = vld [vmem:[%s10 + $0x20] sm:$0xf]
  %v4893 = vld [vmem:[%s10 + $0x24] sm:$0xf]
  %v4894 = vld [vmem:[%s10 + $0x28] sm:$0xf]
  %v4895 = vld [vmem:[%s10 + $0x2c] sm:$0xf]
  %v4896 = vld [vmem:[%s10 + $0x30] sm:$0xf]
  %v4897 = vld [vmem:[%s10 + $0x34] sm:$0xf]
  %v4898 = vld [vmem:[%s10 + $0x38] sm:$0xf]
  %s4899 = scalar_lea.vmem %s8, 64
  %v4900 = vld [vmem:[%s4899] sm:$0xf]
  %v4901 = vld [vmem:[%s4899 + $0x4] sm:$0xf]
  %v4902 = vld [vmem:[%s4899 + $0x8] sm:$0xf]
  %v4903 = vld [vmem:[%s4899 + $0xc] sm:$0xf]
  %v4904 = vld [vmem:[%s4899 + $0x10] sm:$0xf]
  %v4905 = vld [vmem:[%s4899 + $0x14] sm:$0xf]
  %v4906 = vld [vmem:[%s4899 + $0x18] sm:$0xf]
  %v4907 = vld [vmem:[%s4899 + $0x1c] sm:$0xf]
  %v4908 = vld [vmem:[%s4899 + $0x20] sm:$0xf]
  %v4909 = vld [vmem:[%s4899 + $0x24] sm:$0xf]
  %v4910 = vld [vmem:[%s4899 + $0x28] sm:$0xf]
  %v4911 = vld [vmem:[%s4899 + $0x2c] sm:$0xf]
  %v4912 = vld [vmem:[%s4899 + $0x30] sm:$0xf]
  %v4913 = vld [vmem:[%s4899 + $0x34] sm:$0xf]
  %v4914 = vld [vmem:[%s4899 + $0x38] sm:$0xf]
  %v4915 = vld [vmem:[%s4899 + $0x3c] sm:$0xf]
  %v4932 = vunpack.c.l.b16 %v4900
  %v4933 = vunpack.c.l.b16 %v4901
  %v4934 = vunpack.c.l.b16 %v4902
  %v4935 = vunpack.c.l.b16 %v4903
  %v4936 = vunpack.c.l.b16 %v4904
  %v4937 = vunpack.c.l.b16 %v4905
  %v4938 = vunpack.c.l.b16 %v4906
  %v4939 = vunpack.c.l.b16 %v4907
  %v4940 = vunpack.c.l.b16 %v4908
  %v4941 = vunpack.c.l.b16 %v4909
  %v4942 = vunpack.c.l.b16 %v4910
  %v4943 = vunpack.c.l.b16 %v4911
  %v4944 = vunpack.c.l.b16 %v4912
  %v4945 = vunpack.c.l.b16 %v4913
  %v4946 = vunpack.c.l.b16 %v4914
  %v4947 = vunpack.c.l.b16 %v4915
  %v4948 = vpack.c.b16 %v4933, %v4932
  %v4949 = vpack.c.b16 %v4935, %v4934
  %v4950 = vpack.c.b16 %v4937, %v4936
  %v4951 = vpack.c.b16 %v4939, %v4938
  %v4952 = vpack.c.b16 %v4941, %v4940
  %v4953 = vpack.c.b16 %v4943, %v4942
  %v4954 = vpack.c.b16 %v4945, %v4944
  %v4955 = vpack.c.b16 %v4947, %v4946
  %4964 = vmatprep.subr.bf16.mxu0 0
  %4965 = vmatpush1.bf16.msra.mxu0 %v4948
  %4966 = vmatprep.subr.bf16.mxu0 0
  %4967 = vmatpush1.bf16.msra.mxu0 %v4949
  %4968 = vmatprep.subr.bf16.mxu0 0
  %4969 = vmatpush1.bf16.msra.mxu0 %v4950
  %4970 = vmatprep.subr.bf16.mxu0 0
  %4971 = vmatpush1.bf16.msra.mxu0 %v4951
  %4972 = vmatprep.subr.bf16.mxu0 0
  %4973 = vmatpush1.bf16.msra.mxu0 %v4952
  %4974 = vmatprep.subr.bf16.mxu0 0
  %4975 = vmatpush1.bf16.msra.mxu0 %v4953
  %4976 = vmatprep.subr.bf16.mxu0 0
  %4977 = vmatpush1.bf16.msra.mxu0 %v4954
  %4978 = vmatprep.subr.bf16.mxu0 0
  %4979 = vmatpush1.bf16.msra.mxu0 %v4955
  %4980 = vmatprep.subr.bf16.mxu0 0
  %4981 = vmatpush1.bf16.msra.mxu0 0
  %4982 = vmatprep.subr.bf16.mxu0 0
  %4983 = vmatpush1.bf16.msra.mxu0 0
  %4984 = vmatprep.subr.bf16.mxu0 0
  %4985 = vmatpush1.bf16.msra.mxu0 0
  %4986 = vmatprep.subr.bf16.mxu0 0
  %4987 = vmatpush1.bf16.msra.mxu0 0
  %4988 = vmatprep.subr.bf16.mxu0 0
  %4989 = vmatpush1.bf16.msra.mxu0 0
  %4990 = vmatprep.subr.bf16.mxu0 0
  %4991 = vmatpush1.bf16.msra.mxu0 0
  %4992 = vmatprep.subr.bf16.mxu0 0
  %4993 = vmatpush1.bf16.msra.mxu0 0
  %4994 = vmatprep.subr.bf16.mxu0 0
  %4995 = vmatpush1.bf16.msra.mxu0 0
  %4996 = vmatprep.mubr.bf16.mxu0 0
  %4997 = vmatmul.mubr.bf16.gmra.mrb[0].mxu0 %v4590
  %v4998 = vpop.f32.mrb[0].mxu0
  %v4999 = vadd.f32 0.0, %v4998
  %v5000 = vpop.f32.mrb[0].mxu0
  %v5001 = vpop.f32.mrb[0].mxu0
  %v5002 = vadd.f32 0.0, %v5001
  %v5003 = vpop.f32.mrb[0].mxu0
  %5004 = vmatprep.mubr.bf16.mxu0 0
  %5005 = vmatmul.mubr.bf16.gmra.mrb[0].mxu0 %v4591
  %v5006 = vpop.f32.mrb[0].mxu0
  %v5007 = vadd.f32 0.0, %v5006
  %v5008 = vpop.f32.mrb[0].mxu0
  %v5009 = vpop.f32.mrb[0].mxu0
  %v5010 = vadd.f32 0.0, %v5009
  %v5011 = vpop.f32.mrb[0].mxu0
  %5012 = vmatprep.mubr.bf16.mxu0 0
  %5013 = vmatmul.mubr.bf16.gmra.mrb[0].mxu0 %v4592
  %v5014 = vpop.f32.mrb[0].mxu0
  %v5015 = vadd.f32 0.0, %v5014
  %v5016 = vpop.f32.mrb[0].mxu0
  %v5017 = vpop.f32.mrb[0].mxu0
  %v5018 = vadd.f32 0.0, %v5017
  %v5019 = vpop.f32.mrb[0].mxu0
  %5020 = vmatprep.mubr.bf16.mxu0 0
  %5021 = vmatmul.mubr.bf16.gmra.mrb[0].mxu0 %v4593
  %v5022 = vpop.f32.mrb[0].mxu0
  %v5023 = vadd.f32 0.0, %v5022
  %v5024 = vpop.f32.mrb[0].mxu0
  %v5025 = vpop.f32.mrb[0].mxu0
  %v5026 = vadd.f32 0.0, %v5025
  %v5027 = vpop.f32.mrb[0].mxu0
  %5028 = vmatprep.mubr.bf16.mxu0 0
  %5029 = vmatmul.mubr.bf16.gmra.mrb[0].mxu0 %v4594
  %v5030 = vpop.f32.mrb[0].mxu0
  %v5031 = vadd.f32 0.0, %v5030
  %v5032 = vpop.f32.mrb[0].mxu0
  %v5033 = vpop.f32.mrb[0].mxu0
  %v5034 = vadd.f32 0.0, %v5033
  %v5035 = vpop.f32.mrb[0].mxu0
  %5036 = vdwg.mxu0
  %s5037 = scalar_lea.vmem %s9, 64
  %v5038 = vld [vmem:[%s5037] sm:$0xf]
  %v5039 = vld [vmem:[%s5037 + $0x4] sm:$0xf]
  %v5040 = vld [vmem:[%s5037 + $0x8] sm:$0xf]
  %v5041 = vld [vmem:[%s5037 + $0xc] sm:$0xf]
  %v5042 = vld [vmem:[%s5037 + $0x10] sm:$0xf]
  %v5043 = vld [vmem:[%s5037 + $0x14] sm:$0xf]
  %v5044 = vld [vmem:[%s5037 + $0x18] sm:$0xf]
  %v5045 = vld [vmem:[%s5037 + $0x1c] sm:$0xf]
  %v5046 = vld [vmem:[%s5037 + $0x20] sm:$0xf]
  %v5047 = vld [vmem:[%s5037 + $0x24] sm:$0xf]
  %v5048 = vld [vmem:[%s5037 + $0x28] sm:$0xf]
  %v5049 = vld [vmem:[%s5037 + $0x2c] sm:$0xf]
  %v5050 = vld [vmem:[%s5037 + $0x30] sm:$0xf]
  %v5051 = vld [vmem:[%s5037 + $0x34] sm:$0xf]
  %v5052 = vld [vmem:[%s5037 + $0x38] sm:$0xf]
  %v5053 = vld [vmem:[%s5037 + $0x3c] sm:$0xf]
  %v5070 = vunpack.c.l.b16 %v5038
  %v5071 = vunpack.c.l.b16 %v5039
  %v5072 = vunpack.c.l.b16 %v5040
  %v5073 = vunpack.c.l.b16 %v5041
  %v5074 = vunpack.c.l.b16 %v5042
  %v5075 = vunpack.c.l.b16 %v5043
  %v5076 = vunpack.c.l.b16 %v5044
  %v5077 = vunpack.c.l.b16 %v5045
  %v5078 = vunpack.c.l.b16 %v5046
  %v5079 = vunpack.c.l.b16 %v5047
  %v5080 = vunpack.c.l.b16 %v5048
  %v5081 = vunpack.c.l.b16 %v5049
  %v5082 = vunpack.c.l.b16 %v5050
  %v5083 = vunpack.c.l.b16 %v5051
  %v5084 = vunpack.c.l.b16 %v5052
  %v5085 = vunpack.c.l.b16 %v5053
  %v5086 = vpack.c.b16 %v5071, %v5070
  %v5087 = vpack.c.b16 %v5073, %v5072
  %v5088 = vpack.c.b16 %v5075, %v5074
  %v5089 = vpack.c.b16 %v5077, %v5076
  %v5090 = vpack.c.b16 %v5079, %v5078
  %v5091 = vpack.c.b16 %v5081, %v5080
  %v5092 = vpack.c.b16 %v5083, %v5082
  %v5093 = vpack.c.b16 %v5085, %v5084
  %5102 = vmatprep.subr.bf16.mxu0 0
  %5103 = vmatpush1.bf16.msra.mxu0 %v5086
  %5104 = vmatprep.subr.bf16.mxu0 0
  %5105 = vmatpush1.bf16.msra.mxu0 %v5087
  %5106 = vmatprep.subr.bf16.mxu0 0
  %5107 = vmatpush1.bf16.msra.mxu0 %v5088
  %5108 = vmatprep.subr.bf16.mxu0 0
  %5109 = vmatpush1.bf16.msra.mxu0 %v5089
  %5110 = vmatprep.subr.bf16.mxu0 0
  %5111 = vmatpush1.bf16.msra.mxu0 %v5090
  %5112 = vmatprep.subr.bf16.mxu0 0
  %5113 = vmatpush1.bf16.msra.mxu0 %v5091
  %5114 = vmatprep.subr.bf16.mxu0 0
  %5115 = vmatpush1.bf16.msra.mxu0 %v5092
  %5116 = vmatprep.subr.bf16.mxu0 0
  %5117 = vmatpush1.bf16.msra.mxu0 %v5093
  %5118 = vmatprep.subr.bf16.mxu0 0
  %5119 = vmatpush1.bf16.msra.mxu0 0
  %5120 = vmatprep.subr.bf16.mxu0 0
  %5121 = vmatpush1.bf16.msra.mxu0 0
  %5122 = vmatprep.subr.bf16.mxu0 0
  %5123 = vmatpush1.bf16.msra.mxu0 0
  %5124 = vmatprep.subr.bf16.mxu0 0
  %5125 = vmatpush1.bf16.msra.mxu0 0
  %5126 = vmatprep.subr.bf16.mxu0 0
  %5127 = vmatpush1.bf16.msra.mxu0 0
  %5128 = vmatprep.subr.bf16.mxu0 0
  %5129 = vmatpush1.bf16.msra.mxu0 0
  %5130 = vmatprep.subr.bf16.mxu0 0
  %5131 = vmatpush1.bf16.msra.mxu0 0
  %5132 = vmatprep.subr.bf16.mxu0 0
  %5133 = vmatpush1.bf16.msra.mxu0 0
  %5134 = vmatprep.mubr.bf16.mxu0 0
  %5135 = vmatmul.mubr.bf16.gmra.mrb[0].mxu0 %v4590
  %v5136 = vpop.f32.mrb[0].mxu0
  %v5137 = vadd.f32 0.0, %v5136
  %v5138 = vpop.f32.mrb[0].mxu0
  %v5139 = vpop.f32.mrb[0].mxu0
  %v5140 = vadd.f32 0.0, %v5139
  %v5141 = vpop.f32.mrb[0].mxu0
  %5142 = vmatprep.mubr.bf16.mxu0 0
  %5143 = vmatmul.mubr.bf16.gmra.mrb[0].mxu0 %v4591
  %v5144 = vpop.f32.mrb[0].mxu0
  %v5145 = vadd.f32 0.0, %v5144
  %v5146 = vpop.f32.mrb[0].mxu0
  %v5147 = vpop.f32.mrb[0].mxu0
  %v5148 = vadd.f32 0.0, %v5147
  %v5149 = vpop.f32.mrb[0].mxu0
  %5150 = vmatprep.mubr.bf16.mxu0 0
  %5151 = vmatmul.mubr.bf16.gmra.mrb[0].mxu0 %v4592
  %v5152 = vpop.f32.mrb[0].mxu0
  %v5153 = vadd.f32 0.0, %v5152
  %v5154 = vpop.f32.mrb[0].mxu0
  %v5155 = vpop.f32.mrb[0].mxu0
  %v5156 = vadd.f32 0.0, %v5155
  %v5157 = vpop.f32.mrb[0].mxu0
  %5158 = vmatprep.mubr.bf16.mxu0 0
  %5159 = vmatmul.mubr.bf16.gmra.mrb[0].mxu0 %v4593
  %v5160 = vpop.f32.mrb[0].mxu0
  %v5161 = vadd.f32 0.0, %v5160
  %v5162 = vpop.f32.mrb[0].mxu0
  %v5163 = vpop.f32.mrb[0].mxu0
  %v5164 = vadd.f32 0.0, %v5163
  %v5165 = vpop.f32.mrb[0].mxu0
  %5166 = vmatprep.mubr.bf16.mxu0 0
  %5167 = vmatmul.mubr.bf16.gmra.mrb[0].mxu0 %v4594
  %v5168 = vpop.f32.mrb[0].mxu0
  %v5169 = vadd.f32 0.0, %v5168
  %v5170 = vpop.f32.mrb[0].mxu0
  %v5171 = vpop.f32.mrb[0].mxu0
  %v5172 = vadd.f32 0.0, %v5171
  %v5173 = vpop.f32.mrb[0].mxu0
  %5174 = vdwg.mxu0
  %v5175 = vmax.f32 %v4999, %v5137
  %v5176 = vmax.f32 %v5002, %v5140
  %v5177 = vmax.f32 %v5007, %v5145
  %v5178 = vmax.f32 %v5010, %v5148
  %v5179 = vmax.f32 %v5015, %v5153
  %v5180 = vmax.f32 %v5018, %v5156
  %v5181 = vmax.f32 %v5023, %v5161
  %v5182 = vmax.f32 %v5026, %v5164
  %v5183 = vmax.f32 %v5031, %v5169
  %v5184 = vmax.f32 %v5034, %v5172
  %v5185 = vpack.c.bf16 %v5176, %v5175
  %v5186 = vpack.c.bf16 %v5178, %v5177
  %v5187 = vpack.c.bf16 %v5180, %v5179
  %v5188 = vpack.c.bf16 %v5182, %v5181
  %v5189 = vpack.c.bf16 %v5184, %v5183
  %s5190 = scalar_lea.vmem %s10, 60
  %v5191 = vld [vmem:[%s5190] sm:$0xf]
  %v5192 = vld [vmem:[%s5190 + $0x4] sm:$0xf]
  %v5193 = vld [vmem:[%s5190 + $0x8] sm:$0xf]
  %v5194 = vld [vmem:[%s5190 + $0xc] sm:$0xf]
  %v5195 = vld [vmem:[%s5190 + $0x10] sm:$0xf]
  %v5196 = vld [vmem:[%s5190 + $0x14] sm:$0xf]
  %v5197 = vld [vmem:[%s5190 + $0x18] sm:$0xf]
  %v5198 = vld [vmem:[%s5190 + $0x1c] sm:$0xf]
  %v5199 = vld [vmem:[%s5190 + $0x20] sm:$0xf]
  %v5200 = vld [vmem:[%s5190 + $0x24] sm:$0xf]
  %v5201 = vld [vmem:[%s5190 + $0x28] sm:$0xf]
  %v5202 = vld [vmem:[%s5190 + $0x2c] sm:$0xf]
  %v5203 = vld [vmem:[%s5190 + $0x30] sm:$0xf]
  %v5204 = vld [vmem:[%s5190 + $0x34] sm:$0xf]
  %v5205 = vld [vmem:[%s5190 + $0x38] sm:$0xf]
  %v5221 = vunpack.c.l.b16 %v5191
  %v5222 = vunpack.c.l.b16 %v5192
  %v5223 = vunpack.c.l.b16 %v5193
  %v5224 = vunpack.c.l.b16 %v5194
  %v5225 = vunpack.c.l.b16 %v5195
  %v5226 = vunpack.c.l.b16 %v5196
  %v5227 = vunpack.c.l.b16 %v5197
  %v5228 = vunpack.c.l.b16 %v5198
  %v5229 = vunpack.c.l.b16 %v5199
  %v5230 = vunpack.c.l.b16 %v5200
  %v5231 = vunpack.c.l.b16 %v5201
  %v5232 = vunpack.c.l.b16 %v5202
  %v5233 = vunpack.c.l.b16 %v5203
  %v5234 = vunpack.c.l.b16 %v5204
  %v5235 = vunpack.c.l.b16 %v5205
  %v5236 = vpack.c.b16 %v5222, %v5221
  %v5237 = vpack.c.b16 %v5224, %v5223
  %v5238 = vpack.c.b16 %v5226, %v5225
  %v5239 = vpack.c.b16 %v5228, %v5227
  %v5240 = vpack.c.b16 %v5230, %v5229
  %v5241 = vpack.c.b16 %v5232, %v5231
  %v5242 = vpack.c.b16 %v5234, %v5233
  %v5243 = vpack.c.b16 %v5235, %v5235
  %vm5244 = vcmask 654336
  %v5246 = vsel %vm5244, %v5236, 0
  %v5249 = vsel %vm5244, %v5237, 0
  %v5252 = vsel %vm5244, %v5238, 0
  %v5255 = vsel %vm5244, %v5239, 0
  %v5258 = vsel %vm5244, %v5240, 0
  %v5261 = vsel %vm5244, %v5241, 0
  %v5264 = vsel %vm5244, %v5242, 0
  %v5267 = vsel %vm5244, %v5243, 0
  %5269 = vmatprep.subr.bf16.mxu0 0
  %5270 = vmatpush1.bf16.msra.mxu0 %v5185
  %5271 = vmatprep.subr.bf16.mxu0 0
  %5272 = vmatpush1.bf16.msra.mxu0 %v5186
  %5273 = vmatprep.subr.bf16.mxu0 0
  %5274 = vmatpush1.bf16.msra.mxu0 %v5187
  %5275 = vmatprep.subr.bf16.mxu0 0
  %5276 = vmatpush1.bf16.msra.mxu0 %v5188
  %5277 = vmatprep.subr.bf16.mxu0 0
  %5278 = vmatpush1.bf16.msra.mxu0 %v5189
  %5279 = vmatprep.subr.bf16.mxu0 0
  %5280 = vmatpush1.bf16.msra.mxu0 0
  %5281 = vmatprep.subr.bf16.mxu0 0
  %5282 = vmatpush1.bf16.msra.mxu0 0
  %5283 = vmatprep.subr.bf16.mxu0 0
  %5284 = vmatpush1.bf16.msra.mxu0 0
  %5285 = vmatprep.subr.bf16.mxu0 0
  %5286 = vmatpush1.bf16.msra.mxu0 0
  %5287 = vmatprep.subr.bf16.mxu0 0
  %5288 = vmatpush1.bf16.msra.mxu0 0
  %5289 = vmatprep.subr.bf16.mxu0 0
  %5290 = vmatpush1.bf16.msra.mxu0 0
  %5291 = vmatprep.subr.bf16.mxu0 0
  %5292 = vmatpush1.bf16.msra.mxu0 0
  %5293 = vmatprep.subr.bf16.mxu0 0
  %5294 = vmatpush1.bf16.msra.mxu0 0
  %5295 = vmatprep.subr.bf16.mxu0 0
  %5296 = vmatpush1.bf16.msra.mxu0 0
  %5297 = vmatprep.subr.bf16.mxu0 0
  %5298 = vmatpush1.bf16.msra.mxu0 0
  %5299 = vmatprep.subr.bf16.mxu0 0
  %5300 = vmatpush1.bf16.msra.mxu0 0
  %5301 = vmatprep.mubr.bf16.mxu0 0
  %5302 = vmatmul.mubr.bf16.gmra.mrb[0].mxu0 %v5246
  %v5303 = vpop.f32.mrb[0].mxu0
  %v5304 = vadd.f32 0.0, %v5303
  %v5305 = vpop.f32.mrb[0].mxu0
  %v5306 = vpop.f32.mrb[0].mxu0
  %v5307 = vadd.f32 0.0, %v5306
  %v5308 = vpop.f32.mrb[0].mxu0
  %5309 = vmatprep.mubr.bf16.mxu0 0
  %5310 = vmatmul.mubr.bf16.gmra.mrb[0].mxu0 %v5249
  %v5311 = vpop.f32.mrb[0].mxu0
  %v5312 = vadd.f32 0.0, %v5311
  %v5313 = vpop.f32.mrb[0].mxu0
  %v5314 = vpop.f32.mrb[0].mxu0
  %v5315 = vadd.f32 0.0, %v5314
  %v5316 = vpop.f32.mrb[0].mxu0
  %5317 = vmatprep.mubr.bf16.mxu0 0
  %5318 = vmatmul.mubr.bf16.gmra.mrb[0].mxu0 %v5252
  %v5319 = vpop.f32.mrb[0].mxu0
  %v5320 = vadd.f32 0.0, %v5319
  %v5321 = vpop.f32.mrb[0].mxu0
  %v5322 = vpop.f32.mrb[0].mxu0
  %v5323 = vadd.f32 0.0, %v5322
  %v5324 = vpop.f32.mrb[0].mxu0
  %5325 = vmatprep.mubr.bf16.mxu0 0
  %5326 = vmatmul.mubr.bf16.gmra.mrb[0].mxu0 %v5255
  %v5327 = vpop.f32.mrb[0].mxu0
  %v5328 = vadd.f32 0.0, %v5327
  %v5329 = vpop.f32.mrb[0].mxu0
  %v5330 = vpop.f32.mrb[0].mxu0
  %v5331 = vadd.f32 0.0, %v5330
  %v5332 = vpop.f32.mrb[0].mxu0
  %5333 = vmatprep.mubr.bf16.mxu0 0
  %5334 = vmatmul.mubr.bf16.gmra.mrb[0].mxu0 %v5258
  %v5335 = vpop.f32.mrb[0].mxu0
  %v5336 = vadd.f32 0.0, %v5335
  %v5337 = vpop.f32.mrb[0].mxu0
  %v5338 = vpop.f32.mrb[0].mxu0
  %v5339 = vadd.f32 0.0, %v5338
  %v5340 = vpop.f32.mrb[0].mxu0
  %5341 = vmatprep.mubr.bf16.mxu0 0
  %5342 = vmatmul.mubr.bf16.gmra.mrb[0].mxu0 %v5261
  %v5343 = vpop.f32.mrb[0].mxu0
  %v5344 = vadd.f32 0.0, %v5343
  %v5345 = vpop.f32.mrb[0].mxu0
  %v5346 = vpop.f32.mrb[0].mxu0
  %v5347 = vadd.f32 0.0, %v5346
  %v5348 = vpop.f32.mrb[0].mxu0
  %5349 = vmatprep.mubr.bf16.mxu0 0
  %5350 = vmatmul.mubr.bf16.gmra.mrb[0].mxu0 %v5264
  %v5351 = vpop.f32.mrb[0].mxu0
  %v5352 = vadd.f32 0.0, %v5351
  %v5353 = vpop.f32.mrb[0].mxu0
  %v5354 = vpop.f32.mrb[0].mxu0
  %v5355 = vadd.f32 0.0, %v5354
  %v5356 = vpop.f32.mrb[0].mxu0
  %5357 = vmatprep.mubr.bf16.mxu0 0
  %5358 = vmatmul.mubr.bf16.gmra.mrb[0].mxu0 %v5267
  %v5359 = vpop.f32.mrb[0].mxu0
  %v5360 = vadd.f32 0.0, %v5359
  %v5361 = vpop.f32.mrb[0].mxu0
  %v5362 = vpop.f32.mrb[0].mxu0
  %v5363 = vpop.f32.mrb[0].mxu0
  %5364 = vdwg.mxu0
  %v5380 = vunpack.c.l.b16 %v4884
  %v5381 = vunpack.c.l.b16 %v4885
  %v5382 = vunpack.c.l.b16 %v4886
  %v5383 = vunpack.c.l.b16 %v4887
  %v5384 = vunpack.c.l.b16 %v4888
  %v5385 = vunpack.c.l.b16 %v4889
  %v5386 = vunpack.c.l.b16 %v4890
  %v5387 = vunpack.c.l.b16 %v4891
  %v5388 = vunpack.c.l.b16 %v4892
  %v5389 = vunpack.c.l.b16 %v4893
  %v5390 = vunpack.c.l.b16 %v4894
  %v5391 = vunpack.c.l.b16 %v4895
  %v5392 = vunpack.c.l.b16 %v4896
  %v5393 = vunpack.c.l.b16 %v4897
  %v5394 = vunpack.c.l.b16 %v4898
  %v5395 = vpack.c.b16 %v5381, %v5380
  %v5396 = vpack.c.b16 %v5383, %v5382
  %v5397 = vpack.c.b16 %v5385, %v5384
  %v5398 = vpack.c.b16 %v5387, %v5386
  %v5399 = vpack.c.b16 %v5389, %v5388
  %v5400 = vpack.c.b16 %v5391, %v5390
  %v5401 = vpack.c.b16 %v5393, %v5392
  %v5402 = vpack.c.b16 %v5394, %v5394
  %v5404 = vsel %vm5244, %v5395, 0
  %v5407 = vsel %vm5244, %v5396, 0
  %v5410 = vsel %vm5244, %v5397, 0
  %v5413 = vsel %vm5244, %v5398, 0
  %v5416 = vsel %vm5244, %v5399, 0
  %v5419 = vsel %vm5244, %v5400, 0
  %v5422 = vsel %vm5244, %v5401, 0
  %v5425 = vsel %vm5244, %v5402, 0
  %5427 = vmatprep.subr.bf16.mxu0 0
  %5428 = vmatpush1.bf16.msra.mxu0 %v4879
  %5429 = vmatprep.subr.bf16.mxu0 0
  %5430 = vmatpush1.bf16.msra.mxu0 %v4880
  %5431 = vmatprep.subr.bf16.mxu0 0
  %5432 = vmatpush1.bf16.msra.mxu0 %v4881
  %5433 = vmatprep.subr.bf16.mxu0 0
  %5434 = vmatpush1.bf16.msra.mxu0 %v4882
  %5435 = vmatprep.subr.bf16.mxu0 0
  %5436 = vmatpush1.bf16.msra.mxu0 %v4883
  %5437 = vmatprep.subr.bf16.mxu0 0
  %5438 = vmatpush1.bf16.msra.mxu0 0
  %5439 = vmatprep.subr.bf16.mxu0 0
  %5440 = vmatpush1.bf16.msra.mxu0 0
  %5441 = vmatprep.subr.bf16.mxu0 0
  %5442 = vmatpush1.bf16.msra.mxu0 0
  %5443 = vmatprep.subr.bf16.mxu0 0
  %5444 = vmatpush1.bf16.msra.mxu0 0
  %5445 = vmatprep.subr.bf16.mxu0 0
  %5446 = vmatpush1.bf16.msra.mxu0 0
  %5447 = vmatprep.subr.bf16.mxu0 0
  %5448 = vmatpush1.bf16.msra.mxu0 0
  %5449 = vmatprep.subr.bf16.mxu0 0
  %5450 = vmatpush1.bf16.msra.mxu0 0
  %5451 = vmatprep.subr.bf16.mxu0 0
  %5452 = vmatpush1.bf16.msra.mxu0 0
  %5453 = vmatprep.subr.bf16.mxu0 0
  %5454 = vmatpush1.bf16.msra.mxu0 0
  %5455 = vmatprep.subr.bf16.mxu0 0
  %5456 = vmatpush1.bf16.msra.mxu0 0
  %5457 = vmatprep.subr.bf16.mxu0 0
  %5458 = vmatpush1.bf16.msra.mxu0 0
  %5459 = vmatprep.mubr.bf16.mxu0 0
  %5460 = vmatmul.mubr.bf16.gmra.mrb[0].mxu0 %v5404
  %v5461 = vpop.f32.mrb[0].mxu0
  %v5462 = vadd.f32 %v5304, %v5461
  %v5463 = vpop.f32.mrb[0].mxu0
  %v5464 = vpop.f32.mrb[0].mxu0
  %v5465 = vadd.f32 %v5307, %v5464
  %v5466 = vpop.f32.mrb[0].mxu0
  %5467 = vmatprep.mubr.bf16.mxu0 0
  %5468 = vmatmul.mubr.bf16.gmra.mrb[0].mxu0 %v5407
  %v5469 = vpop.f32.mrb[0].mxu0
  %v5470 = vadd.f32 %v5312, %v5469
  %v5471 = vpop.f32.mrb[0].mxu0
  %v5472 = vpop.f32.mrb[0].mxu0
  %v5473 = vadd.f32 %v5315, %v5472
  %v5474 = vpop.f32.mrb[0].mxu0
  %5475 = vmatprep.mubr.bf16.mxu0 0
  %5476 = vmatmul.mubr.bf16.gmra.mrb[0].mxu0 %v5410
  %v5477 = vpop.f32.mrb[0].mxu0
  %v5478 = vadd.f32 %v5320, %v5477
  %v5479 = vpop.f32.mrb[0].mxu0
  %v5480 = vpop.f32.mrb[0].mxu0
  %v5481 = vadd.f32 %v5323, %v5480
  %v5482 = vpop.f32.mrb[0].mxu0
  %5483 = vmatprep.mubr.bf16.mxu0 0
  %5484 = vmatmul.mubr.bf16.gmra.mrb[0].mxu0 %v5413
  %v5485 = vpop.f32.mrb[0].mxu0
  %v5486 = vadd.f32 %v5328, %v5485
  %v5487 = vpop.f32.mrb[0].mxu0
  %v5488 = vpop.f32.mrb[0].mxu0
  %v5489 = vadd.f32 %v5331, %v5488
  %v5490 = vpop.f32.mrb[0].mxu0
  %5491 = vmatprep.mubr.bf16.mxu0 0
  %5492 = vmatmul.mubr.bf16.gmra.mrb[0].mxu0 %v5416
  %v5493 = vpop.f32.mrb[0].mxu0
  %v5494 = vadd.f32 %v5336, %v5493
  %v5495 = vpop.f32.mrb[0].mxu0
  %v5496 = vpop.f32.mrb[0].mxu0
  %v5497 = vadd.f32 %v5339, %v5496
  %v5498 = vpop.f32.mrb[0].mxu0
  %5499 = vmatprep.mubr.bf16.mxu0 0
  %5500 = vmatmul.mubr.bf16.gmra.mrb[0].mxu0 %v5419
  %v5501 = vpop.f32.mrb[0].mxu0
  %v5502 = vadd.f32 %v5344, %v5501
  %v5503 = vpop.f32.mrb[0].mxu0
  %v5504 = vpop.f32.mrb[0].mxu0
  %v5505 = vadd.f32 %v5347, %v5504
  %v5506 = vpop.f32.mrb[0].mxu0
  %5507 = vmatprep.mubr.bf16.mxu0 0
  %5508 = vmatmul.mubr.bf16.gmra.mrb[0].mxu0 %v5422
  %v5509 = vpop.f32.mrb[0].mxu0
  %v5510 = vadd.f32 %v5352, %v5509
  %v5511 = vpop.f32.mrb[0].mxu0
  %v5512 = vpop.f32.mrb[0].mxu0
  %v5513 = vadd.f32 %v5355, %v5512
  %v5514 = vpop.f32.mrb[0].mxu0
  %5515 = vmatprep.mubr.bf16.mxu0 0
  %5516 = vmatmul.mubr.bf16.gmra.mrb[0].mxu0 %v5425
  %v5517 = vpop.f32.mrb[0].mxu0
  %v5518 = vadd.f32 %v5360, %v5517
  %v5519 = vpop.f32.mrb[0].mxu0
  %v5520 = vpop.f32.mrb[0].mxu0
  %v5521 = vpop.f32.mrb[0].mxu0
  %5522 = vdwg.mxu0
  %s5523 = scalar_lea.vmem %s8, 128
  %v5524 = vld [vmem:[%s5523] sm:$0xf]
  %v5525 = vld [vmem:[%s5523 + $0x4] sm:$0xf]
  %v5526 = vld [vmem:[%s5523 + $0x8] sm:$0xf]
  %v5527 = vld [vmem:[%s5523 + $0xc] sm:$0xf]
  %v5528 = vld [vmem:[%s5523 + $0x10] sm:$0xf]
  %v5529 = vld [vmem:[%s5523 + $0x14] sm:$0xf]
  %v5530 = vld [vmem:[%s5523 + $0x18] sm:$0xf]
  %v5531 = vld [vmem:[%s5523 + $0x1c] sm:$0xf]
  %v5532 = vld [vmem:[%s5523 + $0x20] sm:$0xf]
  %v5533 = vld [vmem:[%s5523 + $0x24] sm:$0xf]
  %v5534 = vld [vmem:[%s5523 + $0x28] sm:$0xf]
  %v5535 = vld [vmem:[%s5523 + $0x2c] sm:$0xf]
  %v5536 = vld [vmem:[%s5523 + $0x30] sm:$0xf]
  %v5537 = vld [vmem:[%s5523 + $0x34] sm:$0xf]
  %v5538 = vld [vmem:[%s5523 + $0x38] sm:$0xf]
  %v5539 = vld [vmem:[%s5523 + $0x3c] sm:$0xf]
  %v5556 = vunpack.c.l.b16 %v5524
  %v5557 = vunpack.c.l.b16 %v5525
  %v5558 = vunpack.c.l.b16 %v5526
  %v5559 = vunpack.c.l.b16 %v5527
  %v5560 = vunpack.c.l.b16 %v5528
  %v5561 = vunpack.c.l.b16 %v5529
  %v5562 = vunpack.c.l.b16 %v5530
  %v5563 = vunpack.c.l.b16 %v5531
  %v5564 = vunpack.c.l.b16 %v5532
  %v5565 = vunpack.c.l.b16 %v5533
  %v5566 = vunpack.c.l.b16 %v5534
  %v5567 = vunpack.c.l.b16 %v5535
  %v5568 = vunpack.c.l.b16 %v5536
  %v5569 = vunpack.c.l.b16 %v5537
  %v5570 = vunpack.c.l.b16 %v5538
  %v5571 = vunpack.c.l.b16 %v5539
  %v5572 = vpack.c.b16 %v5557, %v5556
  %v5573 = vpack.c.b16 %v5559, %v5558
  %v5574 = vpack.c.b16 %v5561, %v5560
  %v5575 = vpack.c.b16 %v5563, %v5562
  %v5576 = vpack.c.b16 %v5565, %v5564
  %v5577 = vpack.c.b16 %v5567, %v5566
  %v5578 = vpack.c.b16 %v5569, %v5568
  %v5579 = vpack.c.b16 %v5571, %v5570
  %5588 = vmatprep.subr.bf16.mxu0 0
  %5589 = vmatpush1.bf16.msra.mxu0 %v5572
  %5590 = vmatprep.subr.bf16.mxu0 0
  %5591 = vmatpush1.bf16.msra.mxu0 %v5573
  %5592 = vmatprep.subr.bf16.mxu0 0
  %5593 = vmatpush1.bf16.msra.mxu0 %v5574
  %5594 = vmatprep.subr.bf16.mxu0 0
  %5595 = vmatpush1.bf16.msra.mxu0 %v5575
  %5596 = vmatprep.subr.bf16.mxu0 0
  %5597 = vmatpush1.bf16.msra.mxu0 %v5576
  %5598 = vmatprep.subr.bf16.mxu0 0
  %5599 = vmatpush1.bf16.msra.mxu0 %v5577
  %5600 = vmatprep.subr.bf16.mxu0 0
  %5601 = vmatpush1.bf16.msra.mxu0 %v5578
  %5602 = vmatprep.subr.bf16.mxu0 0
  %5603 = vmatpush1.bf16.msra.mxu0 %v5579
  %5604 = vmatprep.subr.bf16.mxu0 0
  %5605 = vmatpush1.bf16.msra.mxu0 0
  %5606 = vmatprep.subr.bf16.mxu0 0
  %5607 = vmatpush1.bf16.msra.mxu0 0
  %5608 = vmatprep.subr.bf16.mxu0 0
  %5609 = vmatpush1.bf16.msra.mxu0 0
  %5610 = vmatprep.subr.bf16.mxu0 0
  %5611 = vmatpush1.bf16.msra.mxu0 0
  %5612 = vmatprep.subr.bf16.mxu0 0
  %5613 = vmatpush1.bf16.msra.mxu0 0
  %5614 = vmatprep.subr.bf16.mxu0 0
  %5615 = vmatpush1.bf16.msra.mxu0 0
  %5616 = vmatprep.subr.bf16.mxu0 0
  %5617 = vmatpush1.bf16.msra.mxu0 0
  %5618 = vmatprep.subr.bf16.mxu0 0
  %5619 = vmatpush1.bf16.msra.mxu0 0
  %5620 = vmatprep.mubr.bf16.mxu0 0
  %5621 = vmatmul.mubr.bf16.gmra.mrb[0].mxu0 %v4590
  %v5622 = vpop.f32.mrb[0].mxu0
  %v5623 = vadd.f32 0.0, %v5622
  %v5624 = vpop.f32.mrb[0].mxu0
  %v5625 = vpop.f32.mrb[0].mxu0
  %v5626 = vadd.f32 0.0, %v5625
  %v5627 = vpop.f32.mrb[0].mxu0
  %5628 = vmatprep.mubr.bf16.mxu0 0
  %5629 = vmatmul.mubr.bf16.gmra.mrb[0].mxu0 %v4591
  %v5630 = vpop.f32.mrb[0].mxu0
  %v5631 = vadd.f32 0.0, %v5630
  %v5632 = vpop.f32.mrb[0].mxu0
  %v5633 = vpop.f32.mrb[0].mxu0
  %v5634 = vadd.f32 0.0, %v5633
  %v5635 = vpop.f32.mrb[0].mxu0
  %5636 = vmatprep.mubr.bf16.mxu0 0
  %5637 = vmatmul.mubr.bf16.gmra.mrb[0].mxu0 %v4592
  %v5638 = vpop.f32.mrb[0].mxu0
  %v5639 = vadd.f32 0.0, %v5638
  %v5640 = vpop.f32.mrb[0].mxu0
  %v5641 = vpop.f32.mrb[0].mxu0
  %v5642 = vadd.f32 0.0, %v5641
  %v5643 = vpop.f32.mrb[0].mxu0
  %5644 = vmatprep.mubr.bf16.mxu0 0
  %5645 = vmatmul.mubr.bf16.gmra.mrb[0].mxu0 %v4593
  %v5646 = vpop.f32.mrb[0].mxu0
  %v5647 = vadd.f32 0.0, %v5646
  %v5648 = vpop.f32.mrb[0].mxu0
  %v5649 = vpop.f32.mrb[0].mxu0
  %v5650 = vadd.f32 0.0, %v5649
  %v5651 = vpop.f32.mrb[0].mxu0
  %5652 = vmatprep.mubr.bf16.mxu0 0
  %5653 = vmatmul.mubr.bf16.gmra.mrb[0].mxu0 %v4594
  %v5654 = vpop.f32.mrb[0].mxu0
  %v5655 = vadd.f32 0.0, %v5654
  %v5656 = vpop.f32.mrb[0].mxu0
  %v5657 = vpop.f32.mrb[0].mxu0
  %v5658 = vadd.f32 0.0, %v5657
  %v5659 = vpop.f32.mrb[0].mxu0
  %5660 = vdwg.mxu0
  %s5661 = scalar_lea.vmem %s9, 128
  %v5662 = vld [vmem:[%s5661] sm:$0xf]
  %v5663 = vld [vmem:[%s5661 + $0x4] sm:$0xf]
  %v5664 = vld [vmem:[%s5661 + $0x8] sm:$0xf]
  %v5665 = vld [vmem:[%s5661 + $0xc] sm:$0xf]
  %v5666 = vld [vmem:[%s5661 + $0x10] sm:$0xf]
  %v5667 = vld [vmem:[%s5661 + $0x14] sm:$0xf]
  %v5668 = vld [vmem:[%s5661 + $0x18] sm:$0xf]
  %v5669 = vld [vmem:[%s5661 + $0x1c] sm:$0xf]
  %v5670 = vld [vmem:[%s5661 + $0x20] sm:$0xf]
  %v5671 = vld [vmem:[%s5661 + $0x24] sm:$0xf]
  %v5672 = vld [vmem:[%s5661 + $0x28] sm:$0xf]
  %v5673 = vld [vmem:[%s5661 + $0x2c] sm:$0xf]
  %v5674 = vld [vmem:[%s5661 + $0x30] sm:$0xf]
  %v5675 = vld [vmem:[%s5661 + $0x34] sm:$0xf]
  %v5676 = vld [vmem:[%s5661 + $0x38] sm:$0xf]
  %v5677 = vld [vmem:[%s5661 + $0x3c] sm:$0xf]
  %v5694 = vunpack.c.l.b16 %v5662
  %v5695 = vunpack.c.l.b16 %v5663
  %v5696 = vunpack.c.l.b16 %v5664
  %v5697 = vunpack.c.l.b16 %v5665
  %v5698 = vunpack.c.l.b16 %v5666
  %v5699 = vunpack.c.l.b16 %v5667
  %v5700 = vunpack.c.l.b16 %v5668
  %v5701 = vunpack.c.l.b16 %v5669
  %v5702 = vunpack.c.l.b16 %v5670
  %v5703 = vunpack.c.l.b16 %v5671
  %v5704 = vunpack.c.l.b16 %v5672
  %v5705 = vunpack.c.l.b16 %v5673
  %v5706 = vunpack.c.l.b16 %v5674
  %v5707 = vunpack.c.l.b16 %v5675
  %v5708 = vunpack.c.l.b16 %v5676
  %v5709 = vunpack.c.l.b16 %v5677
  %v5710 = vpack.c.b16 %v5695, %v5694
  %v5711 = vpack.c.b16 %v5697, %v5696
  %v5712 = vpack.c.b16 %v5699, %v5698
  %v5713 = vpack.c.b16 %v5701, %v5700
  %v5714 = vpack.c.b16 %v5703, %v5702
  %v5715 = vpack.c.b16 %v5705, %v5704
  %v5716 = vpack.c.b16 %v5707, %v5706
  %v5717 = vpack.c.b16 %v5709, %v5708
  %5726 = vmatprep.subr.bf16.mxu0 0
  %5727 = vmatpush1.bf16.msra.mxu0 %v5710
  %5728 = vmatprep.subr.bf16.mxu0 0
  %5729 = vmatpush1.bf16.msra.mxu0 %v5711
  %5730 = vmatprep.subr.bf16.mxu0 0
  %5731 = vmatpush1.bf16.msra.mxu0 %v5712
  %5732 = vmatprep.subr.bf16.mxu0 0
  %5733 = vmatpush1.bf16.msra.mxu0 %v5713
  %5734 = vmatprep.subr.bf16.mxu0 0
  %5735 = vmatpush1.bf16.msra.mxu0 %v5714
  %5736 = vmatprep.subr.bf16.mxu0 0
  %5737 = vmatpush1.bf16.msra.mxu0 %v5715
  %5738 = vmatprep.subr.bf16.mxu0 0
  %5739 = vmatpush1.bf16.msra.mxu0 %v5716
  %5740 = vmatprep.subr.bf16.mxu0 0
  %5741 = vmatpush1.bf16.msra.mxu0 %v5717
  %5742 = vmatprep.subr.bf16.mxu0 0
  %5743 = vmatpush1.bf16.msra.mxu0 0
  %5744 = vmatprep.subr.bf16.mxu0 0
  %5745 = vmatpush1.bf16.msra.mxu0 0
  %5746 = vmatprep.subr.bf16.mxu0 0
  %5747 = vmatpush1.bf16.msra.mxu0 0
  %5748 = vmatprep.subr.bf16.mxu0 0
  %5749 = vmatpush1.bf16.msra.mxu0 0
  %5750 = vmatprep.subr.bf16.mxu0 0
  %5751 = vmatpush1.bf16.msra.mxu0 0
  %5752 = vmatprep.subr.bf16.mxu0 0
  %5753 = vmatpush1.bf16.msra.mxu0 0
  %5754 = vmatprep.subr.bf16.mxu0 0
  %5755 = vmatpush1.bf16.msra.mxu0 0
  %5756 = vmatprep.subr.bf16.mxu0 0
  %5757 = vmatpush1.bf16.msra.mxu0 0
  %5758 = vmatprep.mubr.bf16.mxu0 0
  %5759 = vmatmul.mubr.bf16.gmra.mrb[0].mxu0 %v4590
  %v5760 = vpop.f32.mrb[0].mxu0
  %v5761 = vadd.f32 0.0, %v5760
  %v5762 = vpop.f32.mrb[0].mxu0
  %v5763 = vpop.f32.mrb[0].mxu0
  %v5764 = vadd.f32 0.0, %v5763
  %v5765 = vpop.f32.mrb[0].mxu0
  %5766 = vmatprep.mubr.bf16.mxu0 0
  %5767 = vmatmul.mubr.bf16.gmra.mrb[0].mxu0 %v4591
  %v5768 = vpop.f32.mrb[0].mxu0
  %v5769 = vadd.f32 0.0, %v5768
  %v5770 = vpop.f32.mrb[0].mxu0
  %v5771 = vpop.f32.mrb[0].mxu0
  %v5772 = vadd.f32 0.0, %v5771
  %v5773 = vpop.f32.mrb[0].mxu0
  %5774 = vmatprep.mubr.bf16.mxu0 0
  %5775 = vmatmul.mubr.bf16.gmra.mrb[0].mxu0 %v4592
  %v5776 = vpop.f32.mrb[0].mxu0
  %v5777 = vadd.f32 0.0, %v5776
  %v5778 = vpop.f32.mrb[0].mxu0
  %v5779 = vpop.f32.mrb[0].mxu0
  %v5780 = vadd.f32 0.0, %v5779
  %v5781 = vpop.f32.mrb[0].mxu0
  %5782 = vmatprep.mubr.bf16.mxu0 0
  %5783 = vmatmul.mubr.bf16.gmra.mrb[0].mxu0 %v4593
  %v5784 = vpop.f32.mrb[0].mxu0
  %v5785 = vadd.f32 0.0, %v5784
  %v5786 = vpop.f32.mrb[0].mxu0
  %v5787 = vpop.f32.mrb[0].mxu0
  %v5788 = vadd.f32 0.0, %v5787
  %v5789 = vpop.f32.mrb[0].mxu0
  %5790 = vmatprep.mubr.bf16.mxu0 0
  %5791 = vmatmul.mubr.bf16.gmra.mrb[0].mxu0 %v4594
  %v5792 = vpop.f32.mrb[0].mxu0
  %v5793 = vadd.f32 0.0, %v5792
  %v5794 = vpop.f32.mrb[0].mxu0
  %v5795 = vpop.f32.mrb[0].mxu0
  %v5796 = vadd.f32 0.0, %v5795
  %v5797 = vpop.f32.mrb[0].mxu0
  %5798 = vdwg.mxu0
  %v5799 = vmax.f32 %v5623, %v5761
  %v5800 = vmax.f32 %v5626, %v5764
  %v5801 = vmax.f32 %v5631, %v5769
  %v5802 = vmax.f32 %v5634, %v5772
  %v5803 = vmax.f32 %v5639, %v5777
  %v5804 = vmax.f32 %v5642, %v5780
  %v5805 = vmax.f32 %v5647, %v5785
  %v5806 = vmax.f32 %v5650, %v5788
  %v5807 = vmax.f32 %v5655, %v5793
  %v5808 = vmax.f32 %v5658, %v5796
  %v5809 = vpack.c.bf16 %v5800, %v5799
  %v5810 = vpack.c.bf16 %v5802, %v5801
  %v5811 = vpack.c.bf16 %v5804, %v5803
  %v5812 = vpack.c.bf16 %v5806, %v5805
  %v5813 = vpack.c.bf16 %v5808, %v5807
  %s5814 = scalar_lea.vmem %s10, 120
  %v5815 = vld [vmem:[%s5814] sm:$0xf]
  %v5816 = vld [vmem:[%s5814 + $0x4] sm:$0xf]
  %v5817 = vld [vmem:[%s5814 + $0x8] sm:$0xf]
  %v5818 = vld [vmem:[%s5814 + $0xc] sm:$0xf]
  %v5819 = vld [vmem:[%s5814 + $0x10] sm:$0xf]
  %v5820 = vld [vmem:[%s5814 + $0x14] sm:$0xf]
  %v5821 = vld [vmem:[%s5814 + $0x18] sm:$0xf]
  %v5822 = vld [vmem:[%s5814 + $0x1c] sm:$0xf]
  %v5823 = vld [vmem:[%s5814 + $0x20] sm:$0xf]
  %v5824 = vld [vmem:[%s5814 + $0x24] sm:$0xf]
  %v5825 = vld [vmem:[%s5814 + $0x28] sm:$0xf]
  %v5826 = vld [vmem:[%s5814 + $0x2c] sm:$0xf]
  %v5827 = vld [vmem:[%s5814 + $0x30] sm:$0xf]
  %v5828 = vld [vmem:[%s5814 + $0x34] sm:$0xf]
  %v5829 = vld [vmem:[%s5814 + $0x38] sm:$0xf]
  %v5845 = vunpack.c.l.b16 %v5815
  %v5846 = vunpack.c.l.b16 %v5816
  %v5847 = vunpack.c.l.b16 %v5817
  %v5848 = vunpack.c.l.b16 %v5818
  %v5849 = vunpack.c.l.b16 %v5819
  %v5850 = vunpack.c.l.b16 %v5820
  %v5851 = vunpack.c.l.b16 %v5821
  %v5852 = vunpack.c.l.b16 %v5822
  %v5853 = vunpack.c.l.b16 %v5823
  %v5854 = vunpack.c.l.b16 %v5824
  %v5855 = vunpack.c.l.b16 %v5825
  %v5856 = vunpack.c.l.b16 %v5826
  %v5857 = vunpack.c.l.b16 %v5827
  %v5858 = vunpack.c.l.b16 %v5828
  %v5859 = vunpack.c.l.b16 %v5829
  %v5860 = vpack.c.b16 %v5846, %v5845
  %v5861 = vpack.c.b16 %v5848, %v5847
  %v5862 = vpack.c.b16 %v5850, %v5849
  %v5863 = vpack.c.b16 %v5852, %v5851
  %v5864 = vpack.c.b16 %v5854, %v5853
  %v5865 = vpack.c.b16 %v5856, %v5855
  %v5866 = vpack.c.b16 %v5858, %v5857
  %v5867 = vpack.c.b16 %v5859, %v5859
  %v5869 = vsel %vm5244, %v5860, 0
  %v5872 = vsel %vm5244, %v5861, 0
  %v5875 = vsel %vm5244, %v5862, 0
  %v5878 = vsel %vm5244, %v5863, 0
  %v5881 = vsel %vm5244, %v5864, 0
  %v5884 = vsel %vm5244, %v5865, 0
  %v5887 = vsel %vm5244, %v5866, 0
  %v5890 = vsel %vm5244, %v5867, 0
  %5892 = vmatprep.subr.bf16.mxu0 0
  %5893 = vmatpush1.bf16.msra.mxu0 %v5809
  %5894 = vmatprep.subr.bf16.mxu0 0
  %5895 = vmatpush1.bf16.msra.mxu0 %v5810
  %5896 = vmatprep.subr.bf16.mxu0 0
  %5897 = vmatpush1.bf16.msra.mxu0 %v5811
  %5898 = vmatprep.subr.bf16.mxu0 0
  %5899 = vmatpush1.bf16.msra.mxu0 %v5812
  %5900 = vmatprep.subr.bf16.mxu0 0
  %5901 = vmatpush1.bf16.msra.mxu0 %v5813
  %5902 = vmatprep.subr.bf16.mxu0 0
  %5903 = vmatpush1.bf16.msra.mxu0 0
  %5904 = vmatprep.subr.bf16.mxu0 0
  %5905 = vmatpush1.bf16.msra.mxu0 0
  %5906 = vmatprep.subr.bf16.mxu0 0
  %5907 = vmatpush1.bf16.msra.mxu0 0
  %5908 = vmatprep.subr.bf16.mxu0 0
  %5909 = vmatpush1.bf16.msra.mxu0 0
  %5910 = vmatprep.subr.bf16.mxu0 0
  %5911 = vmatpush1.bf16.msra.mxu0 0
  %5912 = vmatprep.subr.bf16.mxu0 0
  %5913 = vmatpush1.bf16.msra.mxu0 0
  %5914 = vmatprep.subr.bf16.mxu0 0
  %5915 = vmatpush1.bf16.msra.mxu0 0
  %5916 = vmatprep.subr.bf16.mxu0 0
  %5917 = vmatpush1.bf16.msra.mxu0 0
  %5918 = vmatprep.subr.bf16.mxu0 0
  %5919 = vmatpush1.bf16.msra.mxu0 0
  %5920 = vmatprep.subr.bf16.mxu0 0
  %5921 = vmatpush1.bf16.msra.mxu0 0
  %5922 = vmatprep.subr.bf16.mxu0 0
  %5923 = vmatpush1.bf16.msra.mxu0 0
  %5924 = vmatprep.mubr.bf16.mxu0 0
  %5925 = vmatmul.mubr.bf16.gmra.mrb[0].mxu0 %v5869
  %v5926 = vpop.f32.mrb[0].mxu0
  %v5927 = vadd.f32 0.0, %v5926
  %v5928 = vpop.f32.mrb[0].mxu0
  %v5929 = vpop.f32.mrb[0].mxu0
  %v5930 = vadd.f32 0.0, %v5929
  %v5931 = vpop.f32.mrb[0].mxu0
  %5932 = vmatprep.mubr.bf16.mxu0 0
  %5933 = vmatmul.mubr.bf16.gmra.mrb[0].mxu0 %v5872
  %v5934 = vpop.f32.mrb[0].mxu0
  %v5935 = vadd.f32 0.0, %v5934
  %v5936 = vpop.f32.mrb[0].mxu0
  %v5937 = vpop.f32.mrb[0].mxu0
  %v5938 = vadd.f32 0.0, %v5937
  %v5939 = vpop.f32.mrb[0].mxu0
  %5940 = vmatprep.mubr.bf16.mxu0 0
  %5941 = vmatmul.mubr.bf16.gmra.mrb[0].mxu0 %v5875
  %v5942 = vpop.f32.mrb[0].mxu0
  %v5943 = vadd.f32 0.0, %v5942
  %v5944 = vpop.f32.mrb[0].mxu0
  %v5945 = vpop.f32.mrb[0].mxu0
  %v5946 = vadd.f32 0.0, %v5945
  %v5947 = vpop.f32.mrb[0].mxu0
  %5948 = vmatprep.mubr.bf16.mxu0 0
  %5949 = vmatmul.mubr.bf16.gmra.mrb[0].mxu0 %v5878
  %v5950 = vpop.f32.mrb[0].mxu0
  %v5951 = vadd.f32 0.0, %v5950
  %v5952 = vpop.f32.mrb[0].mxu0
  %v5953 = vpop.f32.mrb[0].mxu0
  %v5954 = vadd.f32 0.0, %v5953
  %v5955 = vpop.f32.mrb[0].mxu0
  %5956 = vmatprep.mubr.bf16.mxu0 0
  %5957 = vmatmul.mubr.bf16.gmra.mrb[0].mxu0 %v5881
  %v5958 = vpop.f32.mrb[0].mxu0
  %v5959 = vadd.f32 0.0, %v5958
  %v5960 = vpop.f32.mrb[0].mxu0
  %v5961 = vpop.f32.mrb[0].mxu0
  %v5962 = vadd.f32 0.0, %v5961
  %v5963 = vpop.f32.mrb[0].mxu0
  %5964 = vmatprep.mubr.bf16.mxu0 0
  %5965 = vmatmul.mubr.bf16.gmra.mrb[0].mxu0 %v5884
  %v5966 = vpop.f32.mrb[0].mxu0
  %v5967 = vadd.f32 0.0, %v5966
  %v5968 = vpop.f32.mrb[0].mxu0
  %v5969 = vpop.f32.mrb[0].mxu0
  %v5970 = vadd.f32 0.0, %v5969
  %v5971 = vpop.f32.mrb[0].mxu0
  %5972 = vmatprep.mubr.bf16.mxu0 0
  %5973 = vmatmul.mubr.bf16.gmra.mrb[0].mxu0 %v5887
  %v5974 = vpop.f32.mrb[0].mxu0
  %v5975 = vadd.f32 0.0, %v5974
  %v5976 = vpop.f32.mrb[0].mxu0
  %v5977 = vpop.f32.mrb[0].mxu0
  %v5978 = vadd.f32 0.0, %v5977
  %v5979 = vpop.f32.mrb[0].mxu0
  %5980 = vmatprep.mubr.bf16.mxu0 0
  %5981 = vmatmul.mubr.bf16.gmra.mrb[0].mxu0 %v5890
  %v5982 = vpop.f32.mrb[0].mxu0
  %v5983 = vadd.f32 0.0, %v5982
  %v5984 = vpop.f32.mrb[0].mxu0
  %v5985 = vpop.f32.mrb[0].mxu0
  %v5986 = vpop.f32.mrb[0].mxu0
  %5987 = vdwg.mxu0
  %v5988 = vadd.f32 %v5462, %v5927
  %v5989 = vadd.f32 %v5465, %v5930
  %v5990 = vadd.f32 %v5470, %v5935
  %v5991 = vadd.f32 %v5473, %v5938
  %v5992 = vadd.f32 %v5478, %v5943
  %v5993 = vadd.f32 %v5481, %v5946
  %v5994 = vadd.f32 %v5486, %v5951
  %v5995 = vadd.f32 %v5489, %v5954
  %v5996 = vadd.f32 %v5494, %v5959
  %v5997 = vadd.f32 %v5497, %v5962
  %v5998 = vadd.f32 %v5502, %v5967
  %v5999 = vadd.f32 %v5505, %v5970
  %v6000 = vadd.f32 %v5510, %v5975
  %v6001 = vadd.f32 %v5513, %v5978
  %v6002 = vadd.f32 %v5518, %v5983
  %s6003 = scalar_lea.vmem %s8, 192
  %v6004 = vld [vmem:[%s6003] sm:$0xf]
  %v6005 = vld [vmem:[%s6003 + $0x4] sm:$0xf]
  %v6006 = vld [vmem:[%s6003 + $0x8] sm:$0xf]
  %v6007 = vld [vmem:[%s6003 + $0xc] sm:$0xf]
  %v6008 = vld [vmem:[%s6003 + $0x10] sm:$0xf]
  %v6009 = vld [vmem:[%s6003 + $0x14] sm:$0xf]
  %v6010 = vld [vmem:[%s6003 + $0x18] sm:$0xf]
  %v6011 = vld [vmem:[%s6003 + $0x1c] sm:$0xf]
  %v6012 = vld [vmem:[%s6003 + $0x20] sm:$0xf]
  %v6013 = vld [vmem:[%s6003 + $0x24] sm:$0xf]
  %v6014 = vld [vmem:[%s6003 + $0x28] sm:$0xf]
  %v6015 = vld [vmem:[%s6003 + $0x2c] sm:$0xf]
  %v6016 = vld [vmem:[%s6003 + $0x30] sm:$0xf]
  %v6017 = vld [vmem:[%s6003 + $0x34] sm:$0xf]
  %v6018 = vld [vmem:[%s6003 + $0x38] sm:$0xf]
  %v6019 = vld [vmem:[%s6003 + $0x3c] sm:$0xf]
  %v6036 = vunpack.c.l.b16 %v6004
  %v6037 = vunpack.c.l.b16 %v6005
  %v6038 = vunpack.c.l.b16 %v6006
  %v6039 = vunpack.c.l.b16 %v6007
  %v6040 = vunpack.c.l.b16 %v6008
  %v6041 = vunpack.c.l.b16 %v6009
  %v6042 = vunpack.c.l.b16 %v6010
  %v6043 = vunpack.c.l.b16 %v6011
  %v6044 = vunpack.c.l.b16 %v6012
  %v6045 = vunpack.c.l.b16 %v6013
  %v6046 = vunpack.c.l.b16 %v6014
  %v6047 = vunpack.c.l.b16 %v6015
  %v6048 = vunpack.c.l.b16 %v6016
  %v6049 = vunpack.c.l.b16 %v6017
  %v6050 = vunpack.c.l.b16 %v6018
  %v6051 = vunpack.c.l.b16 %v6019
  %v6052 = vpack.c.b16 %v6037, %v6036
  %v6053 = vpack.c.b16 %v6039, %v6038
  %v6054 = vpack.c.b16 %v6041, %v6040
  %v6055 = vpack.c.b16 %v6043, %v6042
  %v6056 = vpack.c.b16 %v6045, %v6044
  %v6057 = vpack.c.b16 %v6047, %v6046
  %v6058 = vpack.c.b16 %v6049, %v6048
  %v6059 = vpack.c.b16 %v6051, %v6050
  %6068 = vmatprep.subr.bf16.mxu0 0
  %6069 = vmatpush1.bf16.msra.mxu0 %v6052
  %6070 = vmatprep.subr.bf16.mxu0 0
  %6071 = vmatpush1.bf16.msra.mxu0 %v6053
  %6072 = vmatprep.subr.bf16.mxu0 0
  %6073 = vmatpush1.bf16.msra.mxu0 %v6054
  %6074 = vmatprep.subr.bf16.mxu0 0
  %6075 = vmatpush1.bf16.msra.mxu0 %v6055
  %6076 = vmatprep.subr.bf16.mxu0 0
  %6077 = vmatpush1.bf16.msra.mxu0 %v6056
  %6078 = vmatprep.subr.bf16.mxu0 0
  %6079 = vmatpush1.bf16.msra.mxu0 %v6057
  %6080 = vmatprep.subr.bf16.mxu0 0
  %6081 = vmatpush1.bf16.msra.mxu0 %v6058
  %6082 = vmatprep.subr.bf16.mxu0 0
  %6083 = vmatpush1.bf16.msra.mxu0 %v6059
  %6084 = vmatprep.subr.bf16.mxu0 0
  %6085 = vmatpush1.bf16.msra.mxu0 0
  %6086 = vmatprep.subr.bf16.mxu0 0
  %6087 = vmatpush1.bf16.msra.mxu0 0
  %6088 = vmatprep.subr.bf16.mxu0 0
  %6089 = vmatpush1.bf16.msra.mxu0 0
  %6090 = vmatprep.subr.bf16.mxu0 0
  %6091 = vmatpush1.bf16.msra.mxu0 0
  %6092 = vmatprep.subr.bf16.mxu0 0
  %6093 = vmatpush1.bf16.msra.mxu0 0
  %6094 = vmatprep.subr.bf16.mxu0 0
  %6095 = vmatpush1.bf16.msra.mxu0 0
  %6096 = vmatprep.subr.bf16.mxu0 0
  %6097 = vmatpush1.bf16.msra.mxu0 0
  %6098 = vmatprep.subr.bf16.mxu0 0
  %6099 = vmatpush1.bf16.msra.mxu0 0
  %6100 = vmatprep.mubr.bf16.mxu0 0
  %6101 = vmatmul.mubr.bf16.gmra.mrb[0].mxu0 %v4590
  %v6102 = vpop.f32.mrb[0].mxu0
  %v6103 = vadd.f32 0.0, %v6102
  %v6104 = vpop.f32.mrb[0].mxu0
  %v6105 = vpop.f32.mrb[0].mxu0
  %v6106 = vadd.f32 0.0, %v6105
  %v6107 = vpop.f32.mrb[0].mxu0
  %6108 = vmatprep.mubr.bf16.mxu0 0
  %6109 = vmatmul.mubr.bf16.gmra.mrb[0].mxu0 %v4591
  %v6110 = vpop.f32.mrb[0].mxu0
  %v6111 = vadd.f32 0.0, %v6110
  %v6112 = vpop.f32.mrb[0].mxu0
  %v6113 = vpop.f32.mrb[0].mxu0
  %v6114 = vadd.f32 0.0, %v6113
  %v6115 = vpop.f32.mrb[0].mxu0
  %6116 = vmatprep.mubr.bf16.mxu0 0
  %6117 = vmatmul.mubr.bf16.gmra.mrb[0].mxu0 %v4592
  %v6118 = vpop.f32.mrb[0].mxu0
  %v6119 = vadd.f32 0.0, %v6118
  %v6120 = vpop.f32.mrb[0].mxu0
  %v6121 = vpop.f32.mrb[0].mxu0
  %v6122 = vadd.f32 0.0, %v6121
  %v6123 = vpop.f32.mrb[0].mxu0
  %6124 = vmatprep.mubr.bf16.mxu0 0
  %6125 = vmatmul.mubr.bf16.gmra.mrb[0].mxu0 %v4593
  %v6126 = vpop.f32.mrb[0].mxu0
  %v6127 = vadd.f32 0.0, %v6126
  %v6128 = vpop.f32.mrb[0].mxu0
  %v6129 = vpop.f32.mrb[0].mxu0
  %v6130 = vadd.f32 0.0, %v6129
  %v6131 = vpop.f32.mrb[0].mxu0
  %6132 = vmatprep.mubr.bf16.mxu0 0
  %6133 = vmatmul.mubr.bf16.gmra.mrb[0].mxu0 %v4594
  %v6134 = vpop.f32.mrb[0].mxu0
  %v6135 = vadd.f32 0.0, %v6134
  %v6136 = vpop.f32.mrb[0].mxu0
  %v6137 = vpop.f32.mrb[0].mxu0
  %v6138 = vadd.f32 0.0, %v6137
  %v6139 = vpop.f32.mrb[0].mxu0
  %6140 = vdwg.mxu0
  %s6141 = scalar_lea.vmem %s9, 192
  %v6142 = vld [vmem:[%s6141] sm:$0xf]
  %v6143 = vld [vmem:[%s6141 + $0x4] sm:$0xf]
  %v6144 = vld [vmem:[%s6141 + $0x8] sm:$0xf]
  %v6145 = vld [vmem:[%s6141 + $0xc] sm:$0xf]
  %v6146 = vld [vmem:[%s6141 + $0x10] sm:$0xf]
  %v6147 = vld [vmem:[%s6141 + $0x14] sm:$0xf]
  %v6148 = vld [vmem:[%s6141 + $0x18] sm:$0xf]
  %v6149 = vld [vmem:[%s6141 + $0x1c] sm:$0xf]
  %v6150 = vld [vmem:[%s6141 + $0x20] sm:$0xf]
  %v6151 = vld [vmem:[%s6141 + $0x24] sm:$0xf]
  %v6152 = vld [vmem:[%s6141 + $0x28] sm:$0xf]
  %v6153 = vld [vmem:[%s6141 + $0x2c] sm:$0xf]
  %v6154 = vld [vmem:[%s6141 + $0x30] sm:$0xf]
  %v6155 = vld [vmem:[%s6141 + $0x34] sm:$0xf]
  %v6156 = vld [vmem:[%s6141 + $0x38] sm:$0xf]
  %v6157 = vld [vmem:[%s6141 + $0x3c] sm:$0xf]
  %v6174 = vunpack.c.l.b16 %v6142
  %v6175 = vunpack.c.l.b16 %v6143
  %v6176 = vunpack.c.l.b16 %v6144
  %v6177 = vunpack.c.l.b16 %v6145
  %v6178 = vunpack.c.l.b16 %v6146
  %v6179 = vunpack.c.l.b16 %v6147
  %v6180 = vunpack.c.l.b16 %v6148
  %v6181 = vunpack.c.l.b16 %v6149
  %v6182 = vunpack.c.l.b16 %v6150
  %v6183 = vunpack.c.l.b16 %v6151
  %v6184 = vunpack.c.l.b16 %v6152
  %v6185 = vunpack.c.l.b16 %v6153
  %v6186 = vunpack.c.l.b16 %v6154
  %v6187 = vunpack.c.l.b16 %v6155
  %v6188 = vunpack.c.l.b16 %v6156
  %v6189 = vunpack.c.l.b16 %v6157
  %v6190 = vpack.c.b16 %v6175, %v6174
  %v6191 = vpack.c.b16 %v6177, %v6176
  %v6192 = vpack.c.b16 %v6179, %v6178
  %v6193 = vpack.c.b16 %v6181, %v6180
  %v6194 = vpack.c.b16 %v6183, %v6182
  %v6195 = vpack.c.b16 %v6185, %v6184
  %v6196 = vpack.c.b16 %v6187, %v6186
  %v6197 = vpack.c.b16 %v6189, %v6188
  %6206 = vmatprep.subr.bf16.mxu0 0
  %6207 = vmatpush1.bf16.msra.mxu0 %v6190
  %6208 = vmatprep.subr.bf16.mxu0 0
  %6209 = vmatpush1.bf16.msra.mxu0 %v6191
  %6210 = vmatprep.subr.bf16.mxu0 0
  %6211 = vmatpush1.bf16.msra.mxu0 %v6192
  %6212 = vmatprep.subr.bf16.mxu0 0
  %6213 = vmatpush1.bf16.msra.mxu0 %v6193
  %6214 = vmatprep.subr.bf16.mxu0 0
  %6215 = vmatpush1.bf16.msra.mxu0 %v6194
  %6216 = vmatprep.subr.bf16.mxu0 0
  %6217 = vmatpush1.bf16.msra.mxu0 %v6195
  %6218 = vmatprep.subr.bf16.mxu0 0
  %6219 = vmatpush1.bf16.msra.mxu0 %v6196
  %6220 = vmatprep.subr.bf16.mxu0 0
  %6221 = vmatpush1.bf16.msra.mxu0 %v6197
  %6222 = vmatprep.subr.bf16.mxu0 0
  %6223 = vmatpush1.bf16.msra.mxu0 0
  %6224 = vmatprep.subr.bf16.mxu0 0
  %6225 = vmatpush1.bf16.msra.mxu0 0
  %6226 = vmatprep.subr.bf16.mxu0 0
  %6227 = vmatpush1.bf16.msra.mxu0 0
  %6228 = vmatprep.subr.bf16.mxu0 0
  %6229 = vmatpush1.bf16.msra.mxu0 0
  %6230 = vmatprep.subr.bf16.mxu0 0
  %6231 = vmatpush1.bf16.msra.mxu0 0
  %6232 = vmatprep.subr.bf16.mxu0 0
  %6233 = vmatpush1.bf16.msra.mxu0 0
  %6234 = vmatprep.subr.bf16.mxu0 0
  %6235 = vmatpush1.bf16.msra.mxu0 0
  %6236 = vmatprep.subr.bf16.mxu0 0
  %6237 = vmatpush1.bf16.msra.mxu0 0
  %6238 = vmatprep.mubr.bf16.mxu0 0
  %6239 = vmatmul.mubr.bf16.gmra.mrb[0].mxu0 %v4590
  %v6240 = vpop.f32.mrb[0].mxu0
  %v6241 = vadd.f32 0.0, %v6240
  %v6242 = vpop.f32.mrb[0].mxu0
  %v6243 = vpop.f32.mrb[0].mxu0
  %v6244 = vadd.f32 0.0, %v6243
  %v6245 = vpop.f32.mrb[0].mxu0
  %6246 = vmatprep.mubr.bf16.mxu0 0
  %6247 = vmatmul.mubr.bf16.gmra.mrb[0].mxu0 %v4591
  %v6248 = vpop.f32.mrb[0].mxu0
  %v6249 = vadd.f32 0.0, %v6248
  %v6250 = vpop.f32.mrb[0].mxu0
  %v6251 = vpop.f32.mrb[0].mxu0
  %v6252 = vadd.f32 0.0, %v6251
  %v6253 = vpop.f32.mrb[0].mxu0
  %6254 = vmatprep.mubr.bf16.mxu0 0
  %6255 = vmatmul.mubr.bf16.gmra.mrb[0].mxu0 %v4592
  %v6256 = vpop.f32.mrb[0].mxu0
  %v6257 = vadd.f32 0.0, %v6256
  %v6258 = vpop.f32.mrb[0].mxu0
  %v6259 = vpop.f32.mrb[0].mxu0
  %v6260 = vadd.f32 0.0, %v6259
  %v6261 = vpop.f32.mrb[0].mxu0
  %6262 = vmatprep.mubr.bf16.mxu0 0
  %6263 = vmatmul.mubr.bf16.gmra.mrb[0].mxu0 %v4593
  %v6264 = vpop.f32.mrb[0].mxu0
  %v6265 = vadd.f32 0.0, %v6264
  %v6266 = vpop.f32.mrb[0].mxu0
  %v6267 = vpop.f32.mrb[0].mxu0
  %v6268 = vadd.f32 0.0, %v6267
  %v6269 = vpop.f32.mrb[0].mxu0
  %6270 = vmatprep.mubr.bf16.mxu0 0
  %6271 = vmatmul.mubr.bf16.gmra.mrb[0].mxu0 %v4594
  %v6272 = vpop.f32.mrb[0].mxu0
  %v6273 = vadd.f32 0.0, %v6272
  %v6274 = vpop.f32.mrb[0].mxu0
  %v6275 = vpop.f32.mrb[0].mxu0
  %v6276 = vadd.f32 0.0, %v6275
  %v6277 = vpop.f32.mrb[0].mxu0
  %6278 = vdwg.mxu0
  %v6279 = vmax.f32 %v6103, %v6241
  %v6280 = vmax.f32 %v6106, %v6244
  %v6281 = vmax.f32 %v6111, %v6249
  %v6282 = vmax.f32 %v6114, %v6252
  %v6283 = vmax.f32 %v6119, %v6257
  %v6284 = vmax.f32 %v6122, %v6260
  %v6285 = vmax.f32 %v6127, %v6265
  %v6286 = vmax.f32 %v6130, %v6268
  %v6287 = vmax.f32 %v6135, %v6273
  %v6288 = vmax.f32 %v6138, %v6276
  %v6289 = vpack.c.bf16 %v6280, %v6279
  %v6290 = vpack.c.bf16 %v6282, %v6281
  %v6291 = vpack.c.bf16 %v6284, %v6283
  %v6292 = vpack.c.bf16 %v6286, %v6285
  %v6293 = vpack.c.bf16 %v6288, %v6287
  %s6294 = scalar_lea.vmem %s10, 180
  %v6295 = vld [vmem:[%s6294] sm:$0xf]
  %v6296 = vld [vmem:[%s6294 + $0x4] sm:$0xf]
  %v6297 = vld [vmem:[%s6294 + $0x8] sm:$0xf]
  %v6298 = vld [vmem:[%s6294 + $0xc] sm:$0xf]
  %v6299 = vld [vmem:[%s6294 + $0x10] sm:$0xf]
  %v6300 = vld [vmem:[%s6294 + $0x14] sm:$0xf]
  %v6301 = vld [vmem:[%s6294 + $0x18] sm:$0xf]
  %v6302 = vld [vmem:[%s6294 + $0x1c] sm:$0xf]
  %v6303 = vld [vmem:[%s6294 + $0x20] sm:$0xf]
  %v6304 = vld [vmem:[%s6294 + $0x24] sm:$0xf]
  %v6305 = vld [vmem:[%s6294 + $0x28] sm:$0xf]
  %v6306 = vld [vmem:[%s6294 + $0x2c] sm:$0xf]
  %v6307 = vld [vmem:[%s6294 + $0x30] sm:$0xf]
  %v6308 = vld [vmem:[%s6294 + $0x34] sm:$0xf]
  %v6309 = vld [vmem:[%s6294 + $0x38] sm:$0xf]
  %v6325 = vunpack.c.l.b16 %v6295
  %v6326 = vunpack.c.l.b16 %v6296
  %v6327 = vunpack.c.l.b16 %v6297
  %v6328 = vunpack.c.l.b16 %v6298
  %v6329 = vunpack.c.l.b16 %v6299
  %v6330 = vunpack.c.l.b16 %v6300
  %v6331 = vunpack.c.l.b16 %v6301
  %v6332 = vunpack.c.l.b16 %v6302
  %v6333 = vunpack.c.l.b16 %v6303
  %v6334 = vunpack.c.l.b16 %v6304
  %v6335 = vunpack.c.l.b16 %v6305
  %v6336 = vunpack.c.l.b16 %v6306
  %v6337 = vunpack.c.l.b16 %v6307
  %v6338 = vunpack.c.l.b16 %v6308
  %v6339 = vunpack.c.l.b16 %v6309
  %v6340 = vpack.c.b16 %v6326, %v6325
  %v6341 = vpack.c.b16 %v6328, %v6327
  %v6342 = vpack.c.b16 %v6330, %v6329
  %v6343 = vpack.c.b16 %v6332, %v6331
  %v6344 = vpack.c.b16 %v6334, %v6333
  %v6345 = vpack.c.b16 %v6336, %v6335
  %v6346 = vpack.c.b16 %v6338, %v6337
  %v6347 = vpack.c.b16 %v6339, %v6339
  %v6349 = vsel %vm5244, %v6340, 0
  %v6352 = vsel %vm5244, %v6341, 0
  %v6355 = vsel %vm5244, %v6342, 0
  %v6358 = vsel %vm5244, %v6343, 0
  %v6361 = vsel %vm5244, %v6344, 0
  %v6364 = vsel %vm5244, %v6345, 0
  %v6367 = vsel %vm5244, %v6346, 0
  %v6370 = vsel %vm5244, %v6347, 0
  %6372 = vmatprep.subr.bf16.mxu0 0
  %6373 = vmatpush1.bf16.msra.mxu0 %v6289
  %6374 = vmatprep.subr.bf16.mxu0 0
  %6375 = vmatpush1.bf16.msra.mxu0 %v6290
  %6376 = vmatprep.subr.bf16.mxu0 0
  %6377 = vmatpush1.bf16.msra.mxu0 %v6291
  %6378 = vmatprep.subr.bf16.mxu0 0
  %6379 = vmatpush1.bf16.msra.mxu0 %v6292
  %6380 = vmatprep.subr.bf16.mxu0 0
  %6381 = vmatpush1.bf16.msra.mxu0 %v6293
  %6382 = vmatprep.subr.bf16.mxu0 0
  %6383 = vmatpush1.bf16.msra.mxu0 0
  %6384 = vmatprep.subr.bf16.mxu0 0
  %6385 = vmatpush1.bf16.msra.mxu0 0
  %6386 = vmatprep.subr.bf16.mxu0 0
  %6387 = vmatpush1.bf16.msra.mxu0 0
  %6388 = vmatprep.subr.bf16.mxu0 0
  %6389 = vmatpush1.bf16.msra.mxu0 0
  %6390 = vmatprep.subr.bf16.mxu0 0
  %6391 = vmatpush1.bf16.msra.mxu0 0
  %6392 = vmatprep.subr.bf16.mxu0 0
  %6393 = vmatpush1.bf16.msra.mxu0 0
  %6394 = vmatprep.subr.bf16.mxu0 0
  %6395 = vmatpush1.bf16.msra.mxu0 0
  %6396 = vmatprep.subr.bf16.mxu0 0
  %6397 = vmatpush1.bf16.msra.mxu0 0
  %6398 = vmatprep.subr.bf16.mxu0 0
  %6399 = vmatpush1.bf16.msra.mxu0 0
  %6400 = vmatprep.subr.bf16.mxu0 0
  %6401 = vmatpush1.bf16.msra.mxu0 0
  %6402 = vmatprep.subr.bf16.mxu0 0
  %6403 = vmatpush1.bf16.msra.mxu0 0
  %6404 = vmatprep.mubr.bf16.mxu0 0
  %6405 = vmatmul.mubr.bf16.gmra.mrb[0].mxu0 %v6349
  %v6406 = vpop.f32.mrb[0].mxu0
  %v6407 = vadd.f32 0.0, %v6406
  %v6408 = vpop.f32.mrb[0].mxu0
  %v6409 = vpop.f32.mrb[0].mxu0
  %v6410 = vadd.f32 0.0, %v6409
  %v6411 = vpop.f32.mrb[0].mxu0
  %6412 = vmatprep.mubr.bf16.mxu0 0
  %6413 = vmatmul.mubr.bf16.gmra.mrb[0].mxu0 %v6352
  %v6414 = vpop.f32.mrb[0].mxu0
  %v6415 = vadd.f32 0.0, %v6414
  %v6416 = vpop.f32.mrb[0].mxu0
  %v6417 = vpop.f32.mrb[0].mxu0
  %v6418 = vadd.f32 0.0, %v6417
  %v6419 = vpop.f32.mrb[0].mxu0
  %6420 = vmatprep.mubr.bf16.mxu0 0
  %6421 = vmatmul.mubr.bf16.gmra.mrb[0].mxu0 %v6355
  %v6422 = vpop.f32.mrb[0].mxu0
  %v6423 = vadd.f32 0.0, %v6422
  %v6424 = vpop.f32.mrb[0].mxu0
  %v6425 = vpop.f32.mrb[0].mxu0
  %v6426 = vadd.f32 0.0, %v6425
  %v6427 = vpop.f32.mrb[0].mxu0
  %6428 = vmatprep.mubr.bf16.mxu0 0
  %6429 = vmatmul.mubr.bf16.gmra.mrb[0].mxu0 %v6358
  %v6430 = vpop.f32.mrb[0].mxu0
  %v6431 = vadd.f32 0.0, %v6430
  %v6432 = vpop.f32.mrb[0].mxu0
  %v6433 = vpop.f32.mrb[0].mxu0
  %v6434 = vadd.f32 0.0, %v6433
  %v6435 = vpop.f32.mrb[0].mxu0
  %6436 = vmatprep.mubr.bf16.mxu0 0
  %6437 = vmatmul.mubr.bf16.gmra.mrb[0].mxu0 %v6361
  %v6438 = vpop.f32.mrb[0].mxu0
  %v6439 = vadd.f32 0.0, %v6438
  %v6440 = vpop.f32.mrb[0].mxu0
  %v6441 = vpop.f32.mrb[0].mxu0
  %v6442 = vadd.f32 0.0, %v6441
  %v6443 = vpop.f32.mrb[0].mxu0
  %6444 = vmatprep.mubr.bf16.mxu0 0
  %6445 = vmatmul.mubr.bf16.gmra.mrb[0].mxu0 %v6364
  %v6446 = vpop.f32.mrb[0].mxu0
  %v6447 = vadd.f32 0.0, %v6446
  %v6448 = vpop.f32.mrb[0].mxu0
  %v6449 = vpop.f32.mrb[0].mxu0
  %v6450 = vadd.f32 0.0, %v6449
  %v6451 = vpop.f32.mrb[0].mxu0
  %6452 = vmatprep.mubr.bf16.mxu0 0
  %6453 = vmatmul.mubr.bf16.gmra.mrb[0].mxu0 %v6367
  %v6454 = vpop.f32.mrb[0].mxu0
  %v6455 = vadd.f32 0.0, %v6454
  %v6456 = vpop.f32.mrb[0].mxu0
  %v6457 = vpop.f32.mrb[0].mxu0
  %v6458 = vadd.f32 0.0, %v6457
  %v6459 = vpop.f32.mrb[0].mxu0
  %6460 = vmatprep.mubr.bf16.mxu0 0
  %6461 = vmatmul.mubr.bf16.gmra.mrb[0].mxu0 %v6370
  %v6462 = vpop.f32.mrb[0].mxu0
  %v6463 = vadd.f32 0.0, %v6462
  %v6464 = vpop.f32.mrb[0].mxu0
  %v6465 = vpop.f32.mrb[0].mxu0
  %v6466 = vpop.f32.mrb[0].mxu0
  %6467 = vdwg.mxu0
  %v6468 = vadd.f32 %v5988, %v6407
  %v6469 = vadd.f32 %v5989, %v6410
  %v6470 = vadd.f32 %v5990, %v6415
  %v6471 = vadd.f32 %v5991, %v6418
  %v6472 = vadd.f32 %v5992, %v6423
  %v6473 = vadd.f32 %v5993, %v6426
  %v6474 = vadd.f32 %v5994, %v6431
  %v6475 = vadd.f32 %v5995, %v6434
  %v6476 = vadd.f32 %v5996, %v6439
  %v6477 = vadd.f32 %v5997, %v6442
  %v6478 = vadd.f32 %v5998, %v6447
  %v6479 = vadd.f32 %v5999, %v6450
  %v6480 = vadd.f32 %v6000, %v6455
  %v6481 = vadd.f32 %v6001, %v6458
  %v6482 = vadd.f32 %v6002, %v6463
  %s6483 = scalar_lea.vmem %s8, 256
  %v6484 = vld [vmem:[%s6483] sm:$0xf]
  %v6485 = vld [vmem:[%s6483 + $0x4] sm:$0xf]
  %v6486 = vld [vmem:[%s6483 + $0x8] sm:$0xf]
  %v6487 = vld [vmem:[%s6483 + $0xc] sm:$0xf]
  %v6488 = vld [vmem:[%s6483 + $0x10] sm:$0xf]
  %v6489 = vld [vmem:[%s6483 + $0x14] sm:$0xf]
  %v6490 = vld [vmem:[%s6483 + $0x18] sm:$0xf]
  %v6491 = vld [vmem:[%s6483 + $0x1c] sm:$0xf]
  %v6492 = vld [vmem:[%s6483 + $0x20] sm:$0xf]
  %v6493 = vld [vmem:[%s6483 + $0x24] sm:$0xf]
  %v6494 = vld [vmem:[%s6483 + $0x28] sm:$0xf]
  %v6495 = vld [vmem:[%s6483 + $0x2c] sm:$0xf]
  %v6496 = vld [vmem:[%s6483 + $0x30] sm:$0xf]
  %v6497 = vld [vmem:[%s6483 + $0x34] sm:$0xf]
  %v6498 = vld [vmem:[%s6483 + $0x38] sm:$0xf]
  %v6499 = vld [vmem:[%s6483 + $0x3c] sm:$0xf]
  %v6516 = vunpack.c.l.b16 %v6484
  %v6517 = vunpack.c.l.b16 %v6485
  %v6518 = vunpack.c.l.b16 %v6486
  %v6519 = vunpack.c.l.b16 %v6487
  %v6520 = vunpack.c.l.b16 %v6488
  %v6521 = vunpack.c.l.b16 %v6489
  %v6522 = vunpack.c.l.b16 %v6490
  %v6523 = vunpack.c.l.b16 %v6491
  %v6524 = vunpack.c.l.b16 %v6492
  %v6525 = vunpack.c.l.b16 %v6493
  %v6526 = vunpack.c.l.b16 %v6494
  %v6527 = vunpack.c.l.b16 %v6495
  %v6528 = vunpack.c.l.b16 %v6496
  %v6529 = vunpack.c.l.b16 %v6497
  %v6530 = vunpack.c.l.b16 %v6498
  %v6531 = vunpack.c.l.b16 %v6499
  %v6532 = vpack.c.b16 %v6517, %v6516
  %v6533 = vpack.c.b16 %v6519, %v6518
  %v6534 = vpack.c.b16 %v6521, %v6520
  %v6535 = vpack.c.b16 %v6523, %v6522
  %v6536 = vpack.c.b16 %v6525, %v6524
  %v6537 = vpack.c.b16 %v6527, %v6526
  %v6538 = vpack.c.b16 %v6529, %v6528
  %v6539 = vpack.c.b16 %v6531, %v6530
  %6548 = vmatprep.subr.bf16.mxu0 0
  %6549 = vmatpush1.bf16.msra.mxu0 %v6532
  %6550 = vmatprep.subr.bf16.mxu0 0
  %6551 = vmatpush1.bf16.msra.mxu0 %v6533
  %6552 = vmatprep.subr.bf16.mxu0 0
  %6553 = vmatpush1.bf16.msra.mxu0 %v6534
  %6554 = vmatprep.subr.bf16.mxu0 0
  %6555 = vmatpush1.bf16.msra.mxu0 %v6535
  %6556 = vmatprep.subr.bf16.mxu0 0
  %6557 = vmatpush1.bf16.msra.mxu0 %v6536
  %6558 = vmatprep.subr.bf16.mxu0 0
  %6559 = vmatpush1.bf16.msra.mxu0 %v6537
  %6560 = vmatprep.subr.bf16.mxu0 0
  %6561 = vmatpush1.bf16.msra.mxu0 %v6538
  %6562 = vmatprep.subr.bf16.mxu0 0
  %6563 = vmatpush1.bf16.msra.mxu0 %v6539
  %6564 = vmatprep.subr.bf16.mxu0 0
  %6565 = vmatpush1.bf16.msra.mxu0 0
  %6566 = vmatprep.subr.bf16.mxu0 0
  %6567 = vmatpush1.bf16.msra.mxu0 0
  %6568 = vmatprep.subr.bf16.mxu0 0
  %6569 = vmatpush1.bf16.msra.mxu0 0
  %6570 = vmatprep.subr.bf16.mxu0 0
  %6571 = vmatpush1.bf16.msra.mxu0 0
  %6572 = vmatprep.subr.bf16.mxu0 0
  %6573 = vmatpush1.bf16.msra.mxu0 0
  %6574 = vmatprep.subr.bf16.mxu0 0
  %6575 = vmatpush1.bf16.msra.mxu0 0
  %6576 = vmatprep.subr.bf16.mxu0 0
  %6577 = vmatpush1.bf16.msra.mxu0 0
  %6578 = vmatprep.subr.bf16.mxu0 0
  %6579 = vmatpush1.bf16.msra.mxu0 0
  %6580 = vmatprep.mubr.bf16.mxu0 0
  %6581 = vmatmul.mubr.bf16.gmra.mrb[0].mxu0 %v4590
  %v6582 = vpop.f32.mrb[0].mxu0
  %v6583 = vadd.f32 0.0, %v6582
  %v6584 = vpop.f32.mrb[0].mxu0
  %v6585 = vpop.f32.mrb[0].mxu0
  %v6586 = vadd.f32 0.0, %v6585
  %v6587 = vpop.f32.mrb[0].mxu0
  %6588 = vmatprep.mubr.bf16.mxu0 0
  %6589 = vmatmul.mubr.bf16.gmra.mrb[0].mxu0 %v4591
  %v6590 = vpop.f32.mrb[0].mxu0
  %v6591 = vadd.f32 0.0, %v6590
  %v6592 = vpop.f32.mrb[0].mxu0
  %v6593 = vpop.f32.mrb[0].mxu0
  %v6594 = vadd.f32 0.0, %v6593
  %v6595 = vpop.f32.mrb[0].mxu0
  %6596 = vmatprep.mubr.bf16.mxu0 0
  %6597 = vmatmul.mubr.bf16.gmra.mrb[0].mxu0 %v4592
  %v6598 = vpop.f32.mrb[0].mxu0
  %v6599 = vadd.f32 0.0, %v6598
  %v6600 = vpop.f32.mrb[0].mxu0
  %v6601 = vpop.f32.mrb[0].mxu0
  %v6602 = vadd.f32 0.0, %v6601
  %v6603 = vpop.f32.mrb[0].mxu0
  %6604 = vmatprep.mubr.bf16.mxu0 0
  %6605 = vmatmul.mubr.bf16.gmra.mrb[0].mxu0 %v4593
  %v6606 = vpop.f32.mrb[0].mxu0
  %v6607 = vadd.f32 0.0, %v6606
  %v6608 = vpop.f32.mrb[0].mxu0
  %v6609 = vpop.f32.mrb[0].mxu0
  %v6610 = vadd.f32 0.0, %v6609
  %v6611 = vpop.f32.mrb[0].mxu0
  %6612 = vmatprep.mubr.bf16.mxu0 0
  %6613 = vmatmul.mubr.bf16.gmra.mrb[0].mxu0 %v4594
  %v6614 = vpop.f32.mrb[0].mxu0
  %v6615 = vadd.f32 0.0, %v6614
  %v6616 = vpop.f32.mrb[0].mxu0
  %v6617 = vpop.f32.mrb[0].mxu0
  %v6618 = vadd.f32 0.0, %v6617
  %v6619 = vpop.f32.mrb[0].mxu0
  %6620 = vdwg.mxu0
  %s6621 = scalar_lea.vmem %s9, 256
  %v6622 = vld [vmem:[%s6621] sm:$0xf]
  %v6623 = vld [vmem:[%s6621 + $0x4] sm:$0xf]
  %v6624 = vld [vmem:[%s6621 + $0x8] sm:$0xf]
  %v6625 = vld [vmem:[%s6621 + $0xc] sm:$0xf]
  %v6626 = vld [vmem:[%s6621 + $0x10] sm:$0xf]
  %v6627 = vld [vmem:[%s6621 + $0x14] sm:$0xf]
  %v6628 = vld [vmem:[%s6621 + $0x18] sm:$0xf]
  %v6629 = vld [vmem:[%s6621 + $0x1c] sm:$0xf]
  %v6630 = vld [vmem:[%s6621 + $0x20] sm:$0xf]
  %v6631 = vld [vmem:[%s6621 + $0x24] sm:$0xf]
  %v6632 = vld [vmem:[%s6621 + $0x28] sm:$0xf]
  %v6633 = vld [vmem:[%s6621 + $0x2c] sm:$0xf]
  %v6634 = vld [vmem:[%s6621 + $0x30] sm:$0xf]
  %v6635 = vld [vmem:[%s6621 + $0x34] sm:$0xf]
  %v6636 = vld [vmem:[%s6621 + $0x38] sm:$0xf]
  %v6637 = vld [vmem:[%s6621 + $0x3c] sm:$0xf]
  %v6654 = vunpack.c.l.b16 %v6622
  %v6655 = vunpack.c.l.b16 %v6623
  %v6656 = vunpack.c.l.b16 %v6624
  %v6657 = vunpack.c.l.b16 %v6625
  %v6658 = vunpack.c.l.b16 %v6626
  %v6659 = vunpack.c.l.b16 %v6627
  %v6660 = vunpack.c.l.b16 %v6628
  %v6661 = vunpack.c.l.b16 %v6629
  %v6662 = vunpack.c.l.b16 %v6630
  %v6663 = vunpack.c.l.b16 %v6631
  %v6664 = vunpack.c.l.b16 %v6632
  %v6665 = vunpack.c.l.b16 %v6633
  %v6666 = vunpack.c.l.b16 %v6634
  %v6667 = vunpack.c.l.b16 %v6635
  %v6668 = vunpack.c.l.b16 %v6636
  %v6669 = vunpack.c.l.b16 %v6637
  %v6670 = vpack.c.b16 %v6655, %v6654
  %v6671 = vpack.c.b16 %v6657, %v6656
  %v6672 = vpack.c.b16 %v6659, %v6658
  %v6673 = vpack.c.b16 %v6661, %v6660
  %v6674 = vpack.c.b16 %v6663, %v6662
  %v6675 = vpack.c.b16 %v6665, %v6664
  %v6676 = vpack.c.b16 %v6667, %v6666
  %v6677 = vpack.c.b16 %v6669, %v6668
  %6686 = vmatprep.subr.bf16.mxu0 0
  %6687 = vmatpush1.bf16.msra.mxu0 %v6670
  %6688 = vmatprep.subr.bf16.mxu0 0
  %6689 = vmatpush1.bf16.msra.mxu0 %v6671
  %6690 = vmatprep.subr.bf16.mxu0 0
  %6691 = vmatpush1.bf16.msra.mxu0 %v6672
  %6692 = vmatprep.subr.bf16.mxu0 0
  %6693 = vmatpush1.bf16.msra.mxu0 %v6673
  %6694 = vmatprep.subr.bf16.mxu0 0
  %6695 = vmatpush1.bf16.msra.mxu0 %v6674
  %6696 = vmatprep.subr.bf16.mxu0 0
  %6697 = vmatpush1.bf16.msra.mxu0 %v6675
  %6698 = vmatprep.subr.bf16.mxu0 0
  %6699 = vmatpush1.bf16.msra.mxu0 %v6676
  %6700 = vmatprep.subr.bf16.mxu0 0
  %6701 = vmatpush1.bf16.msra.mxu0 %v6677
  %6702 = vmatprep.subr.bf16.mxu0 0
  %6703 = vmatpush1.bf16.msra.mxu0 0
  %6704 = vmatprep.subr.bf16.mxu0 0
  %6705 = vmatpush1.bf16.msra.mxu0 0
  %6706 = vmatprep.subr.bf16.mxu0 0
  %6707 = vmatpush1.bf16.msra.mxu0 0
  %6708 = vmatprep.subr.bf16.mxu0 0
  %6709 = vmatpush1.bf16.msra.mxu0 0
  %6710 = vmatprep.subr.bf16.mxu0 0
  %6711 = vmatpush1.bf16.msra.mxu0 0
  %6712 = vmatprep.subr.bf16.mxu0 0
  %6713 = vmatpush1.bf16.msra.mxu0 0
  %6714 = vmatprep.subr.bf16.mxu0 0
  %6715 = vmatpush1.bf16.msra.mxu0 0
  %6716 = vmatprep.subr.bf16.mxu0 0
  %6717 = vmatpush1.bf16.msra.mxu0 0
  %6718 = vmatprep.mubr.bf16.mxu0 0
  %6719 = vmatmul.mubr.bf16.gmra.mrb[0].mxu0 %v4590
  %v6720 = vpop.f32.mrb[0].mxu0
  %v6721 = vadd.f32 0.0, %v6720
  %v6722 = vpop.f32.mrb[0].mxu0
  %v6723 = vpop.f32.mrb[0].mxu0
  %v6724 = vadd.f32 0.0, %v6723
  %v6725 = vpop.f32.mrb[0].mxu0
  %6726 = vmatprep.mubr.bf16.mxu0 0
  %6727 = vmatmul.mubr.bf16.gmra.mrb[0].mxu0 %v4591
  %v6728 = vpop.f32.mrb[0].mxu0
  %v6729 = vadd.f32 0.0, %v6728
  %v6730 = vpop.f32.mrb[0].mxu0
  %v6731 = vpop.f32.mrb[0].mxu0
  %v6732 = vadd.f32 0.0, %v6731
  %v6733 = vpop.f32.mrb[0].mxu0
  %6734 = vmatprep.mubr.bf16.mxu0 0
  %6735 = vmatmul.mubr.bf16.gmra.mrb[0].mxu0 %v4592
  %v6736 = vpop.f32.mrb[0].mxu0
  %v6737 = vadd.f32 0.0, %v6736
  %v6738 = vpop.f32.mrb[0].mxu0
  %v6739 = vpop.f32.mrb[0].mxu0
  %v6740 = vadd.f32 0.0, %v6739
  %v6741 = vpop.f32.mrb[0].mxu0
  %6742 = vmatprep.mubr.bf16.mxu0 0
  %6743 = vmatmul.mubr.bf16.gmra.mrb[0].mxu0 %v4593
  %v6744 = vpop.f32.mrb[0].mxu0
  %v6745 = vadd.f32 0.0, %v6744
  %v6746 = vpop.f32.mrb[0].mxu0
  %v6747 = vpop.f32.mrb[0].mxu0
  %v6748 = vadd.f32 0.0, %v6747
  %v6749 = vpop.f32.mrb[0].mxu0
  %6750 = vmatprep.mubr.bf16.mxu0 0
  %6751 = vmatmul.mubr.bf16.gmra.mrb[0].mxu0 %v4594
  %v6752 = vpop.f32.mrb[0].mxu0
  %v6753 = vadd.f32 0.0, %v6752
  %v6754 = vpop.f32.mrb[0].mxu0
  %v6755 = vpop.f32.mrb[0].mxu0
  %v6756 = vadd.f32 0.0, %v6755
  %v6757 = vpop.f32.mrb[0].mxu0
  %6758 = vdwg.mxu0
  %v6759 = vmax.f32 %v6583, %v6721
  %v6760 = vmax.f32 %v6586, %v6724
  %v6761 = vmax.f32 %v6591, %v6729
  %v6762 = vmax.f32 %v6594, %v6732
  %v6763 = vmax.f32 %v6599, %v6737
  %v6764 = vmax.f32 %v6602, %v6740
  %v6765 = vmax.f32 %v6607, %v6745
  %v6766 = vmax.f32 %v6610, %v6748
  %v6767 = vmax.f32 %v6615, %v6753
  %v6768 = vmax.f32 %v6618, %v6756
  %v6769 = vpack.c.bf16 %v6760, %v6759
  %v6770 = vpack.c.bf16 %v6762, %v6761
  %v6771 = vpack.c.bf16 %v6764, %v6763
  %v6772 = vpack.c.bf16 %v6766, %v6765
  %v6773 = vpack.c.bf16 %v6768, %v6767
  %s6774 = scalar_lea.vmem %s10, 240
  %v6775 = vld [vmem:[%s6774] sm:$0xf]
  %v6776 = vld [vmem:[%s6774 + $0x4] sm:$0xf]
  %v6777 = vld [vmem:[%s6774 + $0x8] sm:$0xf]
  %v6778 = vld [vmem:[%s6774 + $0xc] sm:$0xf]
  %v6779 = vld [vmem:[%s6774 + $0x10] sm:$0xf]
  %v6780 = vld [vmem:[%s6774 + $0x14] sm:$0xf]
  %v6781 = vld [vmem:[%s6774 + $0x18] sm:$0xf]
  %v6782 = vld [vmem:[%s6774 + $0x1c] sm:$0xf]
  %v6783 = vld [vmem:[%s6774 + $0x20] sm:$0xf]
  %v6784 = vld [vmem:[%s6774 + $0x24] sm:$0xf]
  %v6785 = vld [vmem:[%s6774 + $0x28] sm:$0xf]
  %v6786 = vld [vmem:[%s6774 + $0x2c] sm:$0xf]
  %v6787 = vld [vmem:[%s6774 + $0x30] sm:$0xf]
  %v6788 = vld [vmem:[%s6774 + $0x34] sm:$0xf]
  %v6789 = vld [vmem:[%s6774 + $0x38] sm:$0xf]
  %v6805 = vunpack.c.l.b16 %v6775
  %v6806 = vunpack.c.l.b16 %v6776
  %v6807 = vunpack.c.l.b16 %v6777
  %v6808 = vunpack.c.l.b16 %v6778
  %v6809 = vunpack.c.l.b16 %v6779
  %v6810 = vunpack.c.l.b16 %v6780
  %v6811 = vunpack.c.l.b16 %v6781
  %v6812 = vunpack.c.l.b16 %v6782
  %v6813 = vunpack.c.l.b16 %v6783
  %v6814 = vunpack.c.l.b16 %v6784
  %v6815 = vunpack.c.l.b16 %v6785
  %v6816 = vunpack.c.l.b16 %v6786
  %v6817 = vunpack.c.l.b16 %v6787
  %v6818 = vunpack.c.l.b16 %v6788
  %v6819 = vunpack.c.l.b16 %v6789
  %v6820 = vpack.c.b16 %v6806, %v6805
  %v6821 = vpack.c.b16 %v6808, %v6807
  %v6822 = vpack.c.b16 %v6810, %v6809
  %v6823 = vpack.c.b16 %v6812, %v6811
  %v6824 = vpack.c.b16 %v6814, %v6813
  %v6825 = vpack.c.b16 %v6816, %v6815
  %v6826 = vpack.c.b16 %v6818, %v6817
  %v6827 = vpack.c.b16 %v6819, %v6819
  %v6829 = vsel %vm5244, %v6820, 0
  %v6832 = vsel %vm5244, %v6821, 0
  %v6835 = vsel %vm5244, %v6822, 0
  %v6838 = vsel %vm5244, %v6823, 0
  %v6841 = vsel %vm5244, %v6824, 0
  %v6844 = vsel %vm5244, %v6825, 0
  %v6847 = vsel %vm5244, %v6826, 0
  %v6850 = vsel %vm5244, %v6827, 0
  %6852 = vmatprep.subr.bf16.mxu0 0
  %6853 = vmatpush1.bf16.msra.mxu0 %v6769
  %6854 = vmatprep.subr.bf16.mxu0 0
  %6855 = vmatpush1.bf16.msra.mxu0 %v6770
  %6856 = vmatprep.subr.bf16.mxu0 0
  %6857 = vmatpush1.bf16.msra.mxu0 %v6771
  %6858 = vmatprep.subr.bf16.mxu0 0
  %6859 = vmatpush1.bf16.msra.mxu0 %v6772
  %6860 = vmatprep.subr.bf16.mxu0 0
  %6861 = vmatpush1.bf16.msra.mxu0 %v6773
  %6862 = vmatprep.subr.bf16.mxu0 0
  %6863 = vmatpush1.bf16.msra.mxu0 0
  %6864 = vmatprep.subr.bf16.mxu0 0
  %6865 = vmatpush1.bf16.msra.mxu0 0
  %6866 = vmatprep.subr.bf16.mxu0 0
  %6867 = vmatpush1.bf16.msra.mxu0 0
  %6868 = vmatprep.subr.bf16.mxu0 0
  %6869 = vmatpush1.bf16.msra.mxu0 0
  %6870 = vmatprep.subr.bf16.mxu0 0
  %6871 = vmatpush1.bf16.msra.mxu0 0
  %6872 = vmatprep.subr.bf16.mxu0 0
  %6873 = vmatpush1.bf16.msra.mxu0 0
  %6874 = vmatprep.subr.bf16.mxu0 0
  %6875 = vmatpush1.bf16.msra.mxu0 0
  %6876 = vmatprep.subr.bf16.mxu0 0
  %6877 = vmatpush1.bf16.msra.mxu0 0
  %6878 = vmatprep.subr.bf16.mxu0 0
  %6879 = vmatpush1.bf16.msra.mxu0 0
  %6880 = vmatprep.subr.bf16.mxu0 0
  %6881 = vmatpush1.bf16.msra.mxu0 0
  %6882 = vmatprep.subr.bf16.mxu0 0
  %6883 = vmatpush1.bf16.msra.mxu0 0
  %6884 = vmatprep.mubr.bf16.mxu0 0
  %6885 = vmatmul.mubr.bf16.gmra.mrb[0].mxu0 %v6829
  %v6886 = vpop.f32.mrb[0].mxu0
  %v6887 = vadd.f32 0.0, %v6886
  %v6888 = vpop.f32.mrb[0].mxu0
  %v6889 = vpop.f32.mrb[0].mxu0
  %v6890 = vadd.f32 0.0, %v6889
  %v6891 = vpop.f32.mrb[0].mxu0
  %6892 = vmatprep.mubr.bf16.mxu0 0
  %6893 = vmatmul.mubr.bf16.gmra.mrb[0].mxu0 %v6832
  %v6894 = vpop.f32.mrb[0].mxu0
  %v6895 = vadd.f32 0.0, %v6894
  %v6896 = vpop.f32.mrb[0].mxu0
  %v6897 = vpop.f32.mrb[0].mxu0
  %v6898 = vadd.f32 0.0, %v6897
  %v6899 = vpop.f32.mrb[0].mxu0
  %6900 = vmatprep.mubr.bf16.mxu0 0
  %6901 = vmatmul.mubr.bf16.gmra.mrb[0].mxu0 %v6835
  %v6902 = vpop.f32.mrb[0].mxu0
  %v6903 = vadd.f32 0.0, %v6902
  %v6904 = vpop.f32.mrb[0].mxu0
  %v6905 = vpop.f32.mrb[0].mxu0
  %v6906 = vadd.f32 0.0, %v6905
  %v6907 = vpop.f32.mrb[0].mxu0
  %6908 = vmatprep.mubr.bf16.mxu0 0
  %6909 = vmatmul.mubr.bf16.gmra.mrb[0].mxu0 %v6838
  %v6910 = vpop.f32.mrb[0].mxu0
  %v6911 = vadd.f32 0.0, %v6910
  %v6912 = vpop.f32.mrb[0].mxu0
  %v6913 = vpop.f32.mrb[0].mxu0
  %v6914 = vadd.f32 0.0, %v6913
  %v6915 = vpop.f32.mrb[0].mxu0
  %6916 = vmatprep.mubr.bf16.mxu0 0
  %6917 = vmatmul.mubr.bf16.gmra.mrb[0].mxu0 %v6841
  %v6918 = vpop.f32.mrb[0].mxu0
  %v6919 = vadd.f32 0.0, %v6918
  %v6920 = vpop.f32.mrb[0].mxu0
  %v6921 = vpop.f32.mrb[0].mxu0
  %v6922 = vadd.f32 0.0, %v6921
  %v6923 = vpop.f32.mrb[0].mxu0
  %6924 = vmatprep.mubr.bf16.mxu0 0
  %6925 = vmatmul.mubr.bf16.gmra.mrb[0].mxu0 %v6844
  %v6926 = vpop.f32.mrb[0].mxu0
  %v6927 = vadd.f32 0.0, %v6926
  %v6928 = vpop.f32.mrb[0].mxu0
  %v6929 = vpop.f32.mrb[0].mxu0
  %v6930 = vadd.f32 0.0, %v6929
  %v6931 = vpop.f32.mrb[0].mxu0
  %6932 = vmatprep.mubr.bf16.mxu0 0
  %6933 = vmatmul.mubr.bf16.gmra.mrb[0].mxu0 %v6847
  %v6934 = vpop.f32.mrb[0].mxu0
  %v6935 = vadd.f32 0.0, %v6934
  %v6936 = vpop.f32.mrb[0].mxu0
  %v6937 = vpop.f32.mrb[0].mxu0
  %v6938 = vadd.f32 0.0, %v6937
  %v6939 = vpop.f32.mrb[0].mxu0
  %6940 = vmatprep.mubr.bf16.mxu0 0
  %6941 = vmatmul.mubr.bf16.gmra.mrb[0].mxu0 %v6850
  %v6942 = vpop.f32.mrb[0].mxu0
  %v6943 = vadd.f32 0.0, %v6942
  %v6944 = vpop.f32.mrb[0].mxu0
  %v6945 = vpop.f32.mrb[0].mxu0
  %v6946 = vpop.f32.mrb[0].mxu0
  %6947 = vdwg.mxu0
  %v6948 = vadd.f32 %v6468, %v6887
  %v6949 = vadd.f32 %v6469, %v6890
  %v6950 = vadd.f32 %v6470, %v6895
  %v6951 = vadd.f32 %v6471, %v6898
  %v6952 = vadd.f32 %v6472, %v6903
  %v6953 = vadd.f32 %v6473, %v6906
  %v6954 = vadd.f32 %v6474, %v6911
  %v6955 = vadd.f32 %v6475, %v6914
  %v6956 = vadd.f32 %v6476, %v6919
  %v6957 = vadd.f32 %v6477, %v6922
  %v6958 = vadd.f32 %v6478, %v6927
  %v6959 = vadd.f32 %v6479, %v6930
  %v6960 = vadd.f32 %v6480, %v6935
  %v6961 = vadd.f32 %v6481, %v6938
  %v6962 = vadd.f32 %v6482, %v6943
  %v6963 = vld [vmem:[%s11] sm:$0xff]
  %v6964 = vld [vmem:[%s11 + $0x8] sm:$0xff]
  %v6965 = vld [vmem:[%s11 + $0x10] sm:$0xff]
  %v6966 = vld [vmem:[%s11 + $0x18] sm:$0xff]
  %v6967 = vld [vmem:[%s11 + $0x20] sm:$0xff]
  %v6968 = vld [vmem:[%s11 + $0x28] sm:$0xff]
  %v6969 = vld [vmem:[%s11 + $0x30] sm:$0xff]
  %v6970 = vld [vmem:[%s11 + $0x38] sm:$0xff]
  %v6971 = vld [vmem:[%s11 + $0x40] sm:$0xff]
  %v6972 = vld [vmem:[%s11 + $0x48] sm:$0xff]
  %v6973 = vld [vmem:[%s11 + $0x50] sm:$0xff]
  %v6974 = vld [vmem:[%s11 + $0x58] sm:$0xff]
  %v6975 = vld [vmem:[%s11 + $0x60] sm:$0xff]
  %v6976 = vld [vmem:[%s11 + $0x68] sm:$0xff]
  %v6977 = vld [vmem:[%s11 + $0x70] sm:$0xff]
  %6979 = vset.pattern.permute.xlu0 0
  %6980 = vperm.xlu0 %6979, %v6963
  %v6981 = vpop.permute.xlu0 %6980
  %6984 = vset.pattern.permute.xlu0 0
  %6985 = vperm.xlu0 %6984, %v6964
  %v6986 = vpop.permute.xlu0 %6985
  %6989 = vset.pattern.permute.xlu0 0
  %6990 = vperm.xlu0 %6989, %v6965
  %v6991 = vpop.permute.xlu0 %6990
  %6994 = vset.pattern.permute.xlu0 0
  %6995 = vperm.xlu0 %6994, %v6966
  %v6996 = vpop.permute.xlu0 %6995
  %6999 = vset.pattern.permute.xlu0 0
  %7000 = vperm.xlu0 %6999, %v6967
  %v7001 = vpop.permute.xlu0 %7000
  %7004 = vset.pattern.permute.xlu0 0
  %7005 = vperm.xlu0 %7004, %v6968
  %v7006 = vpop.permute.xlu0 %7005
  %7009 = vset.pattern.permute.xlu0 0
  %7010 = vperm.xlu0 %7009, %v6969
  %v7011 = vpop.permute.xlu0 %7010
  %7014 = vset.pattern.permute.xlu0 0
  %7015 = vperm.xlu0 %7014, %v6970
  %v7016 = vpop.permute.xlu0 %7015
  %7019 = vset.pattern.permute.xlu0 0
  %7020 = vperm.xlu0 %7019, %v6971
  %v7021 = vpop.permute.xlu0 %7020
  %7024 = vset.pattern.permute.xlu0 0
  %7025 = vperm.xlu0 %7024, %v6972
  %v7026 = vpop.permute.xlu0 %7025
  %7029 = vset.pattern.permute.xlu0 0
  %7030 = vperm.xlu0 %7029, %v6973
  %v7031 = vpop.permute.xlu0 %7030
  %7034 = vset.pattern.permute.xlu0 0
  %7035 = vperm.xlu0 %7034, %v6974
  %v7036 = vpop.permute.xlu0 %7035
  %7039 = vset.pattern.permute.xlu0 0
  %7040 = vperm.xlu0 %7039, %v6975
  %v7041 = vpop.permute.xlu0 %7040
  %7044 = vset.pattern.permute.xlu0 0
  %7045 = vperm.xlu0 %7044, %v6976
  %v7046 = vpop.permute.xlu0 %7045
  %7049 = vset.pattern.permute.xlu0 0
  %7050 = vperm.xlu0 %7049, %v6977
  %v7051 = vpop.permute.xlu0 %7050
  %v7053 = vadd.f32 %v6948, %v6981
  %v7054 = vadd.f32 %v6949, %v6986
  %v7055 = vadd.f32 %v6950, %v6991
  %v7056 = vadd.f32 %v6951, %v6996
  %v7057 = vadd.f32 %v6952, %v7001
  %v7058 = vadd.f32 %v6953, %v7006
  %v7059 = vadd.f32 %v6954, %v7011
  %v7060 = vadd.f32 %v6955, %v7016
  %v7061 = vadd.f32 %v6956, %v7021
  %v7062 = vadd.f32 %v6957, %v7026
  %v7063 = vadd.f32 %v6958, %v7031
  %v7064 = vadd.f32 %v6959, %v7036
  %v7065 = vadd.f32 %v6960, %v7041
  %v7066 = vadd.f32 %v6961, %v7046
  %v7067 = vadd.f32 %v6962, %v7051
  %v7068 = vmax.f32 %v7053, 0.0
  %v7069 = vmax.f32 %v7054, 0.0
  %v7070 = vmax.f32 %v7055, 0.0
  %v7071 = vmax.f32 %v7056, 0.0
  %v7072 = vmax.f32 %v7057, 0.0
  %v7073 = vmax.f32 %v7058, 0.0
  %v7074 = vmax.f32 %v7059, 0.0
  %v7075 = vmax.f32 %v7060, 0.0
  %v7076 = vmax.f32 %v7061, 0.0
  %v7077 = vmax.f32 %v7062, 0.0
  %v7078 = vmax.f32 %v7063, 0.0
  %v7079 = vmax.f32 %v7064, 0.0
  %v7080 = vmax.f32 %v7065, 0.0
  %v7081 = vmax.f32 %v7066, 0.0
  %v7082 = vmax.f32 %v7067, 0.0
  %v7083 = vpack.c.bf16 %v7069, %v7068
  %v7084 = vpack.c.bf16 %v7071, %v7070
  %v7085 = vpack.c.bf16 %v7073, %v7072
  %v7086 = vpack.c.bf16 %v7075, %v7074
  %v7087 = vpack.c.bf16 %v7077, %v7076
  %v7088 = vpack.c.bf16 %v7079, %v7078
  %v7089 = vpack.c.bf16 %v7081, %v7080
  %v7090 = vpack.c.bf16 %v7082, %v7082
  %v7091 = vld [vmem:[%s12] sm:$0xf]
  %v7092 = vld [vmem:[%s12 + $0x4] sm:$0xf]
  %v7093 = vld [vmem:[%s12 + $0x8] sm:$0xf]
  %v7094 = vld [vmem:[%s12 + $0xc] sm:$0xf]
  %v7095 = vld [vmem:[%s12 + $0x10] sm:$0xf]
  %v7096 = vld [vmem:[%s12 + $0x14] sm:$0xf]
  %v7097 = vld [vmem:[%s12 + $0x18] sm:$0xf]
  %v7098 = vld [vmem:[%s12 + $0x1c] sm:$0xf]
  %v7099 = vld [vmem:[%s12 + $0x20] sm:$0xf]
  %v7100 = vld [vmem:[%s12 + $0x24] sm:$0xf]
  %v7101 = vld [vmem:[%s12 + $0x28] sm:$0x3]
  %v7102 = vld [vmem:[%s13] sm:$0xff]
  %v7103 = vld [vmem:[%s13 + $0x8] sm:$0xff]
  %v7104 = vld [vmem:[%s13 + $0x10] sm:$0xff]
  %v7105 = vld [vmem:[%s13 + $0x18] sm:$0xff]
  %v7106 = vld [vmem:[%s13 + $0x20] sm:$0xff]
  %v7107 = vld [vmem:[%s13 + $0x28] sm:$0xff]
  %v7108 = vld [vmem:[%s13 + $0x30] sm:$0xff]
  %v7109 = vld [vmem:[%s13 + $0x38] sm:$0xff]
  %v7110 = vld [vmem:[%s13 + $0x40] sm:$0xff]
  %v7111 = vld [vmem:[%s13 + $0x48] sm:$0xff]
  %v7112 = vld [vmem:[%s13 + $0x50] sm:$0xf]
  %7114 = vset.pattern.permute.xlu0 0
  %7115 = vperm.xlu0 %7114, %v7102
  %v7116 = vpop.permute.xlu0 %7115
  %7119 = vset.pattern.permute.xlu0 0
  %7120 = vperm.xlu0 %7119, %v7103
  %v7121 = vpop.permute.xlu0 %7120
  %7124 = vset.pattern.permute.xlu0 0
  %7125 = vperm.xlu0 %7124, %v7104
  %v7126 = vpop.permute.xlu0 %7125
  %7129 = vset.pattern.permute.xlu0 0
  %7130 = vperm.xlu0 %7129, %v7105
  %v7131 = vpop.permute.xlu0 %7130
  %7134 = vset.pattern.permute.xlu0 0
  %7135 = vperm.xlu0 %7134, %v7106
  %v7136 = vpop.permute.xlu0 %7135
  %7139 = vset.pattern.permute.xlu0 0
  %7140 = vperm.xlu0 %7139, %v7107
  %v7141 = vpop.permute.xlu0 %7140
  %7144 = vset.pattern.permute.xlu0 0
  %7145 = vperm.xlu0 %7144, %v7108
  %v7146 = vpop.permute.xlu0 %7145
  %7149 = vset.pattern.permute.xlu0 0
  %7150 = vperm.xlu0 %7149, %v7109
  %v7151 = vpop.permute.xlu0 %7150
  %7154 = vset.pattern.permute.xlu0 0
  %7155 = vperm.xlu0 %7154, %v7110
  %v7156 = vpop.permute.xlu0 %7155
  %7159 = vset.pattern.permute.xlu0 0
  %7160 = vperm.xlu0 %7159, %v7111
  %v7161 = vpop.permute.xlu0 %7160
  %7164 = vset.pattern.permute.xlu0 0
  %7165 = vperm.xlu0 %7164, %v7112
  %v7166 = vpop.permute.xlu0 %7165
  %v7179 = vunpack.c.l.b16 %v7091
  %v7180 = vunpack.c.l.b16 %v7092
  %v7181 = vunpack.c.l.b16 %v7093
  %v7182 = vunpack.c.l.b16 %v7094
  %v7183 = vunpack.c.l.b16 %v7095
  %v7184 = vunpack.c.l.b16 %v7096
  %v7185 = vunpack.c.l.b16 %v7097
  %v7186 = vunpack.c.l.b16 %v7098
  %v7187 = vunpack.c.l.b16 %v7099
  %v7188 = vunpack.c.l.b16 %v7100
  %v7189 = vunpack.c.l.b16 %v7101
  %v7190 = vpack.c.b16 %v7180, %v7179
  %v7191 = vpack.c.b16 %v7182, %v7181
  %v7192 = vpack.c.b16 %v7184, %v7183
  %v7193 = vpack.c.b16 %v7186, %v7185
  %v7194 = vpack.c.b16 %v7188, %v7187
  %v7195 = vpack.c.b16 %v7189, %v7189
  %vm7196 = vcmask 982016
  %v7198 = vsel %vm7196, %v7190, 0
  %v7201 = vsel %vm7196, %v7191, 0
  %v7204 = vsel %vm7196, %v7192, 0
  %v7207 = vsel %vm7196, %v7193, 0
  %v7210 = vsel %vm7196, %v7194, 0
  %v7213 = vsel %vm7196, %v7195, 0
  %v7216 = vsel %vm2206, %v7090, 0
  %7218 = vmatprep.subr.bf16.mxu0 0
  %7219 = vmatpush1.bf16.msra.mxu0 %v7083
  %7220 = vmatprep.subr.bf16.mxu0 0
  %7221 = vmatpush1.bf16.msra.mxu0 %v7084
  %7222 = vmatprep.subr.bf16.mxu0 0
  %7223 = vmatpush1.bf16.msra.mxu0 %v7085
  %7224 = vmatprep.subr.bf16.mxu0 0
  %7225 = vmatpush1.bf16.msra.mxu0 %v7086
  %7226 = vmatprep.subr.bf16.mxu0 0
  %7227 = vmatpush1.bf16.msra.mxu0 %v7087
  %7228 = vmatprep.subr.bf16.mxu0 0
  %7229 = vmatpush1.bf16.msra.mxu0 %v7088
  %7230 = vmatprep.subr.bf16.mxu0 0
  %7231 = vmatpush1.bf16.msra.mxu0 %v7089
  %7232 = vmatprep.subr.bf16.mxu0 0
  %7233 = vmatpush1.bf16.msra.mxu0 %v7216
  %7234 = vmatprep.subr.bf16.mxu0 0
  %7235 = vmatpush1.bf16.msra.mxu0 0
  %7236 = vmatprep.subr.bf16.mxu0 0
  %7237 = vmatpush1.bf16.msra.mxu0 0
  %7238 = vmatprep.subr.bf16.mxu0 0
  %7239 = vmatpush1.bf16.msra.mxu0 0
  %7240 = vmatprep.subr.bf16.mxu0 0
  %7241 = vmatpush1.bf16.msra.mxu0 0
  %7242 = vmatprep.subr.bf16.mxu0 0
  %7243 = vmatpush1.bf16.msra.mxu0 0
  %7244 = vmatprep.subr.bf16.mxu0 0
  %7245 = vmatpush1.bf16.msra.mxu0 0
  %7246 = vmatprep.subr.bf16.mxu0 0
  %7247 = vmatpush1.bf16.msra.mxu0 0
  %7248 = vmatprep.subr.bf16.mxu0 0
  %7249 = vmatpush1.bf16.msra.mxu0 0
  %7250 = vmatprep.mubr.bf16.mxu0 0
  %7251 = vmatmul.mubr.bf16.gmra.mrb[0].mxu0 %v7198
  %v7252 = vpop.f32.mrb[0].mxu0
  %v7253 = vadd.f32 %v7116, %v7252
  %v7254 = vpop.f32.mrb[0].mxu0
  %v7255 = vpop.f32.mrb[0].mxu0
  %v7256 = vadd.f32 %v7121, %v7255
  %v7257 = vpop.f32.mrb[0].mxu0
  %7258 = vmatprep.mubr.bf16.mxu0 0
  %7259 = vmatmul.mubr.bf16.gmra.mrb[0].mxu0 %v7201
  %v7260 = vpop.f32.mrb[0].mxu0
  %v7261 = vadd.f32 %v7126, %v7260
  %v7262 = vpop.f32.mrb[0].mxu0
  %v7263 = vpop.f32.mrb[0].mxu0
  %v7264 = vadd.f32 %v7131, %v7263
  %v7265 = vpop.f32.mrb[0].mxu0
  %7266 = vmatprep.mubr.bf16.mxu0 0
  %7267 = vmatmul.mubr.bf16.gmra.mrb[0].mxu0 %v7204
  %v7268 = vpop.f32.mrb[0].mxu0
  %v7269 = vadd.f32 %v7136, %v7268
  %v7270 = vpop.f32.mrb[0].mxu0
  %v7271 = vpop.f32.mrb[0].mxu0
  %v7272 = vadd.f32 %v7141, %v7271
  %v7273 = vpop.f32.mrb[0].mxu0
  %7274 = vmatprep.mubr.bf16.mxu0 0
  %7275 = vmatmul.mubr.bf16.gmra.mrb[0].mxu0 %v7207
  %v7276 = vpop.f32.mrb[0].mxu0
  %v7277 = vadd.f32 %v7146, %v7276
  %v7278 = vpop.f32.mrb[0].mxu0
  %v7279 = vpop.f32.mrb[0].mxu0
  %v7280 = vadd.f32 %v7151, %v7279
  %v7281 = vpop.f32.mrb[0].mxu0
  %7282 = vmatprep.mubr.bf16.mxu0 0
  %7283 = vmatmul.mubr.bf16.gmra.mrb[0].mxu0 %v7210
  %v7284 = vpop.f32.mrb[0].mxu0
  %v7285 = vadd.f32 %v7156, %v7284
  %v7286 = vpop.f32.mrb[0].mxu0
  %v7287 = vpop.f32.mrb[0].mxu0
  %v7288 = vadd.f32 %v7161, %v7287
  %v7289 = vpop.f32.mrb[0].mxu0
  %7290 = vmatprep.mubr.bf16.mxu0 0
  %7291 = vmatmul.mubr.bf16.gmra.mrb[0].mxu0 %v7213
  %v7292 = vpop.f32.mrb[0].mxu0
  %v7293 = vadd.f32 %v7166, %v7292
  %v7294 = vpop.f32.mrb[0].mxu0
  %v7295 = vpop.f32.mrb[0].mxu0
  %v7296 = vpop.f32.mrb[0].mxu0
  %7297 = vdwg.mxu0
  %v7298 = vmax.f32 %v7253, 0.0
  %v7299 = vmax.f32 %v7256, 0.0
  %v7300 = vmax.f32 %v7261, 0.0
  %v7301 = vmax.f32 %v7264, 0.0
  %v7302 = vmax.f32 %v7269, 0.0
  %v7303 = vmax.f32 %v7272, 0.0
  %v7304 = vmax.f32 %v7277, 0.0
  %v7305 = vmax.f32 %v7280, 0.0
  %v7306 = vmax.f32 %v7285, 0.0
  %v7307 = vmax.f32 %v7288, 0.0
  %v7308 = vmax.f32 %v7293, 0.0
  %v7309 = vpack.c.bf16 %v7299, %v7298
  %v7310 = vpack.c.bf16 %v7301, %v7300
  %v7311 = vpack.c.bf16 %v7303, %v7302
  %v7312 = vpack.c.bf16 %v7305, %v7304
  %v7313 = vpack.c.bf16 %v7307, %v7306
  %v7314 = vpack.c.bf16 %v7308, %v7308
  %v7315 = vld [vmem:[%s14] sm:$0xf]
  %v7316 = vld [vmem:[%s14 + $0x4] sm:$0x1]
  %v7317 = vld [vmem:[%s15] sm:$0xff]
  %v7318 = vld [vmem:[%s15 + $0x8] sm:$0x3]
  %7320 = vset.pattern.permute.xlu0 0
  %7321 = vperm.xlu0 %7320, %v7317
  %v7322 = vpop.permute.xlu0 %7321
  %7325 = vset.pattern.permute.xlu0 0
  %7326 = vperm.xlu0 %7325, %v7318
  %v7327 = vpop.permute.xlu0 %7326
  %v7331 = vunpack.c.l.b16 %v7315
  %v7332 = vunpack.c.l.b16 %v7316
  %v7333 = vpack.c.b16 %v7332, %v7331
  %v7335 = vsel %vm3294, %v7333, 0
  %v7338 = vsel %vm3445, %v7314, 0
  %7340 = vmatprep.subr.bf16.mxu0 0
  %7341 = vmatpush1.bf16.msra.mxu0 %v7309
  %7342 = vmatprep.subr.bf16.mxu0 0
  %7343 = vmatpush1.bf16.msra.mxu0 %v7310
  %7344 = vmatprep.subr.bf16.mxu0 0
  %7345 = vmatpush1.bf16.msra.mxu0 %v7311
  %7346 = vmatprep.subr.bf16.mxu0 0
  %7347 = vmatpush1.bf16.msra.mxu0 %v7312
  %7348 = vmatprep.subr.bf16.mxu0 0
  %7349 = vmatpush1.bf16.msra.mxu0 %v7313
  %7350 = vmatprep.subr.bf16.mxu0 0
  %7351 = vmatpush1.bf16.msra.mxu0 %v7338
  %7352 = vmatprep.subr.bf16.mxu0 0
  %7353 = vmatpush1.bf16.msra.mxu0 0
  %7354 = vmatprep.subr.bf16.mxu0 0
  %7355 = vmatpush1.bf16.msra.mxu0 0
  %7356 = vmatprep.subr.bf16.mxu0 0
  %7357 = vmatpush1.bf16.msra.mxu0 0
  %7358 = vmatprep.subr.bf16.mxu0 0
  %7359 = vmatpush1.bf16.msra.mxu0 0
  %7360 = vmatprep.subr.bf16.mxu0 0
  %7361 = vmatpush1.bf16.msra.mxu0 0
  %7362 = vmatprep.subr.bf16.mxu0 0
  %7363 = vmatpush1.bf16.msra.mxu0 0
  %7364 = vmatprep.subr.bf16.mxu0 0
  %7365 = vmatpush1.bf16.msra.mxu0 0
  %7366 = vmatprep.subr.bf16.mxu0 0
  %7367 = vmatpush1.bf16.msra.mxu0 0
  %7368 = vmatprep.subr.bf16.mxu0 0
  %7369 = vmatpush1.bf16.msra.mxu0 0
  %7370 = vmatprep.subr.bf16.mxu0 0
  %7371 = vmatpush1.bf16.msra.mxu0 0
  %7372 = vmatprep.mubr.bf16.mxu0 0
  %7373 = vmatmul.mubr.bf16.gmra.mrb[0].mxu0 %v7335
  %v7374 = vpop.f32.mrb[0].mxu0
  %v7375 = vadd.f32 %v7322, %v7374
  %v7376 = vpop.f32.mrb[0].mxu0
  %v7377 = vpop.f32.mrb[0].mxu0
  %v7378 = vadd.f32 %v7327, %v7377
  %v7379 = vpop.f32.mrb[0].mxu0
  %7380 = vdwg.mxu0
  %vm7381 = vcmask 64512
  %7382 = vst.msk [vmem:[%s16] sm:$0xff] %vm7381, %v7375
  %vm7383 = vcmask 58368
  %7384 = vst.msk [vmem:[%s16 + $0x8] sm:$0x3] %vm7383, %v7378
  // Predicated region
  $region66: #{net_forward.1} parent=0 // pred_check
    _
  $region67: #{net_forward.1} parent=0 // pred_check_branch
    %7386 = sbr.rel (0) target = $region69
  $region68: #{net_forward.1} parent=0 // pred_region
    _
  $region69: #{net_forward.1} parent=0 // pred_fallthru
    _
  // Predicated region
  $region70: #{net_forward.1} parent=0 // pred_check
    _
  $region71: #{net_forward.1} parent=0 // pred_check_branch
    %7388 = sbr.rel (0) target = $region73
  $region72: #{net_forward.1} parent=0 // pred_region
    _
  $region73: #{net_forward.1} parent=0 // pred_fallthru
    _

</llo_original>
